<compile_context>
chip_gen: v6e
topology: v6e:2x2x1
jax: 0.10.0
libtpu: 0.0.40
codegen_flags: <defaults>
</compile_context>

<pallas_src>
import functools
import math

import jax
import jax.numpy as jnp
from jax.experimental import pallas as pl
from jax.experimental.pallas import tpu as pltpu


def _gelu_tanh(x):
    # tanh-approximate GELU evaluated in f32 (EUP tanh slot).
    # TODO(synk): PyTorch nn.GELU() defaults to exact erf; the module takes the
    # activation as a config callable, so the tanh form is a demo choice.
    c = math.sqrt(2.0 / math.pi)
    return 0.5 * x * (1.0 + jnp.tanh(c * (x + 0.044715 * x * x * x)))


def conv_transformer_body_kernel(
    x_ref,
    ln1_g_ref, ln1_b_ref,
    wqkv_ref, bqkv_ref,
    wo_ref, bo_ref,
    ln2_g_ref, ln2_b_ref,
    wfc_ref, bfc_ref,
    wpr_ref, bpr_ref,
    out_ref,
    resid_ref,
    *, n_heads, ln_eps,
):
    """Grid = (batch_tiles, n_blocks); one step = one transformer block applied
    to one (Bt, S, E) batch tile.  The residual stream is carried across the
    layer axis in the f32 `resid_ref` scratch."""
    layer = pl.program_id(1)
    n_layers = pl.num_programs(1)

    dt = wqkv_ref.dtype                      # MXU operand dtype (bf16 in demo)
    Bt, S, E = out_ref.shape
    T = Bt * S
    H = n_heads
    hd = E // H

    # Load the input into the f32 residual scratch on the first layer only.
    @pl.when(layer == 0)
    def _():
        resid_ref[...] = x_ref[...].reshape(T, E).astype(jnp.float32)

    x = resid_ref[...]                                   # (T, E) f32

    def layernorm(v, g_ref, b_ref):
        mu = jnp.mean(v, axis=-1, keepdims=True)
        d = v - mu
        var = jnp.mean(d * d, axis=-1, keepdims=True)
        nrm = d * jax.lax.rsqrt(var + ln_eps)
        return nrm * g_ref[0].astype(jnp.float32) + b_ref[0].astype(jnp.float32)

    # ---------------- attention sub-block ----------------
    ln1 = layernorm(x, ln1_g_ref, ln1_b_ref).astype(dt)          # (T, E)
    # One fused, lane-dense QKV projection (f32 accumulation on the MXU).
    qkv = jnp.dot(ln1, wqkv_ref[0], preferred_element_type=jnp.float32)
    qkv = qkv + bqkv_ref[0].astype(jnp.float32)                  # (T, 3E) f32

    def split_heads(off, scale=None):
        # (T, 3E) -> (H*Bt, S, hd): lane-aligned slices (hd=128 in the demo),
        # leading-dim reshapes and a stack along a new major axis only.
        parts = []
        for h in range(H):
            z = qkv[:, off + h * hd: off + (h + 1) * hd]
            if scale is not None:
                z = z * scale
            parts.append(z.astype(dt).reshape(Bt, S, hd))
        z = jnp.stack(parts, axis=0)                             # (H, Bt, S, hd)
        return z.reshape(H * Bt, S, hd)

    q = split_heads(0, scale=1.0 / math.sqrt(hd))                # scale in f32
    k = split_heads(E)
    v = split_heads(2 * E)

    # Scores / softmax: keep a single (H*Bt, S, S) f32 buffer live.
    # TODO(synk): flash-style KV tiling for large S.
    s = jnp.einsum("bqd,bkd->bqk", q, k, preferred_element_type=jnp.float32)
    m = jnp.max(s, axis=-1, keepdims=True)
    s = jnp.exp(s - m)
    denom = jnp.sum(s, axis=-1, keepdims=True)
    p = (s * pl.reciprocal(denom, approx=True)).astype(dt)       # EUP reciprocal

    o = jnp.einsum("bqk,bkd->bqd", p, v, preferred_element_type=jnp.float32)
    # Merge heads back to (T, E) (lane-aligned concat), then ONE (E,E) matmul.
    o = o.reshape(H, Bt, S, hd)
    o = jnp.concatenate([o[h] for h in range(H)], axis=-1)       # (Bt, S, E)
    o = o.reshape(T, E).astype(dt)

    attn = jnp.dot(o, wo_ref[0], preferred_element_type=jnp.float32)
    attn = attn + bo_ref[0].astype(jnp.float32)
    x = x + attn                                                 # residual 1

    # ---------------- MLP sub-block ----------------
    ln2 = layernorm(x, ln2_g_ref, ln2_b_ref).astype(dt)
    h1 = jnp.dot(ln2, wfc_ref[0], preferred_element_type=jnp.float32)
    h1 = _gelu_tanh(h1 + bfc_ref[0].astype(jnp.float32)).astype(dt)
    y = jnp.dot(h1, wpr_ref[0], preferred_element_type=jnp.float32)
    y = y + bpr_ref[0].astype(jnp.float32)
    x = x + y                                                    # residual 2

    resid_ref[...] = x                                           # carry to layer+1

    @pl.when(layer == n_layers - 1)
    def _():
        out_ref[...] = x.reshape(Bt, S, E).astype(out_ref.dtype)


def _pick_batch_tile(B, S, E, hidden, n_heads):
    """Largest divisor of B whose packed (Bt*S) rows and f32 intermediates stay
    comfortably inside VMEM (conservative for v7x's 64 MiB)."""
    best = 1
    for bt in range(1, B + 1):
        if B % bt:
            continue
        rows = bt * S
        interm = 4 * (rows * (3 * E + hidden + 8 * E)
                      + 2 * bt * n_heads * S * S)
        if rows > 1024 or interm > 24 * (1 << 20):
            break
        best = bt
    return best


def _weight_bytes_per_layer(E, hidden, bpe):
    return bpe * (E * 3 * E + 3 * E + E * E + E
                  + E * hidden + hidden + hidden * E + E + 4 * E)


def _vmem_limit_bytes(bt, S, E, hidden, n_heads, bpe):
    wbytes = _weight_bytes_per_layer(E, hidden, bpe)
    act = 2 * 2 * bt * S * E * bpe                 # in + out blocks, double-buffered
    resid = 4 * bt * S * E                         # f32 residual scratch
    interm = 4 * (bt * S * (3 * E + hidden + 8 * E)
                  + 2 * bt * n_heads * S * S)      # f32 temporaries
    need = act + 2 * wbytes + resid + interm
    # Leave generous compiler headroom, but never request v7x's full 64 MiB.
    # (On 128 MiB parts this cap could be raised for much larger configs.)
    return int(min(48 * (1 << 20), max(24 * (1 << 20), 2 * need)))


def _cost_estimate(B, S, E, hidden, n_heads, n_layers, n_batch_tiles, bpe):
    Ttot = B * S
    flops_layer = (2 * Ttot * E * 3 * E            # fused qkv projection
                   + 4 * Ttot * S * E              # scores + PV
                   + 2 * Ttot * E * E              # output projection
                   + 4 * Ttot * E * hidden)        # MLP
    transc_layer = B * n_heads * S * S + Ttot * hidden + 2 * Ttot
    wbytes = _weight_bytes_per_layer(E, hidden, bpe)
    bytes_accessed = 2 * B * S * E * bpe + n_batch_tiles * n_layers * wbytes
    return pl.CostEstimate(flops=int(n_layers * flops_layer),
                           transcendentals=int(n_layers * transc_layer),
                           bytes_accessed=int(bytes_accessed))


def _body_call(x, w, *, n_heads, ln_eps, b_tile):
    B, S, E = x.shape
    n_layers = w["wqkv"].shape[0]
    hidden = w["wfc"].shape[-1]
    n_batch_tiles = B // b_tile
    bpe = jnp.dtype(x.dtype).itemsize

    def wspec(arr):
        # Weights carry a leading layer axis; default double-buffering makes
        # the pipeline prefetch layer l+1's weights while layer l computes.
        return pl.BlockSpec((1,) + arr.shape[1:], lambda b, l: (l, 0, 0))

    in_specs = [
        pl.BlockSpec((b_tile, S, E), lambda b, l: (b, 0, 0)),     # residual in
        wspec(w["ln1_g"]), wspec(w["ln1_b"]),
        wspec(w["wqkv"]), wspec(w["bqkv"]),
        wspec(w["wo"]), wspec(w["bo"]),
        wspec(w["ln2_g"]), wspec(w["ln2_b"]),
        wspec(w["wfc"]), wspec(w["bfc"]),
        wspec(w["wpr"]), wspec(w["bpr"]),
    ]
    out_specs = pl.BlockSpec((b_tile, S, E), lambda b, l: (b, 0, 0))

    kernel = functools.partial(conv_transformer_body_kernel,
                               n_heads=n_heads, ln_eps=ln_eps)

    return pl.pallas_call(
        kernel,
        out_shape=jax.ShapeDtypeStruct((B, S, E), x.dtype),
        grid=(n_batch_tiles, n_layers),
        in_specs=in_specs,
        out_specs=out_specs,
        scratch_shapes=[pltpu.VMEM((b_tile * S, E), jnp.float32)],
        input_output_aliases={0: 0},          # in-place residual stream update
        compiler_params=pltpu.CompilerParams(
            dimension_semantics=("parallel", "arbitrary"),
            vmem_limit_bytes=_vmem_limit_bytes(b_tile, S, E, hidden,
                                               n_heads, bpe),
        ),
        cost_estimate=_cost_estimate(B, S, E, hidden, n_heads, n_layers,
                                     n_batch_tiles, bpe),
    )(
        x,
        w["ln1_g"], w["ln1_b"],
        w["wqkv"], w["bqkv"],
        w["wo"], w["bo"],
        w["ln2_g"], w["ln2_b"],
        w["wfc"], w["bfc"],
        w["wpr"], w["bpr"],
    )


def init_block_params(key, n_embed, linear_size_multiplier, init_std,
                      dtype=jnp.float32):
    """Parameters in the PyTorch module's math layout (1x1 conv == Linear)."""
    E = n_embed
    hidden = linear_size_multiplier * E
    k1, k2, k3, k4 = jax.random.split(key, 4)
    return {
        "ln1_g": jnp.ones((E,), dtype),
        "ln1_b": jnp.zeros((E,), dtype),
        "wqkv": (init_std * jax.random.normal(k1, (E, 3 * E))).astype(dtype),
        "bqkv": jnp.zeros((3 * E,), dtype),
        "wo": (init_std * jax.random.normal(k2, (E, E))).astype(dtype),
        "bo": jnp.zeros((E,), dtype),
        "ln2_g": jnp.ones((E,), dtype),
        "ln2_b": jnp.zeros((E,), dtype),
        "wfc": (init_std * jax.random.normal(k3, (E, hidden))).astype(dtype),
        "bfc": jnp.zeros((hidden,), dtype),
        "wpr": (init_std * jax.random.normal(k4, (hidden, E))).astype(dtype),
        "bpr": jnp.zeros((E,), dtype),
    }


def prepare_body_params(block_params_list):
    """Stack per-block params along a leading layer axis, lane-dense layouts."""
    p0 = block_params_list[0]
    E = p0["wqkv"].shape[0]
    hidden = p0["wfc"].shape[1]
    dt = p0["wqkv"].dtype

    def stack(name, shape):
        return jnp.stack(
            [jnp.asarray(p[name], dt).reshape(shape) for p in block_params_list],
            axis=0)

    return {
        "ln1_g": stack("ln1_g", (1, E)),
        "ln1_b": stack("ln1_b", (1, E)),
        "wqkv": stack("wqkv", (E, 3 * E)),
        "bqkv": stack("bqkv", (1, 3 * E)),
        "wo": stack("wo", (E, E)),
        "bo": stack("bo", (1, E)),
        "ln2_g": stack("ln2_g", (1, E)),
        "ln2_b": stack("ln2_b", (1, E)),
        "wfc": stack("wfc", (E, hidden)),
        "bfc": stack("bfc", (1, hidden)),
        "wpr": stack("wpr", (hidden, E)),
        "bpr": stack("bpr", (1, E)),
    }


def conv_transformer_body(x, block_params_list, *, n_heads, ln_eps=1e-5):
    """x: (B, N, M, E) -> (B, N, M, E); the full stacked ConvTransformerBody."""
    B, N, M, E = x.shape
    S = N * M
    w = prepare_body_params(block_params_list)
    hidden = w["wfc"].shape[-1]
    b_tile = _pick_batch_tile(B, S, E, hidden, n_heads)
    h = x.reshape(B, S, E)
    out = _body_call(h, w, n_heads=n_heads, ln_eps=ln_eps, b_tile=b_tile)
    return out.reshape(B, N, M, E)


if __name__ == "__main__":
    # Small config consistent with the module's forward: x is (B, N, M, EMBED).
    # head_dim = E / n_heads = 128 keeps every in-kernel head slice/concat
    # lane-aligned; bf16 params/activations take the full-rate MXU path with
    # f32 accumulation inside the kernel.
    n_blocks = 2
    n_embed = 256
    n_heads = 2
    linear_size_multiplier = 4
    init_std = 0.02
    ln_eps = 1e-5
    dtype = jnp.bfloat16

    B, N, M = 2, 8, 8          # S = N * M = 64 tokens per image

    root = jax.random.PRNGKey(0)
    kx, kp = jax.random.split(root)
    x = jax.random.normal(kx, (B, N, M, n_embed), dtype=jnp.float32).astype(dtype)

    block_keys = jax.random.split(kp, n_blocks)
    block_params = [
        init_block_params(block_keys[i], n_embed, linear_size_multiplier,
                          init_std, dtype)
        for i in range(n_blocks)
    ]

    out = conv_transformer_body(x, block_params, n_heads=n_heads, ln_eps=ln_eps)
    out = jax.block_until_ready(out)
    assert out.shape == (B, N, M, n_embed)
    assert bool(jnp.all(jnp.isfinite(out.astype(jnp.float32))))
    print("KERNEL_OK")
</pallas_src>

<mosaic_0001>
module attributes {stable_mosaic.version = 11 : i64} {
  func.func @conv_transformer_body_kernel(%arg0: i32, %arg1: i32, %arg2: memref<2x64x256xbf16, #tpu.memory_space<vmem>>, %arg3: memref<1x1x256xbf16, #tpu.memory_space<vmem>>, %arg4: memref<1x1x256xbf16, #tpu.memory_space<vmem>>, %arg5: memref<1x256x768xbf16, #tpu.memory_space<vmem>>, %arg6: memref<1x1x768xbf16, #tpu.memory_space<vmem>>, %arg7: memref<1x256x256xbf16, #tpu.memory_space<vmem>>, %arg8: memref<1x1x256xbf16, #tpu.memory_space<vmem>>, %arg9: memref<1x1x256xbf16, #tpu.memory_space<vmem>>, %arg10: memref<1x1x256xbf16, #tpu.memory_space<vmem>>, %arg11: memref<1x256x1024xbf16, #tpu.memory_space<vmem>>, %arg12: memref<1x1x1024xbf16, #tpu.memory_space<vmem>>, %arg13: memref<1x1024x256xbf16, #tpu.memory_space<vmem>>, %arg14: memref<1x1x256xbf16, #tpu.memory_space<vmem>>, %arg15: memref<2x64x256xbf16, #tpu.memory_space<vmem>>, %arg16: memref<128x256xf32, #tpu.memory_space<vmem>>) attributes {dimension_semantics = [#tpu.dimension_semantics<parallel>, #tpu.dimension_semantics<arbitrary>], iteration_bounds = array<i64: 1, 2>, scalar_prefetch = 0 : i64, scratch_operands = 1 : i64, tpu.core_type = #tpu.core_type<tc>, window_params = [{transform_indices = @transform_0, window_bounds = array<i64: 2, 64, 256>}, {transform_indices = @transform_1, window_bounds = array<i64: 1, 1, 256>}, {transform_indices = @transform_2, window_bounds = array<i64: 1, 1, 256>}, {transform_indices = @transform_3, window_bounds = array<i64: 1, 256, 768>}, {transform_indices = @transform_4, window_bounds = array<i64: 1, 1, 768>}, {transform_indices = @transform_5, window_bounds = array<i64: 1, 256, 256>}, {transform_indices = @transform_6, window_bounds = array<i64: 1, 1, 256>}, {transform_indices = @transform_7, window_bounds = array<i64: 1, 1, 256>}, {transform_indices = @transform_8, window_bounds = array<i64: 1, 1, 256>}, {transform_indices = @transform_9, window_bounds = array<i64: 1, 256, 1024>}, {transform_indices = @transform_10, window_bounds = array<i64: 1, 1, 1024>}, {transform_indices = @transform_11, window_bounds = array<i64: 1, 1024, 256>}, {transform_indices = @transform_12, window_bounds = array<i64: 1, 1, 256>}, {transform_indices = @transform_13, window_bounds = array<i64: 2, 64, 256>}]} {
    %c0_i32 = arith.constant 0 : i32
    %0 = arith.cmpi eq, %arg1, %c0_i32 : i32
    %1 = arith.extui %0 : i1 to i32
    %c0_i32_0 = arith.constant 0 : i32
    %2 = arith.cmpi ne, %1, %c0_i32_0 : i32
    scf.if %2 {
      %c0_64 = arith.constant 0 : index
      %c0_65 = arith.constant 0 : index
      %c0_66 = arith.constant 0 : index
      %165 = vector.load %arg2[%c0_64, %c0_65, %c0_66] : memref<2x64x256xbf16, #tpu.memory_space<vmem>>, vector<2x64x256xbf16>
      %166 = vector.shape_cast %165 : vector<2x64x256xbf16> to vector<128x256xbf16>
      %167 = arith.extf %166 : vector<128x256xbf16> to vector<128x256xf32>
      %c0_67 = arith.constant 0 : index
      %c0_68 = arith.constant 0 : index
      %168 = vector.load %arg16[%c0_67, %c0_68] : memref<128x256xf32, #tpu.memory_space<vmem>>, vector<128x256xf32>
      tpu.vector_store %arg16[%c0_67, %c0_68], %167 {strides = array<i32>} : memref<128x256xf32, #tpu.memory_space<vmem>>, vector<128x256xf32>,
    } else {
    }
    %c0 = arith.constant 0 : index
    %c0_1 = arith.constant 0 : index
    %3 = vector.load %arg16[%c0, %c0_1] : memref<128x256xf32, #tpu.memory_space<vmem>>, vector<128x256xf32>
    %cst = arith.constant dense<0.000000e+00> : vector<128xf32>
    %4 = vector.multi_reduction <add>, %3, %cst [1] : vector<128x256xf32> to vector<128xf32>
    %5 = vector.shape_cast %4 : vector<128xf32> to vector<128x1xf32>
    %cst_2 = arith.constant 2.560000e+02 : f32
    %6 = vector.broadcast %cst_2 : f32 to vector<128x1xf32>
    %7 = arith.divf %5, %6 : vector<128x1xf32>
    %8 = vector.broadcast %7 : vector<128x1xf32> to vector<128x256xf32>
    %9 = arith.subf %3, %8 : vector<128x256xf32>
    %10 = arith.mulf %9, %9 : vector<128x256xf32>
    %cst_3 = arith.constant dense<0.000000e+00> : vector<128xf32>
    %11 = vector.multi_reduction <add>, %10, %cst_3 [1] : vector<128x256xf32> to vector<128xf32>
    %12 = vector.shape_cast %11 : vector<128xf32> to vector<128x1xf32>
    %cst_4 = arith.constant 2.560000e+02 : f32
    %13 = vector.broadcast %cst_4 : f32 to vector<128x1xf32>
    %14 = arith.divf %12, %13 : vector<128x1xf32>
    %cst_5 = arith.constant 9.99999974E-6 : f32
    %15 = vector.broadcast %cst_5 : f32 to vector<128x1xf32>
    %16 = arith.addf %14, %15 : vector<128x1xf32>
    %17 = math.rsqrt %16 : vector<128x1xf32>
    %18 = vector.broadcast %17 : vector<128x1xf32> to vector<128x256xf32>
    %19 = arith.mulf %9, %18 : vector<128x256xf32>
    %c0_6 = arith.constant 0 : index
    %c0_7 = arith.constant 0 : index
    %c0_8 = arith.constant 0 : index
    %20 = vector.load %arg3[%c0_6, %c0_7, %c0_8] : memref<1x1x256xbf16, #tpu.memory_space<vmem>>, vector<1x1x256xbf16>
    %21 = vector.shape_cast %20 : vector<1x1x256xbf16> to vector<1x256xbf16>
    %22 = arith.extf %21 : vector<1x256xbf16> to vector<1x256xf32>
    %23 = vector.broadcast %22 : vector<1x256xf32> to vector<128x256xf32>
    %24 = arith.mulf %19, %23 : vector<128x256xf32>
    %c0_9 = arith.constant 0 : index
    %c0_10 = arith.constant 0 : index
    %c0_11 = arith.constant 0 : index
    %25 = vector.load %arg4[%c0_9, %c0_10, %c0_11] : memref<1x1x256xbf16, #tpu.memory_space<vmem>>, vector<1x1x256xbf16>
    %26 = vector.shape_cast %25 : vector<1x1x256xbf16> to vector<1x256xbf16>
    %27 = arith.extf %26 : vector<1x256xbf16> to vector<1x256xf32>
    %28 = vector.broadcast %27 : vector<1x256xf32> to vector<128x256xf32>
    %29 = arith.addf %24, %28 : vector<128x256xf32>
    %30 = arith.truncf %29 : vector<128x256xf32> to vector<128x256xbf16>
    %c0_12 = arith.constant 0 : index
    %c0_13 = arith.constant 0 : index
    %c0_14 = arith.constant 0 : index
    %31 = vector.load %arg5[%c0_12, %c0_13, %c0_14] : memref<1x256x768xbf16, #tpu.memory_space<vmem>>, vector<1x256x768xbf16>
    %32 = vector.shape_cast %31 : vector<1x256x768xbf16> to vector<256x768xbf16>
    %cst_15 = arith.constant dense<0.000000e+00> : vector<128x768xf32>
    %33 = tpu.matmul %30, %32, %cst_15 {dimension_numbers = #tpu.dot_dimension_numbers<[1], [0], [0], [1], [0, 0, 1, 1], [], []>} : vector<128x256xbf16>, vector<256x768xbf16>, vector<128x768xf32> -> vector<128x768xf32>
    %c0_16 = arith.constant 0 : index
    %c0_17 = arith.constant 0 : index
    %c0_18 = arith.constant 0 : index
    %34 = vector.load %arg6[%c0_16, %c0_17, %c0_18] : memref<1x1x768xbf16, #tpu.memory_space<vmem>>, vector<1x1x768xbf16>
    %35 = vector.shape_cast %34 : vector<1x1x768xbf16> to vector<1x768xbf16>
    %36 = arith.extf %35 : vector<1x768xbf16> to vector<1x768xf32>
    %37 = vector.broadcast %36 : vector<1x768xf32> to vector<128x768xf32>
    %38 = arith.addf %33, %37 : vector<128x768xf32>
    %39 = vector.extract_strided_slice %38 {offsets = [0, 0], sizes = [128, 128], strides = [1, 1]} : vector<128x768xf32> to vector<128x128xf32>
    %cst_19 = arith.constant 0.0883883461 : f32
    %40 = vector.broadcast %cst_19 : f32 to vector<128x128xf32>
    %41 = arith.mulf %39, %40 : vector<128x128xf32>
    %42 = arith.truncf %41 : vector<128x128xf32> to vector<128x128xbf16>
    %43 = vector.shape_cast %42 : vector<128x128xbf16> to vector<2x64x128xbf16>
    %44 = vector.extract_strided_slice %38 {offsets = [0, 128], sizes = [128, 128], strides = [1, 1]} : vector<128x768xf32> to vector<128x128xf32>
    %cst_20 = arith.constant 0.0883883461 : f32
    %45 = vector.broadcast %cst_20 : f32 to vector<128x128xf32>
    %46 = arith.mulf %44, %45 : vector<128x128xf32>
    %47 = arith.truncf %46 : vector<128x128xf32> to vector<128x128xbf16>
    %48 = vector.shape_cast %47 : vector<128x128xbf16> to vector<2x64x128xbf16>
    %49 = vector.shape_cast %43 : vector<2x64x128xbf16> to vector<1x2x64x128xbf16>
    %50 = vector.shape_cast %48 : vector<2x64x128xbf16> to vector<1x2x64x128xbf16>
    %51 = tpu.concatenate %49, %50 in 0 : vector<1x2x64x128xbf16>, vector<1x2x64x128xbf16> -> vector<2x2x64x128xbf16>
    %52 = vector.shape_cast %51 : vector<2x2x64x128xbf16> to vector<4x64x128xbf16>
    %53 = vector.extract_strided_slice %38 {offsets = [0, 256], sizes = [128, 128], strides = [1, 1]} : vector<128x768xf32> to vector<128x128xf32>
    %54 = arith.truncf %53 : vector<128x128xf32> to vector<128x128xbf16>
    %55 = vector.shape_cast %54 : vector<128x128xbf16> to vector<2x64x128xbf16>
    %56 = vector.extract_strided_slice %38 {offsets = [0, 384], sizes = [128, 128], strides = [1, 1]} : vector<128x768xf32> to vector<128x128xf32>
    %57 = arith.truncf %56 : vector<128x128xf32> to vector<128x128xbf16>
    %58 = vector.shape_cast %57 : vector<128x128xbf16> to vector<2x64x128xbf16>
    %59 = vector.shape_cast %55 : vector<2x64x128xbf16> to vector<1x2x64x128xbf16>
    %60 = vector.shape_cast %58 : vector<2x64x128xbf16> to vector<1x2x64x128xbf16>
    %61 = tpu.concatenate %59, %60 in 0 : vector<1x2x64x128xbf16>, vector<1x2x64x128xbf16> -> vector<2x2x64x128xbf16>
    %62 = vector.shape_cast %61 : vector<2x2x64x128xbf16> to vector<4x64x128xbf16>
    %63 = vector.extract_strided_slice %38 {offsets = [0, 512], sizes = [128, 128], strides = [1, 1]} : vector<128x768xf32> to vector<128x128xf32>
    %64 = arith.truncf %63 : vector<128x128xf32> to vector<128x128xbf16>
    %65 = vector.shape_cast %64 : vector<128x128xbf16> to vector<2x64x128xbf16>
    %66 = vector.extract_strided_slice %38 {offsets = [0, 640], sizes = [128, 128], strides = [1, 1]} : vector<128x768xf32> to vector<128x128xf32>
    %67 = arith.truncf %66 : vector<128x128xf32> to vector<128x128xbf16>
    %68 = vector.shape_cast %67 : vector<128x128xbf16> to vector<2x64x128xbf16>
    %69 = vector.shape_cast %65 : vector<2x64x128xbf16> to vector<1x2x64x128xbf16>
    %70 = vector.shape_cast %68 : vector<2x64x128xbf16> to vector<1x2x64x128xbf16>
    %71 = tpu.concatenate %69, %70 in 0 : vector<1x2x64x128xbf16>, vector<1x2x64x128xbf16> -> vector<2x2x64x128xbf16>
    %72 = vector.shape_cast %71 : vector<2x2x64x128xbf16> to vector<4x64x128xbf16>
    "tpu.trace_start"() <{level = 10 : i32, message = "bqd,bkd->bqk"}> : () -> ()
    %cst_21 = arith.constant dense<0.000000e+00> : vector<4x64x64xf32>
    %73 = tpu.matmul %52, %62, %cst_21 {dimension_numbers = #tpu.dot_dimension_numbers<[2], [2], [1], [1], [0, 0, 0, 1, 1, 1], [0], [0]>} : vector<4x64x128xbf16>, vector<4x64x128xbf16>, vector<4x64x64xf32> -> vector<4x64x64xf32>
    "tpu.trace_stop"() : () -> ()
    %cst_22 = arith.constant dense<0xFF800000> : vector<4x64xf32>
    %74 = vector.multi_reduction <maximumf>, %73, %cst_22 [2] : vector<4x64x64xf32> to vector<4x64xf32>
    %75 = vector.shape_cast %74 : vector<4x64xf32> to vector<4x64x1xf32>
    %76 = vector.broadcast %75 : vector<4x64x1xf32> to vector<4x64x64xf32>
    %77 = arith.subf %73, %76 : vector<4x64x64xf32>
    %78 = math.exp %77 : vector<4x64x64xf32>
    %cst_23 = arith.constant dense<0.000000e+00> : vector<4x64xf32>
    %79 = vector.multi_reduction <add>, %78, %cst_23 [2] : vector<4x64x64xf32> to vector<4x64xf32>
    %80 = vector.shape_cast %79 : vector<4x64xf32> to vector<4x64x1xf32>
    %81 = tpu.reciprocal %80 {approx = true} : vector<4x64x1xf32> -> vector<4x64x1xf32>
    %82 = vector.broadcast %81 : vector<4x64x1xf32> to vector<4x64x64xf32>
    %83 = arith.mulf %78, %82 : vector<4x64x64xf32>
    %84 = arith.truncf %83 : vector<4x64x64xf32> to vector<4x64x64xbf16>
    "tpu.trace_start"() <{level = 10 : i32, message = "bqk,bkd->bqd"}> : () -> ()
    %cst_24 = arith.constant dense<0.000000e+00> : vector<4x64x128xf32>
    %85 = tpu.matmul %84, %72, %cst_24 {dimension_numbers = #tpu.dot_dimension_numbers<[2], [1], [1], [2], [0, 0, 0, 1, 1, 2], [0], [0]>} : vector<4x64x64xbf16>, vector<4x64x128xbf16>, vector<4x64x128xf32> -> vector<4x64x128xf32>
    "tpu.trace_stop"() : () -> ()
    %86 = vector.shape_cast %85 : vector<4x64x128xf32> to vector<2x2x64x128xf32>
    %87 = vector.extract_strided_slice %86 {offsets = [0, 0, 0, 0], sizes = [1, 2, 64, 128], strides = [1, 1, 1, 1]} : vector<2x2x64x128xf32> to vector<1x2x64x128xf32>
    %88 = vector.shape_cast %87 : vector<1x2x64x128xf32> to vector<2x64x128xf32>
    %89 = vector.extract_strided_slice %86 {offsets = [1, 0, 0, 0], sizes = [1, 2, 64, 128], strides = [1, 1, 1, 1]} : vector<2x2x64x128xf32> to vector<1x2x64x128xf32>
    %90 = vector.shape_cast %89 : vector<1x2x64x128xf32> to vector<2x64x128xf32>
    %91 = tpu.concatenate %88, %90 in 2 : vector<2x64x128xf32>, vector<2x64x128xf32> -> vector<2x64x256xf32>
    %92 = vector.shape_cast %91 : vector<2x64x256xf32> to vector<128x256xf32>
    %93 = arith.truncf %92 : vector<128x256xf32> to vector<128x256xbf16>
    %c0_25 = arith.constant 0 : index
    %c0_26 = arith.constant 0 : index
    %c0_27 = arith.constant 0 : index
    %94 = vector.load %arg7[%c0_25, %c0_26, %c0_27] : memref<1x256x256xbf16, #tpu.memory_space<vmem>>, vector<1x256x256xbf16>
    %95 = vector.shape_cast %94 : vector<1x256x256xbf16> to vector<256x256xbf16>
    %cst_28 = arith.constant dense<0.000000e+00> : vector<128x256xf32>
    %96 = tpu.matmul %93, %95, %cst_28 {dimension_numbers = #tpu.dot_dimension_numbers<[1], [0], [0], [1], [0, 0, 1, 1], [], []>} : vector<128x256xbf16>, vector<256x256xbf16>, vector<128x256xf32> -> vector<128x256xf32>
    %c0_29 = arith.constant 0 : index
    %c0_30 = arith.constant 0 : index
    %c0_31 = arith.constant 0 : index
    %97 = vector.load %arg8[%c0_29, %c0_30, %c0_31] : memref<1x1x256xbf16, #tpu.memory_space<vmem>>, vector<1x1x256xbf16>
    %98 = vector.shape_cast %97 : vector<1x1x256xbf16> to vector<1x256xbf16>
    %99 = arith.extf %98 : vector<1x256xbf16> to vector<1x256xf32>
    %100 = vector.broadcast %99 : vector<1x256xf32> to vector<128x256xf32>
    %101 = arith.addf %96, %100 : vector<128x256xf32>
    %102 = arith.addf %3, %101 : vector<128x256xf32>
    %cst_32 = arith.constant dense<0.000000e+00> : vector<128xf32>
    %103 = vector.multi_reduction <add>, %102, %cst_32 [1] : vector<128x256xf32> to vector<128xf32>
    %104 = vector.shape_cast %103 : vector<128xf32> to vector<128x1xf32>
    %cst_33 = arith.constant 2.560000e+02 : f32
    %105 = vector.broadcast %cst_33 : f32 to vector<128x1xf32>
    %106 = arith.divf %104, %105 : vector<128x1xf32>
    %107 = vector.broadcast %106 : vector<128x1xf32> to vector<128x256xf32>
    %108 = arith.subf %102, %107 : vector<128x256xf32>
    %109 = arith.mulf %108, %108 : vector<128x256xf32>
    %cst_34 = arith.constant dense<0.000000e+00> : vector<128xf32>
    %110 = vector.multi_reduction <add>, %109, %cst_34 [1] : vector<128x256xf32> to vector<128xf32>
    %111 = vector.shape_cast %110 : vector<128xf32> to vector<128x1xf32>
    %cst_35 = arith.constant 2.560000e+02 : f32
    %112 = vector.broadcast %cst_35 : f32 to vector<128x1xf32>
    %113 = arith.divf %111, %112 : vector<128x1xf32>
    %cst_36 = arith.constant 9.99999974E-6 : f32
    %114 = vector.broadcast %cst_36 : f32 to vector<128x1xf32>
    %115 = arith.addf %113, %114 : vector<128x1xf32>
    %116 = math.rsqrt %115 : vector<128x1xf32>
    %117 = vector.broadcast %116 : vector<128x1xf32> to vector<128x256xf32>
    %118 = arith.mulf %108, %117 : vector<128x256xf32>
    %c0_37 = arith.constant 0 : index
    %c0_38 = arith.constant 0 : index
    %c0_39 = arith.constant 0 : index
    %119 = vector.load %arg9[%c0_37, %c0_38, %c0_39] : memref<1x1x256xbf16, #tpu.memory_space<vmem>>, vector<1x1x256xbf16>
    %120 = vector.shape_cast %119 : vector<1x1x256xbf16> to vector<1x256xbf16>
    %121 = arith.extf %120 : vector<1x256xbf16> to vector<1x256xf32>
    %122 = vector.broadcast %121 : vector<1x256xf32> to vector<128x256xf32>
    %123 = arith.mulf %118, %122 : vector<128x256xf32>
    %c0_40 = arith.constant 0 : index
    %c0_41 = arith.constant 0 : index
    %c0_42 = arith.constant 0 : index
    %124 = vector.load %arg10[%c0_40, %c0_41, %c0_42] : memref<1x1x256xbf16, #tpu.memory_space<vmem>>, vector<1x1x256xbf16>
    %125 = vector.shape_cast %124 : vector<1x1x256xbf16> to vector<1x256xbf16>
    %126 = arith.extf %125 : vector<1x256xbf16> to vector<1x256xf32>
    %127 = vector.broadcast %126 : vector<1x256xf32> to vector<128x256xf32>
    %128 = arith.addf %123, %127 : vector<128x256xf32>
    %129 = arith.truncf %128 : vector<128x256xf32> to vector<128x256xbf16>
    %c0_43 = arith.constant 0 : index
    %c0_44 = arith.constant 0 : index
    %c0_45 = arith.constant 0 : index
    %130 = vector.load %arg11[%c0_43, %c0_44, %c0_45] : memref<1x256x1024xbf16, #tpu.memory_space<vmem>>, vector<1x256x1024xbf16>
    %131 = vector.shape_cast %130 : vector<1x256x1024xbf16> to vector<256x1024xbf16>
    %cst_46 = arith.constant dense<0.000000e+00> : vector<128x1024xf32>
    %132 = tpu.matmul %129, %131, %cst_46 {dimension_numbers = #tpu.dot_dimension_numbers<[1], [0], [0], [1], [0, 0, 1, 1], [], []>} : vector<128x256xbf16>, vector<256x1024xbf16>, vector<128x1024xf32> -> vector<128x1024xf32>
    %c0_47 = arith.constant 0 : index
    %c0_48 = arith.constant 0 : index
    %c0_49 = arith.constant 0 : index
    %133 = vector.load %arg12[%c0_47, %c0_48, %c0_49] : memref<1x1x1024xbf16, #tpu.memory_space<vmem>>, vector<1x1x1024xbf16>
    %134 = vector.shape_cast %133 : vector<1x1x1024xbf16> to vector<1x1024xbf16>
    %135 = arith.extf %134 : vector<1x1024xbf16> to vector<1x1024xf32>
    %136 = vector.broadcast %135 : vector<1x1024xf32> to vector<128x1024xf32>
    %137 = arith.addf %132, %136 : vector<128x1024xf32>
    %cst_50 = arith.constant 5.000000e-01 : f32
    %138 = vector.broadcast %cst_50 : f32 to vector<128x1024xf32>
    %139 = arith.mulf %138, %137 : vector<128x1024xf32>
    %cst_51 = arith.constant 4.471500e-02 : f32
    %140 = vector.broadcast %cst_51 : f32 to vector<128x1024xf32>
    %141 = arith.mulf %140, %137 : vector<128x1024xf32>
    %142 = arith.mulf %141, %137 : vector<128x1024xf32>
    %143 = arith.mulf %142, %137 : vector<128x1024xf32>
    %144 = arith.addf %137, %143 : vector<128x1024xf32>
    %cst_52 = arith.constant 0.797884583 : f32
    %145 = vector.broadcast %cst_52 : f32 to vector<128x1024xf32>
    %146 = arith.mulf %145, %144 : vector<128x1024xf32>
    %147 = math.tanh %146 : vector<128x1024xf32>
    %cst_53 = arith.constant 1.000000e+00 : f32
    %148 = vector.broadcast %cst_53 : f32 to vector<128x1024xf32>
    %149 = arith.addf %148, %147 : vector<128x1024xf32>
    %150 = arith.mulf %139, %149 : vector<128x1024xf32>
    %151 = arith.truncf %150 : vector<128x1024xf32> to vector<128x1024xbf16>
    %c0_54 = arith.constant 0 : index
    %c0_55 = arith.constant 0 : index
    %c0_56 = arith.constant 0 : index
    %152 = vector.load %arg13[%c0_54, %c0_55, %c0_56] : memref<1x1024x256xbf16, #tpu.memory_space<vmem>>, vector<1x1024x256xbf16>
    %153 = vector.shape_cast %152 : vector<1x1024x256xbf16> to vector<1024x256xbf16>
    %cst_57 = arith.constant dense<0.000000e+00> : vector<128x256xf32>
    %154 = tpu.matmul %151, %153, %cst_57 {dimension_numbers = #tpu.dot_dimension_numbers<[1], [0], [0], [1], [0, 0, 1, 1], [], []>} : vector<128x1024xbf16>, vector<1024x256xbf16>, vector<128x256xf32> -> vector<128x256xf32>
    %c0_58 = arith.constant 0 : index
    %c0_59 = arith.constant 0 : index
    %c0_60 = arith.constant 0 : index
    %155 = vector.load %arg14[%c0_58, %c0_59, %c0_60] : memref<1x1x256xbf16, #tpu.memory_space<vmem>>, vector<1x1x256xbf16>
    %156 = vector.shape_cast %155 : vector<1x1x256xbf16> to vector<1x256xbf16>
    %157 = arith.extf %156 : vector<1x256xbf16> to vector<1x256xf32>
    %158 = vector.broadcast %157 : vector<1x256xf32> to vector<128x256xf32>
    %159 = arith.addf %154, %158 : vector<128x256xf32>
    %160 = arith.addf %102, %159 : vector<128x256xf32>
    %c0_61 = arith.constant 0 : index
    %c0_62 = arith.constant 0 : index
    %161 = vector.load %arg16[%c0_61, %c0_62] : memref<128x256xf32, #tpu.memory_space<vmem>>, vector<128x256xf32>
    tpu.vector_store %arg16[%c0_61, %c0_62], %160 {strides = array<i32>} : memref<128x256xf32, #tpu.memory_space<vmem>>, vector<128x256xf32>,
    %c1_i32 = arith.constant 1 : i32
    %162 = arith.cmpi eq, %arg1, %c1_i32 : i32
    %163 = arith.extui %162 : i1 to i32
    %c0_i32_63 = arith.constant 0 : i32
    %164 = arith.cmpi ne, %163, %c0_i32_63 : i32
    scf.if %164 {
      %165 = vector.shape_cast %160 : vector<128x256xf32> to vector<2x64x256xf32>
      %166 = arith.truncf %165 : vector<2x64x256xf32> to vector<2x64x256xbf16>
      %c0_64 = arith.constant 0 : index
      %c0_65 = arith.constant 0 : index
      %c0_66 = arith.constant 0 : index
      %167 = vector.load %arg15[%c0_64, %c0_65, %c0_66] : memref<2x64x256xbf16, #tpu.memory_space<vmem>>, vector<2x64x256xbf16>
      tpu.vector_store %arg15[%c0_64, %c0_65, %c0_66], %166 {strides = array<i32>} : memref<2x64x256xbf16, #tpu.memory_space<vmem>>, vector<2x64x256xbf16>,
    } else {
    }
    return
  }
  func.func @transform_0(%arg0: i32, %arg1: i32) -> (i32, i32, i32) {
    %c0_i32 = arith.constant 0 : i32
    %c0_i32_0 = arith.constant 0 : i32
    %c0_i32_1 = arith.constant 0 : i32
    return %arg0, %c0_i32, %c0_i32_0 : i32, i32, i32
  }
  func.func @transform_1(%arg0: i32, %arg1: i32) -> (i32, i32, i32) {
    %c0_i32 = arith.constant 0 : i32
    %c0_i32_0 = arith.constant 0 : i32
    %c0_i32_1 = arith.constant 0 : i32
    return %arg1, %c0_i32, %c0_i32_0 : i32, i32, i32
  }
  func.func @transform_2(%arg0: i32, %arg1: i32) -> (i32, i32, i32) {
    %c0_i32 = arith.constant 0 : i32
    %c0_i32_0 = arith.constant 0 : i32
    %c0_i32_1 = arith.constant 0 : i32
    return %arg1, %c0_i32, %c0_i32_0 : i32, i32, i32
  }
  func.func @transform_3(%arg0: i32, %arg1: i32) -> (i32, i32, i32) {
    %c0_i32 = arith.constant 0 : i32
    %c0_i32_0 = arith.constant 0 : i32
    %c0_i32_1 = arith.constant 0 : i32
    return %arg1, %c0_i32, %c0_i32_0 : i32, i32, i32
  }
  func.func @transform_4(%arg0: i32, %arg1: i32) -> (i32, i32, i32) {
    %c0_i32 = arith.constant 0 : i32
    %c0_i32_0 = arith.constant 0 : i32
    %c0_i32_1 = arith.constant 0 : i32
    return %arg1, %c0_i32, %c0_i32_0 : i32, i32, i32
  }
  func.func @transform_5(%arg0: i32, %arg1: i32) -> (i32, i32, i32) {
    %c0_i32 = arith.constant 0 : i32
    %c0_i32_0 = arith.constant 0 : i32
    %c0_i32_1 = arith.constant 0 : i32
    return %arg1, %c0_i32, %c0_i32_0 : i32, i32, i32
  }
  func.func @transform_6(%arg0: i32, %arg1: i32) -> (i32, i32, i32) {
    %c0_i32 = arith.constant 0 : i32
    %c0_i32_0 = arith.constant 0 : i32
    %c0_i32_1 = arith.constant 0 : i32
    return %arg1, %c0_i32, %c0_i32_0 : i32, i32, i32
  }
  func.func @transform_7(%arg0: i32, %arg1: i32) -> (i32, i32, i32) {
    %c0_i32 = arith.constant 0 : i32
    %c0_i32_0 = arith.constant 0 : i32
    %c0_i32_1 = arith.constant 0 : i32
    return %arg1, %c0_i32, %c0_i32_0 : i32, i32, i32
  }
  func.func @transform_8(%arg0: i32, %arg1: i32) -> (i32, i32, i32) {
    %c0_i32 = arith.constant 0 : i32
    %c0_i32_0 = arith.constant 0 : i32
    %c0_i32_1 = arith.constant 0 : i32
    return %arg1, %c0_i32, %c0_i32_0 : i32, i32, i32
  }
  func.func @transform_9(%arg0: i32, %arg1: i32) -> (i32, i32, i32) {
    %c0_i32 = arith.constant 0 : i32
    %c0_i32_0 = arith.constant 0 : i32
    %c0_i32_1 = arith.constant 0 : i32
    return %arg1, %c0_i32, %c0_i32_0 : i32, i32, i32
  }
  func.func @transform_10(%arg0: i32, %arg1: i32) -> (i32, i32, i32) {
    %c0_i32 = arith.constant 0 : i32
    %c0_i32_0 = arith.constant 0 : i32
    %c0_i32_1 = arith.constant 0 : i32
    return %arg1, %c0_i32, %c0_i32_0 : i32, i32, i32
  }
  func.func @transform_11(%arg0: i32, %arg1: i32) -> (i32, i32, i32) {
    %c0_i32 = arith.constant 0 : i32
    %c0_i32_0 = arith.constant 0 : i32
    %c0_i32_1 = arith.constant 0 : i32
    return %arg1, %c0_i32, %c0_i32_0 : i32, i32, i32
  }
  func.func @transform_12(%arg0: i32, %arg1: i32) -> (i32, i32, i32) {
    %c0_i32 = arith.constant 0 : i32
    %c0_i32_0 = arith.constant 0 : i32
    %c0_i32_1 = arith.constant 0 : i32
    return %arg1, %c0_i32, %c0_i32_0 : i32, i32, i32
  }
  func.func @transform_13(%arg0: i32, %arg1: i32) -> (i32, i32, i32) {
    %c0_i32 = arith.constant 0 : i32
    %c0_i32_0 = arith.constant 0 : i32
    %c0_i32_1 = arith.constant 0 : i32
    return %arg0, %c0_i32, %c0_i32_0 : i32, i32, i32
  }
}

</mosaic_0001>

<llo_original>
// kernel: tpu_custom_call.1
$region0: #{tpu_custom_call.1}
  #allocation0 [shape = 'u32[]', space=smem, size = 0x4, offset = 0x4, fixed_abs, tag = 'smem constant byte address 0x4 - core index']
  #allocation1 [shape = 'u32[144,128]{1,0:T(1,128)}', space=vmem, size = 0x12000, scoped, tag = 'internal scratch']
  #allocation2 [shape = 'f32[128,256]{1,0:T(8,128)}', space=vmem, size = 0x20000, scoped, tag = 'scratch operand']
  %s0 = inlined_call_operand.hbm [shape: bf16[2,64,256], index: 0, kind: input, shape index: {}, may-alias: {0,13}]
  %s1 = inlined_call_operand.vmem [shape: bf16[2,1,256], index: 1, kind: input, shape index: {}]
  %s2 = inlined_call_operand.vmem [shape: bf16[2,1,256], index: 2, kind: input, shape index: {}]
  %s3 = inlined_call_operand.hbm [shape: bf16[2,256,768], index: 3, kind: input, shape index: {}]
  %s4 = inlined_call_operand.vmem [shape: bf16[2,1,768], index: 4, kind: input, shape index: {}]
  %s5 = inlined_call_operand.hbm [shape: bf16[2,256,256], index: 5, kind: input, shape index: {}]
  %s6 = inlined_call_operand.vmem [shape: bf16[2,1,256], index: 6, kind: input, shape index: {}]
  %s7 = inlined_call_operand.vmem [shape: bf16[2,1,256], index: 7, kind: input, shape index: {}]
  %s8 = inlined_call_operand.vmem [shape: bf16[2,1,256], index: 8, kind: input, shape index: {}]
  %s9 = inlined_call_operand.hbm [shape: bf16[2,256,1024], index: 9, kind: input, shape index: {}]
  %s10 = inlined_call_operand.vmem [shape: bf16[2,1,1024], index: 10, kind: input, shape index: {}]
  %s11 = inlined_call_operand.hbm [shape: bf16[2,1024,256], index: 11, kind: input, shape index: {}]
  %s12 = inlined_call_operand.vmem [shape: bf16[2,1,256], index: 12, kind: input, shape index: {}]
  %s13 = inlined_call_operand.hbm [shape: bf16[2,64,256], index: 13, kind: output, shape index: {}, may-alias: {0,13}]
  %s14 = sld [smem:[#allocation0]]
  $region113: #{tpu_custom_call.1} parent=0
    _
  %s16 = ssub.s32 1, %s14
  %s17 = scalar_select 0, %s16, %s14
  $region1: #{tpu_custom_call.1} parent=0
    #allocation3 [shape = 'u8[65536]{0}', space=vmem, size = 0x10000, scoped, tag = 'input window, operand 0, single buffered']
    #allocation4 [shape = 's32[2]{0}', space=sflag, size = 0x8, scoped, tag = 'scoped memory for tpu_custom_call.1']
    #allocation5 [shape = 's32[2]{0}', space=sflag, size = 0x8, scoped, tag = 'scoped memory for tpu_custom_call.1']
    #allocation6 [shape = 'u8[786432]{0}', space=vmem, size = 0xc0000, scoped, tag = 'input window, operand 3']
    #allocation7 [shape = 's32[2]{0}', space=sflag, size = 0x8, scoped, tag = 'scoped memory for tpu_custom_call.1']
    #allocation8 [shape = 'u8[262144]{0}', space=vmem, size = 0x40000, scoped, tag = 'input window, operand 5']
    #allocation9 [shape = 'u8[1048576]{0}', space=vmem, size = 0x100000, scoped, tag = 'input window, operand 9']
    #allocation10 [shape = 's32[2]{0}', space=sflag, size = 0x8, scoped, tag = 'scoped memory for tpu_custom_call.1']
    #allocation11 [shape = 'u8[1048576]{0}', space=vmem, size = 0x100000, scoped, tag = 'input window, operand 11']
    #allocation12 [shape = 'u8[65536]{0}', space=vmem, size = 0x10000, scoped, tag = 'output window, operand 0, single buffered']
    %18 = vsyncpa [#allocation4], 0
    %19 = vsyncpa [#allocation7], 0
    %s20 = scalar_lea.sflag [#allocation7], 1
    %21 = vsyncpa %s20, 0
    %22 = vsyncpa [#allocation10], 0
    %s23 = scalar_lea.sflag [#allocation10], 1
    %24 = vsyncpa %s23, 0
    %25 = vsyncpa [#allocation5], 0
    loop: start=0, step=1, limit=4
    $region2: #{tpu_custom_call.1} parent=1 // loop_pre_header
      _
    $region3: #{tpu_custom_call.1} parent=1 // loop_header
      %s27 = sphi 0, %s31
      %p28 = scmp.ge.s32.totalorder %s27, 4
      %s34 = sphi 0, %s46
      %s35 = sphi 0, %s42
      %s36 = sphi 0, %s34
      %s37 = sphi 0, %s35
      %s38 = sphi 0, %s36
      %s39 = sphi 0, %s37
      %s49 = sphi 0, %s51
      %s52 = sphi 0, %s49
      %s53 = sphi 0, %s52
      %s69 = sphi 0, %s53
      %s75 = sphi 0, %s77
      %s78 = sphi 0, %s75
      %s79 = sphi 0, %s78
      %s95 = sphi 0, %s79
      %s101 = sphi 0, %s103
      %s104 = sphi 0, %s101
      %s105 = sphi 0, %s104
      %s121 = sphi 0, %s105
      %s127 = sphi 0, %s129
      %s130 = sphi 0, %s127
      %s131 = sphi 0, %s130
      %s147 = sphi 0, %s131
      %s153 = sphi 0, %s155
      %s156 = sphi 0, %s153
      %s157 = sphi 0, %s156
      %s173 = sphi 0, %s157
      %s179 = sphi 0, %s181
      %s182 = sphi 0, %s179
      %s183 = sphi 0, %s182
      %s199 = sphi 0, %s183
      %s205 = sphi 0, %s207
      %s208 = sphi 0, %s205
      %s209 = sphi 0, %s208
      %s225 = sphi 0, %s209
      %s231 = sphi 0, %s233
      %s234 = sphi 0, %s231
      %s235 = sphi 0, %s234
      %s251 = sphi 0, %s235
      %s257 = sphi 0, %s259
      %s260 = sphi 0, %s257
      %s261 = sphi 0, %s260
      %s277 = sphi 0, %s261
      %s283 = sphi 0, %s285
      %s286 = sphi 0, %s283
      %s287 = sphi 0, %s286
      %s303 = sphi 0, %s287
      %s309 = sphi 0, %s311
      %s312 = sphi 0, %s309
      %s313 = sphi 0, %s312
      %s329 = sphi 0, %s313
      %s335 = sphi 0, %s337
      %s338 = sphi 0, %s335
      %s339 = sphi 0, %s338
      %s355 = sphi 0, %s339
      %s361 = sphi 0, %s363
      %s364 = sphi 0, %s361
      %s365 = sphi 0, %s364
      %s381 = sphi 0, %s365
      %s387 = sphi 0, %s389
      %s390 = sphi 0, %s387
      %s391 = sphi 0, %s390
      %s407 = sphi 0, %s391
    $region4: #{tpu_custom_call.1} parent=1 // loop_header_branch
      %30 = sbr.rel (%p28) target = $region8
    $region5: #{tpu_custom_call.1} parent=1 // loop_body
      %s32 = ssub.s32 %s27, 1
      %s33 = ssub.s32 %s27, 2
      %s40 = sadd.s32 1, %s35
      %p41 = scmp.ge.s32.totalorder %s40, 2
      %s42 = scalar_select %p41, 0, %s40
      %s43 = sadd.s32 1, %s34
      %s44 = scalar_select %p41, %s43, %s34
      %p45 = scmp.ge.s32.totalorder %s44, 1
      %s46 = scalar_select %p45, 0, %s44
      %s47 = ssub.s32 %s34, %s46
      %p48 = scmp.eq.s32.totalorder %s47, 0
      %s50 = sadd.s32 %s49, 1
      %s51 = scalar_select %p48, %s49, %s50
      %p54 = pneg %p48
      %p55 = scmp.eq.s32.totalorder %s27, 1
      %p56 = por %p54, %p55
      %p57 = scmp.ne.s32.totalorder %s49, %s52
      %p58 = scmp.eq.s32.totalorder %s27, 0
      %p59 = por %p57, %p58
      %p60 = scmp.ne.s32.totalorder %s49, %s52
      %p61 = scmp.eq.s32.totalorder %s32, 1
      %p62 = por %p60, %p61
      %p63 = scmp.ne.s32.totalorder %s52, %s53
      %p64 = scmp.eq.s32.totalorder %s32, 0
      %p65 = por %p63, %p64
      %p66 = scmp.ne.s32.totalorder %s52, %s53
      %p67 = scmp.eq.s32.totalorder %s33, 1
      %p68 = por %p66, %p67
      %p70 = scmp.ne.s32.totalorder %s53, %s69
      %p71 = scmp.eq.s32.totalorder %s33, 0
      %p72 = por %p70, %p71
      %s73 = ssub.s32 %s35, %s42
      %p74 = scmp.eq.s32.totalorder %s73, 0
      %s76 = sadd.s32 %s75, 1
      %s77 = scalar_select %p74, %s75, %s76
      %p80 = pneg %p74
      %p81 = scmp.eq.s32.totalorder %s27, 1
      %p82 = por %p80, %p81
      %p83 = scmp.ne.s32.totalorder %s75, %s78
      %p84 = scmp.eq.s32.totalorder %s27, 0
      %p85 = por %p83, %p84
      %p86 = scmp.ne.s32.totalorder %s75, %s78
      %p87 = scmp.eq.s32.totalorder %s32, 1
      %p88 = por %p86, %p87
      %p89 = scmp.ne.s32.totalorder %s78, %s79
      %p90 = scmp.eq.s32.totalorder %s32, 0
      %p91 = por %p89, %p90
      %p92 = scmp.ne.s32.totalorder %s78, %s79
      %p93 = scmp.eq.s32.totalorder %s33, 1
      %p94 = por %p92, %p93
      %p96 = scmp.ne.s32.totalorder %s79, %s95
      %p97 = scmp.eq.s32.totalorder %s33, 0
      %p98 = por %p96, %p97
      %s99 = ssub.s32 %s35, %s42
      %p100 = scmp.eq.s32.totalorder %s99, 0
      %s102 = sadd.s32 %s101, 1
      %s103 = scalar_select %p100, %s101, %s102
      %p106 = pneg %p100
      %p107 = scmp.eq.s32.totalorder %s27, 1
      %p108 = por %p106, %p107
      %p109 = scmp.ne.s32.totalorder %s101, %s104
      %p110 = scmp.eq.s32.totalorder %s27, 0
      %p111 = por %p109, %p110
      %p112 = scmp.ne.s32.totalorder %s101, %s104
      %p113 = scmp.eq.s32.totalorder %s32, 1
      %p114 = por %p112, %p113
      %p115 = scmp.ne.s32.totalorder %s104, %s105
      %p116 = scmp.eq.s32.totalorder %s32, 0
      %p117 = por %p115, %p116
      %p118 = scmp.ne.s32.totalorder %s104, %s105
      %p119 = scmp.eq.s32.totalorder %s33, 1
      %p120 = por %p118, %p119
      %p122 = scmp.ne.s32.totalorder %s105, %s121
      %p123 = scmp.eq.s32.totalorder %s33, 0
      %p124 = por %p122, %p123
      %s125 = ssub.s32 %s35, %s42
      %p126 = scmp.eq.s32.totalorder %s125, 0
      %s128 = sadd.s32 %s127, 1
      %s129 = scalar_select %p126, %s127, %s128
      %p132 = pneg %p126
      %p133 = scmp.eq.s32.totalorder %s27, 1
      %p134 = por %p132, %p133
      %p135 = scmp.ne.s32.totalorder %s127, %s130
      %p136 = scmp.eq.s32.totalorder %s27, 0
      %p137 = por %p135, %p136
      %p138 = scmp.ne.s32.totalorder %s127, %s130
      %p139 = scmp.eq.s32.totalorder %s32, 1
      %p140 = por %p138, %p139
      %p141 = scmp.ne.s32.totalorder %s130, %s131
      %p142 = scmp.eq.s32.totalorder %s32, 0
      %p143 = por %p141, %p142
      %p144 = scmp.ne.s32.totalorder %s130, %s131
      %p145 = scmp.eq.s32.totalorder %s33, 1
      %p146 = por %p144, %p145
      %p148 = scmp.ne.s32.totalorder %s131, %s147
      %p149 = scmp.eq.s32.totalorder %s33, 0
      %p150 = por %p148, %p149
      %s151 = ssub.s32 %s35, %s42
      %p152 = scmp.eq.s32.totalorder %s151, 0
      %s154 = sadd.s32 %s153, 1
      %s155 = scalar_select %p152, %s153, %s154
      %p158 = pneg %p152
      %p159 = scmp.eq.s32.totalorder %s27, 1
      %p160 = por %p158, %p159
      %p161 = scmp.ne.s32.totalorder %s153, %s156
      %p162 = scmp.eq.s32.totalorder %s27, 0
      %p163 = por %p161, %p162
      %p164 = scmp.ne.s32.totalorder %s153, %s156
      %p165 = scmp.eq.s32.totalorder %s32, 1
      %p166 = por %p164, %p165
      %p167 = scmp.ne.s32.totalorder %s156, %s157
      %p168 = scmp.eq.s32.totalorder %s32, 0
      %p169 = por %p167, %p168
      %p170 = scmp.ne.s32.totalorder %s156, %s157
      %p171 = scmp.eq.s32.totalorder %s33, 1
      %p172 = por %p170, %p171
      %p174 = scmp.ne.s32.totalorder %s157, %s173
      %p175 = scmp.eq.s32.totalorder %s33, 0
      %p176 = por %p174, %p175
      %s177 = ssub.s32 %s35, %s42
      %p178 = scmp.eq.s32.totalorder %s177, 0
      %s180 = sadd.s32 %s179, 1
      %s181 = scalar_select %p178, %s179, %s180
      %p184 = pneg %p178
      %p185 = scmp.eq.s32.totalorder %s27, 1
      %p186 = por %p184, %p185
      %p187 = scmp.ne.s32.totalorder %s179, %s182
      %p188 = scmp.eq.s32.totalorder %s27, 0
      %p189 = por %p187, %p188
      %p190 = scmp.ne.s32.totalorder %s179, %s182
      %p191 = scmp.eq.s32.totalorder %s32, 1
      %p192 = por %p190, %p191
      %p193 = scmp.ne.s32.totalorder %s182, %s183
      %p194 = scmp.eq.s32.totalorder %s32, 0
      %p195 = por %p193, %p194
      %p196 = scmp.ne.s32.totalorder %s182, %s183
      %p197 = scmp.eq.s32.totalorder %s33, 1
      %p198 = por %p196, %p197
      %p200 = scmp.ne.s32.totalorder %s183, %s199
      %p201 = scmp.eq.s32.totalorder %s33, 0
      %p202 = por %p200, %p201
      %s203 = ssub.s32 %s35, %s42
      %p204 = scmp.eq.s32.totalorder %s203, 0
      %s206 = sadd.s32 %s205, 1
      %s207 = scalar_select %p204, %s205, %s206
      %p210 = pneg %p204
      %p211 = scmp.eq.s32.totalorder %s27, 1
      %p212 = por %p210, %p211
      %p213 = scmp.ne.s32.totalorder %s205, %s208
      %p214 = scmp.eq.s32.totalorder %s27, 0
      %p215 = por %p213, %p214
      %p216 = scmp.ne.s32.totalorder %s205, %s208
      %p217 = scmp.eq.s32.totalorder %s32, 1
      %p218 = por %p216, %p217
      %p219 = scmp.ne.s32.totalorder %s208, %s209
      %p220 = scmp.eq.s32.totalorder %s32, 0
      %p221 = por %p219, %p220
      %p222 = scmp.ne.s32.totalorder %s208, %s209
      %p223 = scmp.eq.s32.totalorder %s33, 1
      %p224 = por %p222, %p223
      %p226 = scmp.ne.s32.totalorder %s209, %s225
      %p227 = scmp.eq.s32.totalorder %s33, 0
      %p228 = por %p226, %p227
      %s229 = ssub.s32 %s35, %s42
      %p230 = scmp.eq.s32.totalorder %s229, 0
      %s232 = sadd.s32 %s231, 1
      %s233 = scalar_select %p230, %s231, %s232
      %p236 = pneg %p230
      %p237 = scmp.eq.s32.totalorder %s27, 1
      %p238 = por %p236, %p237
      %p239 = scmp.ne.s32.totalorder %s231, %s234
      %p240 = scmp.eq.s32.totalorder %s27, 0
      %p241 = por %p239, %p240
      %p242 = scmp.ne.s32.totalorder %s231, %s234
      %p243 = scmp.eq.s32.totalorder %s32, 1
      %p244 = por %p242, %p243
      %p245 = scmp.ne.s32.totalorder %s234, %s235
      %p246 = scmp.eq.s32.totalorder %s32, 0
      %p247 = por %p245, %p246
      %p248 = scmp.ne.s32.totalorder %s234, %s235
      %p249 = scmp.eq.s32.totalorder %s33, 1
      %p250 = por %p248, %p249
      %p252 = scmp.ne.s32.totalorder %s235, %s251
      %p253 = scmp.eq.s32.totalorder %s33, 0
      %p254 = por %p252, %p253
      %s255 = ssub.s32 %s35, %s42
      %p256 = scmp.eq.s32.totalorder %s255, 0
      %s258 = sadd.s32 %s257, 1
      %s259 = scalar_select %p256, %s257, %s258
      %p262 = pneg %p256
      %p263 = scmp.eq.s32.totalorder %s27, 1
      %p264 = por %p262, %p263
      %p265 = scmp.ne.s32.totalorder %s257, %s260
      %p266 = scmp.eq.s32.totalorder %s27, 0
      %p267 = por %p265, %p266
      %p268 = scmp.ne.s32.totalorder %s257, %s260
      %p269 = scmp.eq.s32.totalorder %s32, 1
      %p270 = por %p268, %p269
      %p271 = scmp.ne.s32.totalorder %s260, %s261
      %p272 = scmp.eq.s32.totalorder %s32, 0
      %p273 = por %p271, %p272
      %p274 = scmp.ne.s32.totalorder %s260, %s261
      %p275 = scmp.eq.s32.totalorder %s33, 1
      %p276 = por %p274, %p275
      %p278 = scmp.ne.s32.totalorder %s261, %s277
      %p279 = scmp.eq.s32.totalorder %s33, 0
      %p280 = por %p278, %p279
      %s281 = ssub.s32 %s35, %s42
      %p282 = scmp.eq.s32.totalorder %s281, 0
      %s284 = sadd.s32 %s283, 1
      %s285 = scalar_select %p282, %s283, %s284
      %p288 = pneg %p282
      %p289 = scmp.eq.s32.totalorder %s27, 1
      %p290 = por %p288, %p289
      %p291 = scmp.ne.s32.totalorder %s283, %s286
      %p292 = scmp.eq.s32.totalorder %s27, 0
      %p293 = por %p291, %p292
      %p294 = scmp.ne.s32.totalorder %s283, %s286
      %p295 = scmp.eq.s32.totalorder %s32, 1
      %p296 = por %p294, %p295
      %p297 = scmp.ne.s32.totalorder %s286, %s287
      %p298 = scmp.eq.s32.totalorder %s32, 0
      %p299 = por %p297, %p298
      %p300 = scmp.ne.s32.totalorder %s286, %s287
      %p301 = scmp.eq.s32.totalorder %s33, 1
      %p302 = por %p300, %p301
      %p304 = scmp.ne.s32.totalorder %s287, %s303
      %p305 = scmp.eq.s32.totalorder %s33, 0
      %p306 = por %p304, %p305
      %s307 = ssub.s32 %s35, %s42
      %p308 = scmp.eq.s32.totalorder %s307, 0
      %s310 = sadd.s32 %s309, 1
      %s311 = scalar_select %p308, %s309, %s310
      %p314 = pneg %p308
      %p315 = scmp.eq.s32.totalorder %s27, 1
      %p316 = por %p314, %p315
      %p317 = scmp.ne.s32.totalorder %s309, %s312
      %p318 = scmp.eq.s32.totalorder %s27, 0
      %p319 = por %p317, %p318
      %p320 = scmp.ne.s32.totalorder %s309, %s312
      %p321 = scmp.eq.s32.totalorder %s32, 1
      %p322 = por %p320, %p321
      %p323 = scmp.ne.s32.totalorder %s312, %s313
      %p324 = scmp.eq.s32.totalorder %s32, 0
      %p325 = por %p323, %p324
      %p326 = scmp.ne.s32.totalorder %s312, %s313
      %p327 = scmp.eq.s32.totalorder %s33, 1
      %p328 = por %p326, %p327
      %p330 = scmp.ne.s32.totalorder %s313, %s329
      %p331 = scmp.eq.s32.totalorder %s33, 0
      %p332 = por %p330, %p331
      %s333 = ssub.s32 %s35, %s42
      %p334 = scmp.eq.s32.totalorder %s333, 0
      %s336 = sadd.s32 %s335, 1
      %s337 = scalar_select %p334, %s335, %s336
      %p340 = pneg %p334
      %p341 = scmp.eq.s32.totalorder %s27, 1
      %p342 = por %p340, %p341
      %p343 = scmp.ne.s32.totalorder %s335, %s338
      %p344 = scmp.eq.s32.totalorder %s27, 0
      %p345 = por %p343, %p344
      %p346 = scmp.ne.s32.totalorder %s335, %s338
      %p347 = scmp.eq.s32.totalorder %s32, 1
      %p348 = por %p346, %p347
      %p349 = scmp.ne.s32.totalorder %s338, %s339
      %p350 = scmp.eq.s32.totalorder %s32, 0
      %p351 = por %p349, %p350
      %p352 = scmp.ne.s32.totalorder %s338, %s339
      %p353 = scmp.eq.s32.totalorder %s33, 1
      %p354 = por %p352, %p353
      %p356 = scmp.ne.s32.totalorder %s339, %s355
      %p357 = scmp.eq.s32.totalorder %s33, 0
      %p358 = por %p356, %p357
      %s359 = ssub.s32 %s35, %s42
      %p360 = scmp.eq.s32.totalorder %s359, 0
      %s362 = sadd.s32 %s361, 1
      %s363 = scalar_select %p360, %s361, %s362
      %p366 = pneg %p360
      %p367 = scmp.eq.s32.totalorder %s27, 1
      %p368 = por %p366, %p367
      %p369 = scmp.ne.s32.totalorder %s361, %s364
      %p370 = scmp.eq.s32.totalorder %s27, 0
      %p371 = por %p369, %p370
      %p372 = scmp.ne.s32.totalorder %s361, %s364
      %p373 = scmp.eq.s32.totalorder %s32, 1
      %p374 = por %p372, %p373
      %p375 = scmp.ne.s32.totalorder %s364, %s365
      %p376 = scmp.eq.s32.totalorder %s32, 0
      %p377 = por %p375, %p376
      %p378 = scmp.ne.s32.totalorder %s364, %s365
      %p379 = scmp.eq.s32.totalorder %s33, 1
      %p380 = por %p378, %p379
      %p382 = scmp.ne.s32.totalorder %s365, %s381
      %p383 = scmp.eq.s32.totalorder %s33, 0
      %p384 = por %p382, %p383
      %s385 = ssub.s32 %s34, %s46
      %p386 = scmp.eq.s32.totalorder %s385, 0
      %s388 = sadd.s32 %s387, 1
      %s389 = scalar_select %p386, %s387, %s388
      %p392 = pneg %p386
      %p393 = scmp.eq.s32.totalorder %s27, 1
      %p394 = por %p392, %p393
      %p395 = scmp.ne.s32.totalorder %s387, %s390
      %p396 = scmp.eq.s32.totalorder %s27, 0
      %p397 = por %p395, %p396
      %p398 = scmp.ne.s32.totalorder %s387, %s390
      %p399 = scmp.eq.s32.totalorder %s32, 1
      %p400 = por %p398, %p399
      %p401 = scmp.ne.s32.totalorder %s390, %s391
      %p402 = scmp.eq.s32.totalorder %s32, 0
      %p403 = por %p401, %p402
      %p404 = scmp.ne.s32.totalorder %s390, %s391
      %p405 = scmp.eq.s32.totalorder %s33, 1
      %p406 = por %p404, %p405
      %p408 = scmp.ne.s32.totalorder %s391, %s407
      %p409 = scmp.eq.s32.totalorder %s33, 0
      %p410 = por %p408, %p409
      %p411 = scmp.le.s32.totalorder 1, %s27
      %p412 = scmp.lt.s32.totalorder %s27, 3
      %p413 = pnand %p411, %p412
      %p414 = pneg %p413
      // Predicated region
      $region9: #{tpu_custom_call.1} parent=5 // pred_check
        _
      $region10: #{tpu_custom_call.1} parent=5 // pred_check_branch
        %416 = sbr.rel (%p413) target = $region12
      $region11: #{tpu_custom_call.1} parent=5 // pred_region
        %s417 = ssub.s32 %s27, 1
        // Predicated region
        $region13: #{tpu_custom_call.1} parent=11 // pred_check
          %p418 = pneg %p65
        $region14: #{tpu_custom_call.1} parent=11 // pred_check_branch
          %420 = sbr.rel (%p418) target = $region16
        $region15: #{tpu_custom_call.1} parent=11 // pred_region
          %s421 = smul.u32 2, %s36
          %s423 = ssub.s32 2048, 2048
          %424 = vsyncadd [#allocation4], %s423
          %s425 = smul.addr %s421, 16
          %s426 = smul.addr %s425, 64
          %s427 = scalar_lea.hbm %s0, %s426
          %s428 = sshll.u32 [#allocation3], 4
          %s429 = int_to_ptr.vmem [resolvable:$true] %s428
          %434 = dma.hbm_to_vmem [thread:$0]  %s427, 2048, %s429, [#allocation4], 128, 128, 8
        $region16: #{tpu_custom_call.1} parent=11 // pred_fallthru
          _
      $region12: #{tpu_custom_call.1} parent=5 // pred_fallthru
        _
      %p435 = scmp.lt.s32.totalorder %s27, 2
      // Predicated region
      $region17: #{tpu_custom_call.1} parent=5 // pred_check
        %p436 = pneg %p435
      $region18: #{tpu_custom_call.1} parent=5 // pred_check_branch
        %438 = sbr.rel (%p436) target = $region20
      $region19: #{tpu_custom_call.1} parent=5 // pred_region
        // Predicated region
        $region21: #{tpu_custom_call.1} parent=19 // pred_check
          %p439 = pneg %p85
        $region22: #{tpu_custom_call.1} parent=19 // pred_check_branch
          %441 = sbr.rel (%p439) target = $region24
        $region23: #{tpu_custom_call.1} parent=19 // pred_region
          %p442 = scmp.lt.s32.totalorder %s35, 1
          %s443 = scalar_select %p442, %s35, 1
          %s444 = smul.addr %s443, 2
          %s445 = scalar_lea.vmem %s1, %s444
        $region24: #{tpu_custom_call.1} parent=19 // pred_fallthru
          _
        // Predicated region
        $region25: #{tpu_custom_call.1} parent=19 // pred_check
          %p446 = pneg %p111
        $region26: #{tpu_custom_call.1} parent=19 // pred_check_branch
          %448 = sbr.rel (%p446) target = $region28
        $region27: #{tpu_custom_call.1} parent=19 // pred_region
          %p449 = scmp.lt.s32.totalorder %s35, 1
          %s450 = scalar_select %p449, %s35, 1
          %s451 = smul.addr %s450, 2
          %s452 = scalar_lea.vmem %s2, %s451
        $region28: #{tpu_custom_call.1} parent=19 // pred_fallthru
          _
        // Predicated region
        $region29: #{tpu_custom_call.1} parent=19 // pred_check
          %p453 = pneg %p137
        $region30: #{tpu_custom_call.1} parent=19 // pred_check_branch
          %455 = sbr.rel (%p453) target = $region32
        $region31: #{tpu_custom_call.1} parent=19 // pred_region
          %s456 = sand.u32 %s27, 1
          %s457 = scalar_lea.sflag [#allocation7], %s456
          %s458 = sand.u32 %s127, 1
          %s459 = smul.addr %s458, 768
          %s460 = scalar_lea.vmem [#allocation6], %s459
          %s462 = ssub.s32 12288, 12288
          %463 = vsyncadd %s457, %s462
          %s464 = smul.addr %s35, 192
          %s465 = smul.addr %s464, 64
          %s466 = scalar_lea.hbm %s3, %s465
          %s467 = sshll.u32 %s460, 4
          %s468 = int_to_ptr.vmem [resolvable:$true] %s467
          %473 = dma.hbm_to_vmem [thread:$0]  %s466, 12288, %s468, %s457, 384, 384, 24
        $region32: #{tpu_custom_call.1} parent=19 // pred_fallthru
          _
        // Predicated region
        $region33: #{tpu_custom_call.1} parent=19 // pred_check
          %p474 = pneg %p163
        $region34: #{tpu_custom_call.1} parent=19 // pred_check_branch
          %476 = sbr.rel (%p474) target = $region36
        $region35: #{tpu_custom_call.1} parent=19 // pred_region
          %p477 = scmp.lt.s32.totalorder %s35, 1
          %s478 = scalar_select %p477, %s35, 1
          %s479 = smul.addr %s478, 6
          %s480 = scalar_lea.vmem %s4, %s479
        $region36: #{tpu_custom_call.1} parent=19 // pred_fallthru
          _
        // Predicated region
        $region37: #{tpu_custom_call.1} parent=19 // pred_check
          %p481 = pneg %p189
        $region38: #{tpu_custom_call.1} parent=19 // pred_check_branch
          %483 = sbr.rel (%p481) target = $region40
        $region39: #{tpu_custom_call.1} parent=19 // pred_region
          %s484 = sand.u32 %s27, 1
          %s485 = scalar_lea.sflag [#allocation7], %s484
          %s486 = sand.u32 %s179, 1
          %s487 = smul.addr %s486, 256
          %s488 = scalar_lea.vmem [#allocation8], %s487
          %s490 = ssub.s32 4096, 4096
          %491 = vsyncadd %s485, %s490
          %s492 = smul.addr %s35, 64
          %s493 = smul.addr %s492, 64
          %s494 = scalar_lea.hbm %s5, %s493
          %s495 = sshll.u32 %s488, 4
          %s496 = int_to_ptr.vmem [resolvable:$true] %s495
          %501 = dma.hbm_to_vmem [thread:$0]  %s494, 4096, %s496, %s485, 128, 128, 8
        $region40: #{tpu_custom_call.1} parent=19 // pred_fallthru
          _
        // Predicated region
        $region41: #{tpu_custom_call.1} parent=19 // pred_check
          %p502 = pneg %p215
        $region42: #{tpu_custom_call.1} parent=19 // pred_check_branch
          %504 = sbr.rel (%p502) target = $region44
        $region43: #{tpu_custom_call.1} parent=19 // pred_region
          %p505 = scmp.lt.s32.totalorder %s35, 1
          %s506 = scalar_select %p505, %s35, 1
          %s507 = smul.addr %s506, 2
          %s508 = scalar_lea.vmem %s6, %s507
        $region44: #{tpu_custom_call.1} parent=19 // pred_fallthru
          _
        // Predicated region
        $region45: #{tpu_custom_call.1} parent=19 // pred_check
          %p509 = pneg %p241
        $region46: #{tpu_custom_call.1} parent=19 // pred_check_branch
          %511 = sbr.rel (%p509) target = $region48
        $region47: #{tpu_custom_call.1} parent=19 // pred_region
          %p512 = scmp.lt.s32.totalorder %s35, 1
          %s513 = scalar_select %p512, %s35, 1
          %s514 = smul.addr %s513, 2
          %s515 = scalar_lea.vmem %s7, %s514
        $region48: #{tpu_custom_call.1} parent=19 // pred_fallthru
          _
        // Predicated region
        $region49: #{tpu_custom_call.1} parent=19 // pred_check
          %p516 = pneg %p267
        $region50: #{tpu_custom_call.1} parent=19 // pred_check_branch
          %518 = sbr.rel (%p516) target = $region52
        $region51: #{tpu_custom_call.1} parent=19 // pred_region
          %p519 = scmp.lt.s32.totalorder %s35, 1
          %s520 = scalar_select %p519, %s35, 1
          %s521 = smul.addr %s520, 2
          %s522 = scalar_lea.vmem %s8, %s521
        $region52: #{tpu_custom_call.1} parent=19 // pred_fallthru
          _
        // Predicated region
        $region53: #{tpu_custom_call.1} parent=19 // pred_check
          %p523 = pneg %p293
        $region54: #{tpu_custom_call.1} parent=19 // pred_check_branch
          %525 = sbr.rel (%p523) target = $region56
        $region55: #{tpu_custom_call.1} parent=19 // pred_region
          %s526 = sand.u32 %s27, 1
          %s527 = scalar_lea.sflag [#allocation10], %s526
          %s528 = sand.u32 %s283, 1
          %s529 = smul.addr %s528, 1024
          %s530 = scalar_lea.vmem [#allocation9], %s529
          %s532 = ssub.s32 16384, 16384
          %533 = vsyncadd %s527, %s532
          %s534 = smul.addr %s35, 256
          %s535 = smul.addr %s534, 64
          %s536 = scalar_lea.hbm %s9, %s535
          %s537 = sshll.u32 %s530, 4
          %s538 = int_to_ptr.vmem [resolvable:$true] %s537
          %543 = dma.hbm_to_vmem [thread:$0]  %s536, 16384, %s538, %s527, 512, 512, 32
        $region56: #{tpu_custom_call.1} parent=19 // pred_fallthru
          _
        // Predicated region
        $region57: #{tpu_custom_call.1} parent=19 // pred_check
          %p544 = pneg %p319
        $region58: #{tpu_custom_call.1} parent=19 // pred_check_branch
          %546 = sbr.rel (%p544) target = $region60
        $region59: #{tpu_custom_call.1} parent=19 // pred_region
          %p547 = scmp.lt.s32.totalorder %s35, 1
          %s548 = scalar_select %p547, %s35, 1
          %s549 = smul.addr %s548, 8
          %s550 = scalar_lea.vmem %s10, %s549
        $region60: #{tpu_custom_call.1} parent=19 // pred_fallthru
          _
        // Predicated region
        $region61: #{tpu_custom_call.1} parent=19 // pred_check
          %p551 = pneg %p345
        $region62: #{tpu_custom_call.1} parent=19 // pred_check_branch
          %553 = sbr.rel (%p551) target = $region64
        $region63: #{tpu_custom_call.1} parent=19 // pred_region
          %s554 = sand.u32 %s27, 1
          %s555 = scalar_lea.sflag [#allocation10], %s554
          %s556 = sand.u32 %s335, 1
          %s557 = smul.addr %s556, 1024
          %s558 = scalar_lea.vmem [#allocation11], %s557
          %s560 = ssub.s32 16384, 16384
          %561 = vsyncadd %s555, %s560
          %s562 = smul.addr %s35, 256
          %s563 = smul.addr %s562, 64
          %s564 = scalar_lea.hbm %s11, %s563
          %s565 = sshll.u32 %s558, 4
          %s566 = int_to_ptr.vmem [resolvable:$true] %s565
          %571 = dma.hbm_to_vmem [thread:$0]  %s564, 16384, %s566, %s555, 128, 128, 8
        $region64: #{tpu_custom_call.1} parent=19 // pred_fallthru
          _
        // Predicated region
        $region65: #{tpu_custom_call.1} parent=19 // pred_check
          %p572 = pneg %p371
        $region66: #{tpu_custom_call.1} parent=19 // pred_check_branch
          %574 = sbr.rel (%p572) target = $region68
        $region67: #{tpu_custom_call.1} parent=19 // pred_region
          %p575 = scmp.lt.s32.totalorder %s35, 1
          %s576 = scalar_select %p575, %s35, 1
          %s577 = smul.addr %s576, 2
          %s578 = scalar_lea.vmem %s12, %s577
        $region68: #{tpu_custom_call.1} parent=19 // pred_fallthru
          _
      $region20: #{tpu_custom_call.1} parent=5 // pred_fallthru
        _
      %p579 = scmp.le.s32.totalorder 1, %s27
      %p580 = scmp.lt.s32.totalorder %s27, 3
      %p581 = pnand %p579, %p580
      %p582 = pneg %p581
      // Predicated region
      $region69: #{tpu_custom_call.1} parent=5 // pred_check
        _
      $region70: #{tpu_custom_call.1} parent=5 // pred_check_branch
        %584 = sbr.rel (%p581) target = $region72
      $region71: #{tpu_custom_call.1} parent=5 // pred_region
        %s585 = ssub.s32 %s27, 1
        // Predicated region
        $region73: #{tpu_custom_call.1} parent=71 // pred_check
          %p586 = pneg %p65
        $region74: #{tpu_custom_call.1} parent=71 // pred_check_branch
          %588 = sbr.rel (%p586) target = $region76
        $region75: #{tpu_custom_call.1} parent=71 // pred_region
          %589 = dma.done [#allocation4], 2048
        $region76: #{tpu_custom_call.1} parent=71 // pred_fallthru
          _
        %s590 = sand.u32 %s32, 1
        %s591 = scalar_lea.sflag [#allocation7], %s590
        %s592 = sand.u32 %s130, 1
        %s593 = smul.addr %s592, 768
        %s594 = scalar_lea.vmem [#allocation6], %s593
        // Predicated region
        $region77: #{tpu_custom_call.1} parent=71 // pred_check
          %p595 = pneg %p143
        $region78: #{tpu_custom_call.1} parent=71 // pred_check_branch
          %597 = sbr.rel (%p595) target = $region80
        $region79: #{tpu_custom_call.1} parent=71 // pred_region
          %598 = dma.done %s591, 12288
        $region80: #{tpu_custom_call.1} parent=71 // pred_fallthru
          _
        %s599 = sand.u32 %s32, 1
        %s600 = scalar_lea.sflag [#allocation7], %s599
        %s601 = sand.u32 %s182, 1
        %s602 = smul.addr %s601, 256
        %s603 = scalar_lea.vmem [#allocation8], %s602
        // Predicated region
        $region81: #{tpu_custom_call.1} parent=71 // pred_check
          %p604 = pneg %p195
        $region82: #{tpu_custom_call.1} parent=71 // pred_check_branch
          %606 = sbr.rel (%p604) target = $region84
        $region83: #{tpu_custom_call.1} parent=71 // pred_region
          %607 = dma.done %s600, 4096
        $region84: #{tpu_custom_call.1} parent=71 // pred_fallthru
          _
        %s608 = sand.u32 %s32, 1
        %s609 = scalar_lea.sflag [#allocation10], %s608
        %s610 = sand.u32 %s286, 1
        %s611 = smul.addr %s610, 1024
        %s612 = scalar_lea.vmem [#allocation9], %s611
        // Predicated region
        $region85: #{tpu_custom_call.1} parent=71 // pred_check
          %p613 = pneg %p299
        $region86: #{tpu_custom_call.1} parent=71 // pred_check_branch
          %615 = sbr.rel (%p613) target = $region88
        $region87: #{tpu_custom_call.1} parent=71 // pred_region
          %616 = dma.done %s609, 16384
        $region88: #{tpu_custom_call.1} parent=71 // pred_fallthru
          _
        %s617 = sand.u32 %s32, 1
        %s618 = scalar_lea.sflag [#allocation10], %s617
        %s619 = sand.u32 %s338, 1
        %s620 = smul.addr %s619, 1024
        %s621 = scalar_lea.vmem [#allocation11], %s620
        // Predicated region
        $region89: #{tpu_custom_call.1} parent=71 // pred_check
          %p622 = pneg %p351
        $region90: #{tpu_custom_call.1} parent=71 // pred_check_branch
          %624 = sbr.rel (%p622) target = $region92
        $region91: #{tpu_custom_call.1} parent=71 // pred_region
          %625 = dma.done %s618, 16384
        $region92: #{tpu_custom_call.1} parent=71 // pred_fallthru
          _
        %p626 = pneg %p65
        %p627 = pneg %p62
        %p628 = scmp.lt.s32.totalorder %s37, 1
        %s629 = scalar_select %p628, %s37, 1
        %s630 = smul.addr %s629, 2
        %s631 = scalar_lea.vmem %s1, %s630
        %p632 = pneg %p91
        %p633 = pneg %p88
        %p634 = scmp.lt.s32.totalorder %s37, 1
        %s635 = scalar_select %p634, %s37, 1
        %s636 = smul.addr %s635, 2
        %s637 = scalar_lea.vmem %s2, %s636
        %p638 = pneg %p117
        %p639 = pneg %p114
        %s640 = sand.u32 %s32, 1
        %s641 = scalar_lea.sflag [#allocation7], %s640
        %s642 = sand.u32 %s130, 1
        %s643 = smul.addr %s642, 768
        %s644 = scalar_lea.vmem [#allocation6], %s643
        %p645 = pneg %p143
        %p646 = pneg %p140
        %p647 = scmp.lt.s32.totalorder %s37, 1
        %s648 = scalar_select %p647, %s37, 1
        %s649 = smul.addr %s648, 6
        %s650 = scalar_lea.vmem %s4, %s649
        %p651 = pneg %p169
        %p652 = pneg %p166
        %s653 = sand.u32 %s32, 1
        %s654 = scalar_lea.sflag [#allocation7], %s653
        %s655 = sand.u32 %s182, 1
        %s656 = smul.addr %s655, 256
        %s657 = scalar_lea.vmem [#allocation8], %s656
        %p658 = pneg %p195
        %p659 = pneg %p192
        %p660 = scmp.lt.s32.totalorder %s37, 1
        %s661 = scalar_select %p660, %s37, 1
        %s662 = smul.addr %s661, 2
        %s663 = scalar_lea.vmem %s6, %s662
        %p664 = pneg %p221
        %p665 = pneg %p218
        %p666 = scmp.lt.s32.totalorder %s37, 1
        %s667 = scalar_select %p666, %s37, 1
        %s668 = smul.addr %s667, 2
        %s669 = scalar_lea.vmem %s7, %s668
        %p670 = pneg %p247
        %p671 = pneg %p244
        %p672 = scmp.lt.s32.totalorder %s37, 1
        %s673 = scalar_select %p672, %s37, 1
        %s674 = smul.addr %s673, 2
        %s675 = scalar_lea.vmem %s8, %s674
        %p676 = pneg %p273
        %p677 = pneg %p270
        %s678 = sand.u32 %s32, 1
        %s679 = scalar_lea.sflag [#allocation10], %s678
        %s680 = sand.u32 %s286, 1
        %s681 = smul.addr %s680, 1024
        %s682 = scalar_lea.vmem [#allocation9], %s681
        %p683 = pneg %p299
        %p684 = pneg %p296
        %p685 = scmp.lt.s32.totalorder %s37, 1
        %s686 = scalar_select %p685, %s37, 1
        %s687 = smul.addr %s686, 8
        %s688 = scalar_lea.vmem %s10, %s687
        %p689 = pneg %p325
        %p690 = pneg %p322
        %s691 = sand.u32 %s32, 1
        %s692 = scalar_lea.sflag [#allocation10], %s691
        %s693 = sand.u32 %s338, 1
        %s694 = smul.addr %s693, 1024
        %s695 = scalar_lea.vmem [#allocation11], %s694
        %p696 = pneg %p351
        %p697 = pneg %p348
        %p698 = scmp.lt.s32.totalorder %s37, 1
        %s699 = scalar_select %p698, %s37, 1
        %s700 = smul.addr %s699, 2
        %s701 = scalar_lea.vmem %s12, %s700
        %p702 = pneg %p377
        %p703 = pneg %p374
        %p704 = pneg %p403
        %p705 = pneg %p400
        %s706 = smul.u32 2, %s36
        %p707 = scmp.lt.s32.totalorder %s37, 1
        %s708 = scalar_select %p707, %s37, 1
        %s709 = smul.addr %s708, 2
        %s710 = scalar_lea.vmem %s1, %s709
        %p711 = scmp.lt.s32.totalorder %s37, 1
        %s712 = scalar_select %p711, %s37, 1
        %s713 = smul.addr %s712, 2
        %s714 = scalar_lea.vmem %s2, %s713
        %p715 = scmp.lt.s32.totalorder %s37, 1
        %s716 = scalar_select %p715, %s37, 1
        %s717 = smul.addr %s716, 6
        %s718 = scalar_lea.vmem %s4, %s717
        %p719 = scmp.lt.s32.totalorder %s37, 1
        %s720 = scalar_select %p719, %s37, 1
        %s721 = smul.addr %s720, 2
        %s722 = scalar_lea.vmem %s6, %s721
        %p723 = scmp.lt.s32.totalorder %s37, 1
        %s724 = scalar_select %p723, %s37, 1
        %s725 = smul.addr %s724, 2
        %s726 = scalar_lea.vmem %s7, %s725
        %p727 = scmp.lt.s32.totalorder %s37, 1
        %s728 = scalar_select %p727, %s37, 1
        %s729 = smul.addr %s728, 2
        %s730 = scalar_lea.vmem %s8, %s729
        %p731 = scmp.lt.s32.totalorder %s37, 1
        %s732 = scalar_select %p731, %s37, 1
        %s733 = smul.addr %s732, 8
        %s734 = scalar_lea.vmem %s10, %s733
        %p735 = scmp.lt.s32.totalorder %s37, 1
        %s736 = scalar_select %p735, %s37, 1
        %s737 = smul.addr %s736, 2
        %s738 = scalar_lea.vmem %s12, %s737
        %s739 = smul.u32 2, %s36
        %p741 = scmp.eq.s32.totalorder %s37, 0
        // Predicated region
        $region93: #{tpu_custom_call.1} parent=71 // pred_check
          %p742 = pneg %p741
        $region94: #{tpu_custom_call.1} parent=71 // pred_check_branch
          %744 = sbr.rel (%p742) target = $region96
        $region95: #{tpu_custom_call.1} parent=71 // pred_region
          %v745 = vld [vmem:[#allocation3] sm:$0xff]
          %v746 = vld [vmem:[#allocation3 + $0x8] sm:$0xff]
          %v747 = vld [vmem:[#allocation3 + $0x10] sm:$0xff]
          %v748 = vld [vmem:[#allocation3 + $0x18] sm:$0xff]
          %v749 = vld [vmem:[#allocation3 + $0x20] sm:$0xff]
          %v750 = vld [vmem:[#allocation3 + $0x28] sm:$0xff]
          %v751 = vld [vmem:[#allocation3 + $0x30] sm:$0xff]
          %v752 = vld [vmem:[#allocation3 + $0x38] sm:$0xff]
          %v753 = vld [vmem:[#allocation3 + $0x40] sm:$0xff]
          %v754 = vld [vmem:[#allocation3 + $0x48] sm:$0xff]
          %v755 = vld [vmem:[#allocation3 + $0x50] sm:$0xff]
          %v756 = vld [vmem:[#allocation3 + $0x58] sm:$0xff]
          %v757 = vld [vmem:[#allocation3 + $0x60] sm:$0xff]
          %v758 = vld [vmem:[#allocation3 + $0x68] sm:$0xff]
          %v759 = vld [vmem:[#allocation3 + $0x70] sm:$0xff]
          %v760 = vld [vmem:[#allocation3 + $0x78] sm:$0xff]
          %v761 = vunpack.c.l.bf16 %v745
          %v762 = vunpack.c.h.bf16 %v745
          %v763 = vunpack.c.l.bf16 %v746
          %v764 = vunpack.c.h.bf16 %v746
          %v765 = vunpack.c.l.bf16 %v747
          %v766 = vunpack.c.h.bf16 %v747
          %v767 = vunpack.c.l.bf16 %v748
          %v768 = vunpack.c.h.bf16 %v748
          %v769 = vunpack.c.l.bf16 %v749
          %v770 = vunpack.c.h.bf16 %v749
          %v771 = vunpack.c.l.bf16 %v750
          %v772 = vunpack.c.h.bf16 %v750
          %v773 = vunpack.c.l.bf16 %v751
          %v774 = vunpack.c.h.bf16 %v751
          %v775 = vunpack.c.l.bf16 %v752
          %v776 = vunpack.c.h.bf16 %v752
          %v777 = vunpack.c.l.bf16 %v753
          %v778 = vunpack.c.h.bf16 %v753
          %v779 = vunpack.c.l.bf16 %v754
          %v780 = vunpack.c.h.bf16 %v754
          %v781 = vunpack.c.l.bf16 %v755
          %v782 = vunpack.c.h.bf16 %v755
          %v783 = vunpack.c.l.bf16 %v756
          %v784 = vunpack.c.h.bf16 %v756
          %v785 = vunpack.c.l.bf16 %v757
          %v786 = vunpack.c.h.bf16 %v757
          %v787 = vunpack.c.l.bf16 %v758
          %v788 = vunpack.c.h.bf16 %v758
          %v789 = vunpack.c.l.bf16 %v759
          %v790 = vunpack.c.h.bf16 %v759
          %v791 = vunpack.c.l.bf16 %v760
          %v792 = vunpack.c.h.bf16 %v760
          %793 = vst [vmem:[#allocation2] sm:$0xff] %v761
          %794 = vst [vmem:[#allocation2 + $0x8] sm:$0xff] %v762
          %795 = vst [vmem:[#allocation2 + $0x10] sm:$0xff] %v763
          %796 = vst [vmem:[#allocation2 + $0x18] sm:$0xff] %v764
          %797 = vst [vmem:[#allocation2 + $0x20] sm:$0xff] %v765
          %798 = vst [vmem:[#allocation2 + $0x28] sm:$0xff] %v766
          %799 = vst [vmem:[#allocation2 + $0x30] sm:$0xff] %v767
          %800 = vst [vmem:[#allocation2 + $0x38] sm:$0xff] %v768
          %801 = vst [vmem:[#allocation2 + $0x40] sm:$0xff] %v769
          %802 = vst [vmem:[#allocation2 + $0x48] sm:$0xff] %v770
          %803 = vst [vmem:[#allocation2 + $0x50] sm:$0xff] %v771
          %804 = vst [vmem:[#allocation2 + $0x58] sm:$0xff] %v772
          %805 = vst [vmem:[#allocation2 + $0x60] sm:$0xff] %v773
          %806 = vst [vmem:[#allocation2 + $0x68] sm:$0xff] %v774
          %807 = vst [vmem:[#allocation2 + $0x70] sm:$0xff] %v775
          %808 = vst [vmem:[#allocation2 + $0x78] sm:$0xff] %v776
          %809 = vst [vmem:[#allocation2 + $0x80] sm:$0xff] %v777
          %810 = vst [vmem:[#allocation2 + $0x88] sm:$0xff] %v778
          %811 = vst [vmem:[#allocation2 + $0x90] sm:$0xff] %v779
          %812 = vst [vmem:[#allocation2 + $0x98] sm:$0xff] %v780
          %813 = vst [vmem:[#allocation2 + $0xa0] sm:$0xff] %v781
          %814 = vst [vmem:[#allocation2 + $0xa8] sm:$0xff] %v782
          %815 = vst [vmem:[#allocation2 + $0xb0] sm:$0xff] %v783
          %816 = vst [vmem:[#allocation2 + $0xb8] sm:$0xff] %v784
          %817 = vst [vmem:[#allocation2 + $0xc0] sm:$0xff] %v785
          %818 = vst [vmem:[#allocation2 + $0xc8] sm:$0xff] %v786
          %819 = vst [vmem:[#allocation2 + $0xd0] sm:$0xff] %v787
          %820 = vst [vmem:[#allocation2 + $0xd8] sm:$0xff] %v788
          %821 = vst [vmem:[#allocation2 + $0xe0] sm:$0xff] %v789
          %822 = vst [vmem:[#allocation2 + $0xe8] sm:$0xff] %v790
          %823 = vst [vmem:[#allocation2 + $0xf0] sm:$0xff] %v791
          %824 = vst [vmem:[#allocation2 + $0xf8] sm:$0xff] %v792
        $region96: #{tpu_custom_call.1} parent=71 // pred_fallthru
          _
        %v825 = vld [vmem:[#allocation2] sm:$0xff]
        %v826 = vld [vmem:[#allocation2 + $0x8] sm:$0xff]
        %v827 = vld [vmem:[#allocation2 + $0x10] sm:$0xff]
        %v828 = vld [vmem:[#allocation2 + $0x18] sm:$0xff]
        %v829 = vld [vmem:[#allocation2 + $0x20] sm:$0xff]
        %v830 = vld [vmem:[#allocation2 + $0x28] sm:$0xff]
        %v831 = vld [vmem:[#allocation2 + $0x30] sm:$0xff]
        %v832 = vld [vmem:[#allocation2 + $0x38] sm:$0xff]
        %v833 = vld [vmem:[#allocation2 + $0x40] sm:$0xff]
        %v834 = vld [vmem:[#allocation2 + $0x48] sm:$0xff]
        %v835 = vld [vmem:[#allocation2 + $0x50] sm:$0xff]
        %v836 = vld [vmem:[#allocation2 + $0x58] sm:$0xff]
        %v837 = vld [vmem:[#allocation2 + $0x60] sm:$0xff]
        %v838 = vld [vmem:[#allocation2 + $0x68] sm:$0xff]
        %v839 = vld [vmem:[#allocation2 + $0x70] sm:$0xff]
        %v840 = vld [vmem:[#allocation2 + $0x78] sm:$0xff]
        %v841 = vld [vmem:[#allocation2 + $0x80] sm:$0xff]
        %v842 = vld [vmem:[#allocation2 + $0x88] sm:$0xff]
        %v843 = vld [vmem:[#allocation2 + $0x90] sm:$0xff]
        %v844 = vld [vmem:[#allocation2 + $0x98] sm:$0xff]
        %v845 = vld [vmem:[#allocation2 + $0xa0] sm:$0xff]
        %v846 = vld [vmem:[#allocation2 + $0xa8] sm:$0xff]
        %v847 = vld [vmem:[#allocation2 + $0xb0] sm:$0xff]
        %v848 = vld [vmem:[#allocation2 + $0xb8] sm:$0xff]
        %v849 = vld [vmem:[#allocation2 + $0xc0] sm:$0xff]
        %v850 = vld [vmem:[#allocation2 + $0xc8] sm:$0xff]
        %v851 = vld [vmem:[#allocation2 + $0xd0] sm:$0xff]
        %v852 = vld [vmem:[#allocation2 + $0xd8] sm:$0xff]
        %v853 = vld [vmem:[#allocation2 + $0xe0] sm:$0xff]
        %v854 = vld [vmem:[#allocation2 + $0xe8] sm:$0xff]
        %v855 = vld [vmem:[#allocation2 + $0xf0] sm:$0xff]
        %v856 = vld [vmem:[#allocation2 + $0xf8] sm:$0xff]
        %v857 = vadd.f32 %v825, %v826
        %858 = vadd.xlane.f32.xlu0 %v857
        %v859 = vpop.xlane.xlu0 %858
        %v860 = vadd.f32 %v827, %v828
        %861 = vadd.xlane.f32.xlu0 %v860
        %v862 = vpop.xlane.xlu0 %861
        %v863 = vadd.f32 %v829, %v830
        %864 = vadd.xlane.f32.xlu0 %v863
        %v865 = vpop.xlane.xlu0 %864
        %v866 = vadd.f32 %v831, %v832
        %867 = vadd.xlane.f32.xlu0 %v866
        %v868 = vpop.xlane.xlu0 %867
        %v869 = vadd.f32 %v833, %v834
        %870 = vadd.xlane.f32.xlu0 %v869
        %v871 = vpop.xlane.xlu0 %870
        %v872 = vadd.f32 %v835, %v836
        %873 = vadd.xlane.f32.xlu0 %v872
        %v874 = vpop.xlane.xlu0 %873
        %v875 = vadd.f32 %v837, %v838
        %876 = vadd.xlane.f32.xlu0 %v875
        %v877 = vpop.xlane.xlu0 %876
        %v878 = vadd.f32 %v839, %v840
        %879 = vadd.xlane.f32.xlu0 %v878
        %v880 = vpop.xlane.xlu0 %879
        %v881 = vadd.f32 %v841, %v842
        %882 = vadd.xlane.f32.xlu0 %v881
        %v883 = vpop.xlane.xlu0 %882
        %v884 = vadd.f32 %v843, %v844
        %885 = vadd.xlane.f32.xlu0 %v884
        %v886 = vpop.xlane.xlu0 %885
        %v887 = vadd.f32 %v845, %v846
        %888 = vadd.xlane.f32.xlu0 %v887
        %v889 = vpop.xlane.xlu0 %888
        %v890 = vadd.f32 %v847, %v848
        %891 = vadd.xlane.f32.xlu0 %v890
        %v892 = vpop.xlane.xlu0 %891
        %v893 = vadd.f32 %v849, %v850
        %894 = vadd.xlane.f32.xlu0 %v893
        %v895 = vpop.xlane.xlu0 %894
        %v896 = vadd.f32 %v851, %v852
        %897 = vadd.xlane.f32.xlu0 %v896
        %v898 = vpop.xlane.xlu0 %897
        %v899 = vadd.f32 %v853, %v854
        %900 = vadd.xlane.f32.xlu0 %v899
        %v901 = vpop.xlane.xlu0 %900
        %v902 = vadd.f32 %v855, %v856
        %903 = vadd.xlane.f32.xlu0 %v902
        %v904 = vpop.xlane.xlu0 %903
        %v905 = vrcp.pop 256.0
        %v906 = vmul.f32 %v859, %v905
        %v907 = vmul.f32 %v862, %v905
        %v908 = vmul.f32 %v865, %v905
        %v909 = vmul.f32 %v868, %v905
        %v910 = vmul.f32 %v871, %v905
        %v911 = vmul.f32 %v874, %v905
        %v912 = vmul.f32 %v877, %v905
        %v913 = vmul.f32 %v880, %v905
        %v914 = vmul.f32 %v883, %v905
        %v915 = vmul.f32 %v886, %v905
        %v916 = vmul.f32 %v889, %v905
        %v917 = vmul.f32 %v892, %v905
        %v918 = vmul.f32 %v895, %v905
        %v919 = vmul.f32 %v898, %v905
        %v920 = vmul.f32 %v901, %v905
        %v921 = vmul.f32 %v904, %v905
        %v922 = vsub.f32 %v825, %v906
        %v923 = vsub.f32 %v826, %v906
        %v924 = vsub.f32 %v827, %v907
        %v925 = vsub.f32 %v828, %v907
        %v926 = vsub.f32 %v829, %v908
        %v927 = vsub.f32 %v830, %v908
        %v928 = vsub.f32 %v831, %v909
        %v929 = vsub.f32 %v832, %v909
        %v930 = vsub.f32 %v833, %v910
        %v931 = vsub.f32 %v834, %v910
        %v932 = vsub.f32 %v835, %v911
        %v933 = vsub.f32 %v836, %v911
        %v934 = vsub.f32 %v837, %v912
        %v935 = vsub.f32 %v838, %v912
        %v936 = vsub.f32 %v839, %v913
        %v937 = vsub.f32 %v840, %v913
        %v938 = vsub.f32 %v841, %v914
        %v939 = vsub.f32 %v842, %v914
        %v940 = vsub.f32 %v843, %v915
        %v941 = vsub.f32 %v844, %v915
        %v942 = vsub.f32 %v845, %v916
        %v943 = vsub.f32 %v846, %v916
        %v944 = vsub.f32 %v847, %v917
        %v945 = vsub.f32 %v848, %v917
        %v946 = vsub.f32 %v849, %v918
        %v947 = vsub.f32 %v850, %v918
        %v948 = vsub.f32 %v851, %v919
        %v949 = vsub.f32 %v852, %v919
        %v950 = vsub.f32 %v853, %v920
        %v951 = vsub.f32 %v854, %v920
        %v952 = vsub.f32 %v855, %v921
        %v953 = vsub.f32 %v856, %v921
        %v954 = vmul.f32 %v922, %v922
        %v955 = vmul.f32 %v923, %v923
        %v956 = vmul.f32 %v924, %v924
        %v957 = vmul.f32 %v925, %v925
        %v958 = vmul.f32 %v926, %v926
        %v959 = vmul.f32 %v927, %v927
        %v960 = vmul.f32 %v928, %v928
        %v961 = vmul.f32 %v929, %v929
        %v962 = vmul.f32 %v930, %v930
        %v963 = vmul.f32 %v931, %v931
        %v964 = vmul.f32 %v932, %v932
        %v965 = vmul.f32 %v933, %v933
        %v966 = vmul.f32 %v934, %v934
        %v967 = vmul.f32 %v935, %v935
        %v968 = vmul.f32 %v936, %v936
        %v969 = vmul.f32 %v937, %v937
        %v970 = vmul.f32 %v938, %v938
        %v971 = vmul.f32 %v939, %v939
        %v972 = vmul.f32 %v940, %v940
        %v973 = vmul.f32 %v941, %v941
        %v974 = vmul.f32 %v942, %v942
        %v975 = vmul.f32 %v943, %v943
        %v976 = vmul.f32 %v944, %v944
        %v977 = vmul.f32 %v945, %v945
        %v978 = vmul.f32 %v946, %v946
        %v979 = vmul.f32 %v947, %v947
        %v980 = vmul.f32 %v948, %v948
        %v981 = vmul.f32 %v949, %v949
        %v982 = vmul.f32 %v950, %v950
        %v983 = vmul.f32 %v951, %v951
        %v984 = vmul.f32 %v952, %v952
        %v985 = vmul.f32 %v953, %v953
        %v986 = vadd.f32 %v954, %v955
        %987 = vadd.xlane.f32.xlu0 %v986
        %v988 = vpop.xlane.xlu0 %987
        %v989 = vadd.f32 %v956, %v957
        %990 = vadd.xlane.f32.xlu0 %v989
        %v991 = vpop.xlane.xlu0 %990
        %v992 = vadd.f32 %v958, %v959
        %993 = vadd.xlane.f32.xlu0 %v992
        %v994 = vpop.xlane.xlu0 %993
        %v995 = vadd.f32 %v960, %v961
        %996 = vadd.xlane.f32.xlu0 %v995
        %v997 = vpop.xlane.xlu0 %996
        %v998 = vadd.f32 %v962, %v963
        %999 = vadd.xlane.f32.xlu0 %v998
        %v1000 = vpop.xlane.xlu0 %999
        %v1001 = vadd.f32 %v964, %v965
        %1002 = vadd.xlane.f32.xlu0 %v1001
        %v1003 = vpop.xlane.xlu0 %1002
        %v1004 = vadd.f32 %v966, %v967
        %1005 = vadd.xlane.f32.xlu0 %v1004
        %v1006 = vpop.xlane.xlu0 %1005
        %v1007 = vadd.f32 %v968, %v969
        %1008 = vadd.xlane.f32.xlu0 %v1007
        %v1009 = vpop.xlane.xlu0 %1008
        %v1010 = vadd.f32 %v970, %v971
        %1011 = vadd.xlane.f32.xlu0 %v1010
        %v1012 = vpop.xlane.xlu0 %1011
        %v1013 = vadd.f32 %v972, %v973
        %1014 = vadd.xlane.f32.xlu0 %v1013
        %v1015 = vpop.xlane.xlu0 %1014
        %v1016 = vadd.f32 %v974, %v975
        %1017 = vadd.xlane.f32.xlu0 %v1016
        %v1018 = vpop.xlane.xlu0 %1017
        %v1019 = vadd.f32 %v976, %v977
        %1020 = vadd.xlane.f32.xlu0 %v1019
        %v1021 = vpop.xlane.xlu0 %1020
        %v1022 = vadd.f32 %v978, %v979
        %1023 = vadd.xlane.f32.xlu0 %v1022
        %v1024 = vpop.xlane.xlu0 %1023
        %v1025 = vadd.f32 %v980, %v981
        %1026 = vadd.xlane.f32.xlu0 %v1025
        %v1027 = vpop.xlane.xlu0 %1026
        %v1028 = vadd.f32 %v982, %v983
        %1029 = vadd.xlane.f32.xlu0 %v1028
        %v1030 = vpop.xlane.xlu0 %1029
        %v1031 = vadd.f32 %v984, %v985
        %1032 = vadd.xlane.f32.xlu0 %v1031
        %v1033 = vpop.xlane.xlu0 %1032
        %v1034 = vmul.f32 %v988, %v905
        %v1035 = vmul.f32 %v991, %v905
        %v1036 = vmul.f32 %v994, %v905
        %v1037 = vmul.f32 %v997, %v905
        %v1038 = vmul.f32 %v1000, %v905
        %v1039 = vmul.f32 %v1003, %v905
        %v1040 = vmul.f32 %v1006, %v905
        %v1041 = vmul.f32 %v1009, %v905
        %v1042 = vmul.f32 %v1012, %v905
        %v1043 = vmul.f32 %v1015, %v905
        %v1044 = vmul.f32 %v1018, %v905
        %v1045 = vmul.f32 %v1021, %v905
        %v1046 = vmul.f32 %v1024, %v905
        %v1047 = vmul.f32 %v1027, %v905
        %v1048 = vmul.f32 %v1030, %v905
        %v1049 = vmul.f32 %v1033, %v905
        %v1050 = vadd.f32 %v1034, 1e-05
        %v1051 = vadd.f32 %v1035, 1e-05
        %v1052 = vadd.f32 %v1036, 1e-05
        %v1053 = vadd.f32 %v1037, 1e-05
        %v1054 = vadd.f32 %v1038, 1e-05
        %v1055 = vadd.f32 %v1039, 1e-05
        %v1056 = vadd.f32 %v1040, 1e-05
        %v1057 = vadd.f32 %v1041, 1e-05
        %v1058 = vadd.f32 %v1042, 1e-05
        %v1059 = vadd.f32 %v1043, 1e-05
        %v1060 = vadd.f32 %v1044, 1e-05
        %v1061 = vadd.f32 %v1045, 1e-05
        %v1062 = vadd.f32 %v1046, 1e-05
        %v1063 = vadd.f32 %v1047, 1e-05
        %v1064 = vadd.f32 %v1048, 1e-05
        %v1065 = vadd.f32 %v1049, 1e-05
        %v1066 = vrsqrt.pop %v1050
        %v1067 = vrsqrt.pop %v1051
        %v1068 = vrsqrt.pop %v1052
        %v1069 = vrsqrt.pop %v1053
        %v1070 = vrsqrt.pop %v1054
        %v1071 = vrsqrt.pop %v1055
        %v1072 = vrsqrt.pop %v1056
        %v1073 = vrsqrt.pop %v1057
        %v1074 = vrsqrt.pop %v1058
        %v1075 = vrsqrt.pop %v1059
        %v1076 = vrsqrt.pop %v1060
        %v1077 = vrsqrt.pop %v1061
        %v1078 = vrsqrt.pop %v1062
        %v1079 = vrsqrt.pop %v1063
        %v1080 = vrsqrt.pop %v1064
        %v1081 = vrsqrt.pop %v1065
        %v1082 = vmul.f32 %v922, %v1066
        %v1083 = vmul.f32 %v923, %v1066
        %v1084 = vmul.f32 %v924, %v1067
        %v1085 = vmul.f32 %v925, %v1067
        %v1086 = vmul.f32 %v926, %v1068
        %v1087 = vmul.f32 %v927, %v1068
        %v1088 = vmul.f32 %v928, %v1069
        %v1089 = vmul.f32 %v929, %v1069
        %v1090 = vmul.f32 %v930, %v1070
        %v1091 = vmul.f32 %v931, %v1070
        %v1092 = vmul.f32 %v932, %v1071
        %v1093 = vmul.f32 %v933, %v1071
        %v1094 = vmul.f32 %v934, %v1072
        %v1095 = vmul.f32 %v935, %v1072
        %v1096 = vmul.f32 %v936, %v1073
        %v1097 = vmul.f32 %v937, %v1073
        %v1098 = vmul.f32 %v938, %v1074
        %v1099 = vmul.f32 %v939, %v1074
        %v1100 = vmul.f32 %v940, %v1075
        %v1101 = vmul.f32 %v941, %v1075
        %v1102 = vmul.f32 %v942, %v1076
        %v1103 = vmul.f32 %v943, %v1076
        %v1104 = vmul.f32 %v944, %v1077
        %v1105 = vmul.f32 %v945, %v1077
        %v1106 = vmul.f32 %v946, %v1078
        %v1107 = vmul.f32 %v947, %v1078
        %v1108 = vmul.f32 %v948, %v1079
        %v1109 = vmul.f32 %v949, %v1079
        %v1110 = vmul.f32 %v950, %v1080
        %v1111 = vmul.f32 %v951, %v1080
        %v1112 = vmul.f32 %v952, %v1081
        %v1113 = vmul.f32 %v953, %v1081
        %v1114 = vld [vmem:[%s710] sm:$0x3]
        %v1115 = vunpack.c.l.bf16 %v1114
        %v1117 = vlaneseq
        %v1118 = vshrl.u32 %v1117, 7
        %v1119 = vsub.s32 0, %v1118
        %v1120 = vrot.slane %v1115, %v1119
        %v1121 = vlaneseq
        %v1122 = vshrl.u32 %v1121, 7
        %v1123 = vsub.s32 2, %v1122
        %v1124 = vrot.slane %v1115, %v1123
        %v1127 = vlaneseq
        %v1128 = vshrl.u32 %v1127, 7
        %v1129 = vsub.s32 0, %v1128
        %v1130 = vrot.slane %v1120, %v1129
        %v1131 = vlaneseq
        %v1132 = vshrl.u32 %v1131, 7
        %v1133 = vsub.s32 0, %v1132
        %v1134 = vrot.slane %v1124, %v1133
        %v1135 = vmul.f32 %v1082, %v1130
        %v1136 = vmul.f32 %v1083, %v1134
        %v1137 = vmul.f32 %v1084, %v1130
        %v1138 = vmul.f32 %v1085, %v1134
        %v1139 = vmul.f32 %v1086, %v1130
        %v1140 = vmul.f32 %v1087, %v1134
        %v1141 = vmul.f32 %v1088, %v1130
        %v1142 = vmul.f32 %v1089, %v1134
        %v1143 = vmul.f32 %v1090, %v1130
        %v1144 = vmul.f32 %v1091, %v1134
        %v1145 = vmul.f32 %v1092, %v1130
        %v1146 = vmul.f32 %v1093, %v1134
        %v1147 = vmul.f32 %v1094, %v1130
        %v1148 = vmul.f32 %v1095, %v1134
        %v1149 = vmul.f32 %v1096, %v1130
        %v1150 = vmul.f32 %v1097, %v1134
        %v1151 = vmul.f32 %v1098, %v1130
        %v1152 = vmul.f32 %v1099, %v1134
        %v1153 = vmul.f32 %v1100, %v1130
        %v1154 = vmul.f32 %v1101, %v1134
        %v1155 = vmul.f32 %v1102, %v1130
        %v1156 = vmul.f32 %v1103, %v1134
        %v1157 = vmul.f32 %v1104, %v1130
        %v1158 = vmul.f32 %v1105, %v1134
        %v1159 = vmul.f32 %v1106, %v1130
        %v1160 = vmul.f32 %v1107, %v1134
        %v1161 = vmul.f32 %v1108, %v1130
        %v1162 = vmul.f32 %v1109, %v1134
        %v1163 = vmul.f32 %v1110, %v1130
        %v1164 = vmul.f32 %v1111, %v1134
        %v1165 = vmul.f32 %v1112, %v1130
        %v1166 = vmul.f32 %v1113, %v1134
        %v1167 = vld [vmem:[%s714] sm:$0x3]
        %v1168 = vunpack.c.l.bf16 %v1167
        %v1170 = vlaneseq
        %v1171 = vshrl.u32 %v1170, 7
        %v1172 = vsub.s32 0, %v1171
        %v1173 = vrot.slane %v1168, %v1172
        %v1174 = vlaneseq
        %v1175 = vshrl.u32 %v1174, 7
        %v1176 = vsub.s32 2, %v1175
        %v1177 = vrot.slane %v1168, %v1176
        %v1180 = vlaneseq
        %v1181 = vshrl.u32 %v1180, 7
        %v1182 = vsub.s32 0, %v1181
        %v1183 = vrot.slane %v1173, %v1182
        %v1184 = vlaneseq
        %v1185 = vshrl.u32 %v1184, 7
        %v1186 = vsub.s32 0, %v1185
        %v1187 = vrot.slane %v1177, %v1186
        %v1188 = vadd.f32 %v1135, %v1183
        %v1189 = vadd.f32 %v1136, %v1187
        %v1190 = vadd.f32 %v1137, %v1183
        %v1191 = vadd.f32 %v1138, %v1187
        %v1192 = vadd.f32 %v1139, %v1183
        %v1193 = vadd.f32 %v1140, %v1187
        %v1194 = vadd.f32 %v1141, %v1183
        %v1195 = vadd.f32 %v1142, %v1187
        %v1196 = vadd.f32 %v1143, %v1183
        %v1197 = vadd.f32 %v1144, %v1187
        %v1198 = vadd.f32 %v1145, %v1183
        %v1199 = vadd.f32 %v1146, %v1187
        %v1200 = vadd.f32 %v1147, %v1183
        %v1201 = vadd.f32 %v1148, %v1187
        %v1202 = vadd.f32 %v1149, %v1183
        %v1203 = vadd.f32 %v1150, %v1187
        %v1204 = vadd.f32 %v1151, %v1183
        %v1205 = vadd.f32 %v1152, %v1187
        %v1206 = vadd.f32 %v1153, %v1183
        %v1207 = vadd.f32 %v1154, %v1187
        %v1208 = vadd.f32 %v1155, %v1183
        %v1209 = vadd.f32 %v1156, %v1187
        %v1210 = vadd.f32 %v1157, %v1183
        %v1211 = vadd.f32 %v1158, %v1187
        %v1212 = vadd.f32 %v1159, %v1183
        %v1213 = vadd.f32 %v1160, %v1187
        %v1214 = vadd.f32 %v1161, %v1183
        %v1215 = vadd.f32 %v1162, %v1187
        %v1216 = vadd.f32 %v1163, %v1183
        %v1217 = vadd.f32 %v1164, %v1187
        %v1218 = vadd.f32 %v1165, %v1183
        %v1219 = vadd.f32 %v1166, %v1187
        %v1220 = vpack.c.bf16 %v1190, %v1188
        %v1221 = vpack.c.bf16 %v1191, %v1189
        %v1222 = vpack.c.bf16 %v1194, %v1192
        %v1223 = vpack.c.bf16 %v1195, %v1193
        %v1224 = vpack.c.bf16 %v1198, %v1196
        %v1225 = vpack.c.bf16 %v1199, %v1197
        %v1226 = vpack.c.bf16 %v1202, %v1200
        %v1227 = vpack.c.bf16 %v1203, %v1201
        %v1228 = vpack.c.bf16 %v1206, %v1204
        %v1229 = vpack.c.bf16 %v1207, %v1205
        %v1230 = vpack.c.bf16 %v1210, %v1208
        %v1231 = vpack.c.bf16 %v1211, %v1209
        %v1232 = vpack.c.bf16 %v1214, %v1212
        %v1233 = vpack.c.bf16 %v1215, %v1213
        %v1234 = vpack.c.bf16 %v1218, %v1216
        %v1235 = vpack.c.bf16 %v1219, %v1217
        %v1236 = vld [vmem:[%s594] sm:$0xff]
        %v1237 = vld [vmem:[%s594 + $0x8] sm:$0xff]
        %v1238 = vld [vmem:[%s594 + $0x10] sm:$0xff]
        %v1239 = vld [vmem:[%s594 + $0x18] sm:$0xff]
        %v1240 = vld [vmem:[%s594 + $0x20] sm:$0xff]
        %v1241 = vld [vmem:[%s594 + $0x28] sm:$0xff]
        %v1242 = vld [vmem:[%s594 + $0x30] sm:$0xff]
        %v1243 = vld [vmem:[%s594 + $0x38] sm:$0xff]
        %v1244 = vld [vmem:[%s594 + $0x40] sm:$0xff]
        %v1245 = vld [vmem:[%s594 + $0x48] sm:$0xff]
        %v1246 = vld [vmem:[%s594 + $0x50] sm:$0xff]
        %v1247 = vld [vmem:[%s594 + $0x58] sm:$0xff]
        %v1248 = vld [vmem:[%s594 + $0x60] sm:$0xff]
        %v1249 = vld [vmem:[%s594 + $0x68] sm:$0xff]
        %v1250 = vld [vmem:[%s594 + $0x70] sm:$0xff]
        %v1251 = vld [vmem:[%s594 + $0x78] sm:$0xff]
        %v1252 = vld [vmem:[%s594 + $0x80] sm:$0xff]
        %v1253 = vld [vmem:[%s594 + $0x88] sm:$0xff]
        %v1254 = vld [vmem:[%s594 + $0x90] sm:$0xff]
        %v1255 = vld [vmem:[%s594 + $0x98] sm:$0xff]
        %v1256 = vld [vmem:[%s594 + $0xa0] sm:$0xff]
        %v1257 = vld [vmem:[%s594 + $0xa8] sm:$0xff]
        %v1258 = vld [vmem:[%s594 + $0xb0] sm:$0xff]
        %v1259 = vld [vmem:[%s594 + $0xb8] sm:$0xff]
        %v1260 = vld [vmem:[%s594 + $0xc0] sm:$0xff]
        %v1261 = vld [vmem:[%s594 + $0xc8] sm:$0xff]
        %v1262 = vld [vmem:[%s594 + $0xd0] sm:$0xff]
        %v1263 = vld [vmem:[%s594 + $0xd8] sm:$0xff]
        %v1264 = vld [vmem:[%s594 + $0xe0] sm:$0xff]
        %v1265 = vld [vmem:[%s594 + $0xe8] sm:$0xff]
        %v1266 = vld [vmem:[%s594 + $0xf0] sm:$0xff]
        %v1267 = vld [vmem:[%s594 + $0xf8] sm:$0xff]
        %v1268 = vld [vmem:[%s594 + $0x100] sm:$0xff]
        %v1269 = vld [vmem:[%s594 + $0x108] sm:$0xff]
        %v1270 = vld [vmem:[%s594 + $0x110] sm:$0xff]
        %v1271 = vld [vmem:[%s594 + $0x118] sm:$0xff]
        %v1272 = vld [vmem:[%s594 + $0x120] sm:$0xff]
        %v1273 = vld [vmem:[%s594 + $0x128] sm:$0xff]
        %v1274 = vld [vmem:[%s594 + $0x130] sm:$0xff]
        %v1275 = vld [vmem:[%s594 + $0x138] sm:$0xff]
        %v1276 = vld [vmem:[%s594 + $0x140] sm:$0xff]
        %v1277 = vld [vmem:[%s594 + $0x148] sm:$0xff]
        %v1278 = vld [vmem:[%s594 + $0x150] sm:$0xff]
        %v1279 = vld [vmem:[%s594 + $0x158] sm:$0xff]
        %v1280 = vld [vmem:[%s594 + $0x160] sm:$0xff]
        %v1281 = vld [vmem:[%s594 + $0x168] sm:$0xff]
        %v1282 = vld [vmem:[%s594 + $0x170] sm:$0xff]
        %v1283 = vld [vmem:[%s594 + $0x178] sm:$0xff]
        %v1284 = vld [vmem:[%s594 + $0x180] sm:$0xff]
        %v1285 = vld [vmem:[%s594 + $0x188] sm:$0xff]
        %v1286 = vld [vmem:[%s594 + $0x190] sm:$0xff]
        %v1287 = vld [vmem:[%s594 + $0x198] sm:$0xff]
        %v1288 = vld [vmem:[%s594 + $0x1a0] sm:$0xff]
        %v1289 = vld [vmem:[%s594 + $0x1a8] sm:$0xff]
        %v1290 = vld [vmem:[%s594 + $0x1b0] sm:$0xff]
        %v1291 = vld [vmem:[%s594 + $0x1b8] sm:$0xff]
        %v1292 = vld [vmem:[%s594 + $0x1c0] sm:$0xff]
        %v1293 = vld [vmem:[%s594 + $0x1c8] sm:$0xff]
        %v1294 = vld [vmem:[%s594 + $0x1d0] sm:$0xff]
        %v1295 = vld [vmem:[%s594 + $0x1d8] sm:$0xff]
        %v1296 = vld [vmem:[%s594 + $0x1e0] sm:$0xff]
        %v1297 = vld [vmem:[%s594 + $0x1e8] sm:$0xff]
        %v1298 = vld [vmem:[%s594 + $0x1f0] sm:$0xff]
        %v1299 = vld [vmem:[%s594 + $0x1f8] sm:$0xff]
        %v1300 = vld [vmem:[%s594 + $0x200] sm:$0xff]
        %v1301 = vld [vmem:[%s594 + $0x208] sm:$0xff]
        %v1302 = vld [vmem:[%s594 + $0x210] sm:$0xff]
        %v1303 = vld [vmem:[%s594 + $0x218] sm:$0xff]
        %v1304 = vld [vmem:[%s594 + $0x220] sm:$0xff]
        %v1305 = vld [vmem:[%s594 + $0x228] sm:$0xff]
        %v1306 = vld [vmem:[%s594 + $0x230] sm:$0xff]
        %v1307 = vld [vmem:[%s594 + $0x238] sm:$0xff]
        %v1308 = vld [vmem:[%s594 + $0x240] sm:$0xff]
        %v1309 = vld [vmem:[%s594 + $0x248] sm:$0xff]
        %v1310 = vld [vmem:[%s594 + $0x250] sm:$0xff]
        %v1311 = vld [vmem:[%s594 + $0x258] sm:$0xff]
        %v1312 = vld [vmem:[%s594 + $0x260] sm:$0xff]
        %v1313 = vld [vmem:[%s594 + $0x268] sm:$0xff]
        %v1314 = vld [vmem:[%s594 + $0x270] sm:$0xff]
        %v1315 = vld [vmem:[%s594 + $0x278] sm:$0xff]
        %v1316 = vld [vmem:[%s594 + $0x280] sm:$0xff]
        %v1317 = vld [vmem:[%s594 + $0x288] sm:$0xff]
        %v1318 = vld [vmem:[%s594 + $0x290] sm:$0xff]
        %v1319 = vld [vmem:[%s594 + $0x298] sm:$0xff]
        %v1320 = vld [vmem:[%s594 + $0x2a0] sm:$0xff]
        %v1321 = vld [vmem:[%s594 + $0x2a8] sm:$0xff]
        %v1322 = vld [vmem:[%s594 + $0x2b0] sm:$0xff]
        %v1323 = vld [vmem:[%s594 + $0x2b8] sm:$0xff]
        %v1324 = vld [vmem:[%s594 + $0x2c0] sm:$0xff]
        %v1325 = vld [vmem:[%s594 + $0x2c8] sm:$0xff]
        %v1326 = vld [vmem:[%s594 + $0x2d0] sm:$0xff]
        %v1327 = vld [vmem:[%s594 + $0x2d8] sm:$0xff]
        %v1328 = vld [vmem:[%s594 + $0x2e0] sm:$0xff]
        %v1329 = vld [vmem:[%s594 + $0x2e8] sm:$0xff]
        %v1330 = vld [vmem:[%s594 + $0x2f0] sm:$0xff]
        %v1331 = vld [vmem:[%s594 + $0x2f8] sm:$0xff]
        %v1332 = vld [vmem:[%s718] sm:$0x3f]
        %v1333 = vunpack.c.l.bf16 %v1332
        %v1334 = vunpack.c.h.bf16 %v1332
        %v1337 = vlaneseq
        %v1338 = vshrl.u32 %v1337, 7
        %v1339 = vsub.s32 0, %v1338
        %v1340 = vrot.slane %v1333, %v1339
        %v1341 = vlaneseq
        %v1342 = vshrl.u32 %v1341, 7
        %v1343 = vsub.s32 2, %v1342
        %v1344 = vrot.slane %v1333, %v1343
        %v1345 = vlaneseq
        %v1346 = vshrl.u32 %v1345, 7
        %v1347 = vsub.s32 4, %v1346
        %v1348 = vrot.slane %v1333, %v1347
        %v1349 = vlaneseq
        %v1350 = vshrl.u32 %v1349, 7
        %v1351 = vsub.s32 6, %v1350
        %v1352 = vrot.slane %v1333, %v1351
        %v1353 = vlaneseq
        %v1354 = vshrl.u32 %v1353, 7
        %v1355 = vsub.s32 0, %v1354
        %v1356 = vrot.slane %v1334, %v1355
        %v1357 = vlaneseq
        %v1358 = vshrl.u32 %v1357, 7
        %v1359 = vsub.s32 2, %v1358
        %v1360 = vrot.slane %v1334, %v1359
        %v1367 = vlaneseq
        %v1368 = vshrl.u32 %v1367, 7
        %v1369 = vsub.s32 0, %v1368
        %v1370 = vrot.slane %v1340, %v1369
        %v1371 = vlaneseq
        %v1372 = vshrl.u32 %v1371, 7
        %v1373 = vsub.s32 0, %v1372
        %v1374 = vrot.slane %v1344, %v1373
        %v1375 = vlaneseq
        %v1376 = vshrl.u32 %v1375, 7
        %v1377 = vsub.s32 0, %v1376
        %v1378 = vrot.slane %v1348, %v1377
        %v1379 = vlaneseq
        %v1380 = vshrl.u32 %v1379, 7
        %v1381 = vsub.s32 0, %v1380
        %v1382 = vrot.slane %v1352, %v1381
        %v1383 = vlaneseq
        %v1384 = vshrl.u32 %v1383, 7
        %v1385 = vsub.s32 0, %v1384
        %v1386 = vrot.slane %v1356, %v1385
        %v1387 = vlaneseq
        %v1388 = vshrl.u32 %v1387, 7
        %v1389 = vsub.s32 0, %v1388
        %v1390 = vrot.slane %v1360, %v1389
        %v1487 = vunpack.c.l.b16 %v1236
        %v1488 = vunpack.c.h.b16 %v1236
        %v1489 = vunpack.c.l.b16 %v1237
        %v1490 = vunpack.c.h.b16 %v1237
        %v1491 = vunpack.c.l.b16 %v1238
        %v1492 = vunpack.c.h.b16 %v1238
        %v1493 = vunpack.c.l.b16 %v1239
        %v1494 = vunpack.c.h.b16 %v1239
        %v1495 = vunpack.c.l.b16 %v1240
        %v1496 = vunpack.c.h.b16 %v1240
        %v1497 = vunpack.c.l.b16 %v1241
        %v1498 = vunpack.c.h.b16 %v1241
        %v1499 = vunpack.c.l.b16 %v1242
        %v1500 = vunpack.c.h.b16 %v1242
        %v1501 = vunpack.c.l.b16 %v1243
        %v1502 = vunpack.c.h.b16 %v1243
        %v1503 = vunpack.c.l.b16 %v1244
        %v1504 = vunpack.c.h.b16 %v1244
        %v1505 = vunpack.c.l.b16 %v1245
        %v1506 = vunpack.c.h.b16 %v1245
        %v1507 = vunpack.c.l.b16 %v1246
        %v1508 = vunpack.c.h.b16 %v1246
        %v1509 = vunpack.c.l.b16 %v1247
        %v1510 = vunpack.c.h.b16 %v1247
        %v1511 = vunpack.c.l.b16 %v1248
        %v1512 = vunpack.c.h.b16 %v1248
        %v1513 = vunpack.c.l.b16 %v1249
        %v1514 = vunpack.c.h.b16 %v1249
        %v1515 = vunpack.c.l.b16 %v1250
        %v1516 = vunpack.c.h.b16 %v1250
        %v1517 = vunpack.c.l.b16 %v1251
        %v1518 = vunpack.c.h.b16 %v1251
        %v1519 = vunpack.c.l.b16 %v1252
        %v1520 = vunpack.c.h.b16 %v1252
        %v1521 = vunpack.c.l.b16 %v1253
        %v1522 = vunpack.c.h.b16 %v1253
        %v1523 = vunpack.c.l.b16 %v1254
        %v1524 = vunpack.c.h.b16 %v1254
        %v1525 = vunpack.c.l.b16 %v1255
        %v1526 = vunpack.c.h.b16 %v1255
        %v1527 = vunpack.c.l.b16 %v1256
        %v1528 = vunpack.c.h.b16 %v1256
        %v1529 = vunpack.c.l.b16 %v1257
        %v1530 = vunpack.c.h.b16 %v1257
        %v1531 = vunpack.c.l.b16 %v1258
        %v1532 = vunpack.c.h.b16 %v1258
        %v1533 = vunpack.c.l.b16 %v1259
        %v1534 = vunpack.c.h.b16 %v1259
        %v1535 = vunpack.c.l.b16 %v1260
        %v1536 = vunpack.c.h.b16 %v1260
        %v1537 = vunpack.c.l.b16 %v1261
        %v1538 = vunpack.c.h.b16 %v1261
        %v1539 = vunpack.c.l.b16 %v1262
        %v1540 = vunpack.c.h.b16 %v1262
        %v1541 = vunpack.c.l.b16 %v1263
        %v1542 = vunpack.c.h.b16 %v1263
        %v1543 = vunpack.c.l.b16 %v1264
        %v1544 = vunpack.c.h.b16 %v1264
        %v1545 = vunpack.c.l.b16 %v1265
        %v1546 = vunpack.c.h.b16 %v1265
        %v1547 = vunpack.c.l.b16 %v1266
        %v1548 = vunpack.c.h.b16 %v1266
        %v1549 = vunpack.c.l.b16 %v1267
        %v1550 = vunpack.c.h.b16 %v1267
        %v1551 = vunpack.c.l.b16 %v1268
        %v1552 = vunpack.c.h.b16 %v1268
        %v1553 = vunpack.c.l.b16 %v1269
        %v1554 = vunpack.c.h.b16 %v1269
        %v1555 = vunpack.c.l.b16 %v1270
        %v1556 = vunpack.c.h.b16 %v1270
        %v1557 = vunpack.c.l.b16 %v1271
        %v1558 = vunpack.c.h.b16 %v1271
        %v1559 = vunpack.c.l.b16 %v1272
        %v1560 = vunpack.c.h.b16 %v1272
        %v1561 = vunpack.c.l.b16 %v1273
        %v1562 = vunpack.c.h.b16 %v1273
        %v1563 = vunpack.c.l.b16 %v1274
        %v1564 = vunpack.c.h.b16 %v1274
        %v1565 = vunpack.c.l.b16 %v1275
        %v1566 = vunpack.c.h.b16 %v1275
        %v1567 = vunpack.c.l.b16 %v1276
        %v1568 = vunpack.c.h.b16 %v1276
        %v1569 = vunpack.c.l.b16 %v1277
        %v1570 = vunpack.c.h.b16 %v1277
        %v1571 = vunpack.c.l.b16 %v1278
        %v1572 = vunpack.c.h.b16 %v1278
        %v1573 = vunpack.c.l.b16 %v1279
        %v1574 = vunpack.c.h.b16 %v1279
        %v1575 = vunpack.c.l.b16 %v1280
        %v1576 = vunpack.c.h.b16 %v1280
        %v1577 = vunpack.c.l.b16 %v1281
        %v1578 = vunpack.c.h.b16 %v1281
        %v1579 = vunpack.c.l.b16 %v1282
        %v1580 = vunpack.c.h.b16 %v1282
        %v1581 = vunpack.c.l.b16 %v1283
        %v1582 = vunpack.c.h.b16 %v1283
        %v1583 = vunpack.c.l.b16 %v1284
        %v1584 = vunpack.c.h.b16 %v1284
        %v1585 = vunpack.c.l.b16 %v1285
        %v1586 = vunpack.c.h.b16 %v1285
        %v1587 = vunpack.c.l.b16 %v1286
        %v1588 = vunpack.c.h.b16 %v1286
        %v1589 = vunpack.c.l.b16 %v1287
        %v1590 = vunpack.c.h.b16 %v1287
        %v1591 = vunpack.c.l.b16 %v1288
        %v1592 = vunpack.c.h.b16 %v1288
        %v1593 = vunpack.c.l.b16 %v1289
        %v1594 = vunpack.c.h.b16 %v1289
        %v1595 = vunpack.c.l.b16 %v1290
        %v1596 = vunpack.c.h.b16 %v1290
        %v1597 = vunpack.c.l.b16 %v1291
        %v1598 = vunpack.c.h.b16 %v1291
        %v1599 = vunpack.c.l.b16 %v1292
        %v1600 = vunpack.c.h.b16 %v1292
        %v1601 = vunpack.c.l.b16 %v1293
        %v1602 = vunpack.c.h.b16 %v1293
        %v1603 = vunpack.c.l.b16 %v1294
        %v1604 = vunpack.c.h.b16 %v1294
        %v1605 = vunpack.c.l.b16 %v1295
        %v1606 = vunpack.c.h.b16 %v1295
        %v1607 = vunpack.c.l.b16 %v1296
        %v1608 = vunpack.c.h.b16 %v1296
        %v1609 = vunpack.c.l.b16 %v1297
        %v1610 = vunpack.c.h.b16 %v1297
        %v1611 = vunpack.c.l.b16 %v1298
        %v1612 = vunpack.c.h.b16 %v1298
        %v1613 = vunpack.c.l.b16 %v1299
        %v1614 = vunpack.c.h.b16 %v1299
        %v1615 = vunpack.c.l.b16 %v1300
        %v1616 = vunpack.c.h.b16 %v1300
        %v1617 = vunpack.c.l.b16 %v1301
        %v1618 = vunpack.c.h.b16 %v1301
        %v1619 = vunpack.c.l.b16 %v1302
        %v1620 = vunpack.c.h.b16 %v1302
        %v1621 = vunpack.c.l.b16 %v1303
        %v1622 = vunpack.c.h.b16 %v1303
        %v1623 = vunpack.c.l.b16 %v1304
        %v1624 = vunpack.c.h.b16 %v1304
        %v1625 = vunpack.c.l.b16 %v1305
        %v1626 = vunpack.c.h.b16 %v1305
        %v1627 = vunpack.c.l.b16 %v1306
        %v1628 = vunpack.c.h.b16 %v1306
        %v1629 = vunpack.c.l.b16 %v1307
        %v1630 = vunpack.c.h.b16 %v1307
        %v1631 = vunpack.c.l.b16 %v1308
        %v1632 = vunpack.c.h.b16 %v1308
        %v1633 = vunpack.c.l.b16 %v1309
        %v1634 = vunpack.c.h.b16 %v1309
        %v1635 = vunpack.c.l.b16 %v1310
        %v1636 = vunpack.c.h.b16 %v1310
        %v1637 = vunpack.c.l.b16 %v1311
        %v1638 = vunpack.c.h.b16 %v1311
        %v1639 = vunpack.c.l.b16 %v1312
        %v1640 = vunpack.c.h.b16 %v1312
        %v1641 = vunpack.c.l.b16 %v1313
        %v1642 = vunpack.c.h.b16 %v1313
        %v1643 = vunpack.c.l.b16 %v1314
        %v1644 = vunpack.c.h.b16 %v1314
        %v1645 = vunpack.c.l.b16 %v1315
        %v1646 = vunpack.c.h.b16 %v1315
        %v1647 = vunpack.c.l.b16 %v1316
        %v1648 = vunpack.c.h.b16 %v1316
        %v1649 = vunpack.c.l.b16 %v1317
        %v1650 = vunpack.c.h.b16 %v1317
        %v1651 = vunpack.c.l.b16 %v1318
        %v1652 = vunpack.c.h.b16 %v1318
        %v1653 = vunpack.c.l.b16 %v1319
        %v1654 = vunpack.c.h.b16 %v1319
        %v1655 = vunpack.c.l.b16 %v1320
        %v1656 = vunpack.c.h.b16 %v1320
        %v1657 = vunpack.c.l.b16 %v1321
        %v1658 = vunpack.c.h.b16 %v1321
        %v1659 = vunpack.c.l.b16 %v1322
        %v1660 = vunpack.c.h.b16 %v1322
        %v1661 = vunpack.c.l.b16 %v1323
        %v1662 = vunpack.c.h.b16 %v1323
        %v1663 = vunpack.c.l.b16 %v1324
        %v1664 = vunpack.c.h.b16 %v1324
        %v1665 = vunpack.c.l.b16 %v1325
        %v1666 = vunpack.c.h.b16 %v1325
        %v1667 = vunpack.c.l.b16 %v1326
        %v1668 = vunpack.c.h.b16 %v1326
        %v1669 = vunpack.c.l.b16 %v1327
        %v1670 = vunpack.c.h.b16 %v1327
        %v1671 = vunpack.c.l.b16 %v1328
        %v1672 = vunpack.c.h.b16 %v1328
        %v1673 = vunpack.c.l.b16 %v1329
        %v1674 = vunpack.c.h.b16 %v1329
        %v1675 = vunpack.c.l.b16 %v1330
        %v1676 = vunpack.c.h.b16 %v1330
        %v1677 = vunpack.c.l.b16 %v1331
        %v1678 = vunpack.c.h.b16 %v1331
        %v1679 = vpack.c.b16 %v1493, %v1487
        %v1680 = vpack.c.b16 %v1494, %v1488
        %v1681 = vpack.c.b16 %v1495, %v1489
        %v1682 = vpack.c.b16 %v1496, %v1490
        %v1683 = vpack.c.b16 %v1497, %v1491
        %v1684 = vpack.c.b16 %v1498, %v1492
        %v1685 = vpack.c.b16 %v1505, %v1499
        %v1686 = vpack.c.b16 %v1506, %v1500
        %v1687 = vpack.c.b16 %v1507, %v1501
        %v1688 = vpack.c.b16 %v1508, %v1502
        %v1689 = vpack.c.b16 %v1509, %v1503
        %v1690 = vpack.c.b16 %v1510, %v1504
        %v1691 = vpack.c.b16 %v1517, %v1511
        %v1692 = vpack.c.b16 %v1518, %v1512
        %v1693 = vpack.c.b16 %v1519, %v1513
        %v1694 = vpack.c.b16 %v1520, %v1514
        %v1695 = vpack.c.b16 %v1521, %v1515
        %v1696 = vpack.c.b16 %v1522, %v1516
        %v1697 = vpack.c.b16 %v1529, %v1523
        %v1698 = vpack.c.b16 %v1530, %v1524
        %v1699 = vpack.c.b16 %v1531, %v1525
        %v1700 = vpack.c.b16 %v1532, %v1526
        %v1701 = vpack.c.b16 %v1533, %v1527
        %v1702 = vpack.c.b16 %v1534, %v1528
        %v1703 = vpack.c.b16 %v1541, %v1535
        %v1704 = vpack.c.b16 %v1542, %v1536
        %v1705 = vpack.c.b16 %v1543, %v1537
        %v1706 = vpack.c.b16 %v1544, %v1538
        %v1707 = vpack.c.b16 %v1545, %v1539
        %v1708 = vpack.c.b16 %v1546, %v1540
        %v1709 = vpack.c.b16 %v1553, %v1547
        %v1710 = vpack.c.b16 %v1554, %v1548
        %v1711 = vpack.c.b16 %v1555, %v1549
        %v1712 = vpack.c.b16 %v1556, %v1550
        %v1713 = vpack.c.b16 %v1557, %v1551
        %v1714 = vpack.c.b16 %v1558, %v1552
        %v1715 = vpack.c.b16 %v1565, %v1559
        %v1716 = vpack.c.b16 %v1566, %v1560
        %v1717 = vpack.c.b16 %v1567, %v1561
        %v1718 = vpack.c.b16 %v1568, %v1562
        %v1719 = vpack.c.b16 %v1569, %v1563
        %v1720 = vpack.c.b16 %v1570, %v1564
        %v1721 = vpack.c.b16 %v1577, %v1571
        %v1722 = vpack.c.b16 %v1578, %v1572
        %v1723 = vpack.c.b16 %v1579, %v1573
        %v1724 = vpack.c.b16 %v1580, %v1574
        %v1725 = vpack.c.b16 %v1581, %v1575
        %v1726 = vpack.c.b16 %v1582, %v1576
        %v1727 = vpack.c.b16 %v1589, %v1583
        %v1728 = vpack.c.b16 %v1590, %v1584
        %v1729 = vpack.c.b16 %v1591, %v1585
        %v1730 = vpack.c.b16 %v1592, %v1586
        %v1731 = vpack.c.b16 %v1593, %v1587
        %v1732 = vpack.c.b16 %v1594, %v1588
        %v1733 = vpack.c.b16 %v1601, %v1595
        %v1734 = vpack.c.b16 %v1602, %v1596
        %v1735 = vpack.c.b16 %v1603, %v1597
        %v1736 = vpack.c.b16 %v1604, %v1598
        %v1737 = vpack.c.b16 %v1605, %v1599
        %v1738 = vpack.c.b16 %v1606, %v1600
        %v1739 = vpack.c.b16 %v1613, %v1607
        %v1740 = vpack.c.b16 %v1614, %v1608
        %v1741 = vpack.c.b16 %v1615, %v1609
        %v1742 = vpack.c.b16 %v1616, %v1610
        %v1743 = vpack.c.b16 %v1617, %v1611
        %v1744 = vpack.c.b16 %v1618, %v1612
        %v1745 = vpack.c.b16 %v1625, %v1619
        %v1746 = vpack.c.b16 %v1626, %v1620
        %v1747 = vpack.c.b16 %v1627, %v1621
        %v1748 = vpack.c.b16 %v1628, %v1622
        %v1749 = vpack.c.b16 %v1629, %v1623
        %v1750 = vpack.c.b16 %v1630, %v1624
        %v1751 = vpack.c.b16 %v1637, %v1631
        %v1752 = vpack.c.b16 %v1638, %v1632
        %v1753 = vpack.c.b16 %v1639, %v1633
        %v1754 = vpack.c.b16 %v1640, %v1634
        %v1755 = vpack.c.b16 %v1641, %v1635
        %v1756 = vpack.c.b16 %v1642, %v1636
        %v1757 = vpack.c.b16 %v1649, %v1643
        %v1758 = vpack.c.b16 %v1650, %v1644
        %v1759 = vpack.c.b16 %v1651, %v1645
        %v1760 = vpack.c.b16 %v1652, %v1646
        %v1761 = vpack.c.b16 %v1653, %v1647
        %v1762 = vpack.c.b16 %v1654, %v1648
        %v1763 = vpack.c.b16 %v1661, %v1655
        %v1764 = vpack.c.b16 %v1662, %v1656
        %v1765 = vpack.c.b16 %v1663, %v1657
        %v1766 = vpack.c.b16 %v1664, %v1658
        %v1767 = vpack.c.b16 %v1665, %v1659
        %v1768 = vpack.c.b16 %v1666, %v1660
        %v1769 = vpack.c.b16 %v1673, %v1667
        %v1770 = vpack.c.b16 %v1674, %v1668
        %v1771 = vpack.c.b16 %v1675, %v1669
        %v1772 = vpack.c.b16 %v1676, %v1670
        %v1773 = vpack.c.b16 %v1677, %v1671
        %v1774 = vpack.c.b16 %v1678, %v1672
        %1871 = vmatprep.subr.bf16.mxu0 %v1722
        %1872 = vmatpush1.bf16.msra.mxu0 %v1721
        %1873 = vmatprep.subr.bf16.mxu0 %v1716
        %1874 = vmatpush1.bf16.msra.mxu0 %v1715
        %1875 = vmatprep.subr.bf16.mxu0 %v1710
        %1876 = vmatpush1.bf16.msra.mxu0 %v1709
        %1877 = vmatprep.subr.bf16.mxu0 %v1704
        %1878 = vmatpush1.bf16.msra.mxu0 %v1703
        %1879 = vmatprep.subr.bf16.mxu0 %v1698
        %1880 = vmatpush1.bf16.msra.mxu0 %v1697
        %1881 = vmatprep.subr.bf16.mxu0 %v1692
        %1882 = vmatpush1.bf16.msra.mxu0 %v1691
        %1883 = vmatprep.subr.bf16.mxu0 %v1686
        %1884 = vmatpush1.bf16.msra.mxu0 %v1685
        %1885 = vmatprep.subr.bf16.mxu0 %v1680
        %1886 = vmatpush1.bf16.msra.mxu0 %v1679
        %1887 = vmatprep.subr.bf16.mxu0 %v1770
        %1888 = vmatpush2.bf16.msra.mxu0 %v1769
        %1889 = vmatprep.subr.bf16.mxu0 %v1764
        %1890 = vmatpush2.bf16.msra.mxu0 %v1763
        %1891 = vmatprep.subr.bf16.mxu0 %v1758
        %1892 = vmatpush2.bf16.msra.mxu0 %v1757
        %1893 = vmatprep.subr.bf16.mxu0 %v1752
        %1894 = vmatpush2.bf16.msra.mxu0 %v1751
        %1895 = vmatprep.subr.bf16.mxu0 %v1746
        %1896 = vmatpush2.bf16.msra.mxu0 %v1745
        %1897 = vmatprep.subr.bf16.mxu0 %v1740
        %1898 = vmatpush2.bf16.msra.mxu0 %v1739
        %1899 = vmatprep.subr.bf16.mxu0 %v1734
        %1900 = vmatpush2.bf16.msra.mxu0 %v1733
        %1901 = vmatprep.subr.bf16.mxu0 %v1728
        %1902 = vmatpush2.bf16.msra.mxu0 %v1727
        %1903 = vmatprep.mubr.bf16.mxu0 %v1221
        %1904 = vmatmul.mubr.bf16.gmra.mxu0 %v1220
        %v1905 = vpop.f32.mrf.mxu0
        %v1906 = vadd.f32 %v1370, %v1905
        %v1907 = vpop.f32.mrf.mxu0
        %v1908 = vadd.f32 %v1374, %v1907
        %v1909 = vpop.f32.mrf.mxu0
        %v1910 = vadd.f32 %v1370, %v1909
        %v1911 = vpop.f32.mrf.mxu0
        %v1912 = vadd.f32 %v1374, %v1911
        %1913 = vmatprep.mubr.bf16.mxu0 %v1223
        %1914 = vmatmul.mubr.bf16.gmra.mxu0 %v1222
        %v1915 = vpop.f32.mrf.mxu0
        %v1916 = vadd.f32 %v1370, %v1915
        %v1917 = vpop.f32.mrf.mxu0
        %v1918 = vadd.f32 %v1374, %v1917
        %v1919 = vpop.f32.mrf.mxu0
        %v1920 = vadd.f32 %v1370, %v1919
        %v1921 = vpop.f32.mrf.mxu0
        %v1922 = vadd.f32 %v1374, %v1921
        %1923 = vmatprep.mubr.bf16.mxu0 %v1225
        %1924 = vmatmul.mubr.bf16.gmra.mxu0 %v1224
        %v1925 = vpop.f32.mrf.mxu0
        %v1926 = vadd.f32 %v1370, %v1925
        %v1927 = vpop.f32.mrf.mxu0
        %v1928 = vadd.f32 %v1374, %v1927
        %v1929 = vpop.f32.mrf.mxu0
        %v1930 = vadd.f32 %v1370, %v1929
        %v1931 = vpop.f32.mrf.mxu0
        %v1932 = vadd.f32 %v1374, %v1931
        %1933 = vmatprep.mubr.bf16.mxu0 %v1227
        %1934 = vmatmul.mubr.bf16.gmra.mxu0 %v1226
        %v1935 = vpop.f32.mrf.mxu0
        %v1936 = vadd.f32 %v1370, %v1935
        %v1937 = vpop.f32.mrf.mxu0
        %v1938 = vadd.f32 %v1374, %v1937
        %v1939 = vpop.f32.mrf.mxu0
        %v1940 = vadd.f32 %v1370, %v1939
        %v1941 = vpop.f32.mrf.mxu0
        %v1942 = vadd.f32 %v1374, %v1941
        %1943 = vmatprep.mubr.bf16.mxu0 %v1229
        %1944 = vmatmul.mubr.bf16.gmra.mxu0 %v1228
        %v1945 = vpop.f32.mrf.mxu0
        %v1946 = vadd.f32 %v1370, %v1945
        %v1947 = vpop.f32.mrf.mxu0
        %v1948 = vadd.f32 %v1374, %v1947
        %v1949 = vpop.f32.mrf.mxu0
        %v1950 = vadd.f32 %v1370, %v1949
        %v1951 = vpop.f32.mrf.mxu0
        %v1952 = vadd.f32 %v1374, %v1951
        %1953 = vmatprep.mubr.bf16.mxu0 %v1231
        %1954 = vmatmul.mubr.bf16.gmra.mxu0 %v1230
        %v1955 = vpop.f32.mrf.mxu0
        %v1956 = vadd.f32 %v1370, %v1955
        %v1957 = vpop.f32.mrf.mxu0
        %v1958 = vadd.f32 %v1374, %v1957
        %v1959 = vpop.f32.mrf.mxu0
        %v1960 = vadd.f32 %v1370, %v1959
        %v1961 = vpop.f32.mrf.mxu0
        %v1962 = vadd.f32 %v1374, %v1961
        %1963 = vmatprep.mubr.bf16.mxu0 %v1233
        %1964 = vmatmul.mubr.bf16.gmra.mxu0 %v1232
        %v1965 = vpop.f32.mrf.mxu0
        %v1966 = vadd.f32 %v1370, %v1965
        %v1967 = vpop.f32.mrf.mxu0
        %v1968 = vadd.f32 %v1374, %v1967
        %v1969 = vpop.f32.mrf.mxu0
        %v1970 = vadd.f32 %v1370, %v1969
        %v1971 = vpop.f32.mrf.mxu0
        %v1972 = vadd.f32 %v1374, %v1971
        %1973 = vmatprep.mubr.bf16.mxu0 %v1235
        %1974 = vmatmul.mubr.bf16.gmra.mxu0 %v1234
        %v1975 = vpop.f32.mrf.mxu0
        %v1976 = vadd.f32 %v1370, %v1975
        %v1977 = vpop.f32.mrf.mxu0
        %v1978 = vadd.f32 %v1374, %v1977
        %v1979 = vpop.f32.mrf.mxu0
        %v1980 = vadd.f32 %v1370, %v1979
        %v1981 = vpop.f32.mrf.mxu0
        %v1982 = vadd.f32 %v1374, %v1981
        %1983 = vdwg.mxu0
        %1984 = vmatprep.subr.bf16.mxu0 %v1724
        %1985 = vmatpush1.bf16.msra.mxu0 %v1723
        %1986 = vmatprep.subr.bf16.mxu0 %v1718
        %1987 = vmatpush1.bf16.msra.mxu0 %v1717
        %1988 = vmatprep.subr.bf16.mxu0 %v1712
        %1989 = vmatpush1.bf16.msra.mxu0 %v1711
        %1990 = vmatprep.subr.bf16.mxu0 %v1706
        %1991 = vmatpush1.bf16.msra.mxu0 %v1705
        %1992 = vmatprep.subr.bf16.mxu0 %v1700
        %1993 = vmatpush1.bf16.msra.mxu0 %v1699
        %1994 = vmatprep.subr.bf16.mxu0 %v1694
        %1995 = vmatpush1.bf16.msra.mxu0 %v1693
        %1996 = vmatprep.subr.bf16.mxu0 %v1688
        %1997 = vmatpush1.bf16.msra.mxu0 %v1687
        %1998 = vmatprep.subr.bf16.mxu0 %v1682
        %1999 = vmatpush1.bf16.msra.mxu0 %v1681
        %2000 = vmatprep.subr.bf16.mxu0 %v1772
        %2001 = vmatpush2.bf16.msra.mxu0 %v1771
        %2002 = vmatprep.subr.bf16.mxu0 %v1766
        %2003 = vmatpush2.bf16.msra.mxu0 %v1765
        %2004 = vmatprep.subr.bf16.mxu0 %v1760
        %2005 = vmatpush2.bf16.msra.mxu0 %v1759
        %2006 = vmatprep.subr.bf16.mxu0 %v1754
        %2007 = vmatpush2.bf16.msra.mxu0 %v1753
        %2008 = vmatprep.subr.bf16.mxu0 %v1748
        %2009 = vmatpush2.bf16.msra.mxu0 %v1747
        %2010 = vmatprep.subr.bf16.mxu0 %v1742
        %2011 = vmatpush2.bf16.msra.mxu0 %v1741
        %2012 = vmatprep.subr.bf16.mxu0 %v1736
        %2013 = vmatpush2.bf16.msra.mxu0 %v1735
        %2014 = vmatprep.subr.bf16.mxu0 %v1730
        %2015 = vmatpush2.bf16.msra.mxu0 %v1729
        %2016 = vmatprep.mubr.bf16.mxu0 %v1221
        %2017 = vmatmul.mubr.bf16.gmra.mxu0 %v1220
        %v2018 = vpop.f32.mrf.mxu0
        %v2019 = vadd.f32 %v1378, %v2018
        %v2020 = vpop.f32.mrf.mxu0
        %v2021 = vadd.f32 %v1382, %v2020
        %v2022 = vpop.f32.mrf.mxu0
        %v2023 = vadd.f32 %v1378, %v2022
        %v2024 = vpop.f32.mrf.mxu0
        %v2025 = vadd.f32 %v1382, %v2024
        %2026 = vmatprep.mubr.bf16.mxu0 %v1223
        %2027 = vmatmul.mubr.bf16.gmra.mxu0 %v1222
        %v2028 = vpop.f32.mrf.mxu0
        %v2029 = vadd.f32 %v1378, %v2028
        %v2030 = vpop.f32.mrf.mxu0
        %v2031 = vadd.f32 %v1382, %v2030
        %v2032 = vpop.f32.mrf.mxu0
        %v2033 = vadd.f32 %v1378, %v2032
        %v2034 = vpop.f32.mrf.mxu0
        %v2035 = vadd.f32 %v1382, %v2034
        %2036 = vmatprep.mubr.bf16.mxu0 %v1225
        %2037 = vmatmul.mubr.bf16.gmra.mxu0 %v1224
        %v2038 = vpop.f32.mrf.mxu0
        %v2039 = vadd.f32 %v1378, %v2038
        %v2040 = vpop.f32.mrf.mxu0
        %v2041 = vadd.f32 %v1382, %v2040
        %v2042 = vpop.f32.mrf.mxu0
        %v2043 = vadd.f32 %v1378, %v2042
        %v2044 = vpop.f32.mrf.mxu0
        %v2045 = vadd.f32 %v1382, %v2044
        %2046 = vmatprep.mubr.bf16.mxu0 %v1227
        %2047 = vmatmul.mubr.bf16.gmra.mxu0 %v1226
        %v2048 = vpop.f32.mrf.mxu0
        %v2049 = vadd.f32 %v1378, %v2048
        %v2050 = vpop.f32.mrf.mxu0
        %v2051 = vadd.f32 %v1382, %v2050
        %v2052 = vpop.f32.mrf.mxu0
        %v2053 = vadd.f32 %v1378, %v2052
        %v2054 = vpop.f32.mrf.mxu0
        %v2055 = vadd.f32 %v1382, %v2054
        %2056 = vmatprep.mubr.bf16.mxu0 %v1229
        %2057 = vmatmul.mubr.bf16.gmra.mxu0 %v1228
        %v2058 = vpop.f32.mrf.mxu0
        %v2059 = vadd.f32 %v1378, %v2058
        %v2060 = vpop.f32.mrf.mxu0
        %v2061 = vadd.f32 %v1382, %v2060
        %v2062 = vpop.f32.mrf.mxu0
        %v2063 = vadd.f32 %v1378, %v2062
        %v2064 = vpop.f32.mrf.mxu0
        %v2065 = vadd.f32 %v1382, %v2064
        %2066 = vmatprep.mubr.bf16.mxu0 %v1231
        %2067 = vmatmul.mubr.bf16.gmra.mxu0 %v1230
        %v2068 = vpop.f32.mrf.mxu0
        %v2069 = vadd.f32 %v1378, %v2068
        %v2070 = vpop.f32.mrf.mxu0
        %v2071 = vadd.f32 %v1382, %v2070
        %v2072 = vpop.f32.mrf.mxu0
        %v2073 = vadd.f32 %v1378, %v2072
        %v2074 = vpop.f32.mrf.mxu0
        %v2075 = vadd.f32 %v1382, %v2074
        %2076 = vmatprep.mubr.bf16.mxu0 %v1233
        %2077 = vmatmul.mubr.bf16.gmra.mxu0 %v1232
        %v2078 = vpop.f32.mrf.mxu0
        %v2079 = vadd.f32 %v1378, %v2078
        %v2080 = vpop.f32.mrf.mxu0
        %v2081 = vadd.f32 %v1382, %v2080
        %v2082 = vpop.f32.mrf.mxu0
        %v2083 = vadd.f32 %v1378, %v2082
        %v2084 = vpop.f32.mrf.mxu0
        %v2085 = vadd.f32 %v1382, %v2084
        %2086 = vmatprep.mubr.bf16.mxu0 %v1235
        %2087 = vmatmul.mubr.bf16.gmra.mxu0 %v1234
        %v2088 = vpop.f32.mrf.mxu0
        %v2089 = vadd.f32 %v1378, %v2088
        %v2090 = vpop.f32.mrf.mxu0
        %v2091 = vadd.f32 %v1382, %v2090
        %v2092 = vpop.f32.mrf.mxu0
        %v2093 = vadd.f32 %v1378, %v2092
        %v2094 = vpop.f32.mrf.mxu0
        %v2095 = vadd.f32 %v1382, %v2094
        %2096 = vdwg.mxu0
        %2097 = vmatprep.subr.bf16.mxu0 %v1726
        %2098 = vmatpush1.bf16.msra.mxu0 %v1725
        %2099 = vmatprep.subr.bf16.mxu0 %v1720
        %2100 = vmatpush1.bf16.msra.mxu0 %v1719
        %2101 = vmatprep.subr.bf16.mxu0 %v1714
        %2102 = vmatpush1.bf16.msra.mxu0 %v1713
        %2103 = vmatprep.subr.bf16.mxu0 %v1708
        %2104 = vmatpush1.bf16.msra.mxu0 %v1707
        %2105 = vmatprep.subr.bf16.mxu0 %v1702
        %2106 = vmatpush1.bf16.msra.mxu0 %v1701
        %2107 = vmatprep.subr.bf16.mxu0 %v1696
        %2108 = vmatpush1.bf16.msra.mxu0 %v1695
        %2109 = vmatprep.subr.bf16.mxu0 %v1690
        %2110 = vmatpush1.bf16.msra.mxu0 %v1689
        %2111 = vmatprep.subr.bf16.mxu0 %v1684
        %2112 = vmatpush1.bf16.msra.mxu0 %v1683
        %2113 = vmatprep.subr.bf16.mxu0 %v1774
        %2114 = vmatpush2.bf16.msra.mxu0 %v1773
        %2115 = vmatprep.subr.bf16.mxu0 %v1768
        %2116 = vmatpush2.bf16.msra.mxu0 %v1767
        %2117 = vmatprep.subr.bf16.mxu0 %v1762
        %2118 = vmatpush2.bf16.msra.mxu0 %v1761
        %2119 = vmatprep.subr.bf16.mxu0 %v1756
        %2120 = vmatpush2.bf16.msra.mxu0 %v1755
        %2121 = vmatprep.subr.bf16.mxu0 %v1750
        %2122 = vmatpush2.bf16.msra.mxu0 %v1749
        %2123 = vmatprep.subr.bf16.mxu0 %v1744
        %2124 = vmatpush2.bf16.msra.mxu0 %v1743
        %2125 = vmatprep.subr.bf16.mxu0 %v1738
        %2126 = vmatpush2.bf16.msra.mxu0 %v1737
        %2127 = vmatprep.subr.bf16.mxu0 %v1732
        %2128 = vmatpush2.bf16.msra.mxu0 %v1731
        %2129 = vmatprep.mubr.bf16.mxu0 %v1221
        %2130 = vmatmul.mubr.bf16.gmra.mxu0 %v1220
        %v2131 = vpop.f32.mrf.mxu0
        %v2132 = vadd.f32 %v1386, %v2131
        %v2133 = vpop.f32.mrf.mxu0
        %v2134 = vadd.f32 %v1390, %v2133
        %v2135 = vpop.f32.mrf.mxu0
        %v2136 = vadd.f32 %v1386, %v2135
        %v2137 = vpop.f32.mrf.mxu0
        %v2138 = vadd.f32 %v1390, %v2137
        %2139 = vmatprep.mubr.bf16.mxu0 %v1223
        %2140 = vmatmul.mubr.bf16.gmra.mxu0 %v1222
        %v2141 = vpop.f32.mrf.mxu0
        %v2142 = vadd.f32 %v1386, %v2141
        %v2143 = vpop.f32.mrf.mxu0
        %v2144 = vadd.f32 %v1390, %v2143
        %v2145 = vpop.f32.mrf.mxu0
        %v2146 = vadd.f32 %v1386, %v2145
        %v2147 = vpop.f32.mrf.mxu0
        %v2148 = vadd.f32 %v1390, %v2147
        %2149 = vmatprep.mubr.bf16.mxu0 %v1225
        %2150 = vmatmul.mubr.bf16.gmra.mxu0 %v1224
        %v2151 = vpop.f32.mrf.mxu0
        %v2152 = vadd.f32 %v1386, %v2151
        %v2153 = vpop.f32.mrf.mxu0
        %v2154 = vadd.f32 %v1390, %v2153
        %v2155 = vpop.f32.mrf.mxu0
        %v2156 = vadd.f32 %v1386, %v2155
        %v2157 = vpop.f32.mrf.mxu0
        %v2158 = vadd.f32 %v1390, %v2157
        %2159 = vmatprep.mubr.bf16.mxu0 %v1227
        %2160 = vmatmul.mubr.bf16.gmra.mxu0 %v1226
        %v2161 = vpop.f32.mrf.mxu0
        %v2162 = vadd.f32 %v1386, %v2161
        %v2163 = vpop.f32.mrf.mxu0
        %v2164 = vadd.f32 %v1390, %v2163
        %v2165 = vpop.f32.mrf.mxu0
        %v2166 = vadd.f32 %v1386, %v2165
        %v2167 = vpop.f32.mrf.mxu0
        %v2168 = vadd.f32 %v1390, %v2167
        %2169 = vmatprep.mubr.bf16.mxu0 %v1229
        %2170 = vmatmul.mubr.bf16.gmra.mxu0 %v1228
        %v2171 = vpop.f32.mrf.mxu0
        %v2172 = vadd.f32 %v1386, %v2171
        %v2173 = vpop.f32.mrf.mxu0
        %v2174 = vadd.f32 %v1390, %v2173
        %v2175 = vpop.f32.mrf.mxu0
        %v2176 = vadd.f32 %v1386, %v2175
        %v2177 = vpop.f32.mrf.mxu0
        %v2178 = vadd.f32 %v1390, %v2177
        %2179 = vmatprep.mubr.bf16.mxu0 %v1231
        %2180 = vmatmul.mubr.bf16.gmra.mxu0 %v1230
        %v2181 = vpop.f32.mrf.mxu0
        %v2182 = vadd.f32 %v1386, %v2181
        %v2183 = vpop.f32.mrf.mxu0
        %v2184 = vadd.f32 %v1390, %v2183
        %v2185 = vpop.f32.mrf.mxu0
        %v2186 = vadd.f32 %v1386, %v2185
        %v2187 = vpop.f32.mrf.mxu0
        %v2188 = vadd.f32 %v1390, %v2187
        %2189 = vmatprep.mubr.bf16.mxu0 %v1233
        %2190 = vmatmul.mubr.bf16.gmra.mxu0 %v1232
        %v2191 = vpop.f32.mrf.mxu0
        %v2192 = vadd.f32 %v1386, %v2191
        %v2193 = vpop.f32.mrf.mxu0
        %v2194 = vadd.f32 %v1390, %v2193
        %v2195 = vpop.f32.mrf.mxu0
        %v2196 = vadd.f32 %v1386, %v2195
        %v2197 = vpop.f32.mrf.mxu0
        %v2198 = vadd.f32 %v1390, %v2197
        %2199 = vmatprep.mubr.bf16.mxu0 %v1235
        %2200 = vmatmul.mubr.bf16.gmra.mxu0 %v1234
        %v2201 = vpop.f32.mrf.mxu0
        %v2202 = vadd.f32 %v1386, %v2201
        %v2203 = vpop.f32.mrf.mxu0
        %v2204 = vadd.f32 %v1390, %v2203
        %v2205 = vpop.f32.mrf.mxu0
        %v2206 = vadd.f32 %v1386, %v2205
        %v2207 = vpop.f32.mrf.mxu0
        %v2208 = vadd.f32 %v1390, %v2207
        %2209 = vdwg.mxu0
        %v2210 = vmul.f32 %v1906, 0.088388346
        %v2211 = vmul.f32 %v1910, 0.088388346
        %v2212 = vmul.f32 %v1916, 0.088388346
        %v2213 = vmul.f32 %v1920, 0.088388346
        %v2214 = vmul.f32 %v1926, 0.088388346
        %v2215 = vmul.f32 %v1930, 0.088388346
        %v2216 = vmul.f32 %v1936, 0.088388346
        %v2217 = vmul.f32 %v1940, 0.088388346
        %v2218 = vmul.f32 %v1946, 0.088388346
        %v2219 = vmul.f32 %v1950, 0.088388346
        %v2220 = vmul.f32 %v1956, 0.088388346
        %v2221 = vmul.f32 %v1960, 0.088388346
        %v2222 = vmul.f32 %v1966, 0.088388346
        %v2223 = vmul.f32 %v1970, 0.088388346
        %v2224 = vmul.f32 %v1976, 0.088388346
        %v2225 = vmul.f32 %v1980, 0.088388346
        %v2226 = vpack.c.bf16 %v2211, %v2210
        %v2227 = vpack.c.bf16 %v2213, %v2212
        %v2228 = vpack.c.bf16 %v2215, %v2214
        %v2229 = vpack.c.bf16 %v2217, %v2216
        %v2230 = vpack.c.bf16 %v2219, %v2218
        %v2231 = vpack.c.bf16 %v2221, %v2220
        %v2232 = vpack.c.bf16 %v2223, %v2222
        %v2233 = vpack.c.bf16 %v2225, %v2224
        %v2234 = vmul.f32 %v1908, 0.088388346
        %v2235 = vmul.f32 %v1912, 0.088388346
        %v2236 = vmul.f32 %v1918, 0.088388346
        %v2237 = vmul.f32 %v1922, 0.088388346
        %v2238 = vmul.f32 %v1928, 0.088388346
        %v2239 = vmul.f32 %v1932, 0.088388346
        %v2240 = vmul.f32 %v1938, 0.088388346
        %v2241 = vmul.f32 %v1942, 0.088388346
        %v2242 = vmul.f32 %v1948, 0.088388346
        %v2243 = vmul.f32 %v1952, 0.088388346
        %v2244 = vmul.f32 %v1958, 0.088388346
        %v2245 = vmul.f32 %v1962, 0.088388346
        %v2246 = vmul.f32 %v1968, 0.088388346
        %v2247 = vmul.f32 %v1972, 0.088388346
        %v2248 = vmul.f32 %v1978, 0.088388346
        %v2249 = vmul.f32 %v1982, 0.088388346
        %v2250 = vpack.c.bf16 %v2235, %v2234
        %v2251 = vpack.c.bf16 %v2237, %v2236
        %v2252 = vpack.c.bf16 %v2239, %v2238
        %v2253 = vpack.c.bf16 %v2241, %v2240
        %v2254 = vpack.c.bf16 %v2243, %v2242
        %v2255 = vpack.c.bf16 %v2245, %v2244
        %v2256 = vpack.c.bf16 %v2247, %v2246
        %v2257 = vpack.c.bf16 %v2249, %v2248
        %v2258 = vpack.c.bf16 %v2023, %v2019
        %v2259 = vpack.c.bf16 %v2033, %v2029
        %v2260 = vpack.c.bf16 %v2043, %v2039
        %v2261 = vpack.c.bf16 %v2053, %v2049
        %v2262 = vpack.c.bf16 %v2063, %v2059
        %v2263 = vpack.c.bf16 %v2073, %v2069
        %v2264 = vpack.c.bf16 %v2083, %v2079
        %v2265 = vpack.c.bf16 %v2093, %v2089
        %v2266 = vpack.c.bf16 %v2025, %v2021
        %v2267 = vpack.c.bf16 %v2035, %v2031
        %v2268 = vpack.c.bf16 %v2045, %v2041
        %v2269 = vpack.c.bf16 %v2055, %v2051
        %v2270 = vpack.c.bf16 %v2065, %v2061
        %v2271 = vpack.c.bf16 %v2075, %v2071
        %v2272 = vpack.c.bf16 %v2085, %v2081
        %v2273 = vpack.c.bf16 %v2095, %v2091
        %v2274 = vpack.c.bf16 %v2136, %v2132
        %v2275 = vpack.c.bf16 %v2146, %v2142
        %v2276 = vpack.c.bf16 %v2156, %v2152
        %v2277 = vpack.c.bf16 %v2166, %v2162
        %v2278 = vpack.c.bf16 %v2176, %v2172
        %v2279 = vpack.c.bf16 %v2186, %v2182
        %v2280 = vpack.c.bf16 %v2196, %v2192
        %v2281 = vpack.c.bf16 %v2206, %v2202
        %v2282 = vpack.c.bf16 %v2138, %v2134
        %v2283 = vpack.c.bf16 %v2148, %v2144
        %v2284 = vpack.c.bf16 %v2158, %v2154
        %v2285 = vpack.c.bf16 %v2168, %v2164
        %v2286 = vpack.c.bf16 %v2178, %v2174
        %v2287 = vpack.c.bf16 %v2188, %v2184
        %v2288 = vpack.c.bf16 %v2198, %v2194
        %v2289 = vpack.c.bf16 %v2208, %v2204
        %2290 = vmatprep.subr.bf16.mxu0 0
        %2291 = vmatpush1.bf16.xpose.msra.mxu0 0
        %2292 = vmatprep.subr.bf16.mxu0 0
        %2293 = vmatpush1.bf16.xpose.msra.mxu0 0
        %2294 = vmatprep.subr.bf16.mxu0 0
        %2295 = vmatpush1.bf16.xpose.msra.mxu0 0
        %2296 = vmatprep.subr.bf16.mxu0 0
        %2297 = vmatpush1.bf16.xpose.msra.mxu0 0
        %2298 = vmatprep.subr.bf16.mxu0 0
        %2299 = vmatpush1.bf16.xpose.msra.mxu0 %v2261
        %2300 = vmatprep.subr.bf16.mxu0 0
        %2301 = vmatpush1.bf16.xpose.msra.mxu0 %v2260
        %2302 = vmatprep.subr.bf16.mxu0 0
        %2303 = vmatpush1.bf16.xpose.msra.mxu0 %v2259
        %2304 = vmatprep.subr.bf16.mxu0 0
        %2305 = vmatpush1.bf16.xpose.msra.mxu0 %v2258
        %2306 = vmatprep.subr.bf16.mxu0 0
        %2307 = vmatpush2.bf16.xpose.msra.mxu0 0
        %2308 = vmatprep.subr.bf16.mxu0 0
        %2309 = vmatpush2.bf16.xpose.msra.mxu0 0
        %2310 = vmatprep.subr.bf16.mxu0 0
        %2311 = vmatpush2.bf16.xpose.msra.mxu0 0
        %2312 = vmatprep.subr.bf16.mxu0 0
        %2313 = vmatpush2.bf16.xpose.msra.mxu0 0
        %2314 = vmatprep.subr.bf16.mxu0 0
        %2315 = vmatpush2.bf16.xpose.msra.mxu0 0
        %2316 = vmatprep.subr.bf16.mxu0 0
        %2317 = vmatpush2.bf16.xpose.msra.mxu0 0
        %2318 = vmatprep.subr.bf16.mxu0 0
        %2319 = vmatpush2.bf16.xpose.msra.mxu0 0
        %2320 = vmatprep.subr.bf16.mxu0 0
        %2321 = vmatpush2.bf16.xpose.msra.mxu0 0
        %2322 = vmatprep.mubr.bf16.mxu0 0
        %2323 = vmatmul.mubr.bf16.gmra.mxu0 %v2226
        %v2324 = vpop.f32.mrf.mxu0
        %v2325 = vadd.f32 0.0, %v2324
        %v2326 = vpop.f32.mrf.mxu0
        %v2327 = vpop.f32.mrf.mxu0
        %v2328 = vadd.f32 0.0, %v2327
        %v2329 = vpop.f32.mrf.mxu0
        %2330 = vmatprep.mubr.bf16.mxu0 0
        %2331 = vmatmul.mubr.bf16.gmra.mxu0 %v2227
        %v2332 = vpop.f32.mrf.mxu0
        %v2333 = vadd.f32 0.0, %v2332
        %v2334 = vpop.f32.mrf.mxu0
        %v2335 = vpop.f32.mrf.mxu0
        %v2336 = vadd.f32 0.0, %v2335
        %v2337 = vpop.f32.mrf.mxu0
        %2338 = vmatprep.mubr.bf16.mxu0 0
        %2339 = vmatmul.mubr.bf16.gmra.mxu0 %v2228
        %v2340 = vpop.f32.mrf.mxu0
        %v2341 = vadd.f32 0.0, %v2340
        %v2342 = vpop.f32.mrf.mxu0
        %v2343 = vpop.f32.mrf.mxu0
        %v2344 = vadd.f32 0.0, %v2343
        %v2345 = vpop.f32.mrf.mxu0
        %2346 = vmatprep.mubr.bf16.mxu0 0
        %2347 = vmatmul.mubr.bf16.gmra.mxu0 %v2229
        %v2348 = vpop.f32.mrf.mxu0
        %v2349 = vadd.f32 0.0, %v2348
        %v2350 = vpop.f32.mrf.mxu0
        %v2351 = vpop.f32.mrf.mxu0
        %v2352 = vadd.f32 0.0, %v2351
        %v2353 = vpop.f32.mrf.mxu0
        %2354 = vdwg.mxu0
        %2355 = vmatprep.subr.bf16.mxu0 0
        %2356 = vmatpush1.bf16.xpose.msra.mxu0 0
        %2357 = vmatprep.subr.bf16.mxu0 0
        %2358 = vmatpush1.bf16.xpose.msra.mxu0 0
        %2359 = vmatprep.subr.bf16.mxu0 0
        %2360 = vmatpush1.bf16.xpose.msra.mxu0 0
        %2361 = vmatprep.subr.bf16.mxu0 0
        %2362 = vmatpush1.bf16.xpose.msra.mxu0 0
        %2363 = vmatprep.subr.bf16.mxu0 0
        %2364 = vmatpush1.bf16.xpose.msra.mxu0 %v2265
        %2365 = vmatprep.subr.bf16.mxu0 0
        %2366 = vmatpush1.bf16.xpose.msra.mxu0 %v2264
        %2367 = vmatprep.subr.bf16.mxu0 0
        %2368 = vmatpush1.bf16.xpose.msra.mxu0 %v2263
        %2369 = vmatprep.subr.bf16.mxu0 0
        %2370 = vmatpush1.bf16.xpose.msra.mxu0 %v2262
        %2371 = vmatprep.subr.bf16.mxu0 0
        %2372 = vmatpush2.bf16.xpose.msra.mxu0 0
        %2373 = vmatprep.subr.bf16.mxu0 0
        %2374 = vmatpush2.bf16.xpose.msra.mxu0 0
        %2375 = vmatprep.subr.bf16.mxu0 0
        %2376 = vmatpush2.bf16.xpose.msra.mxu0 0
        %2377 = vmatprep.subr.bf16.mxu0 0
        %2378 = vmatpush2.bf16.xpose.msra.mxu0 0
        %2379 = vmatprep.subr.bf16.mxu0 0
        %2380 = vmatpush2.bf16.xpose.msra.mxu0 0
        %2381 = vmatprep.subr.bf16.mxu0 0
        %2382 = vmatpush2.bf16.xpose.msra.mxu0 0
        %2383 = vmatprep.subr.bf16.mxu0 0
        %2384 = vmatpush2.bf16.xpose.msra.mxu0 0
        %2385 = vmatprep.subr.bf16.mxu0 0
        %2386 = vmatpush2.bf16.xpose.msra.mxu0 0
        %2387 = vmatprep.mubr.bf16.mxu0 0
        %2388 = vmatmul.mubr.bf16.gmra.mxu0 %v2230
        %v2389 = vpop.f32.mrf.mxu0
        %v2390 = vadd.f32 0.0, %v2389
        %v2391 = vpop.f32.mrf.mxu0
        %v2392 = vpop.f32.mrf.mxu0
        %v2393 = vadd.f32 0.0, %v2392
        %v2394 = vpop.f32.mrf.mxu0
        %2395 = vmatprep.mubr.bf16.mxu0 0
        %2396 = vmatmul.mubr.bf16.gmra.mxu0 %v2231
        %v2397 = vpop.f32.mrf.mxu0
        %v2398 = vadd.f32 0.0, %v2397
        %v2399 = vpop.f32.mrf.mxu0
        %v2400 = vpop.f32.mrf.mxu0
        %v2401 = vadd.f32 0.0, %v2400
        %v2402 = vpop.f32.mrf.mxu0
        %2403 = vmatprep.mubr.bf16.mxu0 0
        %2404 = vmatmul.mubr.bf16.gmra.mxu0 %v2232
        %v2405 = vpop.f32.mrf.mxu0
        %v2406 = vadd.f32 0.0, %v2405
        %v2407 = vpop.f32.mrf.mxu0
        %v2408 = vpop.f32.mrf.mxu0
        %v2409 = vadd.f32 0.0, %v2408
        %v2410 = vpop.f32.mrf.mxu0
        %2411 = vmatprep.mubr.bf16.mxu0 0
        %2412 = vmatmul.mubr.bf16.gmra.mxu0 %v2233
        %v2413 = vpop.f32.mrf.mxu0
        %v2414 = vadd.f32 0.0, %v2413
        %v2415 = vpop.f32.mrf.mxu0
        %v2416 = vpop.f32.mrf.mxu0
        %v2417 = vadd.f32 0.0, %v2416
        %v2418 = vpop.f32.mrf.mxu0
        %2419 = vdwg.mxu0
        %2420 = vmatprep.subr.bf16.mxu0 0
        %2421 = vmatpush1.bf16.xpose.msra.mxu0 0
        %2422 = vmatprep.subr.bf16.mxu0 0
        %2423 = vmatpush1.bf16.xpose.msra.mxu0 0
        %2424 = vmatprep.subr.bf16.mxu0 0
        %2425 = vmatpush1.bf16.xpose.msra.mxu0 0
        %2426 = vmatprep.subr.bf16.mxu0 0
        %2427 = vmatpush1.bf16.xpose.msra.mxu0 0
        %2428 = vmatprep.subr.bf16.mxu0 0
        %2429 = vmatpush1.bf16.xpose.msra.mxu0 %v2269
        %2430 = vmatprep.subr.bf16.mxu0 0
        %2431 = vmatpush1.bf16.xpose.msra.mxu0 %v2268
        %2432 = vmatprep.subr.bf16.mxu0 0
        %2433 = vmatpush1.bf16.xpose.msra.mxu0 %v2267
        %2434 = vmatprep.subr.bf16.mxu0 0
        %2435 = vmatpush1.bf16.xpose.msra.mxu0 %v2266
        %2436 = vmatprep.subr.bf16.mxu0 0
        %2437 = vmatpush2.bf16.xpose.msra.mxu0 0
        %2438 = vmatprep.subr.bf16.mxu0 0
        %2439 = vmatpush2.bf16.xpose.msra.mxu0 0
        %2440 = vmatprep.subr.bf16.mxu0 0
        %2441 = vmatpush2.bf16.xpose.msra.mxu0 0
        %2442 = vmatprep.subr.bf16.mxu0 0
        %2443 = vmatpush2.bf16.xpose.msra.mxu0 0
        %2444 = vmatprep.subr.bf16.mxu0 0
        %2445 = vmatpush2.bf16.xpose.msra.mxu0 0
        %2446 = vmatprep.subr.bf16.mxu0 0
        %2447 = vmatpush2.bf16.xpose.msra.mxu0 0
        %2448 = vmatprep.subr.bf16.mxu0 0
        %2449 = vmatpush2.bf16.xpose.msra.mxu0 0
        %2450 = vmatprep.subr.bf16.mxu0 0
        %2451 = vmatpush2.bf16.xpose.msra.mxu0 0
        %2452 = vmatprep.mubr.bf16.mxu0 0
        %2453 = vmatmul.mubr.bf16.gmra.mxu0 %v2250
        %v2454 = vpop.f32.mrf.mxu0
        %v2455 = vadd.f32 0.0, %v2454
        %v2456 = vpop.f32.mrf.mxu0
        %v2457 = vpop.f32.mrf.mxu0
        %v2458 = vadd.f32 0.0, %v2457
        %v2459 = vpop.f32.mrf.mxu0
        %2460 = vmatprep.mubr.bf16.mxu0 0
        %2461 = vmatmul.mubr.bf16.gmra.mxu0 %v2251
        %v2462 = vpop.f32.mrf.mxu0
        %v2463 = vadd.f32 0.0, %v2462
        %v2464 = vpop.f32.mrf.mxu0
        %v2465 = vpop.f32.mrf.mxu0
        %v2466 = vadd.f32 0.0, %v2465
        %v2467 = vpop.f32.mrf.mxu0
        %2468 = vmatprep.mubr.bf16.mxu0 0
        %2469 = vmatmul.mubr.bf16.gmra.mxu0 %v2252
        %v2470 = vpop.f32.mrf.mxu0
        %v2471 = vadd.f32 0.0, %v2470
        %v2472 = vpop.f32.mrf.mxu0
        %v2473 = vpop.f32.mrf.mxu0
        %v2474 = vadd.f32 0.0, %v2473
        %v2475 = vpop.f32.mrf.mxu0
        %2476 = vmatprep.mubr.bf16.mxu0 0
        %2477 = vmatmul.mubr.bf16.gmra.mxu0 %v2253
        %v2478 = vpop.f32.mrf.mxu0
        %v2479 = vadd.f32 0.0, %v2478
        %v2480 = vpop.f32.mrf.mxu0
        %v2481 = vpop.f32.mrf.mxu0
        %v2482 = vadd.f32 0.0, %v2481
        %v2483 = vpop.f32.mrf.mxu0
        %2484 = vdwg.mxu0
        %2485 = vmatprep.subr.bf16.mxu0 0
        %2486 = vmatpush1.bf16.xpose.msra.mxu0 0
        %2487 = vmatprep.subr.bf16.mxu0 0
        %2488 = vmatpush1.bf16.xpose.msra.mxu0 0
        %2489 = vmatprep.subr.bf16.mxu0 0
        %2490 = vmatpush1.bf16.xpose.msra.mxu0 0
        %2491 = vmatprep.subr.bf16.mxu0 0
        %2492 = vmatpush1.bf16.xpose.msra.mxu0 0
        %2493 = vmatprep.subr.bf16.mxu0 0
        %2494 = vmatpush1.bf16.xpose.msra.mxu0 %v2273
        %2495 = vmatprep.subr.bf16.mxu0 0
        %2496 = vmatpush1.bf16.xpose.msra.mxu0 %v2272
        %2497 = vmatprep.subr.bf16.mxu0 0
        %2498 = vmatpush1.bf16.xpose.msra.mxu0 %v2271
        %2499 = vmatprep.subr.bf16.mxu0 0
        %2500 = vmatpush1.bf16.xpose.msra.mxu0 %v2270
        %2501 = vmatprep.subr.bf16.mxu0 0
        %2502 = vmatpush2.bf16.xpose.msra.mxu0 0
        %2503 = vmatprep.subr.bf16.mxu0 0
        %2504 = vmatpush2.bf16.xpose.msra.mxu0 0
        %2505 = vmatprep.subr.bf16.mxu0 0
        %2506 = vmatpush2.bf16.xpose.msra.mxu0 0
        %2507 = vmatprep.subr.bf16.mxu0 0
        %2508 = vmatpush2.bf16.xpose.msra.mxu0 0
        %2509 = vmatprep.subr.bf16.mxu0 0
        %2510 = vmatpush2.bf16.xpose.msra.mxu0 0
        %2511 = vmatprep.subr.bf16.mxu0 0
        %2512 = vmatpush2.bf16.xpose.msra.mxu0 0
        %2513 = vmatprep.subr.bf16.mxu0 0
        %2514 = vmatpush2.bf16.xpose.msra.mxu0 0
        %2515 = vmatprep.subr.bf16.mxu0 0
        %2516 = vmatpush2.bf16.xpose.msra.mxu0 0
        %2517 = vmatprep.mubr.bf16.mxu0 0
        %2518 = vmatmul.mubr.bf16.gmra.mxu0 %v2254
        %v2519 = vpop.f32.mrf.mxu0
        %v2520 = vadd.f32 0.0, %v2519
        %v2521 = vpop.f32.mrf.mxu0
        %v2522 = vpop.f32.mrf.mxu0
        %v2523 = vadd.f32 0.0, %v2522
        %v2524 = vpop.f32.mrf.mxu0
        %2525 = vmatprep.mubr.bf16.mxu0 0
        %2526 = vmatmul.mubr.bf16.gmra.mxu0 %v2255
        %v2527 = vpop.f32.mrf.mxu0
        %v2528 = vadd.f32 0.0, %v2527
        %v2529 = vpop.f32.mrf.mxu0
        %v2530 = vpop.f32.mrf.mxu0
        %v2531 = vadd.f32 0.0, %v2530
        %v2532 = vpop.f32.mrf.mxu0
        %2533 = vmatprep.mubr.bf16.mxu0 0
        %2534 = vmatmul.mubr.bf16.gmra.mxu0 %v2256
        %v2535 = vpop.f32.mrf.mxu0
        %v2536 = vadd.f32 0.0, %v2535
        %v2537 = vpop.f32.mrf.mxu0
        %v2538 = vpop.f32.mrf.mxu0
        %v2539 = vadd.f32 0.0, %v2538
        %v2540 = vpop.f32.mrf.mxu0
        %2541 = vmatprep.mubr.bf16.mxu0 0
        %2542 = vmatmul.mubr.bf16.gmra.mxu0 %v2257
        %v2543 = vpop.f32.mrf.mxu0
        %v2544 = vadd.f32 0.0, %v2543
        %v2545 = vpop.f32.mrf.mxu0
        %v2546 = vpop.f32.mrf.mxu0
        %v2547 = vadd.f32 0.0, %v2546
        %v2548 = vpop.f32.mrf.mxu0
        %2549 = vdwg.mxu0
        %vm2550 = vcmask 523264
        %v2551 = vsel %vm2550, %v2325, -inf
        %2552 = vmax.xlane.f32.xlu0 %v2551
        %v2553 = vpop.xlane.xlu0 %2552
        %v2554 = vsel %vm2550, %v2328, -inf
        %2555 = vmax.xlane.f32.xlu0 %v2554
        %v2556 = vpop.xlane.xlu0 %2555
        %v2557 = vsel %vm2550, %v2333, -inf
        %2558 = vmax.xlane.f32.xlu0 %v2557
        %v2559 = vpop.xlane.xlu0 %2558
        %v2560 = vsel %vm2550, %v2336, -inf
        %2561 = vmax.xlane.f32.xlu0 %v2560
        %v2562 = vpop.xlane.xlu0 %2561
        %v2563 = vsel %vm2550, %v2341, -inf
        %2564 = vmax.xlane.f32.xlu0 %v2563
        %v2565 = vpop.xlane.xlu0 %2564
        %v2566 = vsel %vm2550, %v2344, -inf
        %2567 = vmax.xlane.f32.xlu0 %v2566
        %v2568 = vpop.xlane.xlu0 %2567
        %v2569 = vsel %vm2550, %v2349, -inf
        %2570 = vmax.xlane.f32.xlu0 %v2569
        %v2571 = vpop.xlane.xlu0 %2570
        %v2572 = vsel %vm2550, %v2352, -inf
        %2573 = vmax.xlane.f32.xlu0 %v2572
        %v2574 = vpop.xlane.xlu0 %2573
        %v2575 = vsel %vm2550, %v2390, -inf
        %2576 = vmax.xlane.f32.xlu0 %v2575
        %v2577 = vpop.xlane.xlu0 %2576
        %v2578 = vsel %vm2550, %v2393, -inf
        %2579 = vmax.xlane.f32.xlu0 %v2578
        %v2580 = vpop.xlane.xlu0 %2579
        %v2581 = vsel %vm2550, %v2398, -inf
        %2582 = vmax.xlane.f32.xlu0 %v2581
        %v2583 = vpop.xlane.xlu0 %2582
        %v2584 = vsel %vm2550, %v2401, -inf
        %2585 = vmax.xlane.f32.xlu0 %v2584
        %v2586 = vpop.xlane.xlu0 %2585
        %v2587 = vsel %vm2550, %v2406, -inf
        %2588 = vmax.xlane.f32.xlu0 %v2587
        %v2589 = vpop.xlane.xlu0 %2588
        %v2590 = vsel %vm2550, %v2409, -inf
        %2591 = vmax.xlane.f32.xlu0 %v2590
        %v2592 = vpop.xlane.xlu0 %2591
        %v2593 = vsel %vm2550, %v2414, -inf
        %2594 = vmax.xlane.f32.xlu0 %v2593
        %v2595 = vpop.xlane.xlu0 %2594
        %v2596 = vsel %vm2550, %v2417, -inf
        %2597 = vmax.xlane.f32.xlu0 %v2596
        %v2598 = vpop.xlane.xlu0 %2597
        %v2599 = vsel %vm2550, %v2455, -inf
        %2600 = vmax.xlane.f32.xlu0 %v2599
        %v2601 = vpop.xlane.xlu0 %2600
        %v2602 = vsel %vm2550, %v2458, -inf
        %2603 = vmax.xlane.f32.xlu0 %v2602
        %v2604 = vpop.xlane.xlu0 %2603
        %v2605 = vsel %vm2550, %v2463, -inf
        %2606 = vmax.xlane.f32.xlu0 %v2605
        %v2607 = vpop.xlane.xlu0 %2606
        %v2608 = vsel %vm2550, %v2466, -inf
        %2609 = vmax.xlane.f32.xlu0 %v2608
        %v2610 = vpop.xlane.xlu0 %2609
        %v2611 = vsel %vm2550, %v2471, -inf
        %2612 = vmax.xlane.f32.xlu0 %v2611
        %v2613 = vpop.xlane.xlu0 %2612
        %v2614 = vsel %vm2550, %v2474, -inf
        %2615 = vmax.xlane.f32.xlu0 %v2614
        %v2616 = vpop.xlane.xlu0 %2615
        %v2617 = vsel %vm2550, %v2479, -inf
        %2618 = vmax.xlane.f32.xlu0 %v2617
        %v2619 = vpop.xlane.xlu0 %2618
        %v2620 = vsel %vm2550, %v2482, -inf
        %2621 = vmax.xlane.f32.xlu0 %v2620
        %v2622 = vpop.xlane.xlu0 %2621
        %v2623 = vsel %vm2550, %v2520, -inf
        %2624 = vmax.xlane.f32.xlu0 %v2623
        %v2625 = vpop.xlane.xlu0 %2624
        %v2626 = vsel %vm2550, %v2523, -inf
        %2627 = vmax.xlane.f32.xlu0 %v2626
        %v2628 = vpop.xlane.xlu0 %2627
        %v2629 = vsel %vm2550, %v2528, -inf
        %2630 = vmax.xlane.f32.xlu0 %v2629
        %v2631 = vpop.xlane.xlu0 %2630
        %v2632 = vsel %vm2550, %v2531, -inf
        %2633 = vmax.xlane.f32.xlu0 %v2632
        %v2634 = vpop.xlane.xlu0 %2633
        %v2635 = vsel %vm2550, %v2536, -inf
        %2636 = vmax.xlane.f32.xlu0 %v2635
        %v2637 = vpop.xlane.xlu0 %2636
        %v2638 = vsel %vm2550, %v2539, -inf
        %2639 = vmax.xlane.f32.xlu0 %v2638
        %v2640 = vpop.xlane.xlu0 %2639
        %v2641 = vsel %vm2550, %v2544, -inf
        %2642 = vmax.xlane.f32.xlu0 %v2641
        %v2643 = vpop.xlane.xlu0 %2642
        %v2644 = vsel %vm2550, %v2547, -inf
        %2645 = vmax.xlane.f32.xlu0 %v2644
        %v2646 = vpop.xlane.xlu0 %2645
        %v2647 = vsub.f32 %v2325, %v2553
        %v2648 = vsub.f32 %v2328, %v2556
        %v2649 = vsub.f32 %v2333, %v2559
        %v2650 = vsub.f32 %v2336, %v2562
        %v2651 = vsub.f32 %v2341, %v2565
        %v2652 = vsub.f32 %v2344, %v2568
        %v2653 = vsub.f32 %v2349, %v2571
        %v2654 = vsub.f32 %v2352, %v2574
        %v2655 = vsub.f32 %v2390, %v2577
        %v2656 = vsub.f32 %v2393, %v2580
        %v2657 = vsub.f32 %v2398, %v2583
        %v2658 = vsub.f32 %v2401, %v2586
        %v2659 = vsub.f32 %v2406, %v2589
        %v2660 = vsub.f32 %v2409, %v2592
        %v2661 = vsub.f32 %v2414, %v2595
        %v2662 = vsub.f32 %v2417, %v2598
        %v2663 = vsub.f32 %v2455, %v2601
        %v2664 = vsub.f32 %v2458, %v2604
        %v2665 = vsub.f32 %v2463, %v2607
        %v2666 = vsub.f32 %v2466, %v2610
        %v2667 = vsub.f32 %v2471, %v2613
        %v2668 = vsub.f32 %v2474, %v2616
        %v2669 = vsub.f32 %v2479, %v2619
        %v2670 = vsub.f32 %v2482, %v2622
        %v2671 = vsub.f32 %v2520, %v2625
        %v2672 = vsub.f32 %v2523, %v2628
        %v2673 = vsub.f32 %v2528, %v2631
        %v2674 = vsub.f32 %v2531, %v2634
        %v2675 = vsub.f32 %v2536, %v2637
        %v2676 = vsub.f32 %v2539, %v2640
        %v2677 = vsub.f32 %v2544, %v2643
        %v2678 = vsub.f32 %v2547, %v2646
        %v2679 = vmul.f32 %v2647, 1.442695
        %v2680 = vpow.pop %v2679
        %v2681 = vmul.f32 %v2648, 1.442695
        %v2682 = vpow.pop %v2681
        %v2683 = vmul.f32 %v2649, 1.442695
        %v2684 = vpow.pop %v2683
        %v2685 = vmul.f32 %v2650, 1.442695
        %v2686 = vpow.pop %v2685
        %v2687 = vmul.f32 %v2651, 1.442695
        %v2688 = vpow.pop %v2687
        %v2689 = vmul.f32 %v2652, 1.442695
        %v2690 = vpow.pop %v2689
        %v2691 = vmul.f32 %v2653, 1.442695
        %v2692 = vpow.pop %v2691
        %v2693 = vmul.f32 %v2654, 1.442695
        %v2694 = vpow.pop %v2693
        %v2695 = vmul.f32 %v2655, 1.442695
        %v2696 = vpow.pop %v2695
        %v2697 = vmul.f32 %v2656, 1.442695
        %v2698 = vpow.pop %v2697
        %v2699 = vmul.f32 %v2657, 1.442695
        %v2700 = vpow.pop %v2699
        %v2701 = vmul.f32 %v2658, 1.442695
        %v2702 = vpow.pop %v2701
        %v2703 = vmul.f32 %v2659, 1.442695
        %v2704 = vpow.pop %v2703
        %v2705 = vmul.f32 %v2660, 1.442695
        %v2706 = vpow.pop %v2705
        %v2707 = vmul.f32 %v2661, 1.442695
        %v2708 = vpow.pop %v2707
        %v2709 = vmul.f32 %v2662, 1.442695
        %v2710 = vpow.pop %v2709
        %v2711 = vmul.f32 %v2663, 1.442695
        %v2712 = vpow.pop %v2711
        %v2713 = vmul.f32 %v2664, 1.442695
        %v2714 = vpow.pop %v2713
        %v2715 = vmul.f32 %v2665, 1.442695
        %v2716 = vpow.pop %v2715
        %v2717 = vmul.f32 %v2666, 1.442695
        %v2718 = vpow.pop %v2717
        %v2719 = vmul.f32 %v2667, 1.442695
        %v2720 = vpow.pop %v2719
        %v2721 = vmul.f32 %v2668, 1.442695
        %v2722 = vpow.pop %v2721
        %v2723 = vmul.f32 %v2669, 1.442695
        %v2724 = vpow.pop %v2723
        %v2725 = vmul.f32 %v2670, 1.442695
        %v2726 = vpow.pop %v2725
        %v2727 = vmul.f32 %v2671, 1.442695
        %v2728 = vpow.pop %v2727
        %v2729 = vmul.f32 %v2672, 1.442695
        %v2730 = vpow.pop %v2729
        %v2731 = vmul.f32 %v2673, 1.442695
        %v2732 = vpow.pop %v2731
        %v2733 = vmul.f32 %v2674, 1.442695
        %v2734 = vpow.pop %v2733
        %v2735 = vmul.f32 %v2675, 1.442695
        %v2736 = vpow.pop %v2735
        %v2737 = vmul.f32 %v2676, 1.442695
        %v2738 = vpow.pop %v2737
        %v2739 = vmul.f32 %v2677, 1.442695
        %v2740 = vpow.pop %v2739
        %v2741 = vmul.f32 %v2678, 1.442695
        %v2742 = vpow.pop %v2741
        %v2743 = vsel %vm2550, %v2680, 0.0
        %2744 = vadd.xlane.f32.xlu0 %v2743
        %v2745 = vpop.xlane.xlu0 %2744
        %v2746 = vsel %vm2550, %v2682, 0.0
        %2747 = vadd.xlane.f32.xlu0 %v2746
        %v2748 = vpop.xlane.xlu0 %2747
        %v2749 = vsel %vm2550, %v2684, 0.0
        %2750 = vadd.xlane.f32.xlu0 %v2749
        %v2751 = vpop.xlane.xlu0 %2750
        %v2752 = vsel %vm2550, %v2686, 0.0
        %2753 = vadd.xlane.f32.xlu0 %v2752
        %v2754 = vpop.xlane.xlu0 %2753
        %v2755 = vsel %vm2550, %v2688, 0.0
        %2756 = vadd.xlane.f32.xlu0 %v2755
        %v2757 = vpop.xlane.xlu0 %2756
        %v2758 = vsel %vm2550, %v2690, 0.0
        %2759 = vadd.xlane.f32.xlu0 %v2758
        %v2760 = vpop.xlane.xlu0 %2759
        %v2761 = vsel %vm2550, %v2692, 0.0
        %2762 = vadd.xlane.f32.xlu0 %v2761
        %v2763 = vpop.xlane.xlu0 %2762
        %v2764 = vsel %vm2550, %v2694, 0.0
        %2765 = vadd.xlane.f32.xlu0 %v2764
        %v2766 = vpop.xlane.xlu0 %2765
        %v2767 = vsel %vm2550, %v2696, 0.0
        %2768 = vadd.xlane.f32.xlu0 %v2767
        %v2769 = vpop.xlane.xlu0 %2768
        %v2770 = vsel %vm2550, %v2698, 0.0
        %2771 = vadd.xlane.f32.xlu0 %v2770
        %v2772 = vpop.xlane.xlu0 %2771
        %v2773 = vsel %vm2550, %v2700, 0.0
        %2774 = vadd.xlane.f32.xlu0 %v2773
        %v2775 = vpop.xlane.xlu0 %2774
        %v2776 = vsel %vm2550, %v2702, 0.0
        %2777 = vadd.xlane.f32.xlu0 %v2776
        %v2778 = vpop.xlane.xlu0 %2777
        %v2779 = vsel %vm2550, %v2704, 0.0
        %2780 = vadd.xlane.f32.xlu0 %v2779
        %v2781 = vpop.xlane.xlu0 %2780
        %v2782 = vsel %vm2550, %v2706, 0.0
        %2783 = vadd.xlane.f32.xlu0 %v2782
        %v2784 = vpop.xlane.xlu0 %2783
        %v2785 = vsel %vm2550, %v2708, 0.0
        %2786 = vadd.xlane.f32.xlu0 %v2785
        %v2787 = vpop.xlane.xlu0 %2786
        %v2788 = vsel %vm2550, %v2710, 0.0
        %2789 = vadd.xlane.f32.xlu0 %v2788
        %v2790 = vpop.xlane.xlu0 %2789
        %v2791 = vsel %vm2550, %v2712, 0.0
        %2792 = vadd.xlane.f32.xlu0 %v2791
        %v2793 = vpop.xlane.xlu0 %2792
        %v2794 = vsel %vm2550, %v2714, 0.0
        %2795 = vadd.xlane.f32.xlu0 %v2794
        %v2796 = vpop.xlane.xlu0 %2795
        %v2797 = vsel %vm2550, %v2716, 0.0
        %2798 = vadd.xlane.f32.xlu0 %v2797
        %v2799 = vpop.xlane.xlu0 %2798
        %v2800 = vsel %vm2550, %v2718, 0.0
        %2801 = vadd.xlane.f32.xlu0 %v2800
        %v2802 = vpop.xlane.xlu0 %2801
        %v2803 = vsel %vm2550, %v2720, 0.0
        %2804 = vadd.xlane.f32.xlu0 %v2803
        %v2805 = vpop.xlane.xlu0 %2804
        %v2806 = vsel %vm2550, %v2722, 0.0
        %2807 = vadd.xlane.f32.xlu0 %v2806
        %v2808 = vpop.xlane.xlu0 %2807
        %v2809 = vsel %vm2550, %v2724, 0.0
        %2810 = vadd.xlane.f32.xlu0 %v2809
        %v2811 = vpop.xlane.xlu0 %2810
        %v2812 = vsel %vm2550, %v2726, 0.0
        %2813 = vadd.xlane.f32.xlu0 %v2812
        %v2814 = vpop.xlane.xlu0 %2813
        %v2815 = vsel %vm2550, %v2728, 0.0
        %2816 = vadd.xlane.f32.xlu0 %v2815
        %v2817 = vpop.xlane.xlu0 %2816
        %v2818 = vsel %vm2550, %v2730, 0.0
        %2819 = vadd.xlane.f32.xlu0 %v2818
        %v2820 = vpop.xlane.xlu0 %2819
        %v2821 = vsel %vm2550, %v2732, 0.0
        %2822 = vadd.xlane.f32.xlu0 %v2821
        %v2823 = vpop.xlane.xlu0 %2822
        %v2824 = vsel %vm2550, %v2734, 0.0
        %2825 = vadd.xlane.f32.xlu0 %v2824
        %v2826 = vpop.xlane.xlu0 %2825
        %v2827 = vsel %vm2550, %v2736, 0.0
        %2828 = vadd.xlane.f32.xlu0 %v2827
        %v2829 = vpop.xlane.xlu0 %2828
        %v2830 = vsel %vm2550, %v2738, 0.0
        %2831 = vadd.xlane.f32.xlu0 %v2830
        %v2832 = vpop.xlane.xlu0 %2831
        %v2833 = vsel %vm2550, %v2740, 0.0
        %2834 = vadd.xlane.f32.xlu0 %v2833
        %v2835 = vpop.xlane.xlu0 %2834
        %v2836 = vsel %vm2550, %v2742, 0.0
        %2837 = vadd.xlane.f32.xlu0 %v2836
        %v2838 = vpop.xlane.xlu0 %2837
        %v2839 = vrcp.pop %v2745
        %v2840 = vrcp.pop %v2748
        %v2841 = vrcp.pop %v2751
        %v2842 = vrcp.pop %v2754
        %v2843 = vrcp.pop %v2757
        %v2844 = vrcp.pop %v2760
        %v2845 = vrcp.pop %v2763
        %v2846 = vrcp.pop %v2766
        %v2847 = vrcp.pop %v2769
        %v2848 = vrcp.pop %v2772
        %v2849 = vrcp.pop %v2775
        %v2850 = vrcp.pop %v2778
        %v2851 = vrcp.pop %v2781
        %v2852 = vrcp.pop %v2784
        %v2853 = vrcp.pop %v2787
        %v2854 = vrcp.pop %v2790
        %v2855 = vrcp.pop %v2793
        %v2856 = vrcp.pop %v2796
        %v2857 = vrcp.pop %v2799
        %v2858 = vrcp.pop %v2802
        %v2859 = vrcp.pop %v2805
        %v2860 = vrcp.pop %v2808
        %v2861 = vrcp.pop %v2811
        %v2862 = vrcp.pop %v2814
        %v2863 = vrcp.pop %v2817
        %v2864 = vrcp.pop %v2820
        %v2865 = vrcp.pop %v2823
        %v2866 = vrcp.pop %v2826
        %v2867 = vrcp.pop %v2829
        %v2868 = vrcp.pop %v2832
        %v2869 = vrcp.pop %v2835
        %v2870 = vrcp.pop %v2838
        %v2871 = vmul.f32 %v2680, %v2839
        %v2872 = vmul.f32 %v2682, %v2840
        %v2873 = vmul.f32 %v2684, %v2841
        %v2874 = vmul.f32 %v2686, %v2842
        %v2875 = vmul.f32 %v2688, %v2843
        %v2876 = vmul.f32 %v2690, %v2844
        %v2877 = vmul.f32 %v2692, %v2845
        %v2878 = vmul.f32 %v2694, %v2846
        %v2879 = vmul.f32 %v2696, %v2847
        %v2880 = vmul.f32 %v2698, %v2848
        %v2881 = vmul.f32 %v2700, %v2849
        %v2882 = vmul.f32 %v2702, %v2850
        %v2883 = vmul.f32 %v2704, %v2851
        %v2884 = vmul.f32 %v2706, %v2852
        %v2885 = vmul.f32 %v2708, %v2853
        %v2886 = vmul.f32 %v2710, %v2854
        %v2887 = vmul.f32 %v2712, %v2855
        %v2888 = vmul.f32 %v2714, %v2856
        %v2889 = vmul.f32 %v2716, %v2857
        %v2890 = vmul.f32 %v2718, %v2858
        %v2891 = vmul.f32 %v2720, %v2859
        %v2892 = vmul.f32 %v2722, %v2860
        %v2893 = vmul.f32 %v2724, %v2861
        %v2894 = vmul.f32 %v2726, %v2862
        %v2895 = vmul.f32 %v2728, %v2863
        %v2896 = vmul.f32 %v2730, %v2864
        %v2897 = vmul.f32 %v2732, %v2865
        %v2898 = vmul.f32 %v2734, %v2866
        %v2899 = vmul.f32 %v2736, %v2867
        %v2900 = vmul.f32 %v2738, %v2868
        %v2901 = vmul.f32 %v2740, %v2869
        %v2902 = vmul.f32 %v2742, %v2870
        %v2903 = vpack.c.bf16 %v2872, %v2871
        %v2904 = vpack.c.bf16 %v2874, %v2873
        %v2905 = vpack.c.bf16 %v2876, %v2875
        %v2906 = vpack.c.bf16 %v2878, %v2877
        %v2907 = vpack.c.bf16 %v2880, %v2879
        %v2908 = vpack.c.bf16 %v2882, %v2881
        %v2909 = vpack.c.bf16 %v2884, %v2883
        %v2910 = vpack.c.bf16 %v2886, %v2885
        %v2911 = vpack.c.bf16 %v2888, %v2887
        %v2912 = vpack.c.bf16 %v2890, %v2889
        %v2913 = vpack.c.bf16 %v2892, %v2891
        %v2914 = vpack.c.bf16 %v2894, %v2893
        %v2915 = vpack.c.bf16 %v2896, %v2895
        %v2916 = vpack.c.bf16 %v2898, %v2897
        %v2917 = vpack.c.bf16 %v2900, %v2899
        %v2918 = vpack.c.bf16 %v2902, %v2901
        %v2920 = vsel %vm2550, %v2903, 0
        %v2923 = vsel %vm2550, %v2904, 0
        %v2926 = vsel %vm2550, %v2905, 0
        %v2929 = vsel %vm2550, %v2906, 0
        %2931 = vmatprep.subr.bf16.mxu0 0
        %2932 = vmatpush1.bf16.msra.mxu0 0
        %2933 = vmatprep.subr.bf16.mxu0 0
        %2934 = vmatpush1.bf16.msra.mxu0 0
        %2935 = vmatprep.subr.bf16.mxu0 0
        %2936 = vmatpush1.bf16.msra.mxu0 0
        %2937 = vmatprep.subr.bf16.mxu0 0
        %2938 = vmatpush1.bf16.msra.mxu0 0
        %2939 = vmatprep.subr.bf16.mxu0 0
        %2940 = vmatpush1.bf16.msra.mxu0 %v2277
        %2941 = vmatprep.subr.bf16.mxu0 0
        %2942 = vmatpush1.bf16.msra.mxu0 %v2276
        %2943 = vmatprep.subr.bf16.mxu0 0
        %2944 = vmatpush1.bf16.msra.mxu0 %v2275
        %2945 = vmatprep.subr.bf16.mxu0 0
        %2946 = vmatpush1.bf16.msra.mxu0 %v2274
        %2947 = vmatprep.subr.bf16.mxu0 0
        %2948 = vmatpush2.bf16.msra.mxu0 0
        %2949 = vmatprep.subr.bf16.mxu0 0
        %2950 = vmatpush2.bf16.msra.mxu0 0
        %2951 = vmatprep.subr.bf16.mxu0 0
        %2952 = vmatpush2.bf16.msra.mxu0 0
        %2953 = vmatprep.subr.bf16.mxu0 0
        %2954 = vmatpush2.bf16.msra.mxu0 0
        %2955 = vmatprep.subr.bf16.mxu0 0
        %2956 = vmatpush2.bf16.msra.mxu0 0
        %2957 = vmatprep.subr.bf16.mxu0 0
        %2958 = vmatpush2.bf16.msra.mxu0 0
        %2959 = vmatprep.subr.bf16.mxu0 0
        %2960 = vmatpush2.bf16.msra.mxu0 0
        %2961 = vmatprep.subr.bf16.mxu0 0
        %2962 = vmatpush2.bf16.msra.mxu0 0
        %2963 = vmatprep.mubr.bf16.mxu0 0
        %2964 = vmatmul.mubr.bf16.gmra.mxu0 %v2920
        %v2965 = vpop.f32.mrf.mxu0
        %v2966 = vadd.f32 0.0, %v2965
        %v2967 = vpop.f32.mrf.mxu0
        %v2968 = vpop.f32.mrf.mxu0
        %v2969 = vadd.f32 0.0, %v2968
        %v2970 = vpop.f32.mrf.mxu0
        %2971 = vmatprep.mubr.bf16.mxu0 0
        %2972 = vmatmul.mubr.bf16.gmra.mxu0 %v2923
        %v2973 = vpop.f32.mrf.mxu0
        %v2974 = vadd.f32 0.0, %v2973
        %v2975 = vpop.f32.mrf.mxu0
        %v2976 = vpop.f32.mrf.mxu0
        %v2977 = vadd.f32 0.0, %v2976
        %v2978 = vpop.f32.mrf.mxu0
        %2979 = vmatprep.mubr.bf16.mxu0 0
        %2980 = vmatmul.mubr.bf16.gmra.mxu0 %v2926
        %v2981 = vpop.f32.mrf.mxu0
        %v2982 = vadd.f32 0.0, %v2981
        %v2983 = vpop.f32.mrf.mxu0
        %v2984 = vpop.f32.mrf.mxu0
        %v2985 = vadd.f32 0.0, %v2984
        %v2986 = vpop.f32.mrf.mxu0
        %2987 = vmatprep.mubr.bf16.mxu0 0
        %2988 = vmatmul.mubr.bf16.gmra.mxu0 %v2929
        %v2989 = vpop.f32.mrf.mxu0
        %v2990 = vadd.f32 0.0, %v2989
        %v2991 = vpop.f32.mrf.mxu0
        %v2992 = vpop.f32.mrf.mxu0
        %v2993 = vadd.f32 0.0, %v2992
        %v2994 = vpop.f32.mrf.mxu0
        %2995 = vdwg.mxu0
        %v2997 = vsel %vm2550, %v2907, 0
        %v3000 = vsel %vm2550, %v2908, 0
        %v3003 = vsel %vm2550, %v2909, 0
        %v3006 = vsel %vm2550, %v2910, 0
        %3008 = vmatprep.subr.bf16.mxu0 0
        %3009 = vmatpush1.bf16.msra.mxu0 0
        %3010 = vmatprep.subr.bf16.mxu0 0
        %3011 = vmatpush1.bf16.msra.mxu0 0
        %3012 = vmatprep.subr.bf16.mxu0 0
        %3013 = vmatpush1.bf16.msra.mxu0 0
        %3014 = vmatprep.subr.bf16.mxu0 0
        %3015 = vmatpush1.bf16.msra.mxu0 0
        %3016 = vmatprep.subr.bf16.mxu0 0
        %3017 = vmatpush1.bf16.msra.mxu0 %v2281
        %3018 = vmatprep.subr.bf16.mxu0 0
        %3019 = vmatpush1.bf16.msra.mxu0 %v2280
        %3020 = vmatprep.subr.bf16.mxu0 0
        %3021 = vmatpush1.bf16.msra.mxu0 %v2279
        %3022 = vmatprep.subr.bf16.mxu0 0
        %3023 = vmatpush1.bf16.msra.mxu0 %v2278
        %3024 = vmatprep.subr.bf16.mxu0 0
        %3025 = vmatpush2.bf16.msra.mxu0 0
        %3026 = vmatprep.subr.bf16.mxu0 0
        %3027 = vmatpush2.bf16.msra.mxu0 0
        %3028 = vmatprep.subr.bf16.mxu0 0
        %3029 = vmatpush2.bf16.msra.mxu0 0
        %3030 = vmatprep.subr.bf16.mxu0 0
        %3031 = vmatpush2.bf16.msra.mxu0 0
        %3032 = vmatprep.subr.bf16.mxu0 0
        %3033 = vmatpush2.bf16.msra.mxu0 0
        %3034 = vmatprep.subr.bf16.mxu0 0
        %3035 = vmatpush2.bf16.msra.mxu0 0
        %3036 = vmatprep.subr.bf16.mxu0 0
        %3037 = vmatpush2.bf16.msra.mxu0 0
        %3038 = vmatprep.subr.bf16.mxu0 0
        %3039 = vmatpush2.bf16.msra.mxu0 0
        %3040 = vmatprep.mubr.bf16.mxu0 0
        %3041 = vmatmul.mubr.bf16.gmra.mxu0 %v2997
        %v3042 = vpop.f32.mrf.mxu0
        %v3043 = vadd.f32 0.0, %v3042
        %v3044 = vpop.f32.mrf.mxu0
        %v3045 = vpop.f32.mrf.mxu0
        %v3046 = vadd.f32 0.0, %v3045
        %v3047 = vpop.f32.mrf.mxu0
        %3048 = vmatprep.mubr.bf16.mxu0 0
        %3049 = vmatmul.mubr.bf16.gmra.mxu0 %v3000
        %v3050 = vpop.f32.mrf.mxu0
        %v3051 = vadd.f32 0.0, %v3050
        %v3052 = vpop.f32.mrf.mxu0
        %v3053 = vpop.f32.mrf.mxu0
        %v3054 = vadd.f32 0.0, %v3053
        %v3055 = vpop.f32.mrf.mxu0
        %3056 = vmatprep.mubr.bf16.mxu0 0
        %3057 = vmatmul.mubr.bf16.gmra.mxu0 %v3003
        %v3058 = vpop.f32.mrf.mxu0
        %v3059 = vadd.f32 0.0, %v3058
        %v3060 = vpop.f32.mrf.mxu0
        %v3061 = vpop.f32.mrf.mxu0
        %v3062 = vadd.f32 0.0, %v3061
        %v3063 = vpop.f32.mrf.mxu0
        %3064 = vmatprep.mubr.bf16.mxu0 0
        %3065 = vmatmul.mubr.bf16.gmra.mxu0 %v3006
        %v3066 = vpop.f32.mrf.mxu0
        %v3067 = vadd.f32 0.0, %v3066
        %v3068 = vpop.f32.mrf.mxu0
        %v3069 = vpop.f32.mrf.mxu0
        %v3070 = vadd.f32 0.0, %v3069
        %v3071 = vpop.f32.mrf.mxu0
        %3072 = vdwg.mxu0
        %v3074 = vsel %vm2550, %v2911, 0
        %v3077 = vsel %vm2550, %v2912, 0
        %v3080 = vsel %vm2550, %v2913, 0
        %v3083 = vsel %vm2550, %v2914, 0
        %3085 = vmatprep.subr.bf16.mxu0 0
        %3086 = vmatpush1.bf16.msra.mxu0 0
        %3087 = vmatprep.subr.bf16.mxu0 0
        %3088 = vmatpush1.bf16.msra.mxu0 0
        %3089 = vmatprep.subr.bf16.mxu0 0
        %3090 = vmatpush1.bf16.msra.mxu0 0
        %3091 = vmatprep.subr.bf16.mxu0 0
        %3092 = vmatpush1.bf16.msra.mxu0 0
        %3093 = vmatprep.subr.bf16.mxu0 0
        %3094 = vmatpush1.bf16.msra.mxu0 %v2285
        %3095 = vmatprep.subr.bf16.mxu0 0
        %3096 = vmatpush1.bf16.msra.mxu0 %v2284
        %3097 = vmatprep.subr.bf16.mxu0 0
        %3098 = vmatpush1.bf16.msra.mxu0 %v2283
        %3099 = vmatprep.subr.bf16.mxu0 0
        %3100 = vmatpush1.bf16.msra.mxu0 %v2282
        %3101 = vmatprep.subr.bf16.mxu0 0
        %3102 = vmatpush2.bf16.msra.mxu0 0
        %3103 = vmatprep.subr.bf16.mxu0 0
        %3104 = vmatpush2.bf16.msra.mxu0 0
        %3105 = vmatprep.subr.bf16.mxu0 0
        %3106 = vmatpush2.bf16.msra.mxu0 0
        %3107 = vmatprep.subr.bf16.mxu0 0
        %3108 = vmatpush2.bf16.msra.mxu0 0
        %3109 = vmatprep.subr.bf16.mxu0 0
        %3110 = vmatpush2.bf16.msra.mxu0 0
        %3111 = vmatprep.subr.bf16.mxu0 0
        %3112 = vmatpush2.bf16.msra.mxu0 0
        %3113 = vmatprep.subr.bf16.mxu0 0
        %3114 = vmatpush2.bf16.msra.mxu0 0
        %3115 = vmatprep.subr.bf16.mxu0 0
        %3116 = vmatpush2.bf16.msra.mxu0 0
        %3117 = vmatprep.mubr.bf16.mxu0 0
        %3118 = vmatmul.mubr.bf16.gmra.mxu0 %v3074
        %v3119 = vpop.f32.mrf.mxu0
        %v3120 = vadd.f32 0.0, %v3119
        %v3121 = vpop.f32.mrf.mxu0
        %v3122 = vpop.f32.mrf.mxu0
        %v3123 = vadd.f32 0.0, %v3122
        %v3124 = vpop.f32.mrf.mxu0
        %3125 = vmatprep.mubr.bf16.mxu0 0
        %3126 = vmatmul.mubr.bf16.gmra.mxu0 %v3077
        %v3127 = vpop.f32.mrf.mxu0
        %v3128 = vadd.f32 0.0, %v3127
        %v3129 = vpop.f32.mrf.mxu0
        %v3130 = vpop.f32.mrf.mxu0
        %v3131 = vadd.f32 0.0, %v3130
        %v3132 = vpop.f32.mrf.mxu0
        %3133 = vmatprep.mubr.bf16.mxu0 0
        %3134 = vmatmul.mubr.bf16.gmra.mxu0 %v3080
        %v3135 = vpop.f32.mrf.mxu0
        %v3136 = vadd.f32 0.0, %v3135
        %v3137 = vpop.f32.mrf.mxu0
        %v3138 = vpop.f32.mrf.mxu0
        %v3139 = vadd.f32 0.0, %v3138
        %v3140 = vpop.f32.mrf.mxu0
        %3141 = vmatprep.mubr.bf16.mxu0 0
        %3142 = vmatmul.mubr.bf16.gmra.mxu0 %v3083
        %v3143 = vpop.f32.mrf.mxu0
        %v3144 = vadd.f32 0.0, %v3143
        %v3145 = vpop.f32.mrf.mxu0
        %v3146 = vpop.f32.mrf.mxu0
        %v3147 = vadd.f32 0.0, %v3146
        %v3148 = vpop.f32.mrf.mxu0
        %3149 = vdwg.mxu0
        %v3151 = vsel %vm2550, %v2915, 0
        %v3154 = vsel %vm2550, %v2916, 0
        %v3157 = vsel %vm2550, %v2917, 0
        %v3160 = vsel %vm2550, %v2918, 0
        %3162 = vmatprep.subr.bf16.mxu0 0
        %3163 = vmatpush1.bf16.msra.mxu0 0
        %3164 = vmatprep.subr.bf16.mxu0 0
        %3165 = vmatpush1.bf16.msra.mxu0 0
        %3166 = vmatprep.subr.bf16.mxu0 0
        %3167 = vmatpush1.bf16.msra.mxu0 0
        %3168 = vmatprep.subr.bf16.mxu0 0
        %3169 = vmatpush1.bf16.msra.mxu0 0
        %3170 = vmatprep.subr.bf16.mxu0 0
        %3171 = vmatpush1.bf16.msra.mxu0 %v2289
        %3172 = vmatprep.subr.bf16.mxu0 0
        %3173 = vmatpush1.bf16.msra.mxu0 %v2288
        %3174 = vmatprep.subr.bf16.mxu0 0
        %3175 = vmatpush1.bf16.msra.mxu0 %v2287
        %3176 = vmatprep.subr.bf16.mxu0 0
        %3177 = vmatpush1.bf16.msra.mxu0 %v2286
        %3178 = vmatprep.subr.bf16.mxu0 0
        %3179 = vmatpush2.bf16.msra.mxu0 0
        %3180 = vmatprep.subr.bf16.mxu0 0
        %3181 = vmatpush2.bf16.msra.mxu0 0
        %3182 = vmatprep.subr.bf16.mxu0 0
        %3183 = vmatpush2.bf16.msra.mxu0 0
        %3184 = vmatprep.subr.bf16.mxu0 0
        %3185 = vmatpush2.bf16.msra.mxu0 0
        %3186 = vmatprep.subr.bf16.mxu0 0
        %3187 = vmatpush2.bf16.msra.mxu0 0
        %3188 = vmatprep.subr.bf16.mxu0 0
        %3189 = vmatpush2.bf16.msra.mxu0 0
        %3190 = vmatprep.subr.bf16.mxu0 0
        %3191 = vmatpush2.bf16.msra.mxu0 0
        %3192 = vmatprep.subr.bf16.mxu0 0
        %3193 = vmatpush2.bf16.msra.mxu0 0
        %3194 = vmatprep.mubr.bf16.mxu0 0
        %3195 = vmatmul.mubr.bf16.gmra.mxu0 %v3151
        %v3196 = vpop.f32.mrf.mxu0
        %v3197 = vadd.f32 0.0, %v3196
        %v3198 = vpop.f32.mrf.mxu0
        %v3199 = vpop.f32.mrf.mxu0
        %v3200 = vadd.f32 0.0, %v3199
        %v3201 = vpop.f32.mrf.mxu0
        %3202 = vmatprep.mubr.bf16.mxu0 0
        %3203 = vmatmul.mubr.bf16.gmra.mxu0 %v3154
        %v3204 = vpop.f32.mrf.mxu0
        %v3205 = vadd.f32 0.0, %v3204
        %v3206 = vpop.f32.mrf.mxu0
        %v3207 = vpop.f32.mrf.mxu0
        %v3208 = vadd.f32 0.0, %v3207
        %v3209 = vpop.f32.mrf.mxu0
        %3210 = vmatprep.mubr.bf16.mxu0 0
        %3211 = vmatmul.mubr.bf16.gmra.mxu0 %v3157
        %v3212 = vpop.f32.mrf.mxu0
        %v3213 = vadd.f32 0.0, %v3212
        %v3214 = vpop.f32.mrf.mxu0
        %v3215 = vpop.f32.mrf.mxu0
        %v3216 = vadd.f32 0.0, %v3215
        %v3217 = vpop.f32.mrf.mxu0
        %3218 = vmatprep.mubr.bf16.mxu0 0
        %3219 = vmatmul.mubr.bf16.gmra.mxu0 %v3160
        %v3220 = vpop.f32.mrf.mxu0
        %v3221 = vadd.f32 0.0, %v3220
        %v3222 = vpop.f32.mrf.mxu0
        %v3223 = vpop.f32.mrf.mxu0
        %v3224 = vadd.f32 0.0, %v3223
        %v3225 = vpop.f32.mrf.mxu0
        %3226 = vdwg.mxu0
        %v3227 = vpack.c.bf16 %v2969, %v2966
        %v3228 = vpack.c.bf16 %v3123, %v3120
        %v3229 = vpack.c.bf16 %v2977, %v2974
        %v3230 = vpack.c.bf16 %v3131, %v3128
        %v3231 = vpack.c.bf16 %v2985, %v2982
        %v3232 = vpack.c.bf16 %v3139, %v3136
        %v3233 = vpack.c.bf16 %v2993, %v2990
        %v3234 = vpack.c.bf16 %v3147, %v3144
        %v3235 = vpack.c.bf16 %v3046, %v3043
        %v3236 = vpack.c.bf16 %v3200, %v3197
        %v3237 = vpack.c.bf16 %v3054, %v3051
        %v3238 = vpack.c.bf16 %v3208, %v3205
        %v3239 = vpack.c.bf16 %v3062, %v3059
        %v3240 = vpack.c.bf16 %v3216, %v3213
        %v3241 = vpack.c.bf16 %v3070, %v3067
        %v3242 = vpack.c.bf16 %v3224, %v3221
        %v3243 = vld [vmem:[%s603] sm:$0xff]
        %v3244 = vld [vmem:[%s603 + $0x8] sm:$0xff]
        %v3245 = vld [vmem:[%s603 + $0x10] sm:$0xff]
        %v3246 = vld [vmem:[%s603 + $0x18] sm:$0xff]
        %v3247 = vld [vmem:[%s603 + $0x20] sm:$0xff]
        %v3248 = vld [vmem:[%s603 + $0x28] sm:$0xff]
        %v3249 = vld [vmem:[%s603 + $0x30] sm:$0xff]
        %v3250 = vld [vmem:[%s603 + $0x38] sm:$0xff]
        %v3251 = vld [vmem:[%s603 + $0x40] sm:$0xff]
        %v3252 = vld [vmem:[%s603 + $0x48] sm:$0xff]
        %v3253 = vld [vmem:[%s603 + $0x50] sm:$0xff]
        %v3254 = vld [vmem:[%s603 + $0x58] sm:$0xff]
        %v3255 = vld [vmem:[%s603 + $0x60] sm:$0xff]
        %v3256 = vld [vmem:[%s603 + $0x68] sm:$0xff]
        %v3257 = vld [vmem:[%s603 + $0x70] sm:$0xff]
        %v3258 = vld [vmem:[%s603 + $0x78] sm:$0xff]
        %v3259 = vld [vmem:[%s603 + $0x80] sm:$0xff]
        %v3260 = vld [vmem:[%s603 + $0x88] sm:$0xff]
        %v3261 = vld [vmem:[%s603 + $0x90] sm:$0xff]
        %v3262 = vld [vmem:[%s603 + $0x98] sm:$0xff]
        %v3263 = vld [vmem:[%s603 + $0xa0] sm:$0xff]
        %v3264 = vld [vmem:[%s603 + $0xa8] sm:$0xff]
        %v3265 = vld [vmem:[%s603 + $0xb0] sm:$0xff]
        %v3266 = vld [vmem:[%s603 + $0xb8] sm:$0xff]
        %v3267 = vld [vmem:[%s603 + $0xc0] sm:$0xff]
        %v3268 = vld [vmem:[%s603 + $0xc8] sm:$0xff]
        %v3269 = vld [vmem:[%s603 + $0xd0] sm:$0xff]
        %v3270 = vld [vmem:[%s603 + $0xd8] sm:$0xff]
        %v3271 = vld [vmem:[%s603 + $0xe0] sm:$0xff]
        %v3272 = vld [vmem:[%s603 + $0xe8] sm:$0xff]
        %v3273 = vld [vmem:[%s603 + $0xf0] sm:$0xff]
        %v3274 = vld [vmem:[%s603 + $0xf8] sm:$0xff]
        %v3275 = vld [vmem:[%s722] sm:$0x3]
        %v3276 = vunpack.c.l.bf16 %v3275
        %v3278 = vlaneseq
        %v3279 = vshrl.u32 %v3278, 7
        %v3280 = vsub.s32 0, %v3279
        %v3281 = vrot.slane %v3276, %v3280
        %v3282 = vlaneseq
        %v3283 = vshrl.u32 %v3282, 7
        %v3284 = vsub.s32 2, %v3283
        %v3285 = vrot.slane %v3276, %v3284
        %v3288 = vlaneseq
        %v3289 = vshrl.u32 %v3288, 7
        %v3290 = vsub.s32 0, %v3289
        %v3291 = vrot.slane %v3281, %v3290
        %v3292 = vlaneseq
        %v3293 = vshrl.u32 %v3292, 7
        %v3294 = vsub.s32 0, %v3293
        %v3295 = vrot.slane %v3285, %v3294
        %v3328 = vunpack.c.l.b16 %v3243
        %v3329 = vunpack.c.h.b16 %v3243
        %v3330 = vunpack.c.l.b16 %v3244
        %v3331 = vunpack.c.h.b16 %v3244
        %v3332 = vunpack.c.l.b16 %v3245
        %v3333 = vunpack.c.h.b16 %v3245
        %v3334 = vunpack.c.l.b16 %v3246
        %v3335 = vunpack.c.h.b16 %v3246
        %v3336 = vunpack.c.l.b16 %v3247
        %v3337 = vunpack.c.h.b16 %v3247
        %v3338 = vunpack.c.l.b16 %v3248
        %v3339 = vunpack.c.h.b16 %v3248
        %v3340 = vunpack.c.l.b16 %v3249
        %v3341 = vunpack.c.h.b16 %v3249
        %v3342 = vunpack.c.l.b16 %v3250
        %v3343 = vunpack.c.h.b16 %v3250
        %v3344 = vunpack.c.l.b16 %v3251
        %v3345 = vunpack.c.h.b16 %v3251
        %v3346 = vunpack.c.l.b16 %v3252
        %v3347 = vunpack.c.h.b16 %v3252
        %v3348 = vunpack.c.l.b16 %v3253
        %v3349 = vunpack.c.h.b16 %v3253
        %v3350 = vunpack.c.l.b16 %v3254
        %v3351 = vunpack.c.h.b16 %v3254
        %v3352 = vunpack.c.l.b16 %v3255
        %v3353 = vunpack.c.h.b16 %v3255
        %v3354 = vunpack.c.l.b16 %v3256
        %v3355 = vunpack.c.h.b16 %v3256
        %v3356 = vunpack.c.l.b16 %v3257
        %v3357 = vunpack.c.h.b16 %v3257
        %v3358 = vunpack.c.l.b16 %v3258
        %v3359 = vunpack.c.h.b16 %v3258
        %v3360 = vunpack.c.l.b16 %v3259
        %v3361 = vunpack.c.h.b16 %v3259
        %v3362 = vunpack.c.l.b16 %v3260
        %v3363 = vunpack.c.h.b16 %v3260
        %v3364 = vunpack.c.l.b16 %v3261
        %v3365 = vunpack.c.h.b16 %v3261
        %v3366 = vunpack.c.l.b16 %v3262
        %v3367 = vunpack.c.h.b16 %v3262
        %v3368 = vunpack.c.l.b16 %v3263
        %v3369 = vunpack.c.h.b16 %v3263
        %v3370 = vunpack.c.l.b16 %v3264
        %v3371 = vunpack.c.h.b16 %v3264
        %v3372 = vunpack.c.l.b16 %v3265
        %v3373 = vunpack.c.h.b16 %v3265
        %v3374 = vunpack.c.l.b16 %v3266
        %v3375 = vunpack.c.h.b16 %v3266
        %v3376 = vunpack.c.l.b16 %v3267
        %v3377 = vunpack.c.h.b16 %v3267
        %v3378 = vunpack.c.l.b16 %v3268
        %v3379 = vunpack.c.h.b16 %v3268
        %v3380 = vunpack.c.l.b16 %v3269
        %v3381 = vunpack.c.h.b16 %v3269
        %v3382 = vunpack.c.l.b16 %v3270
        %v3383 = vunpack.c.h.b16 %v3270
        %v3384 = vunpack.c.l.b16 %v3271
        %v3385 = vunpack.c.h.b16 %v3271
        %v3386 = vunpack.c.l.b16 %v3272
        %v3387 = vunpack.c.h.b16 %v3272
        %v3388 = vunpack.c.l.b16 %v3273
        %v3389 = vunpack.c.h.b16 %v3273
        %v3390 = vunpack.c.l.b16 %v3274
        %v3391 = vunpack.c.h.b16 %v3274
        %v3392 = vpack.c.b16 %v3330, %v3328
        %v3393 = vpack.c.b16 %v3331, %v3329
        %v3394 = vpack.c.b16 %v3334, %v3332
        %v3395 = vpack.c.b16 %v3335, %v3333
        %v3396 = vpack.c.b16 %v3338, %v3336
        %v3397 = vpack.c.b16 %v3339, %v3337
        %v3398 = vpack.c.b16 %v3342, %v3340
        %v3399 = vpack.c.b16 %v3343, %v3341
        %v3400 = vpack.c.b16 %v3346, %v3344
        %v3401 = vpack.c.b16 %v3347, %v3345
        %v3402 = vpack.c.b16 %v3350, %v3348
        %v3403 = vpack.c.b16 %v3351, %v3349
        %v3404 = vpack.c.b16 %v3354, %v3352
        %v3405 = vpack.c.b16 %v3355, %v3353
        %v3406 = vpack.c.b16 %v3358, %v3356
        %v3407 = vpack.c.b16 %v3359, %v3357
        %v3408 = vpack.c.b16 %v3362, %v3360
        %v3409 = vpack.c.b16 %v3363, %v3361
        %v3410 = vpack.c.b16 %v3366, %v3364
        %v3411 = vpack.c.b16 %v3367, %v3365
        %v3412 = vpack.c.b16 %v3370, %v3368
        %v3413 = vpack.c.b16 %v3371, %v3369
        %v3414 = vpack.c.b16 %v3374, %v3372
        %v3415 = vpack.c.b16 %v3375, %v3373
        %v3416 = vpack.c.b16 %v3378, %v3376
        %v3417 = vpack.c.b16 %v3379, %v3377
        %v3418 = vpack.c.b16 %v3382, %v3380
        %v3419 = vpack.c.b16 %v3383, %v3381
        %v3420 = vpack.c.b16 %v3386, %v3384
        %v3421 = vpack.c.b16 %v3387, %v3385
        %v3422 = vpack.c.b16 %v3390, %v3388
        %v3423 = vpack.c.b16 %v3391, %v3389
        %3456 = vmatprep.subr.bf16.mxu0 %v3407
        %3457 = vmatpush1.bf16.msra.mxu0 %v3406
        %3458 = vmatprep.subr.bf16.mxu0 %v3405
        %3459 = vmatpush1.bf16.msra.mxu0 %v3404
        %3460 = vmatprep.subr.bf16.mxu0 %v3403
        %3461 = vmatpush1.bf16.msra.mxu0 %v3402
        %3462 = vmatprep.subr.bf16.mxu0 %v3401
        %3463 = vmatpush1.bf16.msra.mxu0 %v3400
        %3464 = vmatprep.subr.bf16.mxu0 %v3399
        %3465 = vmatpush1.bf16.msra.mxu0 %v3398
        %3466 = vmatprep.subr.bf16.mxu0 %v3397
        %3467 = vmatpush1.bf16.msra.mxu0 %v3396
        %3468 = vmatprep.subr.bf16.mxu0 %v3395
        %3469 = vmatpush1.bf16.msra.mxu0 %v3394
        %3470 = vmatprep.subr.bf16.mxu0 %v3393
        %3471 = vmatpush1.bf16.msra.mxu0 %v3392
        %3472 = vmatprep.subr.bf16.mxu0 %v3423
        %3473 = vmatpush2.bf16.msra.mxu0 %v3422
        %3474 = vmatprep.subr.bf16.mxu0 %v3421
        %3475 = vmatpush2.bf16.msra.mxu0 %v3420
        %3476 = vmatprep.subr.bf16.mxu0 %v3419
        %3477 = vmatpush2.bf16.msra.mxu0 %v3418
        %3478 = vmatprep.subr.bf16.mxu0 %v3417
        %3479 = vmatpush2.bf16.msra.mxu0 %v3416
        %3480 = vmatprep.subr.bf16.mxu0 %v3415
        %3481 = vmatpush2.bf16.msra.mxu0 %v3414
        %3482 = vmatprep.subr.bf16.mxu0 %v3413
        %3483 = vmatpush2.bf16.msra.mxu0 %v3412
        %3484 = vmatprep.subr.bf16.mxu0 %v3411
        %3485 = vmatpush2.bf16.msra.mxu0 %v3410
        %3486 = vmatprep.subr.bf16.mxu0 %v3409
        %3487 = vmatpush2.bf16.msra.mxu0 %v3408
        %3488 = vmatprep.mubr.bf16.mxu0 %v3228
        %3489 = vmatmul.mubr.bf16.gmra.mxu0 %v3227
        %v3490 = vpop.f32.mrf.mxu0
        %v3491 = vadd.f32 %v3291, %v3490
        %v3492 = vpop.f32.mrf.mxu0
        %v3493 = vadd.f32 %v3295, %v3492
        %v3494 = vpop.f32.mrf.mxu0
        %v3495 = vadd.f32 %v3291, %v3494
        %v3496 = vpop.f32.mrf.mxu0
        %v3497 = vadd.f32 %v3295, %v3496
        %3498 = vmatprep.mubr.bf16.mxu0 %v3230
        %3499 = vmatmul.mubr.bf16.gmra.mxu0 %v3229
        %v3500 = vpop.f32.mrf.mxu0
        %v3501 = vadd.f32 %v3291, %v3500
        %v3502 = vpop.f32.mrf.mxu0
        %v3503 = vadd.f32 %v3295, %v3502
        %v3504 = vpop.f32.mrf.mxu0
        %v3505 = vadd.f32 %v3291, %v3504
        %v3506 = vpop.f32.mrf.mxu0
        %v3507 = vadd.f32 %v3295, %v3506
        %3508 = vmatprep.mubr.bf16.mxu0 %v3232
        %3509 = vmatmul.mubr.bf16.gmra.mxu0 %v3231
        %v3510 = vpop.f32.mrf.mxu0
        %v3511 = vadd.f32 %v3291, %v3510
        %v3512 = vpop.f32.mrf.mxu0
        %v3513 = vadd.f32 %v3295, %v3512
        %v3514 = vpop.f32.mrf.mxu0
        %v3515 = vadd.f32 %v3291, %v3514
        %v3516 = vpop.f32.mrf.mxu0
        %v3517 = vadd.f32 %v3295, %v3516
        %3518 = vmatprep.mubr.bf16.mxu0 %v3234
        %3519 = vmatmul.mubr.bf16.gmra.mxu0 %v3233
        %v3520 = vpop.f32.mrf.mxu0
        %v3521 = vadd.f32 %v3291, %v3520
        %v3522 = vpop.f32.mrf.mxu0
        %v3523 = vadd.f32 %v3295, %v3522
        %v3524 = vpop.f32.mrf.mxu0
        %v3525 = vadd.f32 %v3291, %v3524
        %v3526 = vpop.f32.mrf.mxu0
        %v3527 = vadd.f32 %v3295, %v3526
        %3528 = vmatprep.mubr.bf16.mxu0 %v3236
        %3529 = vmatmul.mubr.bf16.gmra.mxu0 %v3235
        %v3530 = vpop.f32.mrf.mxu0
        %v3531 = vadd.f32 %v3291, %v3530
        %v3532 = vpop.f32.mrf.mxu0
        %v3533 = vadd.f32 %v3295, %v3532
        %v3534 = vpop.f32.mrf.mxu0
        %v3535 = vadd.f32 %v3291, %v3534
        %v3536 = vpop.f32.mrf.mxu0
        %v3537 = vadd.f32 %v3295, %v3536
        %3538 = vmatprep.mubr.bf16.mxu0 %v3238
        %3539 = vmatmul.mubr.bf16.gmra.mxu0 %v3237
        %v3540 = vpop.f32.mrf.mxu0
        %v3541 = vadd.f32 %v3291, %v3540
        %v3542 = vpop.f32.mrf.mxu0
        %v3543 = vadd.f32 %v3295, %v3542
        %v3544 = vpop.f32.mrf.mxu0
        %v3545 = vadd.f32 %v3291, %v3544
        %v3546 = vpop.f32.mrf.mxu0
        %v3547 = vadd.f32 %v3295, %v3546
        %3548 = vmatprep.mubr.bf16.mxu0 %v3240
        %3549 = vmatmul.mubr.bf16.gmra.mxu0 %v3239
        %v3550 = vpop.f32.mrf.mxu0
        %v3551 = vadd.f32 %v3291, %v3550
        %v3552 = vpop.f32.mrf.mxu0
        %v3553 = vadd.f32 %v3295, %v3552
        %v3554 = vpop.f32.mrf.mxu0
        %v3555 = vadd.f32 %v3291, %v3554
        %v3556 = vpop.f32.mrf.mxu0
        %v3557 = vadd.f32 %v3295, %v3556
        %3558 = vmatprep.mubr.bf16.mxu0 %v3242
        %3559 = vmatmul.mubr.bf16.gmra.mxu0 %v3241
        %v3560 = vpop.f32.mrf.mxu0
        %v3561 = vadd.f32 %v3291, %v3560
        %v3562 = vpop.f32.mrf.mxu0
        %v3563 = vadd.f32 %v3295, %v3562
        %v3564 = vpop.f32.mrf.mxu0
        %v3565 = vadd.f32 %v3291, %v3564
        %v3566 = vpop.f32.mrf.mxu0
        %v3567 = vadd.f32 %v3295, %v3566
        %3568 = vdwg.mxu0
        %v3569 = vadd.f32 %v825, %v3491
        %v3570 = vadd.f32 %v826, %v3493
        %v3571 = vadd.f32 %v827, %v3495
        %v3572 = vadd.f32 %v828, %v3497
        %v3573 = vadd.f32 %v829, %v3501
        %v3574 = vadd.f32 %v830, %v3503
        %v3575 = vadd.f32 %v831, %v3505
        %v3576 = vadd.f32 %v832, %v3507
        %v3577 = vadd.f32 %v833, %v3511
        %v3578 = vadd.f32 %v834, %v3513
        %v3579 = vadd.f32 %v835, %v3515
        %v3580 = vadd.f32 %v836, %v3517
        %v3581 = vadd.f32 %v837, %v3521
        %v3582 = vadd.f32 %v838, %v3523
        %v3583 = vadd.f32 %v839, %v3525
        %v3584 = vadd.f32 %v840, %v3527
        %v3585 = vadd.f32 %v841, %v3531
        %v3586 = vadd.f32 %v842, %v3533
        %v3587 = vadd.f32 %v843, %v3535
        %v3588 = vadd.f32 %v844, %v3537
        %v3589 = vadd.f32 %v845, %v3541
        %v3590 = vadd.f32 %v846, %v3543
        %v3591 = vadd.f32 %v847, %v3545
        %v3592 = vadd.f32 %v848, %v3547
        %v3593 = vadd.f32 %v849, %v3551
        %v3594 = vadd.f32 %v850, %v3553
        %v3595 = vadd.f32 %v851, %v3555
        %v3596 = vadd.f32 %v852, %v3557
        %v3597 = vadd.f32 %v853, %v3561
        %v3598 = vadd.f32 %v854, %v3563
        %v3599 = vadd.f32 %v855, %v3565
        %v3600 = vadd.f32 %v856, %v3567
        %v3601 = vadd.f32 %v3569, %v3570
        %3602 = vadd.xlane.f32.xlu0 %v3601
        %v3603 = vpop.xlane.xlu0 %3602
        %v3604 = vadd.f32 %v3571, %v3572
        %3605 = vadd.xlane.f32.xlu0 %v3604
        %v3606 = vpop.xlane.xlu0 %3605
        %v3607 = vadd.f32 %v3573, %v3574
        %3608 = vadd.xlane.f32.xlu0 %v3607
        %v3609 = vpop.xlane.xlu0 %3608
        %v3610 = vadd.f32 %v3575, %v3576
        %3611 = vadd.xlane.f32.xlu0 %v3610
        %v3612 = vpop.xlane.xlu0 %3611
        %v3613 = vadd.f32 %v3577, %v3578
        %3614 = vadd.xlane.f32.xlu0 %v3613
        %v3615 = vpop.xlane.xlu0 %3614
        %v3616 = vadd.f32 %v3579, %v3580
        %3617 = vadd.xlane.f32.xlu0 %v3616
        %v3618 = vpop.xlane.xlu0 %3617
        %v3619 = vadd.f32 %v3581, %v3582
        %3620 = vadd.xlane.f32.xlu0 %v3619
        %v3621 = vpop.xlane.xlu0 %3620
        %v3622 = vadd.f32 %v3583, %v3584
        %3623 = vadd.xlane.f32.xlu0 %v3622
        %v3624 = vpop.xlane.xlu0 %3623
        %v3625 = vadd.f32 %v3585, %v3586
        %3626 = vadd.xlane.f32.xlu0 %v3625
        %v3627 = vpop.xlane.xlu0 %3626
        %v3628 = vadd.f32 %v3587, %v3588
        %3629 = vadd.xlane.f32.xlu0 %v3628
        %v3630 = vpop.xlane.xlu0 %3629
        %v3631 = vadd.f32 %v3589, %v3590
        %3632 = vadd.xlane.f32.xlu0 %v3631
        %v3633 = vpop.xlane.xlu0 %3632
        %v3634 = vadd.f32 %v3591, %v3592
        %3635 = vadd.xlane.f32.xlu0 %v3634
        %v3636 = vpop.xlane.xlu0 %3635
        %v3637 = vadd.f32 %v3593, %v3594
        %3638 = vadd.xlane.f32.xlu0 %v3637
        %v3639 = vpop.xlane.xlu0 %3638
        %v3640 = vadd.f32 %v3595, %v3596
        %3641 = vadd.xlane.f32.xlu0 %v3640
        %v3642 = vpop.xlane.xlu0 %3641
        %v3643 = vadd.f32 %v3597, %v3598
        %3644 = vadd.xlane.f32.xlu0 %v3643
        %v3645 = vpop.xlane.xlu0 %3644
        %v3646 = vadd.f32 %v3599, %v3600
        %3647 = vadd.xlane.f32.xlu0 %v3646
        %v3648 = vpop.xlane.xlu0 %3647
        %v3649 = vmul.f32 %v3603, %v905
        %v3650 = vmul.f32 %v3606, %v905
        %v3651 = vmul.f32 %v3609, %v905
        %v3652 = vmul.f32 %v3612, %v905
        %v3653 = vmul.f32 %v3615, %v905
        %v3654 = vmul.f32 %v3618, %v905
        %v3655 = vmul.f32 %v3621, %v905
        %v3656 = vmul.f32 %v3624, %v905
        %v3657 = vmul.f32 %v3627, %v905
        %v3658 = vmul.f32 %v3630, %v905
        %v3659 = vmul.f32 %v3633, %v905
        %v3660 = vmul.f32 %v3636, %v905
        %v3661 = vmul.f32 %v3639, %v905
        %v3662 = vmul.f32 %v3642, %v905
        %v3663 = vmul.f32 %v3645, %v905
        %v3664 = vmul.f32 %v3648, %v905
        %v3665 = vsub.f32 %v3569, %v3649
        %v3666 = vsub.f32 %v3570, %v3649
        %v3667 = vsub.f32 %v3571, %v3650
        %v3668 = vsub.f32 %v3572, %v3650
        %v3669 = vsub.f32 %v3573, %v3651
        %v3670 = vsub.f32 %v3574, %v3651
        %v3671 = vsub.f32 %v3575, %v3652
        %v3672 = vsub.f32 %v3576, %v3652
        %v3673 = vsub.f32 %v3577, %v3653
        %v3674 = vsub.f32 %v3578, %v3653
        %v3675 = vsub.f32 %v3579, %v3654
        %v3676 = vsub.f32 %v3580, %v3654
        %v3677 = vsub.f32 %v3581, %v3655
        %v3678 = vsub.f32 %v3582, %v3655
        %v3679 = vsub.f32 %v3583, %v3656
        %v3680 = vsub.f32 %v3584, %v3656
        %v3681 = vsub.f32 %v3585, %v3657
        %v3682 = vsub.f32 %v3586, %v3657
        %v3683 = vsub.f32 %v3587, %v3658
        %v3684 = vsub.f32 %v3588, %v3658
        %v3685 = vsub.f32 %v3589, %v3659
        %v3686 = vsub.f32 %v3590, %v3659
        %v3687 = vsub.f32 %v3591, %v3660
        %v3688 = vsub.f32 %v3592, %v3660
        %v3689 = vsub.f32 %v3593, %v3661
        %v3690 = vsub.f32 %v3594, %v3661
        %v3691 = vsub.f32 %v3595, %v3662
        %v3692 = vsub.f32 %v3596, %v3662
        %v3693 = vsub.f32 %v3597, %v3663
        %v3694 = vsub.f32 %v3598, %v3663
        %v3695 = vsub.f32 %v3599, %v3664
        %v3696 = vsub.f32 %v3600, %v3664
        %v3697 = vmul.f32 %v3665, %v3665
        %v3698 = vmul.f32 %v3666, %v3666
        %v3699 = vmul.f32 %v3667, %v3667
        %v3700 = vmul.f32 %v3668, %v3668
        %v3701 = vmul.f32 %v3669, %v3669
        %v3702 = vmul.f32 %v3670, %v3670
        %v3703 = vmul.f32 %v3671, %v3671
        %v3704 = vmul.f32 %v3672, %v3672
        %v3705 = vmul.f32 %v3673, %v3673
        %v3706 = vmul.f32 %v3674, %v3674
        %v3707 = vmul.f32 %v3675, %v3675
        %v3708 = vmul.f32 %v3676, %v3676
        %v3709 = vmul.f32 %v3677, %v3677
        %v3710 = vmul.f32 %v3678, %v3678
        %v3711 = vmul.f32 %v3679, %v3679
        %v3712 = vmul.f32 %v3680, %v3680
        %v3713 = vmul.f32 %v3681, %v3681
        %v3714 = vmul.f32 %v3682, %v3682
        %v3715 = vmul.f32 %v3683, %v3683
        %v3716 = vmul.f32 %v3684, %v3684
        %v3717 = vmul.f32 %v3685, %v3685
        %v3718 = vmul.f32 %v3686, %v3686
        %v3719 = vmul.f32 %v3687, %v3687
        %v3720 = vmul.f32 %v3688, %v3688
        %v3721 = vmul.f32 %v3689, %v3689
        %v3722 = vmul.f32 %v3690, %v3690
        %v3723 = vmul.f32 %v3691, %v3691
        %v3724 = vmul.f32 %v3692, %v3692
        %v3725 = vmul.f32 %v3693, %v3693
        %v3726 = vmul.f32 %v3694, %v3694
        %v3727 = vmul.f32 %v3695, %v3695
        %v3728 = vmul.f32 %v3696, %v3696
        %v3729 = vadd.f32 %v3697, %v3698
        %3730 = vadd.xlane.f32.xlu0 %v3729
        %v3731 = vpop.xlane.xlu0 %3730
        %v3732 = vadd.f32 %v3699, %v3700
        %3733 = vadd.xlane.f32.xlu0 %v3732
        %v3734 = vpop.xlane.xlu0 %3733
        %v3735 = vadd.f32 %v3701, %v3702
        %3736 = vadd.xlane.f32.xlu0 %v3735
        %v3737 = vpop.xlane.xlu0 %3736
        %v3738 = vadd.f32 %v3703, %v3704
        %3739 = vadd.xlane.f32.xlu0 %v3738
        %v3740 = vpop.xlane.xlu0 %3739
        %v3741 = vadd.f32 %v3705, %v3706
        %3742 = vadd.xlane.f32.xlu0 %v3741
        %v3743 = vpop.xlane.xlu0 %3742
        %v3744 = vadd.f32 %v3707, %v3708
        %3745 = vadd.xlane.f32.xlu0 %v3744
        %v3746 = vpop.xlane.xlu0 %3745
        %v3747 = vadd.f32 %v3709, %v3710
        %3748 = vadd.xlane.f32.xlu0 %v3747
        %v3749 = vpop.xlane.xlu0 %3748
        %v3750 = vadd.f32 %v3711, %v3712
        %3751 = vadd.xlane.f32.xlu0 %v3750
        %v3752 = vpop.xlane.xlu0 %3751
        %v3753 = vadd.f32 %v3713, %v3714
        %3754 = vadd.xlane.f32.xlu0 %v3753
        %v3755 = vpop.xlane.xlu0 %3754
        %v3756 = vadd.f32 %v3715, %v3716
        %3757 = vadd.xlane.f32.xlu0 %v3756
        %v3758 = vpop.xlane.xlu0 %3757
        %v3759 = vadd.f32 %v3717, %v3718
        %3760 = vadd.xlane.f32.xlu0 %v3759
        %v3761 = vpop.xlane.xlu0 %3760
        %v3762 = vadd.f32 %v3719, %v3720
        %3763 = vadd.xlane.f32.xlu0 %v3762
        %v3764 = vpop.xlane.xlu0 %3763
        %v3765 = vadd.f32 %v3721, %v3722
        %3766 = vadd.xlane.f32.xlu0 %v3765
        %v3767 = vpop.xlane.xlu0 %3766
        %v3768 = vadd.f32 %v3723, %v3724
        %3769 = vadd.xlane.f32.xlu0 %v3768
        %v3770 = vpop.xlane.xlu0 %3769
        %v3771 = vadd.f32 %v3725, %v3726
        %3772 = vadd.xlane.f32.xlu0 %v3771
        %v3773 = vpop.xlane.xlu0 %3772
        %v3774 = vadd.f32 %v3727, %v3728
        %3775 = vadd.xlane.f32.xlu0 %v3774
        %v3776 = vpop.xlane.xlu0 %3775
        %v3777 = vmul.f32 %v3731, %v905
        %v3778 = vmul.f32 %v3734, %v905
        %v3779 = vmul.f32 %v3737, %v905
        %v3780 = vmul.f32 %v3740, %v905
        %v3781 = vmul.f32 %v3743, %v905
        %v3782 = vmul.f32 %v3746, %v905
        %v3783 = vmul.f32 %v3749, %v905
        %v3784 = vmul.f32 %v3752, %v905
        %v3785 = vmul.f32 %v3755, %v905
        %v3786 = vmul.f32 %v3758, %v905
        %v3787 = vmul.f32 %v3761, %v905
        %v3788 = vmul.f32 %v3764, %v905
        %v3789 = vmul.f32 %v3767, %v905
        %v3790 = vmul.f32 %v3770, %v905
        %v3791 = vmul.f32 %v3773, %v905
        %v3792 = vmul.f32 %v3776, %v905
        %v3793 = vadd.f32 %v3777, 1e-05
        %v3794 = vadd.f32 %v3778, 1e-05
        %v3795 = vadd.f32 %v3779, 1e-05
        %v3796 = vadd.f32 %v3780, 1e-05
        %v3797 = vadd.f32 %v3781, 1e-05
        %v3798 = vadd.f32 %v3782, 1e-05
        %v3799 = vadd.f32 %v3783, 1e-05
        %v3800 = vadd.f32 %v3784, 1e-05
        %v3801 = vadd.f32 %v3785, 1e-05
        %v3802 = vadd.f32 %v3786, 1e-05
        %v3803 = vadd.f32 %v3787, 1e-05
        %v3804 = vadd.f32 %v3788, 1e-05
        %v3805 = vadd.f32 %v3789, 1e-05
        %v3806 = vadd.f32 %v3790, 1e-05
        %v3807 = vadd.f32 %v3791, 1e-05
        %v3808 = vadd.f32 %v3792, 1e-05
        %v3809 = vrsqrt.pop %v3793
        %v3810 = vrsqrt.pop %v3794
        %v3811 = vrsqrt.pop %v3795
        %v3812 = vrsqrt.pop %v3796
        %v3813 = vrsqrt.pop %v3797
        %v3814 = vrsqrt.pop %v3798
        %v3815 = vrsqrt.pop %v3799
        %v3816 = vrsqrt.pop %v3800
        %v3817 = vrsqrt.pop %v3801
        %v3818 = vrsqrt.pop %v3802
        %v3819 = vrsqrt.pop %v3803
        %v3820 = vrsqrt.pop %v3804
        %v3821 = vrsqrt.pop %v3805
        %v3822 = vrsqrt.pop %v3806
        %v3823 = vrsqrt.pop %v3807
        %v3824 = vrsqrt.pop %v3808
        %v3825 = vmul.f32 %v3665, %v3809
        %v3826 = vmul.f32 %v3666, %v3809
        %v3827 = vmul.f32 %v3667, %v3810
        %v3828 = vmul.f32 %v3668, %v3810
        %v3829 = vmul.f32 %v3669, %v3811
        %v3830 = vmul.f32 %v3670, %v3811
        %v3831 = vmul.f32 %v3671, %v3812
        %v3832 = vmul.f32 %v3672, %v3812
        %v3833 = vmul.f32 %v3673, %v3813
        %v3834 = vmul.f32 %v3674, %v3813
        %v3835 = vmul.f32 %v3675, %v3814
        %v3836 = vmul.f32 %v3676, %v3814
        %v3837 = vmul.f32 %v3677, %v3815
        %v3838 = vmul.f32 %v3678, %v3815
        %v3839 = vmul.f32 %v3679, %v3816
        %v3840 = vmul.f32 %v3680, %v3816
        %v3841 = vmul.f32 %v3681, %v3817
        %v3842 = vmul.f32 %v3682, %v3817
        %v3843 = vmul.f32 %v3683, %v3818
        %v3844 = vmul.f32 %v3684, %v3818
        %v3845 = vmul.f32 %v3685, %v3819
        %v3846 = vmul.f32 %v3686, %v3819
        %v3847 = vmul.f32 %v3687, %v3820
        %v3848 = vmul.f32 %v3688, %v3820
        %v3849 = vmul.f32 %v3689, %v3821
        %v3850 = vmul.f32 %v3690, %v3821
        %v3851 = vmul.f32 %v3691, %v3822
        %v3852 = vmul.f32 %v3692, %v3822
        %v3853 = vmul.f32 %v3693, %v3823
        %v3854 = vmul.f32 %v3694, %v3823
        %v3855 = vmul.f32 %v3695, %v3824
        %v3856 = vmul.f32 %v3696, %v3824
        %v3857 = vld [vmem:[%s726] sm:$0x3]
        %v3858 = vunpack.c.l.bf16 %v3857
        %v3860 = vlaneseq
        %v3861 = vshrl.u32 %v3860, 7
        %v3862 = vsub.s32 0, %v3861
        %v3863 = vrot.slane %v3858, %v3862
        %v3864 = vlaneseq
        %v3865 = vshrl.u32 %v3864, 7
        %v3866 = vsub.s32 2, %v3865
        %v3867 = vrot.slane %v3858, %v3866
        %v3870 = vlaneseq
        %v3871 = vshrl.u32 %v3870, 7
        %v3872 = vsub.s32 0, %v3871
        %v3873 = vrot.slane %v3863, %v3872
        %v3874 = vlaneseq
        %v3875 = vshrl.u32 %v3874, 7
        %v3876 = vsub.s32 0, %v3875
        %v3877 = vrot.slane %v3867, %v3876
        %v3878 = vmul.f32 %v3825, %v3873
        %v3879 = vmul.f32 %v3826, %v3877
        %v3880 = vmul.f32 %v3827, %v3873
        %v3881 = vmul.f32 %v3828, %v3877
        %v3882 = vmul.f32 %v3829, %v3873
        %v3883 = vmul.f32 %v3830, %v3877
        %v3884 = vmul.f32 %v3831, %v3873
        %v3885 = vmul.f32 %v3832, %v3877
        %v3886 = vmul.f32 %v3833, %v3873
        %v3887 = vmul.f32 %v3834, %v3877
        %v3888 = vmul.f32 %v3835, %v3873
        %v3889 = vmul.f32 %v3836, %v3877
        %v3890 = vmul.f32 %v3837, %v3873
        %v3891 = vmul.f32 %v3838, %v3877
        %v3892 = vmul.f32 %v3839, %v3873
        %v3893 = vmul.f32 %v3840, %v3877
        %v3894 = vmul.f32 %v3841, %v3873
        %v3895 = vmul.f32 %v3842, %v3877
        %v3896 = vmul.f32 %v3843, %v3873
        %v3897 = vmul.f32 %v3844, %v3877
        %v3898 = vmul.f32 %v3845, %v3873
        %v3899 = vmul.f32 %v3846, %v3877
        %v3900 = vmul.f32 %v3847, %v3873
        %v3901 = vmul.f32 %v3848, %v3877
        %v3902 = vmul.f32 %v3849, %v3873
        %v3903 = vmul.f32 %v3850, %v3877
        %v3904 = vmul.f32 %v3851, %v3873
        %v3905 = vmul.f32 %v3852, %v3877
        %v3906 = vmul.f32 %v3853, %v3873
        %v3907 = vmul.f32 %v3854, %v3877
        %v3908 = vmul.f32 %v3855, %v3873
        %v3909 = vmul.f32 %v3856, %v3877
        %v3910 = vld [vmem:[%s730] sm:$0x3]
        %v3911 = vunpack.c.l.bf16 %v3910
        %v3913 = vlaneseq
        %v3914 = vshrl.u32 %v3913, 7
        %v3915 = vsub.s32 0, %v3914
        %v3916 = vrot.slane %v3911, %v3915
        %v3917 = vlaneseq
        %v3918 = vshrl.u32 %v3917, 7
        %v3919 = vsub.s32 2, %v3918
        %v3920 = vrot.slane %v3911, %v3919
        %v3923 = vlaneseq
        %v3924 = vshrl.u32 %v3923, 7
        %v3925 = vsub.s32 0, %v3924
        %v3926 = vrot.slane %v3916, %v3925
        %v3927 = vlaneseq
        %v3928 = vshrl.u32 %v3927, 7
        %v3929 = vsub.s32 0, %v3928
        %v3930 = vrot.slane %v3920, %v3929
        %v3931 = vadd.f32 %v3878, %v3926
        %v3932 = vadd.f32 %v3879, %v3930
        %v3933 = vadd.f32 %v3880, %v3926
        %v3934 = vadd.f32 %v3881, %v3930
        %v3935 = vadd.f32 %v3882, %v3926
        %v3936 = vadd.f32 %v3883, %v3930
        %v3937 = vadd.f32 %v3884, %v3926
        %v3938 = vadd.f32 %v3885, %v3930
        %v3939 = vadd.f32 %v3886, %v3926
        %v3940 = vadd.f32 %v3887, %v3930
        %v3941 = vadd.f32 %v3888, %v3926
        %v3942 = vadd.f32 %v3889, %v3930
        %v3943 = vadd.f32 %v3890, %v3926
        %v3944 = vadd.f32 %v3891, %v3930
        %v3945 = vadd.f32 %v3892, %v3926
        %v3946 = vadd.f32 %v3893, %v3930
        %v3947 = vadd.f32 %v3894, %v3926
        %v3948 = vadd.f32 %v3895, %v3930
        %v3949 = vadd.f32 %v3896, %v3926
        %v3950 = vadd.f32 %v3897, %v3930
        %v3951 = vadd.f32 %v3898, %v3926
        %v3952 = vadd.f32 %v3899, %v3930
        %v3953 = vadd.f32 %v3900, %v3926
        %v3954 = vadd.f32 %v3901, %v3930
        %v3955 = vadd.f32 %v3902, %v3926
        %v3956 = vadd.f32 %v3903, %v3930
        %v3957 = vadd.f32 %v3904, %v3926
        %v3958 = vadd.f32 %v3905, %v3930
        %v3959 = vadd.f32 %v3906, %v3926
        %v3960 = vadd.f32 %v3907, %v3930
        %v3961 = vadd.f32 %v3908, %v3926
        %v3962 = vadd.f32 %v3909, %v3930
        %v3963 = vpack.c.bf16 %v3933, %v3931
        %v3964 = vpack.c.bf16 %v3934, %v3932
        %v3965 = vpack.c.bf16 %v3937, %v3935
        %v3966 = vpack.c.bf16 %v3938, %v3936
        %v3967 = vpack.c.bf16 %v3941, %v3939
        %v3968 = vpack.c.bf16 %v3942, %v3940
        %v3969 = vpack.c.bf16 %v3945, %v3943
        %v3970 = vpack.c.bf16 %v3946, %v3944
        %v3971 = vpack.c.bf16 %v3949, %v3947
        %v3972 = vpack.c.bf16 %v3950, %v3948
        %v3973 = vpack.c.bf16 %v3953, %v3951
        %v3974 = vpack.c.bf16 %v3954, %v3952
        %v3975 = vpack.c.bf16 %v3957, %v3955
        %v3976 = vpack.c.bf16 %v3958, %v3956
        %v3977 = vpack.c.bf16 %v3961, %v3959
        %v3978 = vpack.c.bf16 %v3962, %v3960
        %v3979 = vld [vmem:[%s612] sm:$0xff]
        %v3980 = vld [vmem:[%s612 + $0x8] sm:$0xff]
        %v3981 = vld [vmem:[%s612 + $0x10] sm:$0xff]
        %v3982 = vld [vmem:[%s612 + $0x18] sm:$0xff]
        %v3983 = vld [vmem:[%s612 + $0x20] sm:$0xff]
        %v3984 = vld [vmem:[%s612 + $0x28] sm:$0xff]
        %v3985 = vld [vmem:[%s612 + $0x30] sm:$0xff]
        %v3986 = vld [vmem:[%s612 + $0x38] sm:$0xff]
        %v3987 = vld [vmem:[%s612 + $0x40] sm:$0xff]
        %v3988 = vld [vmem:[%s612 + $0x48] sm:$0xff]
        %v3989 = vld [vmem:[%s612 + $0x50] sm:$0xff]
        %v3990 = vld [vmem:[%s612 + $0x58] sm:$0xff]
        %v3991 = vld [vmem:[%s612 + $0x60] sm:$0xff]
        %v3992 = vld [vmem:[%s612 + $0x68] sm:$0xff]
        %v3993 = vld [vmem:[%s612 + $0x70] sm:$0xff]
        %v3994 = vld [vmem:[%s612 + $0x78] sm:$0xff]
        %v3995 = vld [vmem:[%s612 + $0x80] sm:$0xff]
        %v3996 = vld [vmem:[%s612 + $0x88] sm:$0xff]
        %v3997 = vld [vmem:[%s612 + $0x90] sm:$0xff]
        %v3998 = vld [vmem:[%s612 + $0x98] sm:$0xff]
        %v3999 = vld [vmem:[%s612 + $0xa0] sm:$0xff]
        %v4000 = vld [vmem:[%s612 + $0xa8] sm:$0xff]
        %v4001 = vld [vmem:[%s612 + $0xb0] sm:$0xff]
        %v4002 = vld [vmem:[%s612 + $0xb8] sm:$0xff]
        %v4003 = vld [vmem:[%s612 + $0xc0] sm:$0xff]
        %v4004 = vld [vmem:[%s612 + $0xc8] sm:$0xff]
        %v4005 = vld [vmem:[%s612 + $0xd0] sm:$0xff]
        %v4006 = vld [vmem:[%s612 + $0xd8] sm:$0xff]
        %v4007 = vld [vmem:[%s612 + $0xe0] sm:$0xff]
        %v4008 = vld [vmem:[%s612 + $0xe8] sm:$0xff]
        %v4009 = vld [vmem:[%s612 + $0xf0] sm:$0xff]
        %v4010 = vld [vmem:[%s612 + $0xf8] sm:$0xff]
        %v4011 = vld [vmem:[%s612 + $0x100] sm:$0xff]
        %v4012 = vld [vmem:[%s612 + $0x108] sm:$0xff]
        %v4013 = vld [vmem:[%s612 + $0x110] sm:$0xff]
        %v4014 = vld [vmem:[%s612 + $0x118] sm:$0xff]
        %v4015 = vld [vmem:[%s612 + $0x120] sm:$0xff]
        %v4016 = vld [vmem:[%s612 + $0x128] sm:$0xff]
        %v4017 = vld [vmem:[%s612 + $0x130] sm:$0xff]
        %v4018 = vld [vmem:[%s612 + $0x138] sm:$0xff]
        %v4019 = vld [vmem:[%s612 + $0x140] sm:$0xff]
        %v4020 = vld [vmem:[%s612 + $0x148] sm:$0xff]
        %v4021 = vld [vmem:[%s612 + $0x150] sm:$0xff]
        %v4022 = vld [vmem:[%s612 + $0x158] sm:$0xff]
        %v4023 = vld [vmem:[%s612 + $0x160] sm:$0xff]
        %v4024 = vld [vmem:[%s612 + $0x168] sm:$0xff]
        %v4025 = vld [vmem:[%s612 + $0x170] sm:$0xff]
        %v4026 = vld [vmem:[%s612 + $0x178] sm:$0xff]
        %v4027 = vld [vmem:[%s612 + $0x180] sm:$0xff]
        %v4028 = vld [vmem:[%s612 + $0x188] sm:$0xff]
        %v4029 = vld [vmem:[%s612 + $0x190] sm:$0xff]
        %v4030 = vld [vmem:[%s612 + $0x198] sm:$0xff]
        %v4031 = vld [vmem:[%s612 + $0x1a0] sm:$0xff]
        %v4032 = vld [vmem:[%s612 + $0x1a8] sm:$0xff]
        %v4033 = vld [vmem:[%s612 + $0x1b0] sm:$0xff]
        %v4034 = vld [vmem:[%s612 + $0x1b8] sm:$0xff]
        %v4035 = vld [vmem:[%s612 + $0x1c0] sm:$0xff]
        %v4036 = vld [vmem:[%s612 + $0x1c8] sm:$0xff]
        %v4037 = vld [vmem:[%s612 + $0x1d0] sm:$0xff]
        %v4038 = vld [vmem:[%s612 + $0x1d8] sm:$0xff]
        %v4039 = vld [vmem:[%s612 + $0x1e0] sm:$0xff]
        %v4040 = vld [vmem:[%s612 + $0x1e8] sm:$0xff]
        %v4041 = vld [vmem:[%s612 + $0x1f0] sm:$0xff]
        %v4042 = vld [vmem:[%s612 + $0x1f8] sm:$0xff]
        %v4043 = vld [vmem:[%s612 + $0x200] sm:$0xff]
        %v4044 = vld [vmem:[%s612 + $0x208] sm:$0xff]
        %v4045 = vld [vmem:[%s612 + $0x210] sm:$0xff]
        %v4046 = vld [vmem:[%s612 + $0x218] sm:$0xff]
        %v4047 = vld [vmem:[%s612 + $0x220] sm:$0xff]
        %v4048 = vld [vmem:[%s612 + $0x228] sm:$0xff]
        %v4049 = vld [vmem:[%s612 + $0x230] sm:$0xff]
        %v4050 = vld [vmem:[%s612 + $0x238] sm:$0xff]
        %v4051 = vld [vmem:[%s612 + $0x240] sm:$0xff]
        %v4052 = vld [vmem:[%s612 + $0x248] sm:$0xff]
        %v4053 = vld [vmem:[%s612 + $0x250] sm:$0xff]
        %v4054 = vld [vmem:[%s612 + $0x258] sm:$0xff]
        %v4055 = vld [vmem:[%s612 + $0x260] sm:$0xff]
        %v4056 = vld [vmem:[%s612 + $0x268] sm:$0xff]
        %v4057 = vld [vmem:[%s612 + $0x270] sm:$0xff]
        %v4058 = vld [vmem:[%s612 + $0x278] sm:$0xff]
        %v4059 = vld [vmem:[%s612 + $0x280] sm:$0xff]
        %v4060 = vld [vmem:[%s612 + $0x288] sm:$0xff]
        %v4061 = vld [vmem:[%s612 + $0x290] sm:$0xff]
        %v4062 = vld [vmem:[%s612 + $0x298] sm:$0xff]
        %v4063 = vld [vmem:[%s612 + $0x2a0] sm:$0xff]
        %v4064 = vld [vmem:[%s612 + $0x2a8] sm:$0xff]
        %v4065 = vld [vmem:[%s612 + $0x2b0] sm:$0xff]
        %v4066 = vld [vmem:[%s612 + $0x2b8] sm:$0xff]
        %v4067 = vld [vmem:[%s612 + $0x2c0] sm:$0xff]
        %v4068 = vld [vmem:[%s612 + $0x2c8] sm:$0xff]
        %v4069 = vld [vmem:[%s612 + $0x2d0] sm:$0xff]
        %v4070 = vld [vmem:[%s612 + $0x2d8] sm:$0xff]
        %v4071 = vld [vmem:[%s612 + $0x2e0] sm:$0xff]
        %v4072 = vld [vmem:[%s612 + $0x2e8] sm:$0xff]
        %v4073 = vld [vmem:[%s612 + $0x2f0] sm:$0xff]
        %v4074 = vld [vmem:[%s612 + $0x2f8] sm:$0xff]
        %v4075 = vld [vmem:[%s612 + $0x300] sm:$0xff]
        %v4076 = vld [vmem:[%s612 + $0x308] sm:$0xff]
        %v4077 = vld [vmem:[%s612 + $0x310] sm:$0xff]
        %v4078 = vld [vmem:[%s612 + $0x318] sm:$0xff]
        %v4079 = vld [vmem:[%s612 + $0x320] sm:$0xff]
        %v4080 = vld [vmem:[%s612 + $0x328] sm:$0xff]
        %v4081 = vld [vmem:[%s612 + $0x330] sm:$0xff]
        %v4082 = vld [vmem:[%s612 + $0x338] sm:$0xff]
        %v4083 = vld [vmem:[%s612 + $0x340] sm:$0xff]
        %v4084 = vld [vmem:[%s612 + $0x348] sm:$0xff]
        %v4085 = vld [vmem:[%s612 + $0x350] sm:$0xff]
        %v4086 = vld [vmem:[%s612 + $0x358] sm:$0xff]
        %v4087 = vld [vmem:[%s612 + $0x360] sm:$0xff]
        %v4088 = vld [vmem:[%s612 + $0x368] sm:$0xff]
        %v4089 = vld [vmem:[%s612 + $0x370] sm:$0xff]
        %v4090 = vld [vmem:[%s612 + $0x378] sm:$0xff]
        %v4091 = vld [vmem:[%s612 + $0x380] sm:$0xff]
        %v4092 = vld [vmem:[%s612 + $0x388] sm:$0xff]
        %v4093 = vld [vmem:[%s612 + $0x390] sm:$0xff]
        %v4094 = vld [vmem:[%s612 + $0x398] sm:$0xff]
        %v4095 = vld [vmem:[%s612 + $0x3a0] sm:$0xff]
        %v4096 = vld [vmem:[%s612 + $0x3a8] sm:$0xff]
        %v4097 = vld [vmem:[%s612 + $0x3b0] sm:$0xff]
        %v4098 = vld [vmem:[%s612 + $0x3b8] sm:$0xff]
        %v4099 = vld [vmem:[%s612 + $0x3c0] sm:$0xff]
        %v4100 = vld [vmem:[%s612 + $0x3c8] sm:$0xff]
        %v4101 = vld [vmem:[%s612 + $0x3d0] sm:$0xff]
        %v4102 = vld [vmem:[%s612 + $0x3d8] sm:$0xff]
        %v4103 = vld [vmem:[%s612 + $0x3e0] sm:$0xff]
        %v4104 = vld [vmem:[%s612 + $0x3e8] sm:$0xff]
        %v4105 = vld [vmem:[%s612 + $0x3f0] sm:$0xff]
        %v4106 = vld [vmem:[%s612 + $0x3f8] sm:$0xff]
        %v4107 = vld [vmem:[%s734] sm:$0xff]
        %v4108 = vunpack.c.l.bf16 %v4107
        %v4109 = vunpack.c.h.bf16 %v4107
        %v4112 = vlaneseq
        %v4113 = vshrl.u32 %v4112, 7
        %v4114 = vsub.s32 0, %v4113
        %v4115 = vrot.slane %v4108, %v4114
        %v4116 = vlaneseq
        %v4117 = vshrl.u32 %v4116, 7
        %v4118 = vsub.s32 2, %v4117
        %v4119 = vrot.slane %v4108, %v4118
        %v4120 = vlaneseq
        %v4121 = vshrl.u32 %v4120, 7
        %v4122 = vsub.s32 4, %v4121
        %v4123 = vrot.slane %v4108, %v4122
        %v4124 = vlaneseq
        %v4125 = vshrl.u32 %v4124, 7
        %v4126 = vsub.s32 6, %v4125
        %v4127 = vrot.slane %v4108, %v4126
        %v4128 = vlaneseq
        %v4129 = vshrl.u32 %v4128, 7
        %v4130 = vsub.s32 0, %v4129
        %v4131 = vrot.slane %v4109, %v4130
        %v4132 = vlaneseq
        %v4133 = vshrl.u32 %v4132, 7
        %v4134 = vsub.s32 2, %v4133
        %v4135 = vrot.slane %v4109, %v4134
        %v4136 = vlaneseq
        %v4137 = vshrl.u32 %v4136, 7
        %v4138 = vsub.s32 4, %v4137
        %v4139 = vrot.slane %v4109, %v4138
        %v4140 = vlaneseq
        %v4141 = vshrl.u32 %v4140, 7
        %v4142 = vsub.s32 6, %v4141
        %v4143 = vrot.slane %v4109, %v4142
        %v4152 = vlaneseq
        %v4153 = vshrl.u32 %v4152, 7
        %v4154 = vsub.s32 0, %v4153
        %v4155 = vrot.slane %v4115, %v4154
        %v4156 = vlaneseq
        %v4157 = vshrl.u32 %v4156, 7
        %v4158 = vsub.s32 0, %v4157
        %v4159 = vrot.slane %v4119, %v4158
        %v4160 = vlaneseq
        %v4161 = vshrl.u32 %v4160, 7
        %v4162 = vsub.s32 0, %v4161
        %v4163 = vrot.slane %v4123, %v4162
        %v4164 = vlaneseq
        %v4165 = vshrl.u32 %v4164, 7
        %v4166 = vsub.s32 0, %v4165
        %v4167 = vrot.slane %v4127, %v4166
        %v4168 = vlaneseq
        %v4169 = vshrl.u32 %v4168, 7
        %v4170 = vsub.s32 0, %v4169
        %v4171 = vrot.slane %v4131, %v4170
        %v4172 = vlaneseq
        %v4173 = vshrl.u32 %v4172, 7
        %v4174 = vsub.s32 0, %v4173
        %v4175 = vrot.slane %v4135, %v4174
        %v4176 = vlaneseq
        %v4177 = vshrl.u32 %v4176, 7
        %v4178 = vsub.s32 0, %v4177
        %v4179 = vrot.slane %v4139, %v4178
        %v4180 = vlaneseq
        %v4181 = vshrl.u32 %v4180, 7
        %v4182 = vsub.s32 0, %v4181
        %v4183 = vrot.slane %v4143, %v4182
        %v4312 = vunpack.c.l.b16 %v3979
        %v4313 = vunpack.c.h.b16 %v3979
        %v4314 = vunpack.c.l.b16 %v3980
        %v4315 = vunpack.c.h.b16 %v3980
        %v4316 = vunpack.c.l.b16 %v3981
        %v4317 = vunpack.c.h.b16 %v3981
        %v4318 = vunpack.c.l.b16 %v3982
        %v4319 = vunpack.c.h.b16 %v3982
        %v4320 = vunpack.c.l.b16 %v3983
        %v4321 = vunpack.c.h.b16 %v3983
        %v4322 = vunpack.c.l.b16 %v3984
        %v4323 = vunpack.c.h.b16 %v3984
        %v4324 = vunpack.c.l.b16 %v3985
        %v4325 = vunpack.c.h.b16 %v3985
        %v4326 = vunpack.c.l.b16 %v3986
        %v4327 = vunpack.c.h.b16 %v3986
        %v4328 = vunpack.c.l.b16 %v3987
        %v4329 = vunpack.c.h.b16 %v3987
        %v4330 = vunpack.c.l.b16 %v3988
        %v4331 = vunpack.c.h.b16 %v3988
        %v4332 = vunpack.c.l.b16 %v3989
        %v4333 = vunpack.c.h.b16 %v3989
        %v4334 = vunpack.c.l.b16 %v3990
        %v4335 = vunpack.c.h.b16 %v3990
        %v4336 = vunpack.c.l.b16 %v3991
        %v4337 = vunpack.c.h.b16 %v3991
        %v4338 = vunpack.c.l.b16 %v3992
        %v4339 = vunpack.c.h.b16 %v3992
        %v4340 = vunpack.c.l.b16 %v3993
        %v4341 = vunpack.c.h.b16 %v3993
        %v4342 = vunpack.c.l.b16 %v3994
        %v4343 = vunpack.c.h.b16 %v3994
        %v4344 = vunpack.c.l.b16 %v3995
        %v4345 = vunpack.c.h.b16 %v3995
        %v4346 = vunpack.c.l.b16 %v3996
        %v4347 = vunpack.c.h.b16 %v3996
        %v4348 = vunpack.c.l.b16 %v3997
        %v4349 = vunpack.c.h.b16 %v3997
        %v4350 = vunpack.c.l.b16 %v3998
        %v4351 = vunpack.c.h.b16 %v3998
        %v4352 = vunpack.c.l.b16 %v3999
        %v4353 = vunpack.c.h.b16 %v3999
        %v4354 = vunpack.c.l.b16 %v4000
        %v4355 = vunpack.c.h.b16 %v4000
        %v4356 = vunpack.c.l.b16 %v4001
        %v4357 = vunpack.c.h.b16 %v4001
        %v4358 = vunpack.c.l.b16 %v4002
        %v4359 = vunpack.c.h.b16 %v4002
        %v4360 = vunpack.c.l.b16 %v4003
        %v4361 = vunpack.c.h.b16 %v4003
        %v4362 = vunpack.c.l.b16 %v4004
        %v4363 = vunpack.c.h.b16 %v4004
        %v4364 = vunpack.c.l.b16 %v4005
        %v4365 = vunpack.c.h.b16 %v4005
        %v4366 = vunpack.c.l.b16 %v4006
        %v4367 = vunpack.c.h.b16 %v4006
        %v4368 = vunpack.c.l.b16 %v4007
        %v4369 = vunpack.c.h.b16 %v4007
        %v4370 = vunpack.c.l.b16 %v4008
        %v4371 = vunpack.c.h.b16 %v4008
        %v4372 = vunpack.c.l.b16 %v4009
        %v4373 = vunpack.c.h.b16 %v4009
        %v4374 = vunpack.c.l.b16 %v4010
        %v4375 = vunpack.c.h.b16 %v4010
        %v4376 = vunpack.c.l.b16 %v4011
        %v4377 = vunpack.c.h.b16 %v4011
        %v4378 = vunpack.c.l.b16 %v4012
        %v4379 = vunpack.c.h.b16 %v4012
        %v4380 = vunpack.c.l.b16 %v4013
        %v4381 = vunpack.c.h.b16 %v4013
        %v4382 = vunpack.c.l.b16 %v4014
        %v4383 = vunpack.c.h.b16 %v4014
        %v4384 = vunpack.c.l.b16 %v4015
        %v4385 = vunpack.c.h.b16 %v4015
        %v4386 = vunpack.c.l.b16 %v4016
        %v4387 = vunpack.c.h.b16 %v4016
        %v4388 = vunpack.c.l.b16 %v4017
        %v4389 = vunpack.c.h.b16 %v4017
        %v4390 = vunpack.c.l.b16 %v4018
        %v4391 = vunpack.c.h.b16 %v4018
        %v4392 = vunpack.c.l.b16 %v4019
        %v4393 = vunpack.c.h.b16 %v4019
        %v4394 = vunpack.c.l.b16 %v4020
        %v4395 = vunpack.c.h.b16 %v4020
        %v4396 = vunpack.c.l.b16 %v4021
        %v4397 = vunpack.c.h.b16 %v4021
        %v4398 = vunpack.c.l.b16 %v4022
        %v4399 = vunpack.c.h.b16 %v4022
        %v4400 = vunpack.c.l.b16 %v4023
        %v4401 = vunpack.c.h.b16 %v4023
        %v4402 = vunpack.c.l.b16 %v4024
        %v4403 = vunpack.c.h.b16 %v4024
        %v4404 = vunpack.c.l.b16 %v4025
        %v4405 = vunpack.c.h.b16 %v4025
        %v4406 = vunpack.c.l.b16 %v4026
        %v4407 = vunpack.c.h.b16 %v4026
        %v4408 = vunpack.c.l.b16 %v4027
        %v4409 = vunpack.c.h.b16 %v4027
        %v4410 = vunpack.c.l.b16 %v4028
        %v4411 = vunpack.c.h.b16 %v4028
        %v4412 = vunpack.c.l.b16 %v4029
        %v4413 = vunpack.c.h.b16 %v4029
        %v4414 = vunpack.c.l.b16 %v4030
        %v4415 = vunpack.c.h.b16 %v4030
        %v4416 = vunpack.c.l.b16 %v4031
        %v4417 = vunpack.c.h.b16 %v4031
        %v4418 = vunpack.c.l.b16 %v4032
        %v4419 = vunpack.c.h.b16 %v4032
        %v4420 = vunpack.c.l.b16 %v4033
        %v4421 = vunpack.c.h.b16 %v4033
        %v4422 = vunpack.c.l.b16 %v4034
        %v4423 = vunpack.c.h.b16 %v4034
        %v4424 = vunpack.c.l.b16 %v4035
        %v4425 = vunpack.c.h.b16 %v4035
        %v4426 = vunpack.c.l.b16 %v4036
        %v4427 = vunpack.c.h.b16 %v4036
        %v4428 = vunpack.c.l.b16 %v4037
        %v4429 = vunpack.c.h.b16 %v4037
        %v4430 = vunpack.c.l.b16 %v4038
        %v4431 = vunpack.c.h.b16 %v4038
        %v4432 = vunpack.c.l.b16 %v4039
        %v4433 = vunpack.c.h.b16 %v4039
        %v4434 = vunpack.c.l.b16 %v4040
        %v4435 = vunpack.c.h.b16 %v4040
        %v4436 = vunpack.c.l.b16 %v4041
        %v4437 = vunpack.c.h.b16 %v4041
        %v4438 = vunpack.c.l.b16 %v4042
        %v4439 = vunpack.c.h.b16 %v4042
        %v4440 = vunpack.c.l.b16 %v4043
        %v4441 = vunpack.c.h.b16 %v4043
        %v4442 = vunpack.c.l.b16 %v4044
        %v4443 = vunpack.c.h.b16 %v4044
        %v4444 = vunpack.c.l.b16 %v4045
        %v4445 = vunpack.c.h.b16 %v4045
        %v4446 = vunpack.c.l.b16 %v4046
        %v4447 = vunpack.c.h.b16 %v4046
        %v4448 = vunpack.c.l.b16 %v4047
        %v4449 = vunpack.c.h.b16 %v4047
        %v4450 = vunpack.c.l.b16 %v4048
        %v4451 = vunpack.c.h.b16 %v4048
        %v4452 = vunpack.c.l.b16 %v4049
        %v4453 = vunpack.c.h.b16 %v4049
        %v4454 = vunpack.c.l.b16 %v4050
        %v4455 = vunpack.c.h.b16 %v4050
        %v4456 = vunpack.c.l.b16 %v4051
        %v4457 = vunpack.c.h.b16 %v4051
        %v4458 = vunpack.c.l.b16 %v4052
        %v4459 = vunpack.c.h.b16 %v4052
        %v4460 = vunpack.c.l.b16 %v4053
        %v4461 = vunpack.c.h.b16 %v4053
        %v4462 = vunpack.c.l.b16 %v4054
        %v4463 = vunpack.c.h.b16 %v4054
        %v4464 = vunpack.c.l.b16 %v4055
        %v4465 = vunpack.c.h.b16 %v4055
        %v4466 = vunpack.c.l.b16 %v4056
        %v4467 = vunpack.c.h.b16 %v4056
        %v4468 = vunpack.c.l.b16 %v4057
        %v4469 = vunpack.c.h.b16 %v4057
        %v4470 = vunpack.c.l.b16 %v4058
        %v4471 = vunpack.c.h.b16 %v4058
        %v4472 = vunpack.c.l.b16 %v4059
        %v4473 = vunpack.c.h.b16 %v4059
        %v4474 = vunpack.c.l.b16 %v4060
        %v4475 = vunpack.c.h.b16 %v4060
        %v4476 = vunpack.c.l.b16 %v4061
        %v4477 = vunpack.c.h.b16 %v4061
        %v4478 = vunpack.c.l.b16 %v4062
        %v4479 = vunpack.c.h.b16 %v4062
        %v4480 = vunpack.c.l.b16 %v4063
        %v4481 = vunpack.c.h.b16 %v4063
        %v4482 = vunpack.c.l.b16 %v4064
        %v4483 = vunpack.c.h.b16 %v4064
        %v4484 = vunpack.c.l.b16 %v4065
        %v4485 = vunpack.c.h.b16 %v4065
        %v4486 = vunpack.c.l.b16 %v4066
        %v4487 = vunpack.c.h.b16 %v4066
        %v4488 = vunpack.c.l.b16 %v4067
        %v4489 = vunpack.c.h.b16 %v4067
        %v4490 = vunpack.c.l.b16 %v4068
        %v4491 = vunpack.c.h.b16 %v4068
        %v4492 = vunpack.c.l.b16 %v4069
        %v4493 = vunpack.c.h.b16 %v4069
        %v4494 = vunpack.c.l.b16 %v4070
        %v4495 = vunpack.c.h.b16 %v4070
        %v4496 = vunpack.c.l.b16 %v4071
        %v4497 = vunpack.c.h.b16 %v4071
        %v4498 = vunpack.c.l.b16 %v4072
        %v4499 = vunpack.c.h.b16 %v4072
        %v4500 = vunpack.c.l.b16 %v4073
        %v4501 = vunpack.c.h.b16 %v4073
        %v4502 = vunpack.c.l.b16 %v4074
        %v4503 = vunpack.c.h.b16 %v4074
        %v4504 = vunpack.c.l.b16 %v4075
        %v4505 = vunpack.c.h.b16 %v4075
        %v4506 = vunpack.c.l.b16 %v4076
        %v4507 = vunpack.c.h.b16 %v4076
        %v4508 = vunpack.c.l.b16 %v4077
        %v4509 = vunpack.c.h.b16 %v4077
        %v4510 = vunpack.c.l.b16 %v4078
        %v4511 = vunpack.c.h.b16 %v4078
        %v4512 = vunpack.c.l.b16 %v4079
        %v4513 = vunpack.c.h.b16 %v4079
        %v4514 = vunpack.c.l.b16 %v4080
        %v4515 = vunpack.c.h.b16 %v4080
        %v4516 = vunpack.c.l.b16 %v4081
        %v4517 = vunpack.c.h.b16 %v4081
        %v4518 = vunpack.c.l.b16 %v4082
        %v4519 = vunpack.c.h.b16 %v4082
        %v4520 = vunpack.c.l.b16 %v4083
        %v4521 = vunpack.c.h.b16 %v4083
        %v4522 = vunpack.c.l.b16 %v4084
        %v4523 = vunpack.c.h.b16 %v4084
        %v4524 = vunpack.c.l.b16 %v4085
        %v4525 = vunpack.c.h.b16 %v4085
        %v4526 = vunpack.c.l.b16 %v4086
        %v4527 = vunpack.c.h.b16 %v4086
        %v4528 = vunpack.c.l.b16 %v4087
        %v4529 = vunpack.c.h.b16 %v4087
        %v4530 = vunpack.c.l.b16 %v4088
        %v4531 = vunpack.c.h.b16 %v4088
        %v4532 = vunpack.c.l.b16 %v4089
        %v4533 = vunpack.c.h.b16 %v4089
        %v4534 = vunpack.c.l.b16 %v4090
        %v4535 = vunpack.c.h.b16 %v4090
        %v4536 = vunpack.c.l.b16 %v4091
        %v4537 = vunpack.c.h.b16 %v4091
        %v4538 = vunpack.c.l.b16 %v4092
        %v4539 = vunpack.c.h.b16 %v4092
        %v4540 = vunpack.c.l.b16 %v4093
        %v4541 = vunpack.c.h.b16 %v4093
        %v4542 = vunpack.c.l.b16 %v4094
        %v4543 = vunpack.c.h.b16 %v4094
        %v4544 = vunpack.c.l.b16 %v4095
        %v4545 = vunpack.c.h.b16 %v4095
        %v4546 = vunpack.c.l.b16 %v4096
        %v4547 = vunpack.c.h.b16 %v4096
        %v4548 = vunpack.c.l.b16 %v4097
        %v4549 = vunpack.c.h.b16 %v4097
        %v4550 = vunpack.c.l.b16 %v4098
        %v4551 = vunpack.c.h.b16 %v4098
        %v4552 = vunpack.c.l.b16 %v4099
        %v4553 = vunpack.c.h.b16 %v4099
        %v4554 = vunpack.c.l.b16 %v4100
        %v4555 = vunpack.c.h.b16 %v4100
        %v4556 = vunpack.c.l.b16 %v4101
        %v4557 = vunpack.c.h.b16 %v4101
        %v4558 = vunpack.c.l.b16 %v4102
        %v4559 = vunpack.c.h.b16 %v4102
        %v4560 = vunpack.c.l.b16 %v4103
        %v4561 = vunpack.c.h.b16 %v4103
        %v4562 = vunpack.c.l.b16 %v4104
        %v4563 = vunpack.c.h.b16 %v4104
        %v4564 = vunpack.c.l.b16 %v4105
        %v4565 = vunpack.c.h.b16 %v4105
        %v4566 = vunpack.c.l.b16 %v4106
        %v4567 = vunpack.c.h.b16 %v4106
        %v4568 = vpack.c.b16 %v4320, %v4312
        %v4569 = vpack.c.b16 %v4321, %v4313
        %v4570 = vpack.c.b16 %v4322, %v4314
        %v4571 = vpack.c.b16 %v4323, %v4315
        %v4572 = vpack.c.b16 %v4324, %v4316
        %v4573 = vpack.c.b16 %v4325, %v4317
        %v4574 = vpack.c.b16 %v4326, %v4318
        %v4575 = vpack.c.b16 %v4327, %v4319
        %v4576 = vpack.c.b16 %v4336, %v4328
        %v4577 = vpack.c.b16 %v4337, %v4329
        %v4578 = vpack.c.b16 %v4338, %v4330
        %v4579 = vpack.c.b16 %v4339, %v4331
        %v4580 = vpack.c.b16 %v4340, %v4332
        %v4581 = vpack.c.b16 %v4341, %v4333
        %v4582 = vpack.c.b16 %v4342, %v4334
        %v4583 = vpack.c.b16 %v4343, %v4335
        %v4584 = vpack.c.b16 %v4352, %v4344
        %v4585 = vpack.c.b16 %v4353, %v4345
        %v4586 = vpack.c.b16 %v4354, %v4346
        %v4587 = vpack.c.b16 %v4355, %v4347
        %v4588 = vpack.c.b16 %v4356, %v4348
        %v4589 = vpack.c.b16 %v4357, %v4349
        %v4590 = vpack.c.b16 %v4358, %v4350
        %v4591 = vpack.c.b16 %v4359, %v4351
        %v4592 = vpack.c.b16 %v4368, %v4360
        %v4593 = vpack.c.b16 %v4369, %v4361
        %v4594 = vpack.c.b16 %v4370, %v4362
        %v4595 = vpack.c.b16 %v4371, %v4363
        %v4596 = vpack.c.b16 %v4372, %v4364
        %v4597 = vpack.c.b16 %v4373, %v4365
        %v4598 = vpack.c.b16 %v4374, %v4366
        %v4599 = vpack.c.b16 %v4375, %v4367
        %v4600 = vpack.c.b16 %v4384, %v4376
        %v4601 = vpack.c.b16 %v4385, %v4377
        %v4602 = vpack.c.b16 %v4386, %v4378
        %v4603 = vpack.c.b16 %v4387, %v4379
        %v4604 = vpack.c.b16 %v4388, %v4380
        %v4605 = vpack.c.b16 %v4389, %v4381
        %v4606 = vpack.c.b16 %v4390, %v4382
        %v4607 = vpack.c.b16 %v4391, %v4383
        %v4608 = vpack.c.b16 %v4400, %v4392
        %v4609 = vpack.c.b16 %v4401, %v4393
        %v4610 = vpack.c.b16 %v4402, %v4394
        %v4611 = vpack.c.b16 %v4403, %v4395
        %v4612 = vpack.c.b16 %v4404, %v4396
        %v4613 = vpack.c.b16 %v4405, %v4397
        %v4614 = vpack.c.b16 %v4406, %v4398
        %v4615 = vpack.c.b16 %v4407, %v4399
        %v4616 = vpack.c.b16 %v4416, %v4408
        %v4617 = vpack.c.b16 %v4417, %v4409
        %v4618 = vpack.c.b16 %v4418, %v4410
        %v4619 = vpack.c.b16 %v4419, %v4411
        %v4620 = vpack.c.b16 %v4420, %v4412
        %v4621 = vpack.c.b16 %v4421, %v4413
        %v4622 = vpack.c.b16 %v4422, %v4414
        %v4623 = vpack.c.b16 %v4423, %v4415
        %v4624 = vpack.c.b16 %v4432, %v4424
        %v4625 = vpack.c.b16 %v4433, %v4425
        %v4626 = vpack.c.b16 %v4434, %v4426
        %v4627 = vpack.c.b16 %v4435, %v4427
        %v4628 = vpack.c.b16 %v4436, %v4428
        %v4629 = vpack.c.b16 %v4437, %v4429
        %v4630 = vpack.c.b16 %v4438, %v4430
        %v4631 = vpack.c.b16 %v4439, %v4431
        %v4632 = vpack.c.b16 %v4448, %v4440
        %v4633 = vpack.c.b16 %v4449, %v4441
        %v4634 = vpack.c.b16 %v4450, %v4442
        %v4635 = vpack.c.b16 %v4451, %v4443
        %v4636 = vpack.c.b16 %v4452, %v4444
        %v4637 = vpack.c.b16 %v4453, %v4445
        %v4638 = vpack.c.b16 %v4454, %v4446
        %v4639 = vpack.c.b16 %v4455, %v4447
        %v4640 = vpack.c.b16 %v4464, %v4456
        %v4641 = vpack.c.b16 %v4465, %v4457
        %v4642 = vpack.c.b16 %v4466, %v4458
        %v4643 = vpack.c.b16 %v4467, %v4459
        %v4644 = vpack.c.b16 %v4468, %v4460
        %v4645 = vpack.c.b16 %v4469, %v4461
        %v4646 = vpack.c.b16 %v4470, %v4462
        %v4647 = vpack.c.b16 %v4471, %v4463
        %v4648 = vpack.c.b16 %v4480, %v4472
        %v4649 = vpack.c.b16 %v4481, %v4473
        %v4650 = vpack.c.b16 %v4482, %v4474
        %v4651 = vpack.c.b16 %v4483, %v4475
        %v4652 = vpack.c.b16 %v4484, %v4476
        %v4653 = vpack.c.b16 %v4485, %v4477
        %v4654 = vpack.c.b16 %v4486, %v4478
        %v4655 = vpack.c.b16 %v4487, %v4479
        %v4656 = vpack.c.b16 %v4496, %v4488
        %v4657 = vpack.c.b16 %v4497, %v4489
        %v4658 = vpack.c.b16 %v4498, %v4490
        %v4659 = vpack.c.b16 %v4499, %v4491
        %v4660 = vpack.c.b16 %v4500, %v4492
        %v4661 = vpack.c.b16 %v4501, %v4493
        %v4662 = vpack.c.b16 %v4502, %v4494
        %v4663 = vpack.c.b16 %v4503, %v4495
        %v4664 = vpack.c.b16 %v4512, %v4504
        %v4665 = vpack.c.b16 %v4513, %v4505
        %v4666 = vpack.c.b16 %v4514, %v4506
        %v4667 = vpack.c.b16 %v4515, %v4507
        %v4668 = vpack.c.b16 %v4516, %v4508
        %v4669 = vpack.c.b16 %v4517, %v4509
        %v4670 = vpack.c.b16 %v4518, %v4510
        %v4671 = vpack.c.b16 %v4519, %v4511
        %v4672 = vpack.c.b16 %v4528, %v4520
        %v4673 = vpack.c.b16 %v4529, %v4521
        %v4674 = vpack.c.b16 %v4530, %v4522
        %v4675 = vpack.c.b16 %v4531, %v4523
        %v4676 = vpack.c.b16 %v4532, %v4524
        %v4677 = vpack.c.b16 %v4533, %v4525
        %v4678 = vpack.c.b16 %v4534, %v4526
        %v4679 = vpack.c.b16 %v4535, %v4527
        %v4680 = vpack.c.b16 %v4544, %v4536
        %v4681 = vpack.c.b16 %v4545, %v4537
        %v4682 = vpack.c.b16 %v4546, %v4538
        %v4683 = vpack.c.b16 %v4547, %v4539
        %v4684 = vpack.c.b16 %v4548, %v4540
        %v4685 = vpack.c.b16 %v4549, %v4541
        %v4686 = vpack.c.b16 %v4550, %v4542
        %v4687 = vpack.c.b16 %v4551, %v4543
        %v4688 = vpack.c.b16 %v4560, %v4552
        %v4689 = vpack.c.b16 %v4561, %v4553
        %v4690 = vpack.c.b16 %v4562, %v4554
        %v4691 = vpack.c.b16 %v4563, %v4555
        %v4692 = vpack.c.b16 %v4564, %v4556
        %v4693 = vpack.c.b16 %v4565, %v4557
        %v4694 = vpack.c.b16 %v4566, %v4558
        %v4695 = vpack.c.b16 %v4567, %v4559
        %4824 = vmatprep.subr.bf16.mxu0 %v4625
        %4825 = vmatpush1.bf16.msra.mxu0 %v4624
        %4826 = vmatprep.subr.bf16.mxu0 %v4617
        %4827 = vmatpush1.bf16.msra.mxu0 %v4616
        %4828 = vmatprep.subr.bf16.mxu0 %v4609
        %4829 = vmatpush1.bf16.msra.mxu0 %v4608
        %4830 = vmatprep.subr.bf16.mxu0 %v4601
        %4831 = vmatpush1.bf16.msra.mxu0 %v4600
        %4832 = vmatprep.subr.bf16.mxu0 %v4593
        %4833 = vmatpush1.bf16.msra.mxu0 %v4592
        %4834 = vmatprep.subr.bf16.mxu0 %v4585
        %4835 = vmatpush1.bf16.msra.mxu0 %v4584
        %4836 = vmatprep.subr.bf16.mxu0 %v4577
        %4837 = vmatpush1.bf16.msra.mxu0 %v4576
        %4838 = vmatprep.subr.bf16.mxu0 %v4569
        %4839 = vmatpush1.bf16.msra.mxu0 %v4568
        %4840 = vmatprep.subr.bf16.mxu0 %v4689
        %4841 = vmatpush2.bf16.msra.mxu0 %v4688
        %4842 = vmatprep.subr.bf16.mxu0 %v4681
        %4843 = vmatpush2.bf16.msra.mxu0 %v4680
        %4844 = vmatprep.subr.bf16.mxu0 %v4673
        %4845 = vmatpush2.bf16.msra.mxu0 %v4672
        %4846 = vmatprep.subr.bf16.mxu0 %v4665
        %4847 = vmatpush2.bf16.msra.mxu0 %v4664
        %4848 = vmatprep.subr.bf16.mxu0 %v4657
        %4849 = vmatpush2.bf16.msra.mxu0 %v4656
        %4850 = vmatprep.subr.bf16.mxu0 %v4649
        %4851 = vmatpush2.bf16.msra.mxu0 %v4648
        %4852 = vmatprep.subr.bf16.mxu0 %v4641
        %4853 = vmatpush2.bf16.msra.mxu0 %v4640
        %4854 = vmatprep.subr.bf16.mxu0 %v4633
        %4855 = vmatpush2.bf16.msra.mxu0 %v4632
        %4856 = vmatprep.mubr.bf16.mxu0 %v3964
        %4857 = vmatmul.mubr.bf16.gmra.mxu0 %v3963
        %v4858 = vpop.f32.mrf.mxu0
        %v4859 = vadd.f32 %v4155, %v4858
        %v4860 = vpop.f32.mrf.mxu0
        %v4861 = vadd.f32 %v4159, %v4860
        %v4862 = vpop.f32.mrf.mxu0
        %v4863 = vadd.f32 %v4155, %v4862
        %v4864 = vpop.f32.mrf.mxu0
        %v4865 = vadd.f32 %v4159, %v4864
        %4866 = vmatprep.mubr.bf16.mxu0 %v3966
        %4867 = vmatmul.mubr.bf16.gmra.mxu0 %v3965
        %v4868 = vpop.f32.mrf.mxu0
        %v4869 = vadd.f32 %v4155, %v4868
        %v4870 = vpop.f32.mrf.mxu0
        %v4871 = vadd.f32 %v4159, %v4870
        %v4872 = vpop.f32.mrf.mxu0
        %v4873 = vadd.f32 %v4155, %v4872
        %v4874 = vpop.f32.mrf.mxu0
        %v4875 = vadd.f32 %v4159, %v4874
        %4876 = vmatprep.mubr.bf16.mxu0 %v3968
        %4877 = vmatmul.mubr.bf16.gmra.mxu0 %v3967
        %v4878 = vpop.f32.mrf.mxu0
        %v4879 = vadd.f32 %v4155, %v4878
        %v4880 = vpop.f32.mrf.mxu0
        %v4881 = vadd.f32 %v4159, %v4880
        %v4882 = vpop.f32.mrf.mxu0
        %v4883 = vadd.f32 %v4155, %v4882
        %v4884 = vpop.f32.mrf.mxu0
        %v4885 = vadd.f32 %v4159, %v4884
        %4886 = vmatprep.mubr.bf16.mxu0 %v3970
        %4887 = vmatmul.mubr.bf16.gmra.mxu0 %v3969
        %v4888 = vpop.f32.mrf.mxu0
        %v4889 = vadd.f32 %v4155, %v4888
        %v4890 = vpop.f32.mrf.mxu0
        %v4891 = vadd.f32 %v4159, %v4890
        %v4892 = vpop.f32.mrf.mxu0
        %v4893 = vadd.f32 %v4155, %v4892
        %v4894 = vpop.f32.mrf.mxu0
        %v4895 = vadd.f32 %v4159, %v4894
        %4896 = vmatprep.mubr.bf16.mxu0 %v3972
        %4897 = vmatmul.mubr.bf16.gmra.mxu0 %v3971
        %v4898 = vpop.f32.mrf.mxu0
        %v4899 = vadd.f32 %v4155, %v4898
        %v4900 = vpop.f32.mrf.mxu0
        %v4901 = vadd.f32 %v4159, %v4900
        %v4902 = vpop.f32.mrf.mxu0
        %v4903 = vadd.f32 %v4155, %v4902
        %v4904 = vpop.f32.mrf.mxu0
        %v4905 = vadd.f32 %v4159, %v4904
        %4906 = vmatprep.mubr.bf16.mxu0 %v3974
        %4907 = vmatmul.mubr.bf16.gmra.mxu0 %v3973
        %v4908 = vpop.f32.mrf.mxu0
        %v4909 = vadd.f32 %v4155, %v4908
        %v4910 = vpop.f32.mrf.mxu0
        %v4911 = vadd.f32 %v4159, %v4910
        %v4912 = vpop.f32.mrf.mxu0
        %v4913 = vadd.f32 %v4155, %v4912
        %v4914 = vpop.f32.mrf.mxu0
        %v4915 = vadd.f32 %v4159, %v4914
        %4916 = vmatprep.mubr.bf16.mxu0 %v3976
        %4917 = vmatmul.mubr.bf16.gmra.mxu0 %v3975
        %v4918 = vpop.f32.mrf.mxu0
        %v4919 = vadd.f32 %v4155, %v4918
        %v4920 = vpop.f32.mrf.mxu0
        %v4921 = vadd.f32 %v4159, %v4920
        %v4922 = vpop.f32.mrf.mxu0
        %v4923 = vadd.f32 %v4155, %v4922
        %v4924 = vpop.f32.mrf.mxu0
        %v4925 = vadd.f32 %v4159, %v4924
        %4926 = vmatprep.mubr.bf16.mxu0 %v3978
        %4927 = vmatmul.mubr.bf16.gmra.mxu0 %v3977
        %v4928 = vpop.f32.mrf.mxu0
        %v4929 = vadd.f32 %v4155, %v4928
        %v4930 = vpop.f32.mrf.mxu0
        %v4931 = vadd.f32 %v4159, %v4930
        %v4932 = vpop.f32.mrf.mxu0
        %v4933 = vadd.f32 %v4155, %v4932
        %v4934 = vpop.f32.mrf.mxu0
        %v4935 = vadd.f32 %v4159, %v4934
        %4936 = vdwg.mxu0
        %4937 = vmatprep.subr.bf16.mxu0 %v4627
        %4938 = vmatpush1.bf16.msra.mxu0 %v4626
        %4939 = vmatprep.subr.bf16.mxu0 %v4619
        %4940 = vmatpush1.bf16.msra.mxu0 %v4618
        %4941 = vmatprep.subr.bf16.mxu0 %v4611
        %4942 = vmatpush1.bf16.msra.mxu0 %v4610
        %4943 = vmatprep.subr.bf16.mxu0 %v4603
        %4944 = vmatpush1.bf16.msra.mxu0 %v4602
        %4945 = vmatprep.subr.bf16.mxu0 %v4595
        %4946 = vmatpush1.bf16.msra.mxu0 %v4594
        %4947 = vmatprep.subr.bf16.mxu0 %v4587
        %4948 = vmatpush1.bf16.msra.mxu0 %v4586
        %4949 = vmatprep.subr.bf16.mxu0 %v4579
        %4950 = vmatpush1.bf16.msra.mxu0 %v4578
        %4951 = vmatprep.subr.bf16.mxu0 %v4571
        %4952 = vmatpush1.bf16.msra.mxu0 %v4570
        %4953 = vmatprep.subr.bf16.mxu0 %v4691
        %4954 = vmatpush2.bf16.msra.mxu0 %v4690
        %4955 = vmatprep.subr.bf16.mxu0 %v4683
        %4956 = vmatpush2.bf16.msra.mxu0 %v4682
        %4957 = vmatprep.subr.bf16.mxu0 %v4675
        %4958 = vmatpush2.bf16.msra.mxu0 %v4674
        %4959 = vmatprep.subr.bf16.mxu0 %v4667
        %4960 = vmatpush2.bf16.msra.mxu0 %v4666
        %4961 = vmatprep.subr.bf16.mxu0 %v4659
        %4962 = vmatpush2.bf16.msra.mxu0 %v4658
        %4963 = vmatprep.subr.bf16.mxu0 %v4651
        %4964 = vmatpush2.bf16.msra.mxu0 %v4650
        %4965 = vmatprep.subr.bf16.mxu0 %v4643
        %4966 = vmatpush2.bf16.msra.mxu0 %v4642
        %4967 = vmatprep.subr.bf16.mxu0 %v4635
        %4968 = vmatpush2.bf16.msra.mxu0 %v4634
        %4969 = vmatprep.mubr.bf16.mxu0 %v3964
        %4970 = vmatmul.mubr.bf16.gmra.mxu0 %v3963
        %v4971 = vpop.f32.mrf.mxu0
        %v4972 = vadd.f32 %v4163, %v4971
        %v4973 = vpop.f32.mrf.mxu0
        %v4974 = vadd.f32 %v4167, %v4973
        %v4975 = vpop.f32.mrf.mxu0
        %v4976 = vadd.f32 %v4163, %v4975
        %v4977 = vpop.f32.mrf.mxu0
        %v4978 = vadd.f32 %v4167, %v4977
        %4979 = vmatprep.mubr.bf16.mxu0 %v3966
        %4980 = vmatmul.mubr.bf16.gmra.mxu0 %v3965
        %v4981 = vpop.f32.mrf.mxu0
        %v4982 = vadd.f32 %v4163, %v4981
        %v4983 = vpop.f32.mrf.mxu0
        %v4984 = vadd.f32 %v4167, %v4983
        %v4985 = vpop.f32.mrf.mxu0
        %v4986 = vadd.f32 %v4163, %v4985
        %v4987 = vpop.f32.mrf.mxu0
        %v4988 = vadd.f32 %v4167, %v4987
        %4989 = vmatprep.mubr.bf16.mxu0 %v3968
        %4990 = vmatmul.mubr.bf16.gmra.mxu0 %v3967
        %v4991 = vpop.f32.mrf.mxu0
        %v4992 = vadd.f32 %v4163, %v4991
        %v4993 = vpop.f32.mrf.mxu0
        %v4994 = vadd.f32 %v4167, %v4993
        %v4995 = vpop.f32.mrf.mxu0
        %v4996 = vadd.f32 %v4163, %v4995
        %v4997 = vpop.f32.mrf.mxu0
        %v4998 = vadd.f32 %v4167, %v4997
        %4999 = vmatprep.mubr.bf16.mxu0 %v3970
        %5000 = vmatmul.mubr.bf16.gmra.mxu0 %v3969
        %v5001 = vpop.f32.mrf.mxu0
        %v5002 = vadd.f32 %v4163, %v5001
        %v5003 = vpop.f32.mrf.mxu0
        %v5004 = vadd.f32 %v4167, %v5003
        %v5005 = vpop.f32.mrf.mxu0
        %v5006 = vadd.f32 %v4163, %v5005
        %v5007 = vpop.f32.mrf.mxu0
        %v5008 = vadd.f32 %v4167, %v5007
        %5009 = vmatprep.mubr.bf16.mxu0 %v3972
        %5010 = vmatmul.mubr.bf16.gmra.mxu0 %v3971
        %v5011 = vpop.f32.mrf.mxu0
        %v5012 = vadd.f32 %v4163, %v5011
        %v5013 = vpop.f32.mrf.mxu0
        %v5014 = vadd.f32 %v4167, %v5013
        %v5015 = vpop.f32.mrf.mxu0
        %v5016 = vadd.f32 %v4163, %v5015
        %v5017 = vpop.f32.mrf.mxu0
        %v5018 = vadd.f32 %v4167, %v5017
        %5019 = vmatprep.mubr.bf16.mxu0 %v3974
        %5020 = vmatmul.mubr.bf16.gmra.mxu0 %v3973
        %v5021 = vpop.f32.mrf.mxu0
        %v5022 = vadd.f32 %v4163, %v5021
        %v5023 = vpop.f32.mrf.mxu0
        %v5024 = vadd.f32 %v4167, %v5023
        %v5025 = vpop.f32.mrf.mxu0
        %v5026 = vadd.f32 %v4163, %v5025
        %v5027 = vpop.f32.mrf.mxu0
        %v5028 = vadd.f32 %v4167, %v5027
        %5029 = vmatprep.mubr.bf16.mxu0 %v3976
        %5030 = vmatmul.mubr.bf16.gmra.mxu0 %v3975
        %v5031 = vpop.f32.mrf.mxu0
        %v5032 = vadd.f32 %v4163, %v5031
        %v5033 = vpop.f32.mrf.mxu0
        %v5034 = vadd.f32 %v4167, %v5033
        %v5035 = vpop.f32.mrf.mxu0
        %v5036 = vadd.f32 %v4163, %v5035
        %v5037 = vpop.f32.mrf.mxu0
        %v5038 = vadd.f32 %v4167, %v5037
        %5039 = vmatprep.mubr.bf16.mxu0 %v3978
        %5040 = vmatmul.mubr.bf16.gmra.mxu0 %v3977
        %v5041 = vpop.f32.mrf.mxu0
        %v5042 = vadd.f32 %v4163, %v5041
        %v5043 = vpop.f32.mrf.mxu0
        %v5044 = vadd.f32 %v4167, %v5043
        %v5045 = vpop.f32.mrf.mxu0
        %v5046 = vadd.f32 %v4163, %v5045
        %v5047 = vpop.f32.mrf.mxu0
        %v5048 = vadd.f32 %v4167, %v5047
        %5049 = vdwg.mxu0
        %5050 = vmatprep.subr.bf16.mxu0 %v4629
        %5051 = vmatpush1.bf16.msra.mxu0 %v4628
        %5052 = vmatprep.subr.bf16.mxu0 %v4621
        %5053 = vmatpush1.bf16.msra.mxu0 %v4620
        %5054 = vmatprep.subr.bf16.mxu0 %v4613
        %5055 = vmatpush1.bf16.msra.mxu0 %v4612
        %5056 = vmatprep.subr.bf16.mxu0 %v4605
        %5057 = vmatpush1.bf16.msra.mxu0 %v4604
        %5058 = vmatprep.subr.bf16.mxu0 %v4597
        %5059 = vmatpush1.bf16.msra.mxu0 %v4596
        %5060 = vmatprep.subr.bf16.mxu0 %v4589
        %5061 = vmatpush1.bf16.msra.mxu0 %v4588
        %5062 = vmatprep.subr.bf16.mxu0 %v4581
        %5063 = vmatpush1.bf16.msra.mxu0 %v4580
        %5064 = vmatprep.subr.bf16.mxu0 %v4573
        %5065 = vmatpush1.bf16.msra.mxu0 %v4572
        %5066 = vmatprep.subr.bf16.mxu0 %v4693
        %5067 = vmatpush2.bf16.msra.mxu0 %v4692
        %5068 = vmatprep.subr.bf16.mxu0 %v4685
        %5069 = vmatpush2.bf16.msra.mxu0 %v4684
        %5070 = vmatprep.subr.bf16.mxu0 %v4677
        %5071 = vmatpush2.bf16.msra.mxu0 %v4676
        %5072 = vmatprep.subr.bf16.mxu0 %v4669
        %5073 = vmatpush2.bf16.msra.mxu0 %v4668
        %5074 = vmatprep.subr.bf16.mxu0 %v4661
        %5075 = vmatpush2.bf16.msra.mxu0 %v4660
        %5076 = vmatprep.subr.bf16.mxu0 %v4653
        %5077 = vmatpush2.bf16.msra.mxu0 %v4652
        %5078 = vmatprep.subr.bf16.mxu0 %v4645
        %5079 = vmatpush2.bf16.msra.mxu0 %v4644
        %5080 = vmatprep.subr.bf16.mxu0 %v4637
        %5081 = vmatpush2.bf16.msra.mxu0 %v4636
        %5082 = vmatprep.mubr.bf16.mxu0 %v3964
        %5083 = vmatmul.mubr.bf16.gmra.mxu0 %v3963
        %v5084 = vpop.f32.mrf.mxu0
        %v5085 = vadd.f32 %v4171, %v5084
        %v5086 = vpop.f32.mrf.mxu0
        %v5087 = vadd.f32 %v4175, %v5086
        %v5088 = vpop.f32.mrf.mxu0
        %v5089 = vadd.f32 %v4171, %v5088
        %v5090 = vpop.f32.mrf.mxu0
        %v5091 = vadd.f32 %v4175, %v5090
        %5092 = vmatprep.mubr.bf16.mxu0 %v3966
        %5093 = vmatmul.mubr.bf16.gmra.mxu0 %v3965
        %v5094 = vpop.f32.mrf.mxu0
        %v5095 = vadd.f32 %v4171, %v5094
        %v5096 = vpop.f32.mrf.mxu0
        %v5097 = vadd.f32 %v4175, %v5096
        %v5098 = vpop.f32.mrf.mxu0
        %v5099 = vadd.f32 %v4171, %v5098
        %v5100 = vpop.f32.mrf.mxu0
        %v5101 = vadd.f32 %v4175, %v5100
        %5102 = vmatprep.mubr.bf16.mxu0 %v3968
        %5103 = vmatmul.mubr.bf16.gmra.mxu0 %v3967
        %v5104 = vpop.f32.mrf.mxu0
        %v5105 = vadd.f32 %v4171, %v5104
        %v5106 = vpop.f32.mrf.mxu0
        %v5107 = vadd.f32 %v4175, %v5106
        %v5108 = vpop.f32.mrf.mxu0
        %v5109 = vadd.f32 %v4171, %v5108
        %v5110 = vpop.f32.mrf.mxu0
        %v5111 = vadd.f32 %v4175, %v5110
        %5112 = vmatprep.mubr.bf16.mxu0 %v3970
        %5113 = vmatmul.mubr.bf16.gmra.mxu0 %v3969
        %v5114 = vpop.f32.mrf.mxu0
        %v5115 = vadd.f32 %v4171, %v5114
        %v5116 = vpop.f32.mrf.mxu0
        %v5117 = vadd.f32 %v4175, %v5116
        %v5118 = vpop.f32.mrf.mxu0
        %v5119 = vadd.f32 %v4171, %v5118
        %v5120 = vpop.f32.mrf.mxu0
        %v5121 = vadd.f32 %v4175, %v5120
        %5122 = vmatprep.mubr.bf16.mxu0 %v3972
        %5123 = vmatmul.mubr.bf16.gmra.mxu0 %v3971
        %v5124 = vpop.f32.mrf.mxu0
        %v5125 = vadd.f32 %v4171, %v5124
        %v5126 = vpop.f32.mrf.mxu0
        %v5127 = vadd.f32 %v4175, %v5126
        %v5128 = vpop.f32.mrf.mxu0
        %v5129 = vadd.f32 %v4171, %v5128
        %v5130 = vpop.f32.mrf.mxu0
        %v5131 = vadd.f32 %v4175, %v5130
        %5132 = vmatprep.mubr.bf16.mxu0 %v3974
        %5133 = vmatmul.mubr.bf16.gmra.mxu0 %v3973
        %v5134 = vpop.f32.mrf.mxu0
        %v5135 = vadd.f32 %v4171, %v5134
        %v5136 = vpop.f32.mrf.mxu0
        %v5137 = vadd.f32 %v4175, %v5136
        %v5138 = vpop.f32.mrf.mxu0
        %v5139 = vadd.f32 %v4171, %v5138
        %v5140 = vpop.f32.mrf.mxu0
        %v5141 = vadd.f32 %v4175, %v5140
        %5142 = vmatprep.mubr.bf16.mxu0 %v3976
        %5143 = vmatmul.mubr.bf16.gmra.mxu0 %v3975
        %v5144 = vpop.f32.mrf.mxu0
        %v5145 = vadd.f32 %v4171, %v5144
        %v5146 = vpop.f32.mrf.mxu0
        %v5147 = vadd.f32 %v4175, %v5146
        %v5148 = vpop.f32.mrf.mxu0
        %v5149 = vadd.f32 %v4171, %v5148
        %v5150 = vpop.f32.mrf.mxu0
        %v5151 = vadd.f32 %v4175, %v5150
        %5152 = vmatprep.mubr.bf16.mxu0 %v3978
        %5153 = vmatmul.mubr.bf16.gmra.mxu0 %v3977
        %v5154 = vpop.f32.mrf.mxu0
        %v5155 = vadd.f32 %v4171, %v5154
        %v5156 = vpop.f32.mrf.mxu0
        %v5157 = vadd.f32 %v4175, %v5156
        %v5158 = vpop.f32.mrf.mxu0
        %v5159 = vadd.f32 %v4171, %v5158
        %v5160 = vpop.f32.mrf.mxu0
        %v5161 = vadd.f32 %v4175, %v5160
        %5162 = vdwg.mxu0
        %5163 = vmatprep.subr.bf16.mxu0 %v4631
        %5164 = vmatpush1.bf16.msra.mxu0 %v4630
        %5165 = vmatprep.subr.bf16.mxu0 %v4623
        %5166 = vmatpush1.bf16.msra.mxu0 %v4622
        %5167 = vmatprep.subr.bf16.mxu0 %v4615
        %5168 = vmatpush1.bf16.msra.mxu0 %v4614
        %5169 = vmatprep.subr.bf16.mxu0 %v4607
        %5170 = vmatpush1.bf16.msra.mxu0 %v4606
        %5171 = vmatprep.subr.bf16.mxu0 %v4599
        %5172 = vmatpush1.bf16.msra.mxu0 %v4598
        %5173 = vmatprep.subr.bf16.mxu0 %v4591
        %5174 = vmatpush1.bf16.msra.mxu0 %v4590
        %5175 = vmatprep.subr.bf16.mxu0 %v4583
        %5176 = vmatpush1.bf16.msra.mxu0 %v4582
        %5177 = vmatprep.subr.bf16.mxu0 %v4575
        %5178 = vmatpush1.bf16.msra.mxu0 %v4574
        %5179 = vmatprep.subr.bf16.mxu0 %v4695
        %5180 = vmatpush2.bf16.msra.mxu0 %v4694
        %5181 = vmatprep.subr.bf16.mxu0 %v4687
        %5182 = vmatpush2.bf16.msra.mxu0 %v4686
        %5183 = vmatprep.subr.bf16.mxu0 %v4679
        %5184 = vmatpush2.bf16.msra.mxu0 %v4678
        %5185 = vmatprep.subr.bf16.mxu0 %v4671
        %5186 = vmatpush2.bf16.msra.mxu0 %v4670
        %5187 = vmatprep.subr.bf16.mxu0 %v4663
        %5188 = vmatpush2.bf16.msra.mxu0 %v4662
        %5189 = vmatprep.subr.bf16.mxu0 %v4655
        %5190 = vmatpush2.bf16.msra.mxu0 %v4654
        %5191 = vmatprep.subr.bf16.mxu0 %v4647
        %5192 = vmatpush2.bf16.msra.mxu0 %v4646
        %5193 = vmatprep.subr.bf16.mxu0 %v4639
        %5194 = vmatpush2.bf16.msra.mxu0 %v4638
        %5195 = vmatprep.mubr.bf16.mxu0 %v3964
        %5196 = vmatmul.mubr.bf16.gmra.mxu0 %v3963
        %v5197 = vpop.f32.mrf.mxu0
        %v5198 = vadd.f32 %v4179, %v5197
        %v5199 = vpop.f32.mrf.mxu0
        %v5200 = vadd.f32 %v4183, %v5199
        %v5201 = vpop.f32.mrf.mxu0
        %v5202 = vadd.f32 %v4179, %v5201
        %v5203 = vpop.f32.mrf.mxu0
        %v5204 = vadd.f32 %v4183, %v5203
        %5205 = vmatprep.mubr.bf16.mxu0 %v3966
        %5206 = vmatmul.mubr.bf16.gmra.mxu0 %v3965
        %v5207 = vpop.f32.mrf.mxu0
        %v5208 = vadd.f32 %v4179, %v5207
        %v5209 = vpop.f32.mrf.mxu0
        %v5210 = vadd.f32 %v4183, %v5209
        %v5211 = vpop.f32.mrf.mxu0
        %v5212 = vadd.f32 %v4179, %v5211
        %v5213 = vpop.f32.mrf.mxu0
        %v5214 = vadd.f32 %v4183, %v5213
        %5215 = vmatprep.mubr.bf16.mxu0 %v3968
        %5216 = vmatmul.mubr.bf16.gmra.mxu0 %v3967
        %v5217 = vpop.f32.mrf.mxu0
        %v5218 = vadd.f32 %v4179, %v5217
        %v5219 = vpop.f32.mrf.mxu0
        %v5220 = vadd.f32 %v4183, %v5219
        %v5221 = vpop.f32.mrf.mxu0
        %v5222 = vadd.f32 %v4179, %v5221
        %v5223 = vpop.f32.mrf.mxu0
        %v5224 = vadd.f32 %v4183, %v5223
        %5225 = vmatprep.mubr.bf16.mxu0 %v3970
        %5226 = vmatmul.mubr.bf16.gmra.mxu0 %v3969
        %v5227 = vpop.f32.mrf.mxu0
        %v5228 = vadd.f32 %v4179, %v5227
        %v5229 = vpop.f32.mrf.mxu0
        %v5230 = vadd.f32 %v4183, %v5229
        %v5231 = vpop.f32.mrf.mxu0
        %v5232 = vadd.f32 %v4179, %v5231
        %v5233 = vpop.f32.mrf.mxu0
        %v5234 = vadd.f32 %v4183, %v5233
        %5235 = vmatprep.mubr.bf16.mxu0 %v3972
        %5236 = vmatmul.mubr.bf16.gmra.mxu0 %v3971
        %v5237 = vpop.f32.mrf.mxu0
        %v5238 = vadd.f32 %v4179, %v5237
        %v5239 = vpop.f32.mrf.mxu0
        %v5240 = vadd.f32 %v4183, %v5239
        %v5241 = vpop.f32.mrf.mxu0
        %v5242 = vadd.f32 %v4179, %v5241
        %v5243 = vpop.f32.mrf.mxu0
        %v5244 = vadd.f32 %v4183, %v5243
        %5245 = vmatprep.mubr.bf16.mxu0 %v3974
        %5246 = vmatmul.mubr.bf16.gmra.mxu0 %v3973
        %v5247 = vpop.f32.mrf.mxu0
        %v5248 = vadd.f32 %v4179, %v5247
        %v5249 = vpop.f32.mrf.mxu0
        %v5250 = vadd.f32 %v4183, %v5249
        %v5251 = vpop.f32.mrf.mxu0
        %v5252 = vadd.f32 %v4179, %v5251
        %v5253 = vpop.f32.mrf.mxu0
        %v5254 = vadd.f32 %v4183, %v5253
        %5255 = vmatprep.mubr.bf16.mxu0 %v3976
        %5256 = vmatmul.mubr.bf16.gmra.mxu0 %v3975
        %v5257 = vpop.f32.mrf.mxu0
        %v5258 = vadd.f32 %v4179, %v5257
        %v5259 = vpop.f32.mrf.mxu0
        %v5260 = vadd.f32 %v4183, %v5259
        %v5261 = vpop.f32.mrf.mxu0
        %v5262 = vadd.f32 %v4179, %v5261
        %v5263 = vpop.f32.mrf.mxu0
        %v5264 = vadd.f32 %v4183, %v5263
        %5265 = vmatprep.mubr.bf16.mxu0 %v3978
        %5266 = vmatmul.mubr.bf16.gmra.mxu0 %v3977
        %v5267 = vpop.f32.mrf.mxu0
        %v5268 = vadd.f32 %v4179, %v5267
        %v5269 = vpop.f32.mrf.mxu0
        %v5270 = vadd.f32 %v4183, %v5269
        %v5271 = vpop.f32.mrf.mxu0
        %v5272 = vadd.f32 %v4179, %v5271
        %v5273 = vpop.f32.mrf.mxu0
        %v5274 = vadd.f32 %v4183, %v5273
        %5275 = vdwg.mxu0
        %v5276 = vmul.f32 %v4859, 0.5
        %v5277 = vmul.f32 %v4861, 0.5
        %v5278 = vmul.f32 %v4972, 0.5
        %v5279 = vmul.f32 %v4974, 0.5
        %v5280 = vmul.f32 %v5085, 0.5
        %v5281 = vmul.f32 %v5087, 0.5
        %v5282 = vmul.f32 %v5198, 0.5
        %v5283 = vmul.f32 %v5200, 0.5
        %v5284 = vmul.f32 %v4863, 0.5
        %v5285 = vmul.f32 %v4865, 0.5
        %v5286 = vmul.f32 %v4976, 0.5
        %v5287 = vmul.f32 %v4978, 0.5
        %v5288 = vmul.f32 %v5089, 0.5
        %v5289 = vmul.f32 %v5091, 0.5
        %v5290 = vmul.f32 %v5202, 0.5
        %v5291 = vmul.f32 %v5204, 0.5
        %v5292 = vmul.f32 %v4869, 0.5
        %v5293 = vmul.f32 %v4871, 0.5
        %v5294 = vmul.f32 %v4982, 0.5
        %v5295 = vmul.f32 %v4984, 0.5
        %v5296 = vmul.f32 %v5095, 0.5
        %v5297 = vmul.f32 %v5097, 0.5
        %v5298 = vmul.f32 %v5208, 0.5
        %v5299 = vmul.f32 %v5210, 0.5
        %v5300 = vmul.f32 %v4873, 0.5
        %v5301 = vmul.f32 %v4875, 0.5
        %v5302 = vmul.f32 %v4986, 0.5
        %v5303 = vmul.f32 %v4988, 0.5
        %v5304 = vmul.f32 %v5099, 0.5
        %v5305 = vmul.f32 %v5101, 0.5
        %v5306 = vmul.f32 %v5212, 0.5
        %v5307 = vmul.f32 %v5214, 0.5
        %v5308 = vmul.f32 %v4879, 0.5
        %v5309 = vmul.f32 %v4881, 0.5
        %v5310 = vmul.f32 %v4992, 0.5
        %v5311 = vmul.f32 %v4994, 0.5
        %v5312 = vmul.f32 %v5105, 0.5
        %v5313 = vmul.f32 %v5107, 0.5
        %v5314 = vmul.f32 %v5218, 0.5
        %v5315 = vmul.f32 %v5220, 0.5
        %v5316 = vmul.f32 %v4883, 0.5
        %v5317 = vmul.f32 %v4885, 0.5
        %v5318 = vmul.f32 %v4996, 0.5
        %v5319 = vmul.f32 %v4998, 0.5
        %v5320 = vmul.f32 %v5109, 0.5
        %v5321 = vmul.f32 %v5111, 0.5
        %v5322 = vmul.f32 %v5222, 0.5
        %v5323 = vmul.f32 %v5224, 0.5
        %v5324 = vmul.f32 %v4889, 0.5
        %v5325 = vmul.f32 %v4891, 0.5
        %v5326 = vmul.f32 %v5002, 0.5
        %v5327 = vmul.f32 %v5004, 0.5
        %v5328 = vmul.f32 %v5115, 0.5
        %v5329 = vmul.f32 %v5117, 0.5
        %v5330 = vmul.f32 %v5228, 0.5
        %v5331 = vmul.f32 %v5230, 0.5
        %v5332 = vmul.f32 %v4893, 0.5
        %v5333 = vmul.f32 %v4895, 0.5
        %v5334 = vmul.f32 %v5006, 0.5
        %v5335 = vmul.f32 %v5008, 0.5
        %v5336 = vmul.f32 %v5119, 0.5
        %v5337 = vmul.f32 %v5121, 0.5
        %v5338 = vmul.f32 %v5232, 0.5
        %v5339 = vmul.f32 %v5234, 0.5
        %v5340 = vmul.f32 %v4899, 0.5
        %v5341 = vmul.f32 %v4901, 0.5
        %v5342 = vmul.f32 %v5012, 0.5
        %v5343 = vmul.f32 %v5014, 0.5
        %v5344 = vmul.f32 %v5125, 0.5
        %v5345 = vmul.f32 %v5127, 0.5
        %v5346 = vmul.f32 %v5238, 0.5
        %v5347 = vmul.f32 %v5240, 0.5
        %v5348 = vmul.f32 %v4903, 0.5
        %v5349 = vmul.f32 %v4905, 0.5
        %v5350 = vmul.f32 %v5016, 0.5
        %v5351 = vmul.f32 %v5018, 0.5
        %v5352 = vmul.f32 %v5129, 0.5
        %v5353 = vmul.f32 %v5131, 0.5
        %v5354 = vmul.f32 %v5242, 0.5
        %v5355 = vmul.f32 %v5244, 0.5
        %v5356 = vmul.f32 %v4909, 0.5
        %v5357 = vmul.f32 %v4911, 0.5
        %v5358 = vmul.f32 %v5022, 0.5
        %v5359 = vmul.f32 %v5024, 0.5
        %v5360 = vmul.f32 %v5135, 0.5
        %v5361 = vmul.f32 %v5137, 0.5
        %v5362 = vmul.f32 %v5248, 0.5
        %v5363 = vmul.f32 %v5250, 0.5
        %v5364 = vmul.f32 %v4913, 0.5
        %v5365 = vmul.f32 %v4915, 0.5
        %v5366 = vmul.f32 %v5026, 0.5
        %v5367 = vmul.f32 %v5028, 0.5
        %v5368 = vmul.f32 %v5139, 0.5
        %v5369 = vmul.f32 %v5141, 0.5
        %v5370 = vmul.f32 %v5252, 0.5
        %v5371 = vmul.f32 %v5254, 0.5
        %v5372 = vmul.f32 %v4919, 0.5
        %v5373 = vmul.f32 %v4921, 0.5
        %v5374 = vmul.f32 %v5032, 0.5
        %v5375 = vmul.f32 %v5034, 0.5
        %v5376 = vmul.f32 %v5145, 0.5
        %v5377 = vmul.f32 %v5147, 0.5
        %v5378 = vmul.f32 %v5258, 0.5
        %v5379 = vmul.f32 %v5260, 0.5
        %v5380 = vmul.f32 %v4923, 0.5
        %v5381 = vmul.f32 %v4925, 0.5
        %v5382 = vmul.f32 %v5036, 0.5
        %v5383 = vmul.f32 %v5038, 0.5
        %v5384 = vmul.f32 %v5149, 0.5
        %v5385 = vmul.f32 %v5151, 0.5
        %v5386 = vmul.f32 %v5262, 0.5
        %v5387 = vmul.f32 %v5264, 0.5
        %v5388 = vmul.f32 %v4929, 0.5
        %v5389 = vmul.f32 %v4931, 0.5
        %v5390 = vmul.f32 %v5042, 0.5
        %v5391 = vmul.f32 %v5044, 0.5
        %v5392 = vmul.f32 %v5155, 0.5
        %v5393 = vmul.f32 %v5157, 0.5
        %v5394 = vmul.f32 %v5268, 0.5
        %v5395 = vmul.f32 %v5270, 0.5
        %v5396 = vmul.f32 %v4933, 0.5
        %v5397 = vmul.f32 %v4935, 0.5
        %v5398 = vmul.f32 %v5046, 0.5
        %v5399 = vmul.f32 %v5048, 0.5
        %v5400 = vmul.f32 %v5159, 0.5
        %v5401 = vmul.f32 %v5161, 0.5
        %v5402 = vmul.f32 %v5272, 0.5
        %v5403 = vmul.f32 %v5274, 0.5
        %v5404 = vmul.f32 %v4859, 0.044715
        %v5405 = vmul.f32 %v4861, 0.044715
        %v5406 = vmul.f32 %v4972, 0.044715
        %v5407 = vmul.f32 %v4974, 0.044715
        %v5408 = vmul.f32 %v5085, 0.044715
        %v5409 = vmul.f32 %v5087, 0.044715
        %v5410 = vmul.f32 %v5198, 0.044715
        %v5411 = vmul.f32 %v5200, 0.044715
        %v5412 = vmul.f32 %v4863, 0.044715
        %v5413 = vmul.f32 %v4865, 0.044715
        %v5414 = vmul.f32 %v4976, 0.044715
        %v5415 = vmul.f32 %v4978, 0.044715
        %v5416 = vmul.f32 %v5089, 0.044715
        %v5417 = vmul.f32 %v5091, 0.044715
        %v5418 = vmul.f32 %v5202, 0.044715
        %v5419 = vmul.f32 %v5204, 0.044715
        %v5420 = vmul.f32 %v4869, 0.044715
        %v5421 = vmul.f32 %v4871, 0.044715
        %v5422 = vmul.f32 %v4982, 0.044715
        %v5423 = vmul.f32 %v4984, 0.044715
        %v5424 = vmul.f32 %v5095, 0.044715
        %v5425 = vmul.f32 %v5097, 0.044715
        %v5426 = vmul.f32 %v5208, 0.044715
        %v5427 = vmul.f32 %v5210, 0.044715
        %v5428 = vmul.f32 %v4873, 0.044715
        %v5429 = vmul.f32 %v4875, 0.044715
        %v5430 = vmul.f32 %v4986, 0.044715
        %v5431 = vmul.f32 %v4988, 0.044715
        %v5432 = vmul.f32 %v5099, 0.044715
        %v5433 = vmul.f32 %v5101, 0.044715
        %v5434 = vmul.f32 %v5212, 0.044715
        %v5435 = vmul.f32 %v5214, 0.044715
        %v5436 = vmul.f32 %v4879, 0.044715
        %v5437 = vmul.f32 %v4881, 0.044715
        %v5438 = vmul.f32 %v4992, 0.044715
        %v5439 = vmul.f32 %v4994, 0.044715
        %v5440 = vmul.f32 %v5105, 0.044715
        %v5441 = vmul.f32 %v5107, 0.044715
        %v5442 = vmul.f32 %v5218, 0.044715
        %v5443 = vmul.f32 %v5220, 0.044715
        %v5444 = vmul.f32 %v4883, 0.044715
        %v5445 = vmul.f32 %v4885, 0.044715
        %v5446 = vmul.f32 %v4996, 0.044715
        %v5447 = vmul.f32 %v4998, 0.044715
        %v5448 = vmul.f32 %v5109, 0.044715
        %v5449 = vmul.f32 %v5111, 0.044715
        %v5450 = vmul.f32 %v5222, 0.044715
        %v5451 = vmul.f32 %v5224, 0.044715
        %v5452 = vmul.f32 %v4889, 0.044715
        %v5453 = vmul.f32 %v4891, 0.044715
        %v5454 = vmul.f32 %v5002, 0.044715
        %v5455 = vmul.f32 %v5004, 0.044715
        %v5456 = vmul.f32 %v5115, 0.044715
        %v5457 = vmul.f32 %v5117, 0.044715
        %v5458 = vmul.f32 %v5228, 0.044715
        %v5459 = vmul.f32 %v5230, 0.044715
        %v5460 = vmul.f32 %v4893, 0.044715
        %v5461 = vmul.f32 %v4895, 0.044715
        %v5462 = vmul.f32 %v5006, 0.044715
        %v5463 = vmul.f32 %v5008, 0.044715
        %v5464 = vmul.f32 %v5119, 0.044715
        %v5465 = vmul.f32 %v5121, 0.044715
        %v5466 = vmul.f32 %v5232, 0.044715
        %v5467 = vmul.f32 %v5234, 0.044715
        %v5468 = vmul.f32 %v4899, 0.044715
        %v5469 = vmul.f32 %v4901, 0.044715
        %v5470 = vmul.f32 %v5012, 0.044715
        %v5471 = vmul.f32 %v5014, 0.044715
        %v5472 = vmul.f32 %v5125, 0.044715
        %v5473 = vmul.f32 %v5127, 0.044715
        %v5474 = vmul.f32 %v5238, 0.044715
        %v5475 = vmul.f32 %v5240, 0.044715
        %v5476 = vmul.f32 %v4903, 0.044715
        %v5477 = vmul.f32 %v4905, 0.044715
        %v5478 = vmul.f32 %v5016, 0.044715
        %v5479 = vmul.f32 %v5018, 0.044715
        %v5480 = vmul.f32 %v5129, 0.044715
        %v5481 = vmul.f32 %v5131, 0.044715
        %v5482 = vmul.f32 %v5242, 0.044715
        %v5483 = vmul.f32 %v5244, 0.044715
        %v5484 = vmul.f32 %v4909, 0.044715
        %v5485 = vmul.f32 %v4911, 0.044715
        %v5486 = vmul.f32 %v5022, 0.044715
        %v5487 = vmul.f32 %v5024, 0.044715
        %v5488 = vmul.f32 %v5135, 0.044715
        %v5489 = vmul.f32 %v5137, 0.044715
        %v5490 = vmul.f32 %v5248, 0.044715
        %v5491 = vmul.f32 %v5250, 0.044715
        %v5492 = vmul.f32 %v4913, 0.044715
        %v5493 = vmul.f32 %v4915, 0.044715
        %v5494 = vmul.f32 %v5026, 0.044715
        %v5495 = vmul.f32 %v5028, 0.044715
        %v5496 = vmul.f32 %v5139, 0.044715
        %v5497 = vmul.f32 %v5141, 0.044715
        %v5498 = vmul.f32 %v5252, 0.044715
        %v5499 = vmul.f32 %v5254, 0.044715
        %v5500 = vmul.f32 %v4919, 0.044715
        %v5501 = vmul.f32 %v4921, 0.044715
        %v5502 = vmul.f32 %v5032, 0.044715
        %v5503 = vmul.f32 %v5034, 0.044715
        %v5504 = vmul.f32 %v5145, 0.044715
        %v5505 = vmul.f32 %v5147, 0.044715
        %v5506 = vmul.f32 %v5258, 0.044715
        %v5507 = vmul.f32 %v5260, 0.044715
        %v5508 = vmul.f32 %v4923, 0.044715
        %v5509 = vmul.f32 %v4925, 0.044715
        %v5510 = vmul.f32 %v5036, 0.044715
        %v5511 = vmul.f32 %v5038, 0.044715
        %v5512 = vmul.f32 %v5149, 0.044715
        %v5513 = vmul.f32 %v5151, 0.044715
        %v5514 = vmul.f32 %v5262, 0.044715
        %v5515 = vmul.f32 %v5264, 0.044715
        %v5516 = vmul.f32 %v4929, 0.044715
        %v5517 = vmul.f32 %v4931, 0.044715
        %v5518 = vmul.f32 %v5042, 0.044715
        %v5519 = vmul.f32 %v5044, 0.044715
        %v5520 = vmul.f32 %v5155, 0.044715
        %v5521 = vmul.f32 %v5157, 0.044715
        %v5522 = vmul.f32 %v5268, 0.044715
        %v5523 = vmul.f32 %v5270, 0.044715
        %v5524 = vmul.f32 %v4933, 0.044715
        %v5525 = vmul.f32 %v4935, 0.044715
        %v5526 = vmul.f32 %v5046, 0.044715
        %v5527 = vmul.f32 %v5048, 0.044715
        %v5528 = vmul.f32 %v5159, 0.044715
        %v5529 = vmul.f32 %v5161, 0.044715
        %v5530 = vmul.f32 %v5272, 0.044715
        %v5531 = vmul.f32 %v5274, 0.044715
        %v5532 = vmul.f32 %v5404, %v4859
        %v5533 = vmul.f32 %v5405, %v4861
        %v5534 = vmul.f32 %v5406, %v4972
        %v5535 = vmul.f32 %v5407, %v4974
        %v5536 = vmul.f32 %v5408, %v5085
        %v5537 = vmul.f32 %v5409, %v5087
        %v5538 = vmul.f32 %v5410, %v5198
        %v5539 = vmul.f32 %v5411, %v5200
        %v5540 = vmul.f32 %v5412, %v4863
        %v5541 = vmul.f32 %v5413, %v4865
        %v5542 = vmul.f32 %v5414, %v4976
        %v5543 = vmul.f32 %v5415, %v4978
        %v5544 = vmul.f32 %v5416, %v5089
        %v5545 = vmul.f32 %v5417, %v5091
        %v5546 = vmul.f32 %v5418, %v5202
        %v5547 = vmul.f32 %v5419, %v5204
        %v5548 = vmul.f32 %v5420, %v4869
        %v5549 = vmul.f32 %v5421, %v4871
        %v5550 = vmul.f32 %v5422, %v4982
        %v5551 = vmul.f32 %v5423, %v4984
        %v5552 = vmul.f32 %v5424, %v5095
        %v5553 = vmul.f32 %v5425, %v5097
        %v5554 = vmul.f32 %v5426, %v5208
        %v5555 = vmul.f32 %v5427, %v5210
        %v5556 = vmul.f32 %v5428, %v4873
        %v5557 = vmul.f32 %v5429, %v4875
        %v5558 = vmul.f32 %v5430, %v4986
        %v5559 = vmul.f32 %v5431, %v4988
        %v5560 = vmul.f32 %v5432, %v5099
        %v5561 = vmul.f32 %v5433, %v5101
        %v5562 = vmul.f32 %v5434, %v5212
        %v5563 = vmul.f32 %v5435, %v5214
        %v5564 = vmul.f32 %v5436, %v4879
        %v5565 = vmul.f32 %v5437, %v4881
        %v5566 = vmul.f32 %v5438, %v4992
        %v5567 = vmul.f32 %v5439, %v4994
        %v5568 = vmul.f32 %v5440, %v5105
        %v5569 = vmul.f32 %v5441, %v5107
        %v5570 = vmul.f32 %v5442, %v5218
        %v5571 = vmul.f32 %v5443, %v5220
        %v5572 = vmul.f32 %v5444, %v4883
        %v5573 = vmul.f32 %v5445, %v4885
        %v5574 = vmul.f32 %v5446, %v4996
        %v5575 = vmul.f32 %v5447, %v4998
        %v5576 = vmul.f32 %v5448, %v5109
        %v5577 = vmul.f32 %v5449, %v5111
        %v5578 = vmul.f32 %v5450, %v5222
        %v5579 = vmul.f32 %v5451, %v5224
        %v5580 = vmul.f32 %v5452, %v4889
        %v5581 = vmul.f32 %v5453, %v4891
        %v5582 = vmul.f32 %v5454, %v5002
        %v5583 = vmul.f32 %v5455, %v5004
        %v5584 = vmul.f32 %v5456, %v5115
        %v5585 = vmul.f32 %v5457, %v5117
        %v5586 = vmul.f32 %v5458, %v5228
        %v5587 = vmul.f32 %v5459, %v5230
        %v5588 = vmul.f32 %v5460, %v4893
        %v5589 = vmul.f32 %v5461, %v4895
        %v5590 = vmul.f32 %v5462, %v5006
        %v5591 = vmul.f32 %v5463, %v5008
        %v5592 = vmul.f32 %v5464, %v5119
        %v5593 = vmul.f32 %v5465, %v5121
        %v5594 = vmul.f32 %v5466, %v5232
        %v5595 = vmul.f32 %v5467, %v5234
        %v5596 = vmul.f32 %v5468, %v4899
        %v5597 = vmul.f32 %v5469, %v4901
        %v5598 = vmul.f32 %v5470, %v5012
        %v5599 = vmul.f32 %v5471, %v5014
        %v5600 = vmul.f32 %v5472, %v5125
        %v5601 = vmul.f32 %v5473, %v5127
        %v5602 = vmul.f32 %v5474, %v5238
        %v5603 = vmul.f32 %v5475, %v5240
        %v5604 = vmul.f32 %v5476, %v4903
        %v5605 = vmul.f32 %v5477, %v4905
        %v5606 = vmul.f32 %v5478, %v5016
        %v5607 = vmul.f32 %v5479, %v5018
        %v5608 = vmul.f32 %v5480, %v5129
        %v5609 = vmul.f32 %v5481, %v5131
        %v5610 = vmul.f32 %v5482, %v5242
        %v5611 = vmul.f32 %v5483, %v5244
        %v5612 = vmul.f32 %v5484, %v4909
        %v5613 = vmul.f32 %v5485, %v4911
        %v5614 = vmul.f32 %v5486, %v5022
        %v5615 = vmul.f32 %v5487, %v5024
        %v5616 = vmul.f32 %v5488, %v5135
        %v5617 = vmul.f32 %v5489, %v5137
        %v5618 = vmul.f32 %v5490, %v5248
        %v5619 = vmul.f32 %v5491, %v5250
        %v5620 = vmul.f32 %v5492, %v4913
        %v5621 = vmul.f32 %v5493, %v4915
        %v5622 = vmul.f32 %v5494, %v5026
        %v5623 = vmul.f32 %v5495, %v5028
        %v5624 = vmul.f32 %v5496, %v5139
        %v5625 = vmul.f32 %v5497, %v5141
        %v5626 = vmul.f32 %v5498, %v5252
        %v5627 = vmul.f32 %v5499, %v5254
        %v5628 = vmul.f32 %v5500, %v4919
        %v5629 = vmul.f32 %v5501, %v4921
        %v5630 = vmul.f32 %v5502, %v5032
        %v5631 = vmul.f32 %v5503, %v5034
        %v5632 = vmul.f32 %v5504, %v5145
        %v5633 = vmul.f32 %v5505, %v5147
        %v5634 = vmul.f32 %v5506, %v5258
        %v5635 = vmul.f32 %v5507, %v5260
        %v5636 = vmul.f32 %v5508, %v4923
        %v5637 = vmul.f32 %v5509, %v4925
        %v5638 = vmul.f32 %v5510, %v5036
        %v5639 = vmul.f32 %v5511, %v5038
        %v5640 = vmul.f32 %v5512, %v5149
        %v5641 = vmul.f32 %v5513, %v5151
        %v5642 = vmul.f32 %v5514, %v5262
        %v5643 = vmul.f32 %v5515, %v5264
        %v5644 = vmul.f32 %v5516, %v4929
        %v5645 = vmul.f32 %v5517, %v4931
        %v5646 = vmul.f32 %v5518, %v5042
        %v5647 = vmul.f32 %v5519, %v5044
        %v5648 = vmul.f32 %v5520, %v5155
        %v5649 = vmul.f32 %v5521, %v5157
        %v5650 = vmul.f32 %v5522, %v5268
        %v5651 = vmul.f32 %v5523, %v5270
        %v5652 = vmul.f32 %v5524, %v4933
        %v5653 = vmul.f32 %v5525, %v4935
        %v5654 = vmul.f32 %v5526, %v5046
        %v5655 = vmul.f32 %v5527, %v5048
        %v5656 = vmul.f32 %v5528, %v5159
        %v5657 = vmul.f32 %v5529, %v5161
        %v5658 = vmul.f32 %v5530, %v5272
        %v5659 = vmul.f32 %v5531, %v5274
        %v5660 = vmul.f32 %v5532, %v4859
        %v5661 = vmul.f32 %v5533, %v4861
        %v5662 = vmul.f32 %v5534, %v4972
        %v5663 = vmul.f32 %v5535, %v4974
        %v5664 = vmul.f32 %v5536, %v5085
        %v5665 = vmul.f32 %v5537, %v5087
        %v5666 = vmul.f32 %v5538, %v5198
        %v5667 = vmul.f32 %v5539, %v5200
        %v5668 = vmul.f32 %v5540, %v4863
        %v5669 = vmul.f32 %v5541, %v4865
        %v5670 = vmul.f32 %v5542, %v4976
        %v5671 = vmul.f32 %v5543, %v4978
        %v5672 = vmul.f32 %v5544, %v5089
        %v5673 = vmul.f32 %v5545, %v5091
        %v5674 = vmul.f32 %v5546, %v5202
        %v5675 = vmul.f32 %v5547, %v5204
        %v5676 = vmul.f32 %v5548, %v4869
        %v5677 = vmul.f32 %v5549, %v4871
        %v5678 = vmul.f32 %v5550, %v4982
        %v5679 = vmul.f32 %v5551, %v4984
        %v5680 = vmul.f32 %v5552, %v5095
        %v5681 = vmul.f32 %v5553, %v5097
        %v5682 = vmul.f32 %v5554, %v5208
        %v5683 = vmul.f32 %v5555, %v5210
        %v5684 = vmul.f32 %v5556, %v4873
        %v5685 = vmul.f32 %v5557, %v4875
        %v5686 = vmul.f32 %v5558, %v4986
        %v5687 = vmul.f32 %v5559, %v4988
        %v5688 = vmul.f32 %v5560, %v5099
        %v5689 = vmul.f32 %v5561, %v5101
        %v5690 = vmul.f32 %v5562, %v5212
        %v5691 = vmul.f32 %v5563, %v5214
        %v5692 = vmul.f32 %v5564, %v4879
        %v5693 = vmul.f32 %v5565, %v4881
        %v5694 = vmul.f32 %v5566, %v4992
        %v5695 = vmul.f32 %v5567, %v4994
        %v5696 = vmul.f32 %v5568, %v5105
        %v5697 = vmul.f32 %v5569, %v5107
        %v5698 = vmul.f32 %v5570, %v5218
        %v5699 = vmul.f32 %v5571, %v5220
        %v5700 = vmul.f32 %v5572, %v4883
        %v5701 = vmul.f32 %v5573, %v4885
        %v5702 = vmul.f32 %v5574, %v4996
        %v5703 = vmul.f32 %v5575, %v4998
        %v5704 = vmul.f32 %v5576, %v5109
        %v5705 = vmul.f32 %v5577, %v5111
        %v5706 = vmul.f32 %v5578, %v5222
        %v5707 = vmul.f32 %v5579, %v5224
        %v5708 = vmul.f32 %v5580, %v4889
        %v5709 = vmul.f32 %v5581, %v4891
        %v5710 = vmul.f32 %v5582, %v5002
        %v5711 = vmul.f32 %v5583, %v5004
        %v5712 = vmul.f32 %v5584, %v5115
        %v5713 = vmul.f32 %v5585, %v5117
        %v5714 = vmul.f32 %v5586, %v5228
        %v5715 = vmul.f32 %v5587, %v5230
        %v5716 = vmul.f32 %v5588, %v4893
        %v5717 = vmul.f32 %v5589, %v4895
        %v5718 = vmul.f32 %v5590, %v5006
        %v5719 = vmul.f32 %v5591, %v5008
        %v5720 = vmul.f32 %v5592, %v5119
        %v5721 = vmul.f32 %v5593, %v5121
        %v5722 = vmul.f32 %v5594, %v5232
        %v5723 = vmul.f32 %v5595, %v5234
        %v5724 = vmul.f32 %v5596, %v4899
        %v5725 = vmul.f32 %v5597, %v4901
        %v5726 = vmul.f32 %v5598, %v5012
        %v5727 = vmul.f32 %v5599, %v5014
        %v5728 = vmul.f32 %v5600, %v5125
        %v5729 = vmul.f32 %v5601, %v5127
        %v5730 = vmul.f32 %v5602, %v5238
        %v5731 = vmul.f32 %v5603, %v5240
        %v5732 = vmul.f32 %v5604, %v4903
        %v5733 = vmul.f32 %v5605, %v4905
        %v5734 = vmul.f32 %v5606, %v5016
        %v5735 = vmul.f32 %v5607, %v5018
        %v5736 = vmul.f32 %v5608, %v5129
        %v5737 = vmul.f32 %v5609, %v5131
        %v5738 = vmul.f32 %v5610, %v5242
        %v5739 = vmul.f32 %v5611, %v5244
        %v5740 = vmul.f32 %v5612, %v4909
        %v5741 = vmul.f32 %v5613, %v4911
        %v5742 = vmul.f32 %v5614, %v5022
        %v5743 = vmul.f32 %v5615, %v5024
        %v5744 = vmul.f32 %v5616, %v5135
        %v5745 = vmul.f32 %v5617, %v5137
        %v5746 = vmul.f32 %v5618, %v5248
        %v5747 = vmul.f32 %v5619, %v5250
        %v5748 = vmul.f32 %v5620, %v4913
        %v5749 = vmul.f32 %v5621, %v4915
        %v5750 = vmul.f32 %v5622, %v5026
        %v5751 = vmul.f32 %v5623, %v5028
        %v5752 = vmul.f32 %v5624, %v5139
        %v5753 = vmul.f32 %v5625, %v5141
        %v5754 = vmul.f32 %v5626, %v5252
        %v5755 = vmul.f32 %v5627, %v5254
        %v5756 = vmul.f32 %v5628, %v4919
        %v5757 = vmul.f32 %v5629, %v4921
        %v5758 = vmul.f32 %v5630, %v5032
        %v5759 = vmul.f32 %v5631, %v5034
        %v5760 = vmul.f32 %v5632, %v5145
        %v5761 = vmul.f32 %v5633, %v5147
        %v5762 = vmul.f32 %v5634, %v5258
        %v5763 = vmul.f32 %v5635, %v5260
        %v5764 = vmul.f32 %v5636, %v4923
        %v5765 = vmul.f32 %v5637, %v4925
        %v5766 = vmul.f32 %v5638, %v5036
        %v5767 = vmul.f32 %v5639, %v5038
        %v5768 = vmul.f32 %v5640, %v5149
        %v5769 = vmul.f32 %v5641, %v5151
        %v5770 = vmul.f32 %v5642, %v5262
        %v5771 = vmul.f32 %v5643, %v5264
        %v5772 = vmul.f32 %v5644, %v4929
        %v5773 = vmul.f32 %v5645, %v4931
        %v5774 = vmul.f32 %v5646, %v5042
        %v5775 = vmul.f32 %v5647, %v5044
        %v5776 = vmul.f32 %v5648, %v5155
        %v5777 = vmul.f32 %v5649, %v5157
        %v5778 = vmul.f32 %v5650, %v5268
        %v5779 = vmul.f32 %v5651, %v5270
        %v5780 = vmul.f32 %v5652, %v4933
        %v5781 = vmul.f32 %v5653, %v4935
        %v5782 = vmul.f32 %v5654, %v5046
        %v5783 = vmul.f32 %v5655, %v5048
        %v5784 = vmul.f32 %v5656, %v5159
        %v5785 = vmul.f32 %v5657, %v5161
        %v5786 = vmul.f32 %v5658, %v5272
        %v5787 = vmul.f32 %v5659, %v5274
        %v5788 = vadd.f32 %v4859, %v5660
        %v5789 = vadd.f32 %v4861, %v5661
        %v5790 = vadd.f32 %v4972, %v5662
        %v5791 = vadd.f32 %v4974, %v5663
        %v5792 = vadd.f32 %v5085, %v5664
        %v5793 = vadd.f32 %v5087, %v5665
        %v5794 = vadd.f32 %v5198, %v5666
        %v5795 = vadd.f32 %v5200, %v5667
        %v5796 = vadd.f32 %v4863, %v5668
        %v5797 = vadd.f32 %v4865, %v5669
        %v5798 = vadd.f32 %v4976, %v5670
        %v5799 = vadd.f32 %v4978, %v5671
        %v5800 = vadd.f32 %v5089, %v5672
        %v5801 = vadd.f32 %v5091, %v5673
        %v5802 = vadd.f32 %v5202, %v5674
        %v5803 = vadd.f32 %v5204, %v5675
        %v5804 = vadd.f32 %v4869, %v5676
        %v5805 = vadd.f32 %v4871, %v5677
        %v5806 = vadd.f32 %v4982, %v5678
        %v5807 = vadd.f32 %v4984, %v5679
        %v5808 = vadd.f32 %v5095, %v5680
        %v5809 = vadd.f32 %v5097, %v5681
        %v5810 = vadd.f32 %v5208, %v5682
        %v5811 = vadd.f32 %v5210, %v5683
        %v5812 = vadd.f32 %v4873, %v5684
        %v5813 = vadd.f32 %v4875, %v5685
        %v5814 = vadd.f32 %v4986, %v5686
        %v5815 = vadd.f32 %v4988, %v5687
        %v5816 = vadd.f32 %v5099, %v5688
        %v5817 = vadd.f32 %v5101, %v5689
        %v5818 = vadd.f32 %v5212, %v5690
        %v5819 = vadd.f32 %v5214, %v5691
        %v5820 = vadd.f32 %v4879, %v5692
        %v5821 = vadd.f32 %v4881, %v5693
        %v5822 = vadd.f32 %v4992, %v5694
        %v5823 = vadd.f32 %v4994, %v5695
        %v5824 = vadd.f32 %v5105, %v5696
        %v5825 = vadd.f32 %v5107, %v5697
        %v5826 = vadd.f32 %v5218, %v5698
        %v5827 = vadd.f32 %v5220, %v5699
        %v5828 = vadd.f32 %v4883, %v5700
        %v5829 = vadd.f32 %v4885, %v5701
        %v5830 = vadd.f32 %v4996, %v5702
        %v5831 = vadd.f32 %v4998, %v5703
        %v5832 = vadd.f32 %v5109, %v5704
        %v5833 = vadd.f32 %v5111, %v5705
        %v5834 = vadd.f32 %v5222, %v5706
        %v5835 = vadd.f32 %v5224, %v5707
        %v5836 = vadd.f32 %v4889, %v5708
        %v5837 = vadd.f32 %v4891, %v5709
        %v5838 = vadd.f32 %v5002, %v5710
        %v5839 = vadd.f32 %v5004, %v5711
        %v5840 = vadd.f32 %v5115, %v5712
        %v5841 = vadd.f32 %v5117, %v5713
        %v5842 = vadd.f32 %v5228, %v5714
        %v5843 = vadd.f32 %v5230, %v5715
        %v5844 = vadd.f32 %v4893, %v5716
        %v5845 = vadd.f32 %v4895, %v5717
        %v5846 = vadd.f32 %v5006, %v5718
        %v5847 = vadd.f32 %v5008, %v5719
        %v5848 = vadd.f32 %v5119, %v5720
        %v5849 = vadd.f32 %v5121, %v5721
        %v5850 = vadd.f32 %v5232, %v5722
        %v5851 = vadd.f32 %v5234, %v5723
        %v5852 = vadd.f32 %v4899, %v5724
        %v5853 = vadd.f32 %v4901, %v5725
        %v5854 = vadd.f32 %v5012, %v5726
        %v5855 = vadd.f32 %v5014, %v5727
        %v5856 = vadd.f32 %v5125, %v5728
        %v5857 = vadd.f32 %v5127, %v5729
        %v5858 = vadd.f32 %v5238, %v5730
        %v5859 = vadd.f32 %v5240, %v5731
        %v5860 = vadd.f32 %v4903, %v5732
        %v5861 = vadd.f32 %v4905, %v5733
        %v5862 = vadd.f32 %v5016, %v5734
        %v5863 = vadd.f32 %v5018, %v5735
        %v5864 = vadd.f32 %v5129, %v5736
        %v5865 = vadd.f32 %v5131, %v5737
        %v5866 = vadd.f32 %v5242, %v5738
        %v5867 = vadd.f32 %v5244, %v5739
        %v5868 = vadd.f32 %v4909, %v5740
        %v5869 = vadd.f32 %v4911, %v5741
        %v5870 = vadd.f32 %v5022, %v5742
        %v5871 = vadd.f32 %v5024, %v5743
        %v5872 = vadd.f32 %v5135, %v5744
        %v5873 = vadd.f32 %v5137, %v5745
        %v5874 = vadd.f32 %v5248, %v5746
        %v5875 = vadd.f32 %v5250, %v5747
        %v5876 = vadd.f32 %v4913, %v5748
        %v5877 = vadd.f32 %v4915, %v5749
        %v5878 = vadd.f32 %v5026, %v5750
        %v5879 = vadd.f32 %v5028, %v5751
        %v5880 = vadd.f32 %v5139, %v5752
        %v5881 = vadd.f32 %v5141, %v5753
        %v5882 = vadd.f32 %v5252, %v5754
        %v5883 = vadd.f32 %v5254, %v5755
        %v5884 = vadd.f32 %v4919, %v5756
        %v5885 = vadd.f32 %v4921, %v5757
        %v5886 = vadd.f32 %v5032, %v5758
        %v5887 = vadd.f32 %v5034, %v5759
        %v5888 = vadd.f32 %v5145, %v5760
        %v5889 = vadd.f32 %v5147, %v5761
        %v5890 = vadd.f32 %v5258, %v5762
        %v5891 = vadd.f32 %v5260, %v5763
        %v5892 = vadd.f32 %v4923, %v5764
        %v5893 = vadd.f32 %v4925, %v5765
        %v5894 = vadd.f32 %v5036, %v5766
        %v5895 = vadd.f32 %v5038, %v5767
        %v5896 = vadd.f32 %v5149, %v5768
        %v5897 = vadd.f32 %v5151, %v5769
        %v5898 = vadd.f32 %v5262, %v5770
        %v5899 = vadd.f32 %v5264, %v5771
        %v5900 = vadd.f32 %v4929, %v5772
        %v5901 = vadd.f32 %v4931, %v5773
        %v5902 = vadd.f32 %v5042, %v5774
        %v5903 = vadd.f32 %v5044, %v5775
        %v5904 = vadd.f32 %v5155, %v5776
        %v5905 = vadd.f32 %v5157, %v5777
        %v5906 = vadd.f32 %v5268, %v5778
        %v5907 = vadd.f32 %v5270, %v5779
        %v5908 = vadd.f32 %v4933, %v5780
        %v5909 = vadd.f32 %v4935, %v5781
        %v5910 = vadd.f32 %v5046, %v5782
        %v5911 = vadd.f32 %v5048, %v5783
        %v5912 = vadd.f32 %v5159, %v5784
        %v5913 = vadd.f32 %v5161, %v5785
        %v5914 = vadd.f32 %v5272, %v5786
        %v5915 = vadd.f32 %v5274, %v5787
        %v5916 = vmul.f32 %v5788, 0.7978846
        %v5917 = vmul.f32 %v5789, 0.7978846
        %v5918 = vmul.f32 %v5790, 0.7978846
        %v5919 = vmul.f32 %v5791, 0.7978846
        %v5920 = vmul.f32 %v5792, 0.7978846
        %v5921 = vmul.f32 %v5793, 0.7978846
        %v5922 = vmul.f32 %v5794, 0.7978846
        %v5923 = vmul.f32 %v5795, 0.7978846
        %v5924 = vmul.f32 %v5796, 0.7978846
        %v5925 = vmul.f32 %v5797, 0.7978846
        %v5926 = vmul.f32 %v5798, 0.7978846
        %v5927 = vmul.f32 %v5799, 0.7978846
        %v5928 = vmul.f32 %v5800, 0.7978846
        %v5929 = vmul.f32 %v5801, 0.7978846
        %v5930 = vmul.f32 %v5802, 0.7978846
        %v5931 = vmul.f32 %v5803, 0.7978846
        %v5932 = vmul.f32 %v5804, 0.7978846
        %v5933 = vmul.f32 %v5805, 0.7978846
        %v5934 = vmul.f32 %v5806, 0.7978846
        %v5935 = vmul.f32 %v5807, 0.7978846
        %v5936 = vmul.f32 %v5808, 0.7978846
        %v5937 = vmul.f32 %v5809, 0.7978846
        %v5938 = vmul.f32 %v5810, 0.7978846
        %v5939 = vmul.f32 %v5811, 0.7978846
        %v5940 = vmul.f32 %v5812, 0.7978846
        %v5941 = vmul.f32 %v5813, 0.7978846
        %v5942 = vmul.f32 %v5814, 0.7978846
        %v5943 = vmul.f32 %v5815, 0.7978846
        %v5944 = vmul.f32 %v5816, 0.7978846
        %v5945 = vmul.f32 %v5817, 0.7978846
        %v5946 = vmul.f32 %v5818, 0.7978846
        %v5947 = vmul.f32 %v5819, 0.7978846
        %v5948 = vmul.f32 %v5820, 0.7978846
        %v5949 = vmul.f32 %v5821, 0.7978846
        %v5950 = vmul.f32 %v5822, 0.7978846
        %v5951 = vmul.f32 %v5823, 0.7978846
        %v5952 = vmul.f32 %v5824, 0.7978846
        %v5953 = vmul.f32 %v5825, 0.7978846
        %v5954 = vmul.f32 %v5826, 0.7978846
        %v5955 = vmul.f32 %v5827, 0.7978846
        %v5956 = vmul.f32 %v5828, 0.7978846
        %v5957 = vmul.f32 %v5829, 0.7978846
        %v5958 = vmul.f32 %v5830, 0.7978846
        %v5959 = vmul.f32 %v5831, 0.7978846
        %v5960 = vmul.f32 %v5832, 0.7978846
        %v5961 = vmul.f32 %v5833, 0.7978846
        %v5962 = vmul.f32 %v5834, 0.7978846
        %v5963 = vmul.f32 %v5835, 0.7978846
        %v5964 = vmul.f32 %v5836, 0.7978846
        %v5965 = vmul.f32 %v5837, 0.7978846
        %v5966 = vmul.f32 %v5838, 0.7978846
        %v5967 = vmul.f32 %v5839, 0.7978846
        %v5968 = vmul.f32 %v5840, 0.7978846
        %v5969 = vmul.f32 %v5841, 0.7978846
        %v5970 = vmul.f32 %v5842, 0.7978846
        %v5971 = vmul.f32 %v5843, 0.7978846
        %v5972 = vmul.f32 %v5844, 0.7978846
        %v5973 = vmul.f32 %v5845, 0.7978846
        %v5974 = vmul.f32 %v5846, 0.7978846
        %v5975 = vmul.f32 %v5847, 0.7978846
        %v5976 = vmul.f32 %v5848, 0.7978846
        %v5977 = vmul.f32 %v5849, 0.7978846
        %v5978 = vmul.f32 %v5850, 0.7978846
        %v5979 = vmul.f32 %v5851, 0.7978846
        %v5980 = vmul.f32 %v5852, 0.7978846
        %v5981 = vmul.f32 %v5853, 0.7978846
        %v5982 = vmul.f32 %v5854, 0.7978846
        %v5983 = vmul.f32 %v5855, 0.7978846
        %v5984 = vmul.f32 %v5856, 0.7978846
        %v5985 = vmul.f32 %v5857, 0.7978846
        %v5986 = vmul.f32 %v5858, 0.7978846
        %v5987 = vmul.f32 %v5859, 0.7978846
        %v5988 = vmul.f32 %v5860, 0.7978846
        %v5989 = vmul.f32 %v5861, 0.7978846
        %v5990 = vmul.f32 %v5862, 0.7978846
        %v5991 = vmul.f32 %v5863, 0.7978846
        %v5992 = vmul.f32 %v5864, 0.7978846
        %v5993 = vmul.f32 %v5865, 0.7978846
        %v5994 = vmul.f32 %v5866, 0.7978846
        %v5995 = vmul.f32 %v5867, 0.7978846
        %v5996 = vmul.f32 %v5868, 0.7978846
        %v5997 = vmul.f32 %v5869, 0.7978846
        %v5998 = vmul.f32 %v5870, 0.7978846
        %v5999 = vmul.f32 %v5871, 0.7978846
        %v6000 = vmul.f32 %v5872, 0.7978846
        %v6001 = vmul.f32 %v5873, 0.7978846
        %v6002 = vmul.f32 %v5874, 0.7978846
        %v6003 = vmul.f32 %v5875, 0.7978846
        %v6004 = vmul.f32 %v5876, 0.7978846
        %v6005 = vmul.f32 %v5877, 0.7978846
        %v6006 = vmul.f32 %v5878, 0.7978846
        %v6007 = vmul.f32 %v5879, 0.7978846
        %v6008 = vmul.f32 %v5880, 0.7978846
        %v6009 = vmul.f32 %v5881, 0.7978846
        %v6010 = vmul.f32 %v5882, 0.7978846
        %v6011 = vmul.f32 %v5883, 0.7978846
        %v6012 = vmul.f32 %v5884, 0.7978846
        %v6013 = vmul.f32 %v5885, 0.7978846
        %v6014 = vmul.f32 %v5886, 0.7978846
        %v6015 = vmul.f32 %v5887, 0.7978846
        %v6016 = vmul.f32 %v5888, 0.7978846
        %v6017 = vmul.f32 %v5889, 0.7978846
        %v6018 = vmul.f32 %v5890, 0.7978846
        %v6019 = vmul.f32 %v5891, 0.7978846
        %v6020 = vmul.f32 %v5892, 0.7978846
        %v6021 = vmul.f32 %v5893, 0.7978846
        %v6022 = vmul.f32 %v5894, 0.7978846
        %v6023 = vmul.f32 %v5895, 0.7978846
        %v6024 = vmul.f32 %v5896, 0.7978846
        %v6025 = vmul.f32 %v5897, 0.7978846
        %v6026 = vmul.f32 %v5898, 0.7978846
        %v6027 = vmul.f32 %v5899, 0.7978846
        %v6028 = vmul.f32 %v5900, 0.7978846
        %v6029 = vmul.f32 %v5901, 0.7978846
        %v6030 = vmul.f32 %v5902, 0.7978846
        %v6031 = vmul.f32 %v5903, 0.7978846
        %v6032 = vmul.f32 %v5904, 0.7978846
        %v6033 = vmul.f32 %v5905, 0.7978846
        %v6034 = vmul.f32 %v5906, 0.7978846
        %v6035 = vmul.f32 %v5907, 0.7978846
        %v6036 = vmul.f32 %v5908, 0.7978846
        %v6037 = vmul.f32 %v5909, 0.7978846
        %v6038 = vmul.f32 %v5910, 0.7978846
        %v6039 = vmul.f32 %v5911, 0.7978846
        %v6040 = vmul.f32 %v5912, 0.7978846
        %v6041 = vmul.f32 %v5913, 0.7978846
        %v6042 = vmul.f32 %v5914, 0.7978846
        %v6043 = vmul.f32 %v5915, 0.7978846
        %v6044 = vtanh.pop %v5916
        %v6045 = vtanh.pop %v5917
        %v6046 = vtanh.pop %v5918
        %v6047 = vtanh.pop %v5919
        %v6048 = vtanh.pop %v5920
        %v6049 = vtanh.pop %v5921
        %v6050 = vtanh.pop %v5922
        %v6051 = vtanh.pop %v5923
        %v6052 = vtanh.pop %v5924
        %v6053 = vtanh.pop %v5925
        %v6054 = vtanh.pop %v5926
        %v6055 = vtanh.pop %v5927
        %v6056 = vtanh.pop %v5928
        %v6057 = vtanh.pop %v5929
        %v6058 = vtanh.pop %v5930
        %v6059 = vtanh.pop %v5931
        %v6060 = vtanh.pop %v5932
        %v6061 = vtanh.pop %v5933
        %v6062 = vtanh.pop %v5934
        %v6063 = vtanh.pop %v5935
        %v6064 = vtanh.pop %v5936
        %v6065 = vtanh.pop %v5937
        %v6066 = vtanh.pop %v5938
        %v6067 = vtanh.pop %v5939
        %v6068 = vtanh.pop %v5940
        %v6069 = vtanh.pop %v5941
        %v6070 = vtanh.pop %v5942
        %v6071 = vtanh.pop %v5943
        %v6072 = vtanh.pop %v5944
        %v6073 = vtanh.pop %v5945
        %v6074 = vtanh.pop %v5946
        %v6075 = vtanh.pop %v5947
        %v6076 = vtanh.pop %v5948
        %v6077 = vtanh.pop %v5949
        %v6078 = vtanh.pop %v5950
        %v6079 = vtanh.pop %v5951
        %v6080 = vtanh.pop %v5952
        %v6081 = vtanh.pop %v5953
        %v6082 = vtanh.pop %v5954
        %v6083 = vtanh.pop %v5955
        %v6084 = vtanh.pop %v5956
        %v6085 = vtanh.pop %v5957
        %v6086 = vtanh.pop %v5958
        %v6087 = vtanh.pop %v5959
        %v6088 = vtanh.pop %v5960
        %v6089 = vtanh.pop %v5961
        %v6090 = vtanh.pop %v5962
        %v6091 = vtanh.pop %v5963
        %v6092 = vtanh.pop %v5964
        %v6093 = vtanh.pop %v5965
        %v6094 = vtanh.pop %v5966
        %v6095 = vtanh.pop %v5967
        %v6096 = vtanh.pop %v5968
        %v6097 = vtanh.pop %v5969
        %v6098 = vtanh.pop %v5970
        %v6099 = vtanh.pop %v5971
        %v6100 = vtanh.pop %v5972
        %v6101 = vtanh.pop %v5973
        %v6102 = vtanh.pop %v5974
        %v6103 = vtanh.pop %v5975
        %v6104 = vtanh.pop %v5976
        %v6105 = vtanh.pop %v5977
        %v6106 = vtanh.pop %v5978
        %v6107 = vtanh.pop %v5979
        %v6108 = vtanh.pop %v5980
        %v6109 = vtanh.pop %v5981
        %v6110 = vtanh.pop %v5982
        %v6111 = vtanh.pop %v5983
        %v6112 = vtanh.pop %v5984
        %v6113 = vtanh.pop %v5985
        %v6114 = vtanh.pop %v5986
        %v6115 = vtanh.pop %v5987
        %v6116 = vtanh.pop %v5988
        %v6117 = vtanh.pop %v5989
        %v6118 = vtanh.pop %v5990
        %v6119 = vtanh.pop %v5991
        %v6120 = vtanh.pop %v5992
        %v6121 = vtanh.pop %v5993
        %v6122 = vtanh.pop %v5994
        %v6123 = vtanh.pop %v5995
        %v6124 = vtanh.pop %v5996
        %v6125 = vtanh.pop %v5997
        %v6126 = vtanh.pop %v5998
        %v6127 = vtanh.pop %v5999
        %v6128 = vtanh.pop %v6000
        %v6129 = vtanh.pop %v6001
        %v6130 = vtanh.pop %v6002
        %v6131 = vtanh.pop %v6003
        %v6132 = vtanh.pop %v6004
        %v6133 = vtanh.pop %v6005
        %v6134 = vtanh.pop %v6006
        %v6135 = vtanh.pop %v6007
        %v6136 = vtanh.pop %v6008
        %v6137 = vtanh.pop %v6009
        %v6138 = vtanh.pop %v6010
        %v6139 = vtanh.pop %v6011
        %v6140 = vtanh.pop %v6012
        %v6141 = vtanh.pop %v6013
        %v6142 = vtanh.pop %v6014
        %v6143 = vtanh.pop %v6015
        %v6144 = vtanh.pop %v6016
        %v6145 = vtanh.pop %v6017
        %v6146 = vtanh.pop %v6018
        %v6147 = vtanh.pop %v6019
        %v6148 = vtanh.pop %v6020
        %v6149 = vtanh.pop %v6021
        %v6150 = vtanh.pop %v6022
        %v6151 = vtanh.pop %v6023
        %v6152 = vtanh.pop %v6024
        %v6153 = vtanh.pop %v6025
        %v6154 = vtanh.pop %v6026
        %v6155 = vtanh.pop %v6027
        %v6156 = vtanh.pop %v6028
        %v6157 = vtanh.pop %v6029
        %v6158 = vtanh.pop %v6030
        %v6159 = vtanh.pop %v6031
        %v6160 = vtanh.pop %v6032
        %v6161 = vtanh.pop %v6033
        %v6162 = vtanh.pop %v6034
        %v6163 = vtanh.pop %v6035
        %v6164 = vtanh.pop %v6036
        %v6165 = vtanh.pop %v6037
        %v6166 = vtanh.pop %v6038
        %v6167 = vtanh.pop %v6039
        %v6168 = vtanh.pop %v6040
        %v6169 = vtanh.pop %v6041
        %v6170 = vtanh.pop %v6042
        %v6171 = vtanh.pop %v6043
        %v6172 = vadd.f32 %v6044, 1.0
        %v6173 = vadd.f32 %v6045, 1.0
        %v6174 = vadd.f32 %v6046, 1.0
        %v6175 = vadd.f32 %v6047, 1.0
        %v6176 = vadd.f32 %v6048, 1.0
        %v6177 = vadd.f32 %v6049, 1.0
        %v6178 = vadd.f32 %v6050, 1.0
        %v6179 = vadd.f32 %v6051, 1.0
        %v6180 = vadd.f32 %v6052, 1.0
        %v6181 = vadd.f32 %v6053, 1.0
        %v6182 = vadd.f32 %v6054, 1.0
        %v6183 = vadd.f32 %v6055, 1.0
        %v6184 = vadd.f32 %v6056, 1.0
        %v6185 = vadd.f32 %v6057, 1.0
        %v6186 = vadd.f32 %v6058, 1.0
        %v6187 = vadd.f32 %v6059, 1.0
        %v6188 = vadd.f32 %v6060, 1.0
        %v6189 = vadd.f32 %v6061, 1.0
        %v6190 = vadd.f32 %v6062, 1.0
        %v6191 = vadd.f32 %v6063, 1.0
        %v6192 = vadd.f32 %v6064, 1.0
        %v6193 = vadd.f32 %v6065, 1.0
        %v6194 = vadd.f32 %v6066, 1.0
        %v6195 = vadd.f32 %v6067, 1.0
        %v6196 = vadd.f32 %v6068, 1.0
        %v6197 = vadd.f32 %v6069, 1.0
        %v6198 = vadd.f32 %v6070, 1.0
        %v6199 = vadd.f32 %v6071, 1.0
        %v6200 = vadd.f32 %v6072, 1.0
        %v6201 = vadd.f32 %v6073, 1.0
        %v6202 = vadd.f32 %v6074, 1.0
        %v6203 = vadd.f32 %v6075, 1.0
        %v6204 = vadd.f32 %v6076, 1.0
        %v6205 = vadd.f32 %v6077, 1.0
        %v6206 = vadd.f32 %v6078, 1.0
        %v6207 = vadd.f32 %v6079, 1.0
        %v6208 = vadd.f32 %v6080, 1.0
        %v6209 = vadd.f32 %v6081, 1.0
        %v6210 = vadd.f32 %v6082, 1.0
        %v6211 = vadd.f32 %v6083, 1.0
        %v6212 = vadd.f32 %v6084, 1.0
        %v6213 = vadd.f32 %v6085, 1.0
        %v6214 = vadd.f32 %v6086, 1.0
        %v6215 = vadd.f32 %v6087, 1.0
        %v6216 = vadd.f32 %v6088, 1.0
        %v6217 = vadd.f32 %v6089, 1.0
        %v6218 = vadd.f32 %v6090, 1.0
        %v6219 = vadd.f32 %v6091, 1.0
        %v6220 = vadd.f32 %v6092, 1.0
        %v6221 = vadd.f32 %v6093, 1.0
        %v6222 = vadd.f32 %v6094, 1.0
        %v6223 = vadd.f32 %v6095, 1.0
        %v6224 = vadd.f32 %v6096, 1.0
        %v6225 = vadd.f32 %v6097, 1.0
        %v6226 = vadd.f32 %v6098, 1.0
        %v6227 = vadd.f32 %v6099, 1.0
        %v6228 = vadd.f32 %v6100, 1.0
        %v6229 = vadd.f32 %v6101, 1.0
        %v6230 = vadd.f32 %v6102, 1.0
        %v6231 = vadd.f32 %v6103, 1.0
        %v6232 = vadd.f32 %v6104, 1.0
        %v6233 = vadd.f32 %v6105, 1.0
        %v6234 = vadd.f32 %v6106, 1.0
        %v6235 = vadd.f32 %v6107, 1.0
        %v6236 = vadd.f32 %v6108, 1.0
        %v6237 = vadd.f32 %v6109, 1.0
        %v6238 = vadd.f32 %v6110, 1.0
        %v6239 = vadd.f32 %v6111, 1.0
        %v6240 = vadd.f32 %v6112, 1.0
        %v6241 = vadd.f32 %v6113, 1.0
        %v6242 = vadd.f32 %v6114, 1.0
        %v6243 = vadd.f32 %v6115, 1.0
        %v6244 = vadd.f32 %v6116, 1.0
        %v6245 = vadd.f32 %v6117, 1.0
        %v6246 = vadd.f32 %v6118, 1.0
        %v6247 = vadd.f32 %v6119, 1.0
        %v6248 = vadd.f32 %v6120, 1.0
        %v6249 = vadd.f32 %v6121, 1.0
        %v6250 = vadd.f32 %v6122, 1.0
        %v6251 = vadd.f32 %v6123, 1.0
        %v6252 = vadd.f32 %v6124, 1.0
        %v6253 = vadd.f32 %v6125, 1.0
        %v6254 = vadd.f32 %v6126, 1.0
        %v6255 = vadd.f32 %v6127, 1.0
        %v6256 = vadd.f32 %v6128, 1.0
        %v6257 = vadd.f32 %v6129, 1.0
        %v6258 = vadd.f32 %v6130, 1.0
        %v6259 = vadd.f32 %v6131, 1.0
        %v6260 = vadd.f32 %v6132, 1.0
        %v6261 = vadd.f32 %v6133, 1.0
        %v6262 = vadd.f32 %v6134, 1.0
        %v6263 = vadd.f32 %v6135, 1.0
        %v6264 = vadd.f32 %v6136, 1.0
        %v6265 = vadd.f32 %v6137, 1.0
        %v6266 = vadd.f32 %v6138, 1.0
        %v6267 = vadd.f32 %v6139, 1.0
        %v6268 = vadd.f32 %v6140, 1.0
        %v6269 = vadd.f32 %v6141, 1.0
        %v6270 = vadd.f32 %v6142, 1.0
        %v6271 = vadd.f32 %v6143, 1.0
        %v6272 = vadd.f32 %v6144, 1.0
        %v6273 = vadd.f32 %v6145, 1.0
        %v6274 = vadd.f32 %v6146, 1.0
        %v6275 = vadd.f32 %v6147, 1.0
        %v6276 = vadd.f32 %v6148, 1.0
        %v6277 = vadd.f32 %v6149, 1.0
        %v6278 = vadd.f32 %v6150, 1.0
        %v6279 = vadd.f32 %v6151, 1.0
        %v6280 = vadd.f32 %v6152, 1.0
        %v6281 = vadd.f32 %v6153, 1.0
        %v6282 = vadd.f32 %v6154, 1.0
        %v6283 = vadd.f32 %v6155, 1.0
        %v6284 = vadd.f32 %v6156, 1.0
        %v6285 = vadd.f32 %v6157, 1.0
        %v6286 = vadd.f32 %v6158, 1.0
        %v6287 = vadd.f32 %v6159, 1.0
        %v6288 = vadd.f32 %v6160, 1.0
        %v6289 = vadd.f32 %v6161, 1.0
        %v6290 = vadd.f32 %v6162, 1.0
        %v6291 = vadd.f32 %v6163, 1.0
        %v6292 = vadd.f32 %v6164, 1.0
        %v6293 = vadd.f32 %v6165, 1.0
        %v6294 = vadd.f32 %v6166, 1.0
        %v6295 = vadd.f32 %v6167, 1.0
        %v6296 = vadd.f32 %v6168, 1.0
        %v6297 = vadd.f32 %v6169, 1.0
        %v6298 = vadd.f32 %v6170, 1.0
        %v6299 = vadd.f32 %v6171, 1.0
        %v6300 = vmul.f32 %v5276, %v6172
        %v6301 = vmul.f32 %v5277, %v6173
        %v6302 = vmul.f32 %v5278, %v6174
        %v6303 = vmul.f32 %v5279, %v6175
        %v6304 = vmul.f32 %v5280, %v6176
        %v6305 = vmul.f32 %v5281, %v6177
        %v6306 = vmul.f32 %v5282, %v6178
        %v6307 = vmul.f32 %v5283, %v6179
        %v6308 = vmul.f32 %v5284, %v6180
        %v6309 = vmul.f32 %v5285, %v6181
        %v6310 = vmul.f32 %v5286, %v6182
        %v6311 = vmul.f32 %v5287, %v6183
        %v6312 = vmul.f32 %v5288, %v6184
        %v6313 = vmul.f32 %v5289, %v6185
        %v6314 = vmul.f32 %v5290, %v6186
        %v6315 = vmul.f32 %v5291, %v6187
        %v6316 = vmul.f32 %v5292, %v6188
        %v6317 = vmul.f32 %v5293, %v6189
        %v6318 = vmul.f32 %v5294, %v6190
        %v6319 = vmul.f32 %v5295, %v6191
        %v6320 = vmul.f32 %v5296, %v6192
        %v6321 = vmul.f32 %v5297, %v6193
        %v6322 = vmul.f32 %v5298, %v6194
        %v6323 = vmul.f32 %v5299, %v6195
        %v6324 = vmul.f32 %v5300, %v6196
        %v6325 = vmul.f32 %v5301, %v6197
        %v6326 = vmul.f32 %v5302, %v6198
        %v6327 = vmul.f32 %v5303, %v6199
        %v6328 = vmul.f32 %v5304, %v6200
        %v6329 = vmul.f32 %v5305, %v6201
        %v6330 = vmul.f32 %v5306, %v6202
        %v6331 = vmul.f32 %v5307, %v6203
        %v6332 = vmul.f32 %v5308, %v6204
        %v6333 = vmul.f32 %v5309, %v6205
        %v6334 = vmul.f32 %v5310, %v6206
        %v6335 = vmul.f32 %v5311, %v6207
        %v6336 = vmul.f32 %v5312, %v6208
        %v6337 = vmul.f32 %v5313, %v6209
        %v6338 = vmul.f32 %v5314, %v6210
        %v6339 = vmul.f32 %v5315, %v6211
        %v6340 = vmul.f32 %v5316, %v6212
        %v6341 = vmul.f32 %v5317, %v6213
        %v6342 = vmul.f32 %v5318, %v6214
        %v6343 = vmul.f32 %v5319, %v6215
        %v6344 = vmul.f32 %v5320, %v6216
        %v6345 = vmul.f32 %v5321, %v6217
        %v6346 = vmul.f32 %v5322, %v6218
        %v6347 = vmul.f32 %v5323, %v6219
        %v6348 = vmul.f32 %v5324, %v6220
        %v6349 = vmul.f32 %v5325, %v6221
        %v6350 = vmul.f32 %v5326, %v6222
        %v6351 = vmul.f32 %v5327, %v6223
        %v6352 = vmul.f32 %v5328, %v6224
        %v6353 = vmul.f32 %v5329, %v6225
        %v6354 = vmul.f32 %v5330, %v6226
        %v6355 = vmul.f32 %v5331, %v6227
        %v6356 = vmul.f32 %v5332, %v6228
        %v6357 = vmul.f32 %v5333, %v6229
        %v6358 = vmul.f32 %v5334, %v6230
        %v6359 = vmul.f32 %v5335, %v6231
        %v6360 = vmul.f32 %v5336, %v6232
        %v6361 = vmul.f32 %v5337, %v6233
        %v6362 = vmul.f32 %v5338, %v6234
        %v6363 = vmul.f32 %v5339, %v6235
        %v6364 = vmul.f32 %v5340, %v6236
        %v6365 = vmul.f32 %v5341, %v6237
        %v6366 = vmul.f32 %v5342, %v6238
        %v6367 = vmul.f32 %v5343, %v6239
        %v6368 = vmul.f32 %v5344, %v6240
        %v6369 = vmul.f32 %v5345, %v6241
        %v6370 = vmul.f32 %v5346, %v6242
        %v6371 = vmul.f32 %v5347, %v6243
        %v6372 = vmul.f32 %v5348, %v6244
        %v6373 = vmul.f32 %v5349, %v6245
        %v6374 = vmul.f32 %v5350, %v6246
        %v6375 = vmul.f32 %v5351, %v6247
        %v6376 = vmul.f32 %v5352, %v6248
        %v6377 = vmul.f32 %v5353, %v6249
        %v6378 = vmul.f32 %v5354, %v6250
        %v6379 = vmul.f32 %v5355, %v6251
        %v6380 = vmul.f32 %v5356, %v6252
        %v6381 = vmul.f32 %v5357, %v6253
        %v6382 = vmul.f32 %v5358, %v6254
        %v6383 = vmul.f32 %v5359, %v6255
        %v6384 = vmul.f32 %v5360, %v6256
        %v6385 = vmul.f32 %v5361, %v6257
        %v6386 = vmul.f32 %v5362, %v6258
        %v6387 = vmul.f32 %v5363, %v6259
        %v6388 = vmul.f32 %v5364, %v6260
        %v6389 = vmul.f32 %v5365, %v6261
        %v6390 = vmul.f32 %v5366, %v6262
        %v6391 = vmul.f32 %v5367, %v6263
        %v6392 = vmul.f32 %v5368, %v6264
        %v6393 = vmul.f32 %v5369, %v6265
        %v6394 = vmul.f32 %v5370, %v6266
        %v6395 = vmul.f32 %v5371, %v6267
        %v6396 = vmul.f32 %v5372, %v6268
        %v6397 = vmul.f32 %v5373, %v6269
        %v6398 = vmul.f32 %v5374, %v6270
        %v6399 = vmul.f32 %v5375, %v6271
        %v6400 = vmul.f32 %v5376, %v6272
        %v6401 = vmul.f32 %v5377, %v6273
        %v6402 = vmul.f32 %v5378, %v6274
        %v6403 = vmul.f32 %v5379, %v6275
        %v6404 = vmul.f32 %v5380, %v6276
        %v6405 = vmul.f32 %v5381, %v6277
        %v6406 = vmul.f32 %v5382, %v6278
        %v6407 = vmul.f32 %v5383, %v6279
        %v6408 = vmul.f32 %v5384, %v6280
        %v6409 = vmul.f32 %v5385, %v6281
        %v6410 = vmul.f32 %v5386, %v6282
        %v6411 = vmul.f32 %v5387, %v6283
        %v6412 = vmul.f32 %v5388, %v6284
        %v6413 = vmul.f32 %v5389, %v6285
        %v6414 = vmul.f32 %v5390, %v6286
        %v6415 = vmul.f32 %v5391, %v6287
        %v6416 = vmul.f32 %v5392, %v6288
        %v6417 = vmul.f32 %v5393, %v6289
        %v6418 = vmul.f32 %v5394, %v6290
        %v6419 = vmul.f32 %v5395, %v6291
        %v6420 = vmul.f32 %v5396, %v6292
        %v6421 = vmul.f32 %v5397, %v6293
        %v6422 = vmul.f32 %v5398, %v6294
        %v6423 = vmul.f32 %v5399, %v6295
        %v6424 = vmul.f32 %v5400, %v6296
        %v6425 = vmul.f32 %v5401, %v6297
        %v6426 = vmul.f32 %v5402, %v6298
        %v6427 = vmul.f32 %v5403, %v6299
        %v6428 = vpack.c.bf16 %v6308, %v6300
        %v6429 = vpack.c.bf16 %v6309, %v6301
        %v6430 = vpack.c.bf16 %v6310, %v6302
        %v6431 = vpack.c.bf16 %v6311, %v6303
        %v6432 = vpack.c.bf16 %v6312, %v6304
        %v6433 = vpack.c.bf16 %v6313, %v6305
        %v6434 = vpack.c.bf16 %v6314, %v6306
        %v6435 = vpack.c.bf16 %v6315, %v6307
        %v6436 = vpack.c.bf16 %v6324, %v6316
        %v6437 = vpack.c.bf16 %v6325, %v6317
        %v6438 = vpack.c.bf16 %v6326, %v6318
        %v6439 = vpack.c.bf16 %v6327, %v6319
        %v6440 = vpack.c.bf16 %v6328, %v6320
        %v6441 = vpack.c.bf16 %v6329, %v6321
        %v6442 = vpack.c.bf16 %v6330, %v6322
        %v6443 = vpack.c.bf16 %v6331, %v6323
        %v6444 = vpack.c.bf16 %v6340, %v6332
        %v6445 = vpack.c.bf16 %v6341, %v6333
        %v6446 = vpack.c.bf16 %v6342, %v6334
        %v6447 = vpack.c.bf16 %v6343, %v6335
        %v6448 = vpack.c.bf16 %v6344, %v6336
        %v6449 = vpack.c.bf16 %v6345, %v6337
        %v6450 = vpack.c.bf16 %v6346, %v6338
        %v6451 = vpack.c.bf16 %v6347, %v6339
        %v6452 = vpack.c.bf16 %v6356, %v6348
        %v6453 = vpack.c.bf16 %v6357, %v6349
        %v6454 = vpack.c.bf16 %v6358, %v6350
        %v6455 = vpack.c.bf16 %v6359, %v6351
        %v6456 = vpack.c.bf16 %v6360, %v6352
        %v6457 = vpack.c.bf16 %v6361, %v6353
        %v6458 = vpack.c.bf16 %v6362, %v6354
        %v6459 = vpack.c.bf16 %v6363, %v6355
        %v6460 = vpack.c.bf16 %v6372, %v6364
        %v6461 = vpack.c.bf16 %v6373, %v6365
        %v6462 = vpack.c.bf16 %v6374, %v6366
        %v6463 = vpack.c.bf16 %v6375, %v6367
        %v6464 = vpack.c.bf16 %v6376, %v6368
        %v6465 = vpack.c.bf16 %v6377, %v6369
        %v6466 = vpack.c.bf16 %v6378, %v6370
        %v6467 = vpack.c.bf16 %v6379, %v6371
        %v6468 = vpack.c.bf16 %v6388, %v6380
        %v6469 = vpack.c.bf16 %v6389, %v6381
        %v6470 = vpack.c.bf16 %v6390, %v6382
        %v6471 = vpack.c.bf16 %v6391, %v6383
        %v6472 = vpack.c.bf16 %v6392, %v6384
        %v6473 = vpack.c.bf16 %v6393, %v6385
        %v6474 = vpack.c.bf16 %v6394, %v6386
        %v6475 = vpack.c.bf16 %v6395, %v6387
        %v6476 = vpack.c.bf16 %v6404, %v6396
        %v6477 = vpack.c.bf16 %v6405, %v6397
        %v6478 = vpack.c.bf16 %v6406, %v6398
        %v6479 = vpack.c.bf16 %v6407, %v6399
        %v6480 = vpack.c.bf16 %v6408, %v6400
        %v6481 = vpack.c.bf16 %v6409, %v6401
        %v6482 = vpack.c.bf16 %v6410, %v6402
        %v6483 = vpack.c.bf16 %v6411, %v6403
        %v6484 = vpack.c.bf16 %v6420, %v6412
        %v6485 = vpack.c.bf16 %v6421, %v6413
        %v6486 = vpack.c.bf16 %v6422, %v6414
        %v6487 = vpack.c.bf16 %v6423, %v6415
        %v6488 = vpack.c.bf16 %v6424, %v6416
        %v6489 = vpack.c.bf16 %v6425, %v6417
        %v6490 = vpack.c.bf16 %v6426, %v6418
        %v6491 = vpack.c.bf16 %v6427, %v6419
        %v6492 = vld [vmem:[%s621] sm:$0xff]
        %v6493 = vld [vmem:[%s621 + $0x8] sm:$0xff]
        %v6494 = vld [vmem:[%s621 + $0x10] sm:$0xff]
        %v6495 = vld [vmem:[%s621 + $0x18] sm:$0xff]
        %v6496 = vld [vmem:[%s621 + $0x20] sm:$0xff]
        %v6497 = vld [vmem:[%s621 + $0x28] sm:$0xff]
        %v6498 = vld [vmem:[%s621 + $0x30] sm:$0xff]
        %v6499 = vld [vmem:[%s621 + $0x38] sm:$0xff]
        %v6500 = vld [vmem:[%s621 + $0x40] sm:$0xff]
        %v6501 = vld [vmem:[%s621 + $0x48] sm:$0xff]
        %v6502 = vld [vmem:[%s621 + $0x50] sm:$0xff]
        %v6503 = vld [vmem:[%s621 + $0x58] sm:$0xff]
        %v6504 = vld [vmem:[%s621 + $0x60] sm:$0xff]
        %v6505 = vld [vmem:[%s621 + $0x68] sm:$0xff]
        %v6506 = vld [vmem:[%s621 + $0x70] sm:$0xff]
        %v6507 = vld [vmem:[%s621 + $0x78] sm:$0xff]
        %v6508 = vld [vmem:[%s621 + $0x80] sm:$0xff]
        %v6509 = vld [vmem:[%s621 + $0x88] sm:$0xff]
        %v6510 = vld [vmem:[%s621 + $0x90] sm:$0xff]
        %v6511 = vld [vmem:[%s621 + $0x98] sm:$0xff]
        %v6512 = vld [vmem:[%s621 + $0xa0] sm:$0xff]
        %v6513 = vld [vmem:[%s621 + $0xa8] sm:$0xff]
        %v6514 = vld [vmem:[%s621 + $0xb0] sm:$0xff]
        %v6515 = vld [vmem:[%s621 + $0xb8] sm:$0xff]
        %v6516 = vld [vmem:[%s621 + $0xc0] sm:$0xff]
        %v6517 = vld [vmem:[%s621 + $0xc8] sm:$0xff]
        %v6518 = vld [vmem:[%s621 + $0xd0] sm:$0xff]
        %v6519 = vld [vmem:[%s621 + $0xd8] sm:$0xff]
        %v6520 = vld [vmem:[%s621 + $0xe0] sm:$0xff]
        %v6521 = vld [vmem:[%s621 + $0xe8] sm:$0xff]
        %v6522 = vld [vmem:[%s621 + $0xf0] sm:$0xff]
        %v6523 = vld [vmem:[%s621 + $0xf8] sm:$0xff]
        %v6524 = vld [vmem:[%s621 + $0x100] sm:$0xff]
        %v6525 = vld [vmem:[%s621 + $0x108] sm:$0xff]
        %v6526 = vld [vmem:[%s621 + $0x110] sm:$0xff]
        %v6527 = vld [vmem:[%s621 + $0x118] sm:$0xff]
        %v6528 = vld [vmem:[%s621 + $0x120] sm:$0xff]
        %v6529 = vld [vmem:[%s621 + $0x128] sm:$0xff]
        %v6530 = vld [vmem:[%s621 + $0x130] sm:$0xff]
        %v6531 = vld [vmem:[%s621 + $0x138] sm:$0xff]
        %v6532 = vld [vmem:[%s621 + $0x140] sm:$0xff]
        %v6533 = vld [vmem:[%s621 + $0x148] sm:$0xff]
        %v6534 = vld [vmem:[%s621 + $0x150] sm:$0xff]
        %v6535 = vld [vmem:[%s621 + $0x158] sm:$0xff]
        %v6536 = vld [vmem:[%s621 + $0x160] sm:$0xff]
        %v6537 = vld [vmem:[%s621 + $0x168] sm:$0xff]
        %v6538 = vld [vmem:[%s621 + $0x170] sm:$0xff]
        %v6539 = vld [vmem:[%s621 + $0x178] sm:$0xff]
        %v6540 = vld [vmem:[%s621 + $0x180] sm:$0xff]
        %v6541 = vld [vmem:[%s621 + $0x188] sm:$0xff]
        %v6542 = vld [vmem:[%s621 + $0x190] sm:$0xff]
        %v6543 = vld [vmem:[%s621 + $0x198] sm:$0xff]
        %v6544 = vld [vmem:[%s621 + $0x1a0] sm:$0xff]
        %v6545 = vld [vmem:[%s621 + $0x1a8] sm:$0xff]
        %v6546 = vld [vmem:[%s621 + $0x1b0] sm:$0xff]
        %v6547 = vld [vmem:[%s621 + $0x1b8] sm:$0xff]
        %v6548 = vld [vmem:[%s621 + $0x1c0] sm:$0xff]
        %v6549 = vld [vmem:[%s621 + $0x1c8] sm:$0xff]
        %v6550 = vld [vmem:[%s621 + $0x1d0] sm:$0xff]
        %v6551 = vld [vmem:[%s621 + $0x1d8] sm:$0xff]
        %v6552 = vld [vmem:[%s621 + $0x1e0] sm:$0xff]
        %v6553 = vld [vmem:[%s621 + $0x1e8] sm:$0xff]
        %v6554 = vld [vmem:[%s621 + $0x1f0] sm:$0xff]
        %v6555 = vld [vmem:[%s621 + $0x1f8] sm:$0xff]
        %v6556 = vld [vmem:[%s621 + $0x200] sm:$0xff]
        %v6557 = vld [vmem:[%s621 + $0x208] sm:$0xff]
        %v6558 = vld [vmem:[%s621 + $0x210] sm:$0xff]
        %v6559 = vld [vmem:[%s621 + $0x218] sm:$0xff]
        %v6560 = vld [vmem:[%s621 + $0x220] sm:$0xff]
        %v6561 = vld [vmem:[%s621 + $0x228] sm:$0xff]
        %v6562 = vld [vmem:[%s621 + $0x230] sm:$0xff]
        %v6563 = vld [vmem:[%s621 + $0x238] sm:$0xff]
        %v6564 = vld [vmem:[%s621 + $0x240] sm:$0xff]
        %v6565 = vld [vmem:[%s621 + $0x248] sm:$0xff]
        %v6566 = vld [vmem:[%s621 + $0x250] sm:$0xff]
        %v6567 = vld [vmem:[%s621 + $0x258] sm:$0xff]
        %v6568 = vld [vmem:[%s621 + $0x260] sm:$0xff]
        %v6569 = vld [vmem:[%s621 + $0x268] sm:$0xff]
        %v6570 = vld [vmem:[%s621 + $0x270] sm:$0xff]
        %v6571 = vld [vmem:[%s621 + $0x278] sm:$0xff]
        %v6572 = vld [vmem:[%s621 + $0x280] sm:$0xff]
        %v6573 = vld [vmem:[%s621 + $0x288] sm:$0xff]
        %v6574 = vld [vmem:[%s621 + $0x290] sm:$0xff]
        %v6575 = vld [vmem:[%s621 + $0x298] sm:$0xff]
        %v6576 = vld [vmem:[%s621 + $0x2a0] sm:$0xff]
        %v6577 = vld [vmem:[%s621 + $0x2a8] sm:$0xff]
        %v6578 = vld [vmem:[%s621 + $0x2b0] sm:$0xff]
        %v6579 = vld [vmem:[%s621 + $0x2b8] sm:$0xff]
        %v6580 = vld [vmem:[%s621 + $0x2c0] sm:$0xff]
        %v6581 = vld [vmem:[%s621 + $0x2c8] sm:$0xff]
        %v6582 = vld [vmem:[%s621 + $0x2d0] sm:$0xff]
        %v6583 = vld [vmem:[%s621 + $0x2d8] sm:$0xff]
        %v6584 = vld [vmem:[%s621 + $0x2e0] sm:$0xff]
        %v6585 = vld [vmem:[%s621 + $0x2e8] sm:$0xff]
        %v6586 = vld [vmem:[%s621 + $0x2f0] sm:$0xff]
        %v6587 = vld [vmem:[%s621 + $0x2f8] sm:$0xff]
        %v6588 = vld [vmem:[%s621 + $0x300] sm:$0xff]
        %v6589 = vld [vmem:[%s621 + $0x308] sm:$0xff]
        %v6590 = vld [vmem:[%s621 + $0x310] sm:$0xff]
        %v6591 = vld [vmem:[%s621 + $0x318] sm:$0xff]
        %v6592 = vld [vmem:[%s621 + $0x320] sm:$0xff]
        %v6593 = vld [vmem:[%s621 + $0x328] sm:$0xff]
        %v6594 = vld [vmem:[%s621 + $0x330] sm:$0xff]
        %v6595 = vld [vmem:[%s621 + $0x338] sm:$0xff]
        %v6596 = vld [vmem:[%s621 + $0x340] sm:$0xff]
        %v6597 = vld [vmem:[%s621 + $0x348] sm:$0xff]
        %v6598 = vld [vmem:[%s621 + $0x350] sm:$0xff]
        %v6599 = vld [vmem:[%s621 + $0x358] sm:$0xff]
        %v6600 = vld [vmem:[%s621 + $0x360] sm:$0xff]
        %v6601 = vld [vmem:[%s621 + $0x368] sm:$0xff]
        %v6602 = vld [vmem:[%s621 + $0x370] sm:$0xff]
        %v6603 = vld [vmem:[%s621 + $0x378] sm:$0xff]
        %v6604 = vld [vmem:[%s621 + $0x380] sm:$0xff]
        %v6605 = vld [vmem:[%s621 + $0x388] sm:$0xff]
        %v6606 = vld [vmem:[%s621 + $0x390] sm:$0xff]
        %v6607 = vld [vmem:[%s621 + $0x398] sm:$0xff]
        %v6608 = vld [vmem:[%s621 + $0x3a0] sm:$0xff]
        %v6609 = vld [vmem:[%s621 + $0x3a8] sm:$0xff]
        %v6610 = vld [vmem:[%s621 + $0x3b0] sm:$0xff]
        %v6611 = vld [vmem:[%s621 + $0x3b8] sm:$0xff]
        %v6612 = vld [vmem:[%s621 + $0x3c0] sm:$0xff]
        %v6613 = vld [vmem:[%s621 + $0x3c8] sm:$0xff]
        %v6614 = vld [vmem:[%s621 + $0x3d0] sm:$0xff]
        %v6615 = vld [vmem:[%s621 + $0x3d8] sm:$0xff]
        %v6616 = vld [vmem:[%s621 + $0x3e0] sm:$0xff]
        %v6617 = vld [vmem:[%s621 + $0x3e8] sm:$0xff]
        %v6618 = vld [vmem:[%s621 + $0x3f0] sm:$0xff]
        %v6619 = vld [vmem:[%s621 + $0x3f8] sm:$0xff]
        %v6620 = vld [vmem:[%s738] sm:$0x3]
        %v6621 = vunpack.c.l.bf16 %v6620
        %v6623 = vlaneseq
        %v6624 = vshrl.u32 %v6623, 7
        %v6625 = vsub.s32 0, %v6624
        %v6626 = vrot.slane %v6621, %v6625
        %v6627 = vlaneseq
        %v6628 = vshrl.u32 %v6627, 7
        %v6629 = vsub.s32 2, %v6628
        %v6630 = vrot.slane %v6621, %v6629
        %v6633 = vlaneseq
        %v6634 = vshrl.u32 %v6633, 7
        %v6635 = vsub.s32 0, %v6634
        %v6636 = vrot.slane %v6626, %v6635
        %v6637 = vlaneseq
        %v6638 = vshrl.u32 %v6637, 7
        %v6639 = vsub.s32 0, %v6638
        %v6640 = vrot.slane %v6630, %v6639
        %v6769 = vunpack.c.l.b16 %v6492
        %v6770 = vunpack.c.h.b16 %v6492
        %v6771 = vunpack.c.l.b16 %v6493
        %v6772 = vunpack.c.h.b16 %v6493
        %v6773 = vunpack.c.l.b16 %v6494
        %v6774 = vunpack.c.h.b16 %v6494
        %v6775 = vunpack.c.l.b16 %v6495
        %v6776 = vunpack.c.h.b16 %v6495
        %v6777 = vunpack.c.l.b16 %v6496
        %v6778 = vunpack.c.h.b16 %v6496
        %v6779 = vunpack.c.l.b16 %v6497
        %v6780 = vunpack.c.h.b16 %v6497
        %v6781 = vunpack.c.l.b16 %v6498
        %v6782 = vunpack.c.h.b16 %v6498
        %v6783 = vunpack.c.l.b16 %v6499
        %v6784 = vunpack.c.h.b16 %v6499
        %v6785 = vunpack.c.l.b16 %v6500
        %v6786 = vunpack.c.h.b16 %v6500
        %v6787 = vunpack.c.l.b16 %v6501
        %v6788 = vunpack.c.h.b16 %v6501
        %v6789 = vunpack.c.l.b16 %v6502
        %v6790 = vunpack.c.h.b16 %v6502
        %v6791 = vunpack.c.l.b16 %v6503
        %v6792 = vunpack.c.h.b16 %v6503
        %v6793 = vunpack.c.l.b16 %v6504
        %v6794 = vunpack.c.h.b16 %v6504
        %v6795 = vunpack.c.l.b16 %v6505
        %v6796 = vunpack.c.h.b16 %v6505
        %v6797 = vunpack.c.l.b16 %v6506
        %v6798 = vunpack.c.h.b16 %v6506
        %v6799 = vunpack.c.l.b16 %v6507
        %v6800 = vunpack.c.h.b16 %v6507
        %v6801 = vunpack.c.l.b16 %v6508
        %v6802 = vunpack.c.h.b16 %v6508
        %v6803 = vunpack.c.l.b16 %v6509
        %v6804 = vunpack.c.h.b16 %v6509
        %v6805 = vunpack.c.l.b16 %v6510
        %v6806 = vunpack.c.h.b16 %v6510
        %v6807 = vunpack.c.l.b16 %v6511
        %v6808 = vunpack.c.h.b16 %v6511
        %v6809 = vunpack.c.l.b16 %v6512
        %v6810 = vunpack.c.h.b16 %v6512
        %v6811 = vunpack.c.l.b16 %v6513
        %v6812 = vunpack.c.h.b16 %v6513
        %v6813 = vunpack.c.l.b16 %v6514
        %v6814 = vunpack.c.h.b16 %v6514
        %v6815 = vunpack.c.l.b16 %v6515
        %v6816 = vunpack.c.h.b16 %v6515
        %v6817 = vunpack.c.l.b16 %v6516
        %v6818 = vunpack.c.h.b16 %v6516
        %v6819 = vunpack.c.l.b16 %v6517
        %v6820 = vunpack.c.h.b16 %v6517
        %v6821 = vunpack.c.l.b16 %v6518
        %v6822 = vunpack.c.h.b16 %v6518
        %v6823 = vunpack.c.l.b16 %v6519
        %v6824 = vunpack.c.h.b16 %v6519
        %v6825 = vunpack.c.l.b16 %v6520
        %v6826 = vunpack.c.h.b16 %v6520
        %v6827 = vunpack.c.l.b16 %v6521
        %v6828 = vunpack.c.h.b16 %v6521
        %v6829 = vunpack.c.l.b16 %v6522
        %v6830 = vunpack.c.h.b16 %v6522
        %v6831 = vunpack.c.l.b16 %v6523
        %v6832 = vunpack.c.h.b16 %v6523
        %v6833 = vunpack.c.l.b16 %v6524
        %v6834 = vunpack.c.h.b16 %v6524
        %v6835 = vunpack.c.l.b16 %v6525
        %v6836 = vunpack.c.h.b16 %v6525
        %v6837 = vunpack.c.l.b16 %v6526
        %v6838 = vunpack.c.h.b16 %v6526
        %v6839 = vunpack.c.l.b16 %v6527
        %v6840 = vunpack.c.h.b16 %v6527
        %v6841 = vunpack.c.l.b16 %v6528
        %v6842 = vunpack.c.h.b16 %v6528
        %v6843 = vunpack.c.l.b16 %v6529
        %v6844 = vunpack.c.h.b16 %v6529
        %v6845 = vunpack.c.l.b16 %v6530
        %v6846 = vunpack.c.h.b16 %v6530
        %v6847 = vunpack.c.l.b16 %v6531
        %v6848 = vunpack.c.h.b16 %v6531
        %v6849 = vunpack.c.l.b16 %v6532
        %v6850 = vunpack.c.h.b16 %v6532
        %v6851 = vunpack.c.l.b16 %v6533
        %v6852 = vunpack.c.h.b16 %v6533
        %v6853 = vunpack.c.l.b16 %v6534
        %v6854 = vunpack.c.h.b16 %v6534
        %v6855 = vunpack.c.l.b16 %v6535
        %v6856 = vunpack.c.h.b16 %v6535
        %v6857 = vunpack.c.l.b16 %v6536
        %v6858 = vunpack.c.h.b16 %v6536
        %v6859 = vunpack.c.l.b16 %v6537
        %v6860 = vunpack.c.h.b16 %v6537
        %v6861 = vunpack.c.l.b16 %v6538
        %v6862 = vunpack.c.h.b16 %v6538
        %v6863 = vunpack.c.l.b16 %v6539
        %v6864 = vunpack.c.h.b16 %v6539
        %v6865 = vunpack.c.l.b16 %v6540
        %v6866 = vunpack.c.h.b16 %v6540
        %v6867 = vunpack.c.l.b16 %v6541
        %v6868 = vunpack.c.h.b16 %v6541
        %v6869 = vunpack.c.l.b16 %v6542
        %v6870 = vunpack.c.h.b16 %v6542
        %v6871 = vunpack.c.l.b16 %v6543
        %v6872 = vunpack.c.h.b16 %v6543
        %v6873 = vunpack.c.l.b16 %v6544
        %v6874 = vunpack.c.h.b16 %v6544
        %v6875 = vunpack.c.l.b16 %v6545
        %v6876 = vunpack.c.h.b16 %v6545
        %v6877 = vunpack.c.l.b16 %v6546
        %v6878 = vunpack.c.h.b16 %v6546
        %v6879 = vunpack.c.l.b16 %v6547
        %v6880 = vunpack.c.h.b16 %v6547
        %v6881 = vunpack.c.l.b16 %v6548
        %v6882 = vunpack.c.h.b16 %v6548
        %v6883 = vunpack.c.l.b16 %v6549
        %v6884 = vunpack.c.h.b16 %v6549
        %v6885 = vunpack.c.l.b16 %v6550
        %v6886 = vunpack.c.h.b16 %v6550
        %v6887 = vunpack.c.l.b16 %v6551
        %v6888 = vunpack.c.h.b16 %v6551
        %v6889 = vunpack.c.l.b16 %v6552
        %v6890 = vunpack.c.h.b16 %v6552
        %v6891 = vunpack.c.l.b16 %v6553
        %v6892 = vunpack.c.h.b16 %v6553
        %v6893 = vunpack.c.l.b16 %v6554
        %v6894 = vunpack.c.h.b16 %v6554
        %v6895 = vunpack.c.l.b16 %v6555
        %v6896 = vunpack.c.h.b16 %v6555
        %v6897 = vunpack.c.l.b16 %v6556
        %v6898 = vunpack.c.h.b16 %v6556
        %v6899 = vunpack.c.l.b16 %v6557
        %v6900 = vunpack.c.h.b16 %v6557
        %v6901 = vunpack.c.l.b16 %v6558
        %v6902 = vunpack.c.h.b16 %v6558
        %v6903 = vunpack.c.l.b16 %v6559
        %v6904 = vunpack.c.h.b16 %v6559
        %v6905 = vunpack.c.l.b16 %v6560
        %v6906 = vunpack.c.h.b16 %v6560
        %v6907 = vunpack.c.l.b16 %v6561
        %v6908 = vunpack.c.h.b16 %v6561
        %v6909 = vunpack.c.l.b16 %v6562
        %v6910 = vunpack.c.h.b16 %v6562
        %v6911 = vunpack.c.l.b16 %v6563
        %v6912 = vunpack.c.h.b16 %v6563
        %v6913 = vunpack.c.l.b16 %v6564
        %v6914 = vunpack.c.h.b16 %v6564
        %v6915 = vunpack.c.l.b16 %v6565
        %v6916 = vunpack.c.h.b16 %v6565
        %v6917 = vunpack.c.l.b16 %v6566
        %v6918 = vunpack.c.h.b16 %v6566
        %v6919 = vunpack.c.l.b16 %v6567
        %v6920 = vunpack.c.h.b16 %v6567
        %v6921 = vunpack.c.l.b16 %v6568
        %v6922 = vunpack.c.h.b16 %v6568
        %v6923 = vunpack.c.l.b16 %v6569
        %v6924 = vunpack.c.h.b16 %v6569
        %v6925 = vunpack.c.l.b16 %v6570
        %v6926 = vunpack.c.h.b16 %v6570
        %v6927 = vunpack.c.l.b16 %v6571
        %v6928 = vunpack.c.h.b16 %v6571
        %v6929 = vunpack.c.l.b16 %v6572
        %v6930 = vunpack.c.h.b16 %v6572
        %v6931 = vunpack.c.l.b16 %v6573
        %v6932 = vunpack.c.h.b16 %v6573
        %v6933 = vunpack.c.l.b16 %v6574
        %v6934 = vunpack.c.h.b16 %v6574
        %v6935 = vunpack.c.l.b16 %v6575
        %v6936 = vunpack.c.h.b16 %v6575
        %v6937 = vunpack.c.l.b16 %v6576
        %v6938 = vunpack.c.h.b16 %v6576
        %v6939 = vunpack.c.l.b16 %v6577
        %v6940 = vunpack.c.h.b16 %v6577
        %v6941 = vunpack.c.l.b16 %v6578
        %v6942 = vunpack.c.h.b16 %v6578
        %v6943 = vunpack.c.l.b16 %v6579
        %v6944 = vunpack.c.h.b16 %v6579
        %v6945 = vunpack.c.l.b16 %v6580
        %v6946 = vunpack.c.h.b16 %v6580
        %v6947 = vunpack.c.l.b16 %v6581
        %v6948 = vunpack.c.h.b16 %v6581
        %v6949 = vunpack.c.l.b16 %v6582
        %v6950 = vunpack.c.h.b16 %v6582
        %v6951 = vunpack.c.l.b16 %v6583
        %v6952 = vunpack.c.h.b16 %v6583
        %v6953 = vunpack.c.l.b16 %v6584
        %v6954 = vunpack.c.h.b16 %v6584
        %v6955 = vunpack.c.l.b16 %v6585
        %v6956 = vunpack.c.h.b16 %v6585
        %v6957 = vunpack.c.l.b16 %v6586
        %v6958 = vunpack.c.h.b16 %v6586
        %v6959 = vunpack.c.l.b16 %v6587
        %v6960 = vunpack.c.h.b16 %v6587
        %v6961 = vunpack.c.l.b16 %v6588
        %v6962 = vunpack.c.h.b16 %v6588
        %v6963 = vunpack.c.l.b16 %v6589
        %v6964 = vunpack.c.h.b16 %v6589
        %v6965 = vunpack.c.l.b16 %v6590
        %v6966 = vunpack.c.h.b16 %v6590
        %v6967 = vunpack.c.l.b16 %v6591
        %v6968 = vunpack.c.h.b16 %v6591
        %v6969 = vunpack.c.l.b16 %v6592
        %v6970 = vunpack.c.h.b16 %v6592
        %v6971 = vunpack.c.l.b16 %v6593
        %v6972 = vunpack.c.h.b16 %v6593
        %v6973 = vunpack.c.l.b16 %v6594
        %v6974 = vunpack.c.h.b16 %v6594
        %v6975 = vunpack.c.l.b16 %v6595
        %v6976 = vunpack.c.h.b16 %v6595
        %v6977 = vunpack.c.l.b16 %v6596
        %v6978 = vunpack.c.h.b16 %v6596
        %v6979 = vunpack.c.l.b16 %v6597
        %v6980 = vunpack.c.h.b16 %v6597
        %v6981 = vunpack.c.l.b16 %v6598
        %v6982 = vunpack.c.h.b16 %v6598
        %v6983 = vunpack.c.l.b16 %v6599
        %v6984 = vunpack.c.h.b16 %v6599
        %v6985 = vunpack.c.l.b16 %v6600
        %v6986 = vunpack.c.h.b16 %v6600
        %v6987 = vunpack.c.l.b16 %v6601
        %v6988 = vunpack.c.h.b16 %v6601
        %v6989 = vunpack.c.l.b16 %v6602
        %v6990 = vunpack.c.h.b16 %v6602
        %v6991 = vunpack.c.l.b16 %v6603
        %v6992 = vunpack.c.h.b16 %v6603
        %v6993 = vunpack.c.l.b16 %v6604
        %v6994 = vunpack.c.h.b16 %v6604
        %v6995 = vunpack.c.l.b16 %v6605
        %v6996 = vunpack.c.h.b16 %v6605
        %v6997 = vunpack.c.l.b16 %v6606
        %v6998 = vunpack.c.h.b16 %v6606
        %v6999 = vunpack.c.l.b16 %v6607
        %v7000 = vunpack.c.h.b16 %v6607
        %v7001 = vunpack.c.l.b16 %v6608
        %v7002 = vunpack.c.h.b16 %v6608
        %v7003 = vunpack.c.l.b16 %v6609
        %v7004 = vunpack.c.h.b16 %v6609
        %v7005 = vunpack.c.l.b16 %v6610
        %v7006 = vunpack.c.h.b16 %v6610
        %v7007 = vunpack.c.l.b16 %v6611
        %v7008 = vunpack.c.h.b16 %v6611
        %v7009 = vunpack.c.l.b16 %v6612
        %v7010 = vunpack.c.h.b16 %v6612
        %v7011 = vunpack.c.l.b16 %v6613
        %v7012 = vunpack.c.h.b16 %v6613
        %v7013 = vunpack.c.l.b16 %v6614
        %v7014 = vunpack.c.h.b16 %v6614
        %v7015 = vunpack.c.l.b16 %v6615
        %v7016 = vunpack.c.h.b16 %v6615
        %v7017 = vunpack.c.l.b16 %v6616
        %v7018 = vunpack.c.h.b16 %v6616
        %v7019 = vunpack.c.l.b16 %v6617
        %v7020 = vunpack.c.h.b16 %v6617
        %v7021 = vunpack.c.l.b16 %v6618
        %v7022 = vunpack.c.h.b16 %v6618
        %v7023 = vunpack.c.l.b16 %v6619
        %v7024 = vunpack.c.h.b16 %v6619
        %v7025 = vpack.c.b16 %v6771, %v6769
        %v7026 = vpack.c.b16 %v6772, %v6770
        %v7027 = vpack.c.b16 %v6775, %v6773
        %v7028 = vpack.c.b16 %v6776, %v6774
        %v7029 = vpack.c.b16 %v6779, %v6777
        %v7030 = vpack.c.b16 %v6780, %v6778
        %v7031 = vpack.c.b16 %v6783, %v6781
        %v7032 = vpack.c.b16 %v6784, %v6782
        %v7033 = vpack.c.b16 %v6787, %v6785
        %v7034 = vpack.c.b16 %v6788, %v6786
        %v7035 = vpack.c.b16 %v6791, %v6789
        %v7036 = vpack.c.b16 %v6792, %v6790
        %v7037 = vpack.c.b16 %v6795, %v6793
        %v7038 = vpack.c.b16 %v6796, %v6794
        %v7039 = vpack.c.b16 %v6799, %v6797
        %v7040 = vpack.c.b16 %v6800, %v6798
        %v7041 = vpack.c.b16 %v6803, %v6801
        %v7042 = vpack.c.b16 %v6804, %v6802
        %v7043 = vpack.c.b16 %v6807, %v6805
        %v7044 = vpack.c.b16 %v6808, %v6806
        %v7045 = vpack.c.b16 %v6811, %v6809
        %v7046 = vpack.c.b16 %v6812, %v6810
        %v7047 = vpack.c.b16 %v6815, %v6813
        %v7048 = vpack.c.b16 %v6816, %v6814
        %v7049 = vpack.c.b16 %v6819, %v6817
        %v7050 = vpack.c.b16 %v6820, %v6818
        %v7051 = vpack.c.b16 %v6823, %v6821
        %v7052 = vpack.c.b16 %v6824, %v6822
        %v7053 = vpack.c.b16 %v6827, %v6825
        %v7054 = vpack.c.b16 %v6828, %v6826
        %v7055 = vpack.c.b16 %v6831, %v6829
        %v7056 = vpack.c.b16 %v6832, %v6830
        %v7057 = vpack.c.b16 %v6835, %v6833
        %v7058 = vpack.c.b16 %v6836, %v6834
        %v7059 = vpack.c.b16 %v6839, %v6837
        %v7060 = vpack.c.b16 %v6840, %v6838
        %v7061 = vpack.c.b16 %v6843, %v6841
        %v7062 = vpack.c.b16 %v6844, %v6842
        %v7063 = vpack.c.b16 %v6847, %v6845
        %v7064 = vpack.c.b16 %v6848, %v6846
        %v7065 = vpack.c.b16 %v6851, %v6849
        %v7066 = vpack.c.b16 %v6852, %v6850
        %v7067 = vpack.c.b16 %v6855, %v6853
        %v7068 = vpack.c.b16 %v6856, %v6854
        %v7069 = vpack.c.b16 %v6859, %v6857
        %v7070 = vpack.c.b16 %v6860, %v6858
        %v7071 = vpack.c.b16 %v6863, %v6861
        %v7072 = vpack.c.b16 %v6864, %v6862
        %v7073 = vpack.c.b16 %v6867, %v6865
        %v7074 = vpack.c.b16 %v6868, %v6866
        %v7075 = vpack.c.b16 %v6871, %v6869
        %v7076 = vpack.c.b16 %v6872, %v6870
        %v7077 = vpack.c.b16 %v6875, %v6873
        %v7078 = vpack.c.b16 %v6876, %v6874
        %v7079 = vpack.c.b16 %v6879, %v6877
        %v7080 = vpack.c.b16 %v6880, %v6878
        %v7081 = vpack.c.b16 %v6883, %v6881
        %v7082 = vpack.c.b16 %v6884, %v6882
        %v7083 = vpack.c.b16 %v6887, %v6885
        %v7084 = vpack.c.b16 %v6888, %v6886
        %v7085 = vpack.c.b16 %v6891, %v6889
        %v7086 = vpack.c.b16 %v6892, %v6890
        %v7087 = vpack.c.b16 %v6895, %v6893
        %v7088 = vpack.c.b16 %v6896, %v6894
        %v7089 = vpack.c.b16 %v6899, %v6897
        %v7090 = vpack.c.b16 %v6900, %v6898
        %v7091 = vpack.c.b16 %v6903, %v6901
        %v7092 = vpack.c.b16 %v6904, %v6902
        %v7093 = vpack.c.b16 %v6907, %v6905
        %v7094 = vpack.c.b16 %v6908, %v6906
        %v7095 = vpack.c.b16 %v6911, %v6909
        %v7096 = vpack.c.b16 %v6912, %v6910
        %v7097 = vpack.c.b16 %v6915, %v6913
        %v7098 = vpack.c.b16 %v6916, %v6914
        %v7099 = vpack.c.b16 %v6919, %v6917
        %v7100 = vpack.c.b16 %v6920, %v6918
        %v7101 = vpack.c.b16 %v6923, %v6921
        %v7102 = vpack.c.b16 %v6924, %v6922
        %v7103 = vpack.c.b16 %v6927, %v6925
        %v7104 = vpack.c.b16 %v6928, %v6926
        %v7105 = vpack.c.b16 %v6931, %v6929
        %v7106 = vpack.c.b16 %v6932, %v6930
        %v7107 = vpack.c.b16 %v6935, %v6933
        %v7108 = vpack.c.b16 %v6936, %v6934
        %v7109 = vpack.c.b16 %v6939, %v6937
        %v7110 = vpack.c.b16 %v6940, %v6938
        %v7111 = vpack.c.b16 %v6943, %v6941
        %v7112 = vpack.c.b16 %v6944, %v6942
        %v7113 = vpack.c.b16 %v6947, %v6945
        %v7114 = vpack.c.b16 %v6948, %v6946
        %v7115 = vpack.c.b16 %v6951, %v6949
        %v7116 = vpack.c.b16 %v6952, %v6950
        %v7117 = vpack.c.b16 %v6955, %v6953
        %v7118 = vpack.c.b16 %v6956, %v6954
        %v7119 = vpack.c.b16 %v6959, %v6957
        %v7120 = vpack.c.b16 %v6960, %v6958
        %v7121 = vpack.c.b16 %v6963, %v6961
        %v7122 = vpack.c.b16 %v6964, %v6962
        %v7123 = vpack.c.b16 %v6967, %v6965
        %v7124 = vpack.c.b16 %v6968, %v6966
        %v7125 = vpack.c.b16 %v6971, %v6969
        %v7126 = vpack.c.b16 %v6972, %v6970
        %v7127 = vpack.c.b16 %v6975, %v6973
        %v7128 = vpack.c.b16 %v6976, %v6974
        %v7129 = vpack.c.b16 %v6979, %v6977
        %v7130 = vpack.c.b16 %v6980, %v6978
        %v7131 = vpack.c.b16 %v6983, %v6981
        %v7132 = vpack.c.b16 %v6984, %v6982
        %v7133 = vpack.c.b16 %v6987, %v6985
        %v7134 = vpack.c.b16 %v6988, %v6986
        %v7135 = vpack.c.b16 %v6991, %v6989
        %v7136 = vpack.c.b16 %v6992, %v6990
        %v7137 = vpack.c.b16 %v6995, %v6993
        %v7138 = vpack.c.b16 %v6996, %v6994
        %v7139 = vpack.c.b16 %v6999, %v6997
        %v7140 = vpack.c.b16 %v7000, %v6998
        %v7141 = vpack.c.b16 %v7003, %v7001
        %v7142 = vpack.c.b16 %v7004, %v7002
        %v7143 = vpack.c.b16 %v7007, %v7005
        %v7144 = vpack.c.b16 %v7008, %v7006
        %v7145 = vpack.c.b16 %v7011, %v7009
        %v7146 = vpack.c.b16 %v7012, %v7010
        %v7147 = vpack.c.b16 %v7015, %v7013
        %v7148 = vpack.c.b16 %v7016, %v7014
        %v7149 = vpack.c.b16 %v7019, %v7017
        %v7150 = vpack.c.b16 %v7020, %v7018
        %v7151 = vpack.c.b16 %v7023, %v7021
        %v7152 = vpack.c.b16 %v7024, %v7022
        %7281 = vmatprep.subr.bf16.mxu0 %v7040
        %7282 = vmatpush1.bf16.msra.mxu0 %v7039
        %7283 = vmatprep.subr.bf16.mxu0 %v7038
        %7284 = vmatpush1.bf16.msra.mxu0 %v7037
        %7285 = vmatprep.subr.bf16.mxu0 %v7036
        %7286 = vmatpush1.bf16.msra.mxu0 %v7035
        %7287 = vmatprep.subr.bf16.mxu0 %v7034
        %7288 = vmatpush1.bf16.msra.mxu0 %v7033
        %7289 = vmatprep.subr.bf16.mxu0 %v7032
        %7290 = vmatpush1.bf16.msra.mxu0 %v7031
        %7291 = vmatprep.subr.bf16.mxu0 %v7030
        %7292 = vmatpush1.bf16.msra.mxu0 %v7029
        %7293 = vmatprep.subr.bf16.mxu0 %v7028
        %7294 = vmatpush1.bf16.msra.mxu0 %v7027
        %7295 = vmatprep.subr.bf16.mxu0 %v7026
        %7296 = vmatpush1.bf16.msra.mxu0 %v7025
        %7297 = vmatprep.subr.bf16.mxu0 %v7056
        %7298 = vmatpush2.bf16.msra.mxu0 %v7055
        %7299 = vmatprep.subr.bf16.mxu0 %v7054
        %7300 = vmatpush2.bf16.msra.mxu0 %v7053
        %7301 = vmatprep.subr.bf16.mxu0 %v7052
        %7302 = vmatpush2.bf16.msra.mxu0 %v7051
        %7303 = vmatprep.subr.bf16.mxu0 %v7050
        %7304 = vmatpush2.bf16.msra.mxu0 %v7049
        %7305 = vmatprep.subr.bf16.mxu0 %v7048
        %7306 = vmatpush2.bf16.msra.mxu0 %v7047
        %7307 = vmatprep.subr.bf16.mxu0 %v7046
        %7308 = vmatpush2.bf16.msra.mxu0 %v7045
        %7309 = vmatprep.subr.bf16.mxu0 %v7044
        %7310 = vmatpush2.bf16.msra.mxu0 %v7043
        %7311 = vmatprep.subr.bf16.mxu0 %v7042
        %7312 = vmatpush2.bf16.msra.mxu0 %v7041
        %7313 = vmatprep.mubr.bf16.mxu0 %v6429
        %7314 = vmatmul.mubr.bf16.gmra.mxu0 %v6428
        %v7315 = vpop.f32.mrf.mxu0
        %v7316 = vadd.f32 %v6636, %v7315
        %v7317 = vpop.f32.mrf.mxu0
        %v7318 = vadd.f32 %v6640, %v7317
        %v7319 = vpop.f32.mrf.mxu0
        %v7320 = vadd.f32 %v6636, %v7319
        %v7321 = vpop.f32.mrf.mxu0
        %v7322 = vadd.f32 %v6640, %v7321
        %7323 = vmatprep.mubr.bf16.mxu0 %v6437
        %7324 = vmatmul.mubr.bf16.gmra.mxu0 %v6436
        %v7325 = vpop.f32.mrf.mxu0
        %v7326 = vadd.f32 %v6636, %v7325
        %v7327 = vpop.f32.mrf.mxu0
        %v7328 = vadd.f32 %v6640, %v7327
        %v7329 = vpop.f32.mrf.mxu0
        %v7330 = vadd.f32 %v6636, %v7329
        %v7331 = vpop.f32.mrf.mxu0
        %v7332 = vadd.f32 %v6640, %v7331
        %7333 = vmatprep.mubr.bf16.mxu0 %v6445
        %7334 = vmatmul.mubr.bf16.gmra.mxu0 %v6444
        %v7335 = vpop.f32.mrf.mxu0
        %v7336 = vadd.f32 %v6636, %v7335
        %v7337 = vpop.f32.mrf.mxu0
        %v7338 = vadd.f32 %v6640, %v7337
        %v7339 = vpop.f32.mrf.mxu0
        %v7340 = vadd.f32 %v6636, %v7339
        %v7341 = vpop.f32.mrf.mxu0
        %v7342 = vadd.f32 %v6640, %v7341
        %7343 = vmatprep.mubr.bf16.mxu0 %v6453
        %7344 = vmatmul.mubr.bf16.gmra.mxu0 %v6452
        %v7345 = vpop.f32.mrf.mxu0
        %v7346 = vadd.f32 %v6636, %v7345
        %v7347 = vpop.f32.mrf.mxu0
        %v7348 = vadd.f32 %v6640, %v7347
        %v7349 = vpop.f32.mrf.mxu0
        %v7350 = vadd.f32 %v6636, %v7349
        %v7351 = vpop.f32.mrf.mxu0
        %v7352 = vadd.f32 %v6640, %v7351
        %7353 = vmatprep.mubr.bf16.mxu0 %v6461
        %7354 = vmatmul.mubr.bf16.gmra.mxu0 %v6460
        %v7355 = vpop.f32.mrf.mxu0
        %v7356 = vadd.f32 %v6636, %v7355
        %v7357 = vpop.f32.mrf.mxu0
        %v7358 = vadd.f32 %v6640, %v7357
        %v7359 = vpop.f32.mrf.mxu0
        %v7360 = vadd.f32 %v6636, %v7359
        %v7361 = vpop.f32.mrf.mxu0
        %v7362 = vadd.f32 %v6640, %v7361
        %7363 = vmatprep.mubr.bf16.mxu0 %v6469
        %7364 = vmatmul.mubr.bf16.gmra.mxu0 %v6468
        %v7365 = vpop.f32.mrf.mxu0
        %v7366 = vadd.f32 %v6636, %v7365
        %v7367 = vpop.f32.mrf.mxu0
        %v7368 = vadd.f32 %v6640, %v7367
        %v7369 = vpop.f32.mrf.mxu0
        %v7370 = vadd.f32 %v6636, %v7369
        %v7371 = vpop.f32.mrf.mxu0
        %v7372 = vadd.f32 %v6640, %v7371
        %7373 = vmatprep.mubr.bf16.mxu0 %v6477
        %7374 = vmatmul.mubr.bf16.gmra.mxu0 %v6476
        %v7375 = vpop.f32.mrf.mxu0
        %v7376 = vadd.f32 %v6636, %v7375
        %v7377 = vpop.f32.mrf.mxu0
        %v7378 = vadd.f32 %v6640, %v7377
        %v7379 = vpop.f32.mrf.mxu0
        %v7380 = vadd.f32 %v6636, %v7379
        %v7381 = vpop.f32.mrf.mxu0
        %v7382 = vadd.f32 %v6640, %v7381
        %7383 = vmatprep.mubr.bf16.mxu0 %v6485
        %7384 = vmatmul.mubr.bf16.gmra.mxu0 %v6484
        %v7385 = vpop.f32.mrf.mxu0
        %v7386 = vadd.f32 %v6636, %v7385
        %v7387 = vpop.f32.mrf.mxu0
        %v7388 = vadd.f32 %v6640, %v7387
        %v7389 = vpop.f32.mrf.mxu0
        %v7390 = vadd.f32 %v6636, %v7389
        %v7391 = vpop.f32.mrf.mxu0
        %v7392 = vadd.f32 %v6640, %v7391
        %7393 = vdwg.mxu0
        %7394 = vmatprep.subr.bf16.mxu0 %v7072
        %7395 = vmatpush1.bf16.msra.mxu0 %v7071
        %7396 = vmatprep.subr.bf16.mxu0 %v7070
        %7397 = vmatpush1.bf16.msra.mxu0 %v7069
        %7398 = vmatprep.subr.bf16.mxu0 %v7068
        %7399 = vmatpush1.bf16.msra.mxu0 %v7067
        %7400 = vmatprep.subr.bf16.mxu0 %v7066
        %7401 = vmatpush1.bf16.msra.mxu0 %v7065
        %7402 = vmatprep.subr.bf16.mxu0 %v7064
        %7403 = vmatpush1.bf16.msra.mxu0 %v7063
        %7404 = vmatprep.subr.bf16.mxu0 %v7062
        %7405 = vmatpush1.bf16.msra.mxu0 %v7061
        %7406 = vmatprep.subr.bf16.mxu0 %v7060
        %7407 = vmatpush1.bf16.msra.mxu0 %v7059
        %7408 = vmatprep.subr.bf16.mxu0 %v7058
        %7409 = vmatpush1.bf16.msra.mxu0 %v7057
        %7410 = vmatprep.subr.bf16.mxu0 %v7088
        %7411 = vmatpush2.bf16.msra.mxu0 %v7087
        %7412 = vmatprep.subr.bf16.mxu0 %v7086
        %7413 = vmatpush2.bf16.msra.mxu0 %v7085
        %7414 = vmatprep.subr.bf16.mxu0 %v7084
        %7415 = vmatpush2.bf16.msra.mxu0 %v7083
        %7416 = vmatprep.subr.bf16.mxu0 %v7082
        %7417 = vmatpush2.bf16.msra.mxu0 %v7081
        %7418 = vmatprep.subr.bf16.mxu0 %v7080
        %7419 = vmatpush2.bf16.msra.mxu0 %v7079
        %7420 = vmatprep.subr.bf16.mxu0 %v7078
        %7421 = vmatpush2.bf16.msra.mxu0 %v7077
        %7422 = vmatprep.subr.bf16.mxu0 %v7076
        %7423 = vmatpush2.bf16.msra.mxu0 %v7075
        %7424 = vmatprep.subr.bf16.mxu0 %v7074
        %7425 = vmatpush2.bf16.msra.mxu0 %v7073
        %7426 = vmatprep.mubr.bf16.mxu0 %v6431
        %7427 = vmatmul.mubr.bf16.gmra.mxu0 %v6430
        %v7428 = vpop.f32.mrf.mxu0
        %v7429 = vadd.f32 %v7316, %v7428
        %v7430 = vpop.f32.mrf.mxu0
        %v7431 = vadd.f32 %v7318, %v7430
        %v7432 = vpop.f32.mrf.mxu0
        %v7433 = vadd.f32 %v7320, %v7432
        %v7434 = vpop.f32.mrf.mxu0
        %v7435 = vadd.f32 %v7322, %v7434
        %7436 = vmatprep.mubr.bf16.mxu0 %v6439
        %7437 = vmatmul.mubr.bf16.gmra.mxu0 %v6438
        %v7438 = vpop.f32.mrf.mxu0
        %v7439 = vadd.f32 %v7326, %v7438
        %v7440 = vpop.f32.mrf.mxu0
        %v7441 = vadd.f32 %v7328, %v7440
        %v7442 = vpop.f32.mrf.mxu0
        %v7443 = vadd.f32 %v7330, %v7442
        %v7444 = vpop.f32.mrf.mxu0
        %v7445 = vadd.f32 %v7332, %v7444
        %7446 = vmatprep.mubr.bf16.mxu0 %v6447
        %7447 = vmatmul.mubr.bf16.gmra.mxu0 %v6446
        %v7448 = vpop.f32.mrf.mxu0
        %v7449 = vadd.f32 %v7336, %v7448
        %v7450 = vpop.f32.mrf.mxu0
        %v7451 = vadd.f32 %v7338, %v7450
        %v7452 = vpop.f32.mrf.mxu0
        %v7453 = vadd.f32 %v7340, %v7452
        %v7454 = vpop.f32.mrf.mxu0
        %v7455 = vadd.f32 %v7342, %v7454
        %7456 = vmatprep.mubr.bf16.mxu0 %v6455
        %7457 = vmatmul.mubr.bf16.gmra.mxu0 %v6454
        %v7458 = vpop.f32.mrf.mxu0
        %v7459 = vadd.f32 %v7346, %v7458
        %v7460 = vpop.f32.mrf.mxu0
        %v7461 = vadd.f32 %v7348, %v7460
        %v7462 = vpop.f32.mrf.mxu0
        %v7463 = vadd.f32 %v7350, %v7462
        %v7464 = vpop.f32.mrf.mxu0
        %v7465 = vadd.f32 %v7352, %v7464
        %7466 = vmatprep.mubr.bf16.mxu0 %v6463
        %7467 = vmatmul.mubr.bf16.gmra.mxu0 %v6462
        %v7468 = vpop.f32.mrf.mxu0
        %v7469 = vadd.f32 %v7356, %v7468
        %v7470 = vpop.f32.mrf.mxu0
        %v7471 = vadd.f32 %v7358, %v7470
        %v7472 = vpop.f32.mrf.mxu0
        %v7473 = vadd.f32 %v7360, %v7472
        %v7474 = vpop.f32.mrf.mxu0
        %v7475 = vadd.f32 %v7362, %v7474
        %7476 = vmatprep.mubr.bf16.mxu0 %v6471
        %7477 = vmatmul.mubr.bf16.gmra.mxu0 %v6470
        %v7478 = vpop.f32.mrf.mxu0
        %v7479 = vadd.f32 %v7366, %v7478
        %v7480 = vpop.f32.mrf.mxu0
        %v7481 = vadd.f32 %v7368, %v7480
        %v7482 = vpop.f32.mrf.mxu0
        %v7483 = vadd.f32 %v7370, %v7482
        %v7484 = vpop.f32.mrf.mxu0
        %v7485 = vadd.f32 %v7372, %v7484
        %7486 = vmatprep.mubr.bf16.mxu0 %v6479
        %7487 = vmatmul.mubr.bf16.gmra.mxu0 %v6478
        %v7488 = vpop.f32.mrf.mxu0
        %v7489 = vadd.f32 %v7376, %v7488
        %v7490 = vpop.f32.mrf.mxu0
        %v7491 = vadd.f32 %v7378, %v7490
        %v7492 = vpop.f32.mrf.mxu0
        %v7493 = vadd.f32 %v7380, %v7492
        %v7494 = vpop.f32.mrf.mxu0
        %v7495 = vadd.f32 %v7382, %v7494
        %7496 = vmatprep.mubr.bf16.mxu0 %v6487
        %7497 = vmatmul.mubr.bf16.gmra.mxu0 %v6486
        %v7498 = vpop.f32.mrf.mxu0
        %v7499 = vadd.f32 %v7386, %v7498
        %v7500 = vpop.f32.mrf.mxu0
        %v7501 = vadd.f32 %v7388, %v7500
        %v7502 = vpop.f32.mrf.mxu0
        %v7503 = vadd.f32 %v7390, %v7502
        %v7504 = vpop.f32.mrf.mxu0
        %v7505 = vadd.f32 %v7392, %v7504
        %7506 = vdwg.mxu0
        %7507 = vmatprep.subr.bf16.mxu0 %v7104
        %7508 = vmatpush1.bf16.msra.mxu0 %v7103
        %7509 = vmatprep.subr.bf16.mxu0 %v7102
        %7510 = vmatpush1.bf16.msra.mxu0 %v7101
        %7511 = vmatprep.subr.bf16.mxu0 %v7100
        %7512 = vmatpush1.bf16.msra.mxu0 %v7099
        %7513 = vmatprep.subr.bf16.mxu0 %v7098
        %7514 = vmatpush1.bf16.msra.mxu0 %v7097
        %7515 = vmatprep.subr.bf16.mxu0 %v7096
        %7516 = vmatpush1.bf16.msra.mxu0 %v7095
        %7517 = vmatprep.subr.bf16.mxu0 %v7094
        %7518 = vmatpush1.bf16.msra.mxu0 %v7093
        %7519 = vmatprep.subr.bf16.mxu0 %v7092
        %7520 = vmatpush1.bf16.msra.mxu0 %v7091
        %7521 = vmatprep.subr.bf16.mxu0 %v7090
        %7522 = vmatpush1.bf16.msra.mxu0 %v7089
        %7523 = vmatprep.subr.bf16.mxu0 %v7120
        %7524 = vmatpush2.bf16.msra.mxu0 %v7119
        %7525 = vmatprep.subr.bf16.mxu0 %v7118
        %7526 = vmatpush2.bf16.msra.mxu0 %v7117
        %7527 = vmatprep.subr.bf16.mxu0 %v7116
        %7528 = vmatpush2.bf16.msra.mxu0 %v7115
        %7529 = vmatprep.subr.bf16.mxu0 %v7114
        %7530 = vmatpush2.bf16.msra.mxu0 %v7113
        %7531 = vmatprep.subr.bf16.mxu0 %v7112
        %7532 = vmatpush2.bf16.msra.mxu0 %v7111
        %7533 = vmatprep.subr.bf16.mxu0 %v7110
        %7534 = vmatpush2.bf16.msra.mxu0 %v7109
        %7535 = vmatprep.subr.bf16.mxu0 %v7108
        %7536 = vmatpush2.bf16.msra.mxu0 %v7107
        %7537 = vmatprep.subr.bf16.mxu0 %v7106
        %7538 = vmatpush2.bf16.msra.mxu0 %v7105
        %7539 = vmatprep.mubr.bf16.mxu0 %v6433
        %7540 = vmatmul.mubr.bf16.gmra.mxu0 %v6432
        %v7541 = vpop.f32.mrf.mxu0
        %v7542 = vadd.f32 %v7429, %v7541
        %v7543 = vpop.f32.mrf.mxu0
        %v7544 = vadd.f32 %v7431, %v7543
        %v7545 = vpop.f32.mrf.mxu0
        %v7546 = vadd.f32 %v7433, %v7545
        %v7547 = vpop.f32.mrf.mxu0
        %v7548 = vadd.f32 %v7435, %v7547
        %7549 = vmatprep.mubr.bf16.mxu0 %v6441
        %7550 = vmatmul.mubr.bf16.gmra.mxu0 %v6440
        %v7551 = vpop.f32.mrf.mxu0
        %v7552 = vadd.f32 %v7439, %v7551
        %v7553 = vpop.f32.mrf.mxu0
        %v7554 = vadd.f32 %v7441, %v7553
        %v7555 = vpop.f32.mrf.mxu0
        %v7556 = vadd.f32 %v7443, %v7555
        %v7557 = vpop.f32.mrf.mxu0
        %v7558 = vadd.f32 %v7445, %v7557
        %7559 = vmatprep.mubr.bf16.mxu0 %v6449
        %7560 = vmatmul.mubr.bf16.gmra.mxu0 %v6448
        %v7561 = vpop.f32.mrf.mxu0
        %v7562 = vadd.f32 %v7449, %v7561
        %v7563 = vpop.f32.mrf.mxu0
        %v7564 = vadd.f32 %v7451, %v7563
        %v7565 = vpop.f32.mrf.mxu0
        %v7566 = vadd.f32 %v7453, %v7565
        %v7567 = vpop.f32.mrf.mxu0
        %v7568 = vadd.f32 %v7455, %v7567
        %7569 = vmatprep.mubr.bf16.mxu0 %v6457
        %7570 = vmatmul.mubr.bf16.gmra.mxu0 %v6456
        %v7571 = vpop.f32.mrf.mxu0
        %v7572 = vadd.f32 %v7459, %v7571
        %v7573 = vpop.f32.mrf.mxu0
        %v7574 = vadd.f32 %v7461, %v7573
        %v7575 = vpop.f32.mrf.mxu0
        %v7576 = vadd.f32 %v7463, %v7575
        %v7577 = vpop.f32.mrf.mxu0
        %v7578 = vadd.f32 %v7465, %v7577
        %7579 = vmatprep.mubr.bf16.mxu0 %v6465
        %7580 = vmatmul.mubr.bf16.gmra.mxu0 %v6464
        %v7581 = vpop.f32.mrf.mxu0
        %v7582 = vadd.f32 %v7469, %v7581
        %v7583 = vpop.f32.mrf.mxu0
        %v7584 = vadd.f32 %v7471, %v7583
        %v7585 = vpop.f32.mrf.mxu0
        %v7586 = vadd.f32 %v7473, %v7585
        %v7587 = vpop.f32.mrf.mxu0
        %v7588 = vadd.f32 %v7475, %v7587
        %7589 = vmatprep.mubr.bf16.mxu0 %v6473
        %7590 = vmatmul.mubr.bf16.gmra.mxu0 %v6472
        %v7591 = vpop.f32.mrf.mxu0
        %v7592 = vadd.f32 %v7479, %v7591
        %v7593 = vpop.f32.mrf.mxu0
        %v7594 = vadd.f32 %v7481, %v7593
        %v7595 = vpop.f32.mrf.mxu0
        %v7596 = vadd.f32 %v7483, %v7595
        %v7597 = vpop.f32.mrf.mxu0
        %v7598 = vadd.f32 %v7485, %v7597
        %7599 = vmatprep.mubr.bf16.mxu0 %v6481
        %7600 = vmatmul.mubr.bf16.gmra.mxu0 %v6480
        %v7601 = vpop.f32.mrf.mxu0
        %v7602 = vadd.f32 %v7489, %v7601
        %v7603 = vpop.f32.mrf.mxu0
        %v7604 = vadd.f32 %v7491, %v7603
        %v7605 = vpop.f32.mrf.mxu0
        %v7606 = vadd.f32 %v7493, %v7605
        %v7607 = vpop.f32.mrf.mxu0
        %v7608 = vadd.f32 %v7495, %v7607
        %7609 = vmatprep.mubr.bf16.mxu0 %v6489
        %7610 = vmatmul.mubr.bf16.gmra.mxu0 %v6488
        %v7611 = vpop.f32.mrf.mxu0
        %v7612 = vadd.f32 %v7499, %v7611
        %v7613 = vpop.f32.mrf.mxu0
        %v7614 = vadd.f32 %v7501, %v7613
        %v7615 = vpop.f32.mrf.mxu0
        %v7616 = vadd.f32 %v7503, %v7615
        %v7617 = vpop.f32.mrf.mxu0
        %v7618 = vadd.f32 %v7505, %v7617
        %7619 = vdwg.mxu0
        %7620 = vmatprep.subr.bf16.mxu0 %v7136
        %7621 = vmatpush1.bf16.msra.mxu0 %v7135
        %7622 = vmatprep.subr.bf16.mxu0 %v7134
        %7623 = vmatpush1.bf16.msra.mxu0 %v7133
        %7624 = vmatprep.subr.bf16.mxu0 %v7132
        %7625 = vmatpush1.bf16.msra.mxu0 %v7131
        %7626 = vmatprep.subr.bf16.mxu0 %v7130
        %7627 = vmatpush1.bf16.msra.mxu0 %v7129
        %7628 = vmatprep.subr.bf16.mxu0 %v7128
        %7629 = vmatpush1.bf16.msra.mxu0 %v7127
        %7630 = vmatprep.subr.bf16.mxu0 %v7126
        %7631 = vmatpush1.bf16.msra.mxu0 %v7125
        %7632 = vmatprep.subr.bf16.mxu0 %v7124
        %7633 = vmatpush1.bf16.msra.mxu0 %v7123
        %7634 = vmatprep.subr.bf16.mxu0 %v7122
        %7635 = vmatpush1.bf16.msra.mxu0 %v7121
        %7636 = vmatprep.subr.bf16.mxu0 %v7152
        %7637 = vmatpush2.bf16.msra.mxu0 %v7151
        %7638 = vmatprep.subr.bf16.mxu0 %v7150
        %7639 = vmatpush2.bf16.msra.mxu0 %v7149
        %7640 = vmatprep.subr.bf16.mxu0 %v7148
        %7641 = vmatpush2.bf16.msra.mxu0 %v7147
        %7642 = vmatprep.subr.bf16.mxu0 %v7146
        %7643 = vmatpush2.bf16.msra.mxu0 %v7145
        %7644 = vmatprep.subr.bf16.mxu0 %v7144
        %7645 = vmatpush2.bf16.msra.mxu0 %v7143
        %7646 = vmatprep.subr.bf16.mxu0 %v7142
        %7647 = vmatpush2.bf16.msra.mxu0 %v7141
        %7648 = vmatprep.subr.bf16.mxu0 %v7140
        %7649 = vmatpush2.bf16.msra.mxu0 %v7139
        %7650 = vmatprep.subr.bf16.mxu0 %v7138
        %7651 = vmatpush2.bf16.msra.mxu0 %v7137
        %7652 = vmatprep.mubr.bf16.mxu0 %v6435
        %7653 = vmatmul.mubr.bf16.gmra.mxu0 %v6434
        %v7654 = vpop.f32.mrf.mxu0
        %v7655 = vadd.f32 %v7542, %v7654
        %v7656 = vpop.f32.mrf.mxu0
        %v7657 = vadd.f32 %v7544, %v7656
        %v7658 = vpop.f32.mrf.mxu0
        %v7659 = vadd.f32 %v7546, %v7658
        %v7660 = vpop.f32.mrf.mxu0
        %v7661 = vadd.f32 %v7548, %v7660
        %7662 = vmatprep.mubr.bf16.mxu0 %v6443
        %7663 = vmatmul.mubr.bf16.gmra.mxu0 %v6442
        %v7664 = vpop.f32.mrf.mxu0
        %v7665 = vadd.f32 %v7552, %v7664
        %v7666 = vpop.f32.mrf.mxu0
        %v7667 = vadd.f32 %v7554, %v7666
        %v7668 = vpop.f32.mrf.mxu0
        %v7669 = vadd.f32 %v7556, %v7668
        %v7670 = vpop.f32.mrf.mxu0
        %v7671 = vadd.f32 %v7558, %v7670
        %7672 = vmatprep.mubr.bf16.mxu0 %v6451
        %7673 = vmatmul.mubr.bf16.gmra.mxu0 %v6450
        %v7674 = vpop.f32.mrf.mxu0
        %v7675 = vadd.f32 %v7562, %v7674
        %v7676 = vpop.f32.mrf.mxu0
        %v7677 = vadd.f32 %v7564, %v7676
        %v7678 = vpop.f32.mrf.mxu0
        %v7679 = vadd.f32 %v7566, %v7678
        %v7680 = vpop.f32.mrf.mxu0
        %v7681 = vadd.f32 %v7568, %v7680
        %7682 = vmatprep.mubr.bf16.mxu0 %v6459
        %7683 = vmatmul.mubr.bf16.gmra.mxu0 %v6458
        %v7684 = vpop.f32.mrf.mxu0
        %v7685 = vadd.f32 %v7572, %v7684
        %v7686 = vpop.f32.mrf.mxu0
        %v7687 = vadd.f32 %v7574, %v7686
        %v7688 = vpop.f32.mrf.mxu0
        %v7689 = vadd.f32 %v7576, %v7688
        %v7690 = vpop.f32.mrf.mxu0
        %v7691 = vadd.f32 %v7578, %v7690
        %7692 = vmatprep.mubr.bf16.mxu0 %v6467
        %7693 = vmatmul.mubr.bf16.gmra.mxu0 %v6466
        %v7694 = vpop.f32.mrf.mxu0
        %v7695 = vadd.f32 %v7582, %v7694
        %v7696 = vpop.f32.mrf.mxu0
        %v7697 = vadd.f32 %v7584, %v7696
        %v7698 = vpop.f32.mrf.mxu0
        %v7699 = vadd.f32 %v7586, %v7698
        %v7700 = vpop.f32.mrf.mxu0
        %v7701 = vadd.f32 %v7588, %v7700
        %7702 = vmatprep.mubr.bf16.mxu0 %v6475
        %7703 = vmatmul.mubr.bf16.gmra.mxu0 %v6474
        %v7704 = vpop.f32.mrf.mxu0
        %v7705 = vadd.f32 %v7592, %v7704
        %v7706 = vpop.f32.mrf.mxu0
        %v7707 = vadd.f32 %v7594, %v7706
        %v7708 = vpop.f32.mrf.mxu0
        %v7709 = vadd.f32 %v7596, %v7708
        %v7710 = vpop.f32.mrf.mxu0
        %v7711 = vadd.f32 %v7598, %v7710
        %7712 = vmatprep.mubr.bf16.mxu0 %v6483
        %7713 = vmatmul.mubr.bf16.gmra.mxu0 %v6482
        %v7714 = vpop.f32.mrf.mxu0
        %v7715 = vadd.f32 %v7602, %v7714
        %v7716 = vpop.f32.mrf.mxu0
        %v7717 = vadd.f32 %v7604, %v7716
        %v7718 = vpop.f32.mrf.mxu0
        %v7719 = vadd.f32 %v7606, %v7718
        %v7720 = vpop.f32.mrf.mxu0
        %v7721 = vadd.f32 %v7608, %v7720
        %7722 = vmatprep.mubr.bf16.mxu0 %v6491
        %7723 = vmatmul.mubr.bf16.gmra.mxu0 %v6490
        %v7724 = vpop.f32.mrf.mxu0
        %v7725 = vadd.f32 %v7612, %v7724
        %v7726 = vpop.f32.mrf.mxu0
        %v7727 = vadd.f32 %v7614, %v7726
        %v7728 = vpop.f32.mrf.mxu0
        %v7729 = vadd.f32 %v7616, %v7728
        %v7730 = vpop.f32.mrf.mxu0
        %v7731 = vadd.f32 %v7618, %v7730
        %7732 = vdwg.mxu0
        %v7733 = vadd.f32 %v3569, %v7655
        %v7734 = vadd.f32 %v3570, %v7657
        %v7735 = vadd.f32 %v3571, %v7659
        %v7736 = vadd.f32 %v3572, %v7661
        %v7737 = vadd.f32 %v3573, %v7665
        %v7738 = vadd.f32 %v3574, %v7667
        %v7739 = vadd.f32 %v3575, %v7669
        %v7740 = vadd.f32 %v3576, %v7671
        %v7741 = vadd.f32 %v3577, %v7675
        %v7742 = vadd.f32 %v3578, %v7677
        %v7743 = vadd.f32 %v3579, %v7679
        %v7744 = vadd.f32 %v3580, %v7681
        %v7745 = vadd.f32 %v3581, %v7685
        %v7746 = vadd.f32 %v3582, %v7687
        %v7747 = vadd.f32 %v3583, %v7689
        %v7748 = vadd.f32 %v3584, %v7691
        %v7749 = vadd.f32 %v3585, %v7695
        %v7750 = vadd.f32 %v3586, %v7697
        %v7751 = vadd.f32 %v3587, %v7699
        %v7752 = vadd.f32 %v3588, %v7701
        %v7753 = vadd.f32 %v3589, %v7705
        %v7754 = vadd.f32 %v3590, %v7707
        %v7755 = vadd.f32 %v3591, %v7709
        %v7756 = vadd.f32 %v3592, %v7711
        %v7757 = vadd.f32 %v3593, %v7715
        %v7758 = vadd.f32 %v3594, %v7717
        %v7759 = vadd.f32 %v3595, %v7719
        %v7760 = vadd.f32 %v3596, %v7721
        %v7761 = vadd.f32 %v3597, %v7725
        %v7762 = vadd.f32 %v3598, %v7727
        %v7763 = vadd.f32 %v3599, %v7729
        %v7764 = vadd.f32 %v3600, %v7731
        %7765 = vst [vmem:[#allocation2] sm:$0xff] %v7733
        %7766 = vst [vmem:[#allocation2 + $0x8] sm:$0xff] %v7734
        %7767 = vst [vmem:[#allocation2 + $0x10] sm:$0xff] %v7735
        %7768 = vst [vmem:[#allocation2 + $0x18] sm:$0xff] %v7736
        %7769 = vst [vmem:[#allocation2 + $0x20] sm:$0xff] %v7737
        %7770 = vst [vmem:[#allocation2 + $0x28] sm:$0xff] %v7738
        %7771 = vst [vmem:[#allocation2 + $0x30] sm:$0xff] %v7739
        %7772 = vst [vmem:[#allocation2 + $0x38] sm:$0xff] %v7740
        %7773 = vst [vmem:[#allocation2 + $0x40] sm:$0xff] %v7741
        %7774 = vst [vmem:[#allocation2 + $0x48] sm:$0xff] %v7742
        %7775 = vst [vmem:[#allocation2 + $0x50] sm:$0xff] %v7743
        %7776 = vst [vmem:[#allocation2 + $0x58] sm:$0xff] %v7744
        %7777 = vst [vmem:[#allocation2 + $0x60] sm:$0xff] %v7745
        %7778 = vst [vmem:[#allocation2 + $0x68] sm:$0xff] %v7746
        %7779 = vst [vmem:[#allocation2 + $0x70] sm:$0xff] %v7747
        %7780 = vst [vmem:[#allocation2 + $0x78] sm:$0xff] %v7748
        %7781 = vst [vmem:[#allocation2 + $0x80] sm:$0xff] %v7749
        %7782 = vst [vmem:[#allocation2 + $0x88] sm:$0xff] %v7750
        %7783 = vst [vmem:[#allocation2 + $0x90] sm:$0xff] %v7751
        %7784 = vst [vmem:[#allocation2 + $0x98] sm:$0xff] %v7752
        %7785 = vst [vmem:[#allocation2 + $0xa0] sm:$0xff] %v7753
        %7786 = vst [vmem:[#allocation2 + $0xa8] sm:$0xff] %v7754
        %7787 = vst [vmem:[#allocation2 + $0xb0] sm:$0xff] %v7755
        %7788 = vst [vmem:[#allocation2 + $0xb8] sm:$0xff] %v7756
        %7789 = vst [vmem:[#allocation2 + $0xc0] sm:$0xff] %v7757
        %7790 = vst [vmem:[#allocation2 + $0xc8] sm:$0xff] %v7758
        %7791 = vst [vmem:[#allocation2 + $0xd0] sm:$0xff] %v7759
        %7792 = vst [vmem:[#allocation2 + $0xd8] sm:$0xff] %v7760
        %7793 = vst [vmem:[#allocation2 + $0xe0] sm:$0xff] %v7761
        %7794 = vst [vmem:[#allocation2 + $0xe8] sm:$0xff] %v7762
        %7795 = vst [vmem:[#allocation2 + $0xf0] sm:$0xff] %v7763
        %7796 = vst [vmem:[#allocation2 + $0xf8] sm:$0xff] %v7764
        %p7797 = scmp.eq.s32.totalorder %s37, 1
        // Predicated region
        $region97: #{tpu_custom_call.1} parent=71 // pred_check
          %p7798 = pneg %p7797
        $region98: #{tpu_custom_call.1} parent=71 // pred_check_branch
          %7800 = sbr.rel (%p7798) target = $region100
        $region99: #{tpu_custom_call.1} parent=71 // pred_region
          %v7801 = vpack.c.bf16 %v7735, %v7733
          %v7802 = vpack.c.bf16 %v7736, %v7734
          %v7803 = vpack.c.bf16 %v7739, %v7737
          %v7804 = vpack.c.bf16 %v7740, %v7738
          %v7805 = vpack.c.bf16 %v7743, %v7741
          %v7806 = vpack.c.bf16 %v7744, %v7742
          %v7807 = vpack.c.bf16 %v7747, %v7745
          %v7808 = vpack.c.bf16 %v7748, %v7746
          %v7809 = vpack.c.bf16 %v7751, %v7749
          %v7810 = vpack.c.bf16 %v7752, %v7750
          %v7811 = vpack.c.bf16 %v7755, %v7753
          %v7812 = vpack.c.bf16 %v7756, %v7754
          %v7813 = vpack.c.bf16 %v7759, %v7757
          %v7814 = vpack.c.bf16 %v7760, %v7758
          %v7815 = vpack.c.bf16 %v7763, %v7761
          %v7816 = vpack.c.bf16 %v7764, %v7762
          %v7833 = vunpack.c.l.b16 %v7801
          %v7834 = vunpack.c.l.b16 %v7802
          %v7835 = vunpack.c.h.b16 %v7801
          %v7836 = vunpack.c.h.b16 %v7802
          %v7837 = vunpack.c.l.b16 %v7803
          %v7838 = vunpack.c.l.b16 %v7804
          %v7839 = vunpack.c.h.b16 %v7803
          %v7840 = vunpack.c.h.b16 %v7804
          %v7841 = vunpack.c.l.b16 %v7805
          %v7842 = vunpack.c.l.b16 %v7806
          %v7843 = vunpack.c.h.b16 %v7805
          %v7844 = vunpack.c.h.b16 %v7806
          %v7845 = vunpack.c.l.b16 %v7807
          %v7846 = vunpack.c.l.b16 %v7808
          %v7847 = vunpack.c.h.b16 %v7807
          %v7848 = vunpack.c.h.b16 %v7808
          %v7849 = vunpack.c.l.b16 %v7809
          %v7850 = vunpack.c.l.b16 %v7810
          %v7851 = vunpack.c.h.b16 %v7809
          %v7852 = vunpack.c.h.b16 %v7810
          %v7853 = vunpack.c.l.b16 %v7811
          %v7854 = vunpack.c.l.b16 %v7812
          %v7855 = vunpack.c.h.b16 %v7811
          %v7856 = vunpack.c.h.b16 %v7812
          %v7857 = vunpack.c.l.b16 %v7813
          %v7858 = vunpack.c.l.b16 %v7814
          %v7859 = vunpack.c.h.b16 %v7813
          %v7860 = vunpack.c.h.b16 %v7814
          %v7861 = vunpack.c.l.b16 %v7815
          %v7862 = vunpack.c.l.b16 %v7816
          %v7863 = vunpack.c.h.b16 %v7815
          %v7864 = vunpack.c.h.b16 %v7816
          %v7865 = vpack.c.b16 %v7834, %v7833
          %v7866 = vpack.c.b16 %v7836, %v7835
          %v7867 = vpack.c.b16 %v7838, %v7837
          %v7868 = vpack.c.b16 %v7840, %v7839
          %v7869 = vpack.c.b16 %v7842, %v7841
          %v7870 = vpack.c.b16 %v7844, %v7843
          %v7871 = vpack.c.b16 %v7846, %v7845
          %v7872 = vpack.c.b16 %v7848, %v7847
          %v7873 = vpack.c.b16 %v7850, %v7849
          %v7874 = vpack.c.b16 %v7852, %v7851
          %v7875 = vpack.c.b16 %v7854, %v7853
          %v7876 = vpack.c.b16 %v7856, %v7855
          %v7877 = vpack.c.b16 %v7858, %v7857
          %v7878 = vpack.c.b16 %v7860, %v7859
          %v7879 = vpack.c.b16 %v7862, %v7861
          %v7880 = vpack.c.b16 %v7864, %v7863
          %7897 = vst [vmem:[#allocation12] sm:$0xff] %v7865
          %7898 = vst [vmem:[#allocation12 + $0x8] sm:$0xff] %v7866
          %7899 = vst [vmem:[#allocation12 + $0x10] sm:$0xff] %v7867
          %7900 = vst [vmem:[#allocation12 + $0x18] sm:$0xff] %v7868
          %7901 = vst [vmem:[#allocation12 + $0x20] sm:$0xff] %v7869
          %7902 = vst [vmem:[#allocation12 + $0x28] sm:$0xff] %v7870
          %7903 = vst [vmem:[#allocation12 + $0x30] sm:$0xff] %v7871
          %7904 = vst [vmem:[#allocation12 + $0x38] sm:$0xff] %v7872
          %7905 = vst [vmem:[#allocation12 + $0x40] sm:$0xff] %v7873
          %7906 = vst [vmem:[#allocation12 + $0x48] sm:$0xff] %v7874
          %7907 = vst [vmem:[#allocation12 + $0x50] sm:$0xff] %v7875
          %7908 = vst [vmem:[#allocation12 + $0x58] sm:$0xff] %v7876
          %7909 = vst [vmem:[#allocation12 + $0x60] sm:$0xff] %v7877
          %7910 = vst [vmem:[#allocation12 + $0x68] sm:$0xff] %v7878
          %7911 = vst [vmem:[#allocation12 + $0x70] sm:$0xff] %v7879
          %7912 = vst [vmem:[#allocation12 + $0x78] sm:$0xff] %v7880
        $region100: #{tpu_custom_call.1} parent=71 // pred_fallthru
          _
        // Predicated region
        $region101: #{tpu_custom_call.1} parent=71 // pred_check
          %p7913 = pneg %p400
        $region102: #{tpu_custom_call.1} parent=71 // pred_check_branch
          %7915 = sbr.rel (%p7913) target = $region104
        $region103: #{tpu_custom_call.1} parent=71 // pred_region
          %s7916 = smul.u32 2, %s36
          %s7918 = ssub.s32 2048, 2048
          %7919 = vsyncadd [#allocation5], %s7918
          %s7920 = smul.addr %s7916, 16
          %s7921 = smul.addr %s7920, 64
          %s7922 = scalar_lea.hbm %s13, %s7921
          %s7923 = sshll.u32 [#allocation12], 4
          %s7924 = int_to_ptr.vmem [resolvable:$true] %s7923
          %7929 = dma.vmem_to_hbm [thread:$0]  %s7924, 2048, %s7922, [#allocation5], 128, 128, 8
        $region104: #{tpu_custom_call.1} parent=71 // pred_fallthru
          _
        // Predicated region
        $region105: #{tpu_custom_call.1} parent=71 // pred_check
          %p7930 = pneg %p400
        $region106: #{tpu_custom_call.1} parent=71 // pred_check_branch
          %7932 = sbr.rel (%p7930) target = $region108
        $region107: #{tpu_custom_call.1} parent=71 // pred_region
          %7933 = dma.done [#allocation5], 2048
        $region108: #{tpu_custom_call.1} parent=71 // pred_fallthru
          _
      $region72: #{tpu_custom_call.1} parent=5 // pred_fallthru
        _
      %p7934 = scmp.le.s32.totalorder 2, %s27
      // Predicated region
      $region109: #{tpu_custom_call.1} parent=5 // pred_check
        %p7935 = pneg %p7934
      $region110: #{tpu_custom_call.1} parent=5 // pred_check_branch
        %7937 = sbr.rel (%p7935) target = $region112
      $region111: #{tpu_custom_call.1} parent=5 // pred_region
        %s7938 = ssub.s32 %s27, 2
      $region112: #{tpu_custom_call.1} parent=5 // pred_fallthru
        _
    $region6: #{tpu_custom_call.1} parent=1 // loop_footer
      %s31 = sadd.s32 1, %s27
    $region7: #{tpu_custom_call.1} parent=1 // loop_footer_branch
      %26 = sbr.rel target = $region3
    $region8: #{tpu_custom_call.1} parent=1 // loop_exit
      _
    %7939 = vsyncpa [#allocation4], 1
    %s7940 = scalar_lea.sflag [#allocation4], 1
    %7941 = vsyncpa %s7940, 1
    %7942 = vsyncpa [#allocation7], 1
    %s7943 = scalar_lea.sflag [#allocation7], 1
    %7944 = vsyncpa %s7943, 1
    %7945 = vsyncpa [#allocation10], 1
    %s7946 = scalar_lea.sflag [#allocation10], 1
    %7947 = vsyncpa %s7946, 1
    %7948 = vsyncpa [#allocation5], 1
    %s7949 = scalar_lea.sflag [#allocation5], 1
    %7950 = vsyncpa %s7949, 1

</llo_original>
